<compile_context>
chip_gen: v6e
topology: v6e:2x2x1
jax: 0.10.0
libtpu: 0.0.40
codegen_flags: <defaults>
</compile_context>

<pallas_src>
import jax
import jax.numpy as jnp
from jax import lax
from jax.experimental import pallas as pl
from jax.experimental.pallas import tpu as pltpu

EPS = 1e-5
LANE = 128      # output-channel padding (lane-dense stores / MXU N dim)
SUBLANE = 8     # flat-row (sublane) alignment


def _round_up(x, m):
    return (x + m - 1) // m * m


def _vmem_limit(*block_nbytes):
    """Scoped-VMEM budget sized from the actual double-buffered working set."""
    need = 2 * sum(int(b) for b in block_nbytes) + (8 << 20)
    # Safe on all generations for these block sizes; allows growth on
    # v5e/v6e (128 MiB physical).  On v7x (64 MiB) the demo need is tiny.
    return int(min(max(need, 24 << 20), 96 << 20))


# ---------------------------------------------------------------------------
# Conv3x3 (+ optional fused input BN/ReLU/mask) + per-image BN partial stats.
# One grid step == one image; steps are independent -> "parallel".
# ---------------------------------------------------------------------------
def _make_conv_stats_kernel(tap_offsets, wp, hwp, flat, fuse_input_bn):

    def _conv_and_stats(tap, w_ref, stat_mask_ref, y_ref, sum_ref, ssq_ref):
        acc = jnp.dot(tap(0), w_ref[0], preferred_element_type=jnp.float32)
        for t in range(1, len(tap_offsets)):          # static unroll over taps
            acc = acc + jnp.dot(tap(t), w_ref[t],
                                preferred_element_type=jnp.float32)
        c = acc.shape[-1]
        # Raw conv output placed directly into the NEXT layer's padded flat
        # layout: [wp top-pad rows | hwp conv rows | 2*wp bottom-pad rows].
        y_ref[0:wp, :] = jnp.zeros((wp, c), jnp.float32)
        y_ref[wp:wp + hwp, :] = acc
        y_ref[wp + hwp:flat, :] = jnp.zeros((flat - wp - hwp, c), jnp.float32)
        # Per-image BN partials over the valid output columns only.
        masked = acc * stat_mask_ref[...]              # (hwp,1) resident mask
        sum_ref[...] = jnp.sum(masked, axis=0, keepdims=True)
        ssq_ref[...] = jnp.sum(masked * acc, axis=0, keepdims=True)

    if fuse_input_bn:
        def kernel(x_ref, w_ref, sc_ref, sh_ref, in_mask_ref, stat_mask_ref,
                   y_ref, sum_ref, ssq_ref, xn_ref):
            # Previous layer's BN + ReLU + pad/garbage-column zeroing, fused
            # once per block into a VMEM scratch; taps slice the scratch.
            xn_ref[...] = (jnp.maximum(
                x_ref[...] * sc_ref[...] + sh_ref[...], 0.0) * in_mask_ref[...])
            tap = lambda t: xn_ref[tap_offsets[t]:tap_offsets[t] + hwp, :]
            _conv_and_stats(tap, w_ref, stat_mask_ref, y_ref, sum_ref, ssq_ref)
    else:
        def kernel(x_ref, w_ref, stat_mask_ref, y_ref, sum_ref, ssq_ref):
            tap = lambda t: x_ref[tap_offsets[t]:tap_offsets[t] + hwp, :]
            _conv_and_stats(tap, w_ref, stat_mask_ref, y_ref, sum_ref, ssq_ref)

    return kernel


def _conv_layer(x_flat, w_tap, stat_mask, tap_offsets, wp, hwp, flat,
                in_bn=None):
    """Raw conv into the padded flat layout + per-image BN (sum, sumsq)."""
    n, flat_in, cb = x_flat.shape
    assert flat_in == flat
    t, kdim, coutp = w_tap.shape

    in_specs = [
        pl.BlockSpec((None, flat, cb), lambda i: (i, 0, 0)),
        pl.BlockSpec((t, kdim, coutp), lambda i: (0, 0, 0)),   # resident weights
    ]
    args = [x_flat, w_tap]
    scratch_shapes = []
    if in_bn is not None:
        sc, sh, msk = in_bn
        in_specs += [
            pl.BlockSpec((1, cb), lambda i: (0, 0)),
            pl.BlockSpec((1, cb), lambda i: (0, 0)),
            pl.BlockSpec((flat, 1), lambda i: (0, 0)),
        ]
        args += [sc, sh, msk]
        scratch_shapes = [pltpu.VMEM((flat, cb), jnp.float32)]
    in_specs.append(pl.BlockSpec((hwp, 1), lambda i: (0, 0)))   # resident mask
    args.append(stat_mask)

    kernel = _make_conv_stats_kernel(tap_offsets, wp, hwp, flat,
                                     in_bn is not None)

    block_bytes = (flat * cb * 4, t * kdim * coutp * 4, flat * coutp * 4,
                   flat * 4 + hwp * 4 + 4 * coutp * 4,
                   (flat * cb * 4 if in_bn is not None else 0))

    return pl.pallas_call(
        kernel,
        grid=(n,),
        in_specs=in_specs,
        out_specs=[
            pl.BlockSpec((None, flat, coutp), lambda i: (i, 0, 0)),
            pl.BlockSpec((None, 1, coutp), lambda i: (i, 0, 0)),
            pl.BlockSpec((None, 1, coutp), lambda i: (i, 0, 0)),
        ],
        out_shape=[
            jax.ShapeDtypeStruct((n, flat, coutp), jnp.float32),
            jax.ShapeDtypeStruct((n, 1, coutp), jnp.float32),
            jax.ShapeDtypeStruct((n, 1, coutp), jnp.float32),
        ],
        scratch_shapes=scratch_shapes,
        compiler_params=pltpu.CompilerParams(
            dimension_semantics=("parallel",),
            vmem_limit_bytes=_vmem_limit(*block_bytes)),
    )(*args)


# ---------------------------------------------------------------------------
# Final standalone BN + ReLU (in place over the padded flat layout).
# ---------------------------------------------------------------------------
def _bn_relu_mask_kernel(y_ref, scale_ref, shift_ref, mask_ref, o_ref):
    o_ref[...] = (jnp.maximum(y_ref[...] * scale_ref[...] + shift_ref[...], 0.0)
                  * mask_ref[...])


def _bn_relu_inplace(y_flat, scale, shift, full_mask):
    n, flat, coutp = y_flat.shape
    block_bytes = (flat * coutp * 4, 2 * coutp * 4 + flat * 4, flat * coutp * 4)
    return pl.pallas_call(
        _bn_relu_mask_kernel,
        grid=(n,),
        in_specs=[
            pl.BlockSpec((None, flat, coutp), lambda i: (i, 0, 0)),
            pl.BlockSpec((1, coutp), lambda i: (0, 0)),
            pl.BlockSpec((1, coutp), lambda i: (0, 0)),
            pl.BlockSpec((flat, 1), lambda i: (0, 0)),
        ],
        out_specs=pl.BlockSpec((None, flat, coutp), lambda i: (i, 0, 0)),
        out_shape=jax.ShapeDtypeStruct((n, flat, coutp), jnp.float32),
        input_output_aliases={0: 0},          # normalize y in place
        compiler_params=pltpu.CompilerParams(
            dimension_semantics=("parallel",),
            vmem_limit_bytes=_vmem_limit(*block_bytes)),
    )(y_flat, scale, shift, full_mask)


# ---------------------------------------------------------------------------
# Wrapper-side helpers.
# ---------------------------------------------------------------------------
def _bn_affine(sum_parts, ssq_parts, gamma_p, beta_p, count):
    """(per-image sum, sumsq) -> BN (scale, shift). Tiny, plain XLA."""
    s = jnp.sum(sum_parts, axis=0)                  # (1, C)
    q = jnp.sum(ssq_parts, axis=0)
    mean = s / count
    var = q / count - mean * mean                   # biased, single-pass, fp32
    scale = gamma_p * lax.rsqrt(var + EPS)
    shift = beta_p - mean * scale
    return scale, shift


def _col_masks(h, w, wp, left):
    """Validity masks for a layer whose INPUT has `left` left zero columns.

    The conv output of that layer places real column c at wide column
    c + left - 1; columns outside [left-1, left+w-2] are garbage/pad.
    Returns (stat_mask (h*wp,1), full_mask ((h+3)*wp,1))."""
    lo, hi = left - 1, left + w - 2
    hwp, flat = h * wp, (h + 3) * wp
    col_h = jnp.arange(hwp) % wp
    stat_mask = ((col_h >= lo) & (col_h <= hi)).astype(jnp.float32)[:, None]
    f = jnp.arange(flat)
    col_f = f % wp
    interior = (f >= wp) & (f < wp + hwp)
    full_mask = (interior & (col_f >= lo) & (col_f <= hi)
                 ).astype(jnp.float32)[:, None]
    return stat_mask, full_mask


def block_forward(x_nchw, params):
    """Equivalent of Block.forward. Input/output are NCHW like PyTorch."""
    n, cin, h, w = x_nchw.shape
    cout1 = params["w1"].shape[-1]
    cout2 = params["w2"].shape[-1]
    coutp1 = _round_up(cout1, LANE)
    coutp2 = _round_up(cout2, LANE)

    wp = _round_up(w + 4, SUBLANE)       # 8-aligned wide row width
    hwp = h * wp
    flat = (h + 3) * wp
    count = float(n * h * w)

    x = jnp.transpose(x_nchw, (0, 2, 3, 1))                    # NCHW -> NHWC

    # ---------------- layer 1: conv -> raw y1 + per-image stats ----------------
    left1 = 3                          # 3 left zero cols -> output lands at left=2
    pack1 = (3 * cin) <= LANE          # pack dx taps along K when Cin is small
    cin_p = cin if pack1 else _round_up(cin, SUBLANE)
    xp = jnp.pad(x, ((0, 0), (1, 2), (left1, wp - w - left1), (0, cin_p - cin)))
    xf = xp.reshape(n, flat, cin_p)

    if pack1:
        kpack = _round_up(3 * cin, SUBLANE)
        xf_in1 = jnp.concatenate(
            [xf,
             jnp.pad(xf[:, 1:, :], ((0, 0), (0, 1), (0, 0))),
             jnp.pad(xf[:, 2:, :], ((0, 0), (0, 2), (0, 0)))], axis=-1)
        xf_in1 = jnp.pad(xf_in1, ((0, 0), (0, 0), (0, kpack - 3 * cin)))
        w1 = params["w1"].reshape(3, 3 * cin, cout1)            # (dy, dx*cin+c, o)
        w1 = jnp.pad(w1, ((0, 0), (0, kpack - 3 * cin), (0, coutp1 - cout1)))
        offs1 = (0, wp, 2 * wp)                                  # aligned dy taps
    else:
        xf_in1 = xf
        w1 = jnp.pad(params["w1"],
                     ((0, 0), (0, 0), (0, cin_p - cin), (0, coutp1 - cout1)))
        w1 = w1.reshape(9, cin_p, coutp1)
        offs1 = tuple(dy * wp + dx for dy in range(3) for dx in range(3))

    stat_mask1, full_mask1 = _col_masks(h, w, wp, left1)
    y1, s1, q1 = _conv_layer(xf_in1, w1, stat_mask1, offs1, wp, hwp, flat)

    g1 = jnp.pad(params["g1"], (0, coutp1 - cout1)).reshape(1, coutp1)
    b1 = jnp.pad(params["b1"], (0, coutp1 - cout1)).reshape(1, coutp1)
    scale1, shift1 = _bn_affine(s1, q1, g1, b1, count)

    # ------------- layer 2: (fused BN1+ReLU) conv -> raw y2 + stats -------------
    left2 = left1 - 1                  # layer-1 output already sits at left=2
    w2 = jnp.pad(params["w2"],
                 ((0, 0), (0, 0), (0, coutp1 - cout1), (0, coutp2 - cout2)))
    w2 = w2.reshape(9, coutp1, coutp2)
    offs2 = tuple(dy * wp + dx for dy in range(3) for dx in range(3))

    stat_mask2, full_mask2 = _col_masks(h, w, wp, left2)
    y2, s2, q2 = _conv_layer(y1, w2, stat_mask2, offs2, wp, hwp, flat,
                             in_bn=(scale1, shift1, full_mask1))

    g2 = jnp.pad(params["g2"], (0, coutp2 - cout2)).reshape(1, coutp2)
    b2 = jnp.pad(params["b2"], (0, coutp2 - cout2)).reshape(1, coutp2)
    scale2, shift2 = _bn_affine(s2, q2, g2, b2, count)

    # ---------------- final BN + ReLU (in place) + crop ----------------
    out_flat = _bn_relu_inplace(y2, scale2, shift2, full_mask2)
    out = out_flat.reshape(n, h + 3, wp, coutp2)[
        :, 1:h + 1, left2 - 1:left2 - 1 + w, :cout2]
    return jnp.transpose(out, (0, 3, 1, 2))                    # NHWC -> NCHW


# ---------------------------------------------------------------------------
# Pure-JAX reference (correctness sanity check) + params.
# ---------------------------------------------------------------------------
def _ref_layer(x_nhwc, w_hwio, gamma, beta):
    y = lax.conv_general_dilated(
        x_nhwc, w_hwio, window_strides=(1, 1), padding="SAME",
        dimension_numbers=("NHWC", "HWIO", "NHWC"))
    mean = jnp.mean(y, axis=(0, 1, 2))
    var = jnp.mean((y - mean) ** 2, axis=(0, 1, 2))
    y = (y - mean) * (gamma * lax.rsqrt(var + EPS)) + beta
    return jnp.maximum(y, 0.0)


def _ref_block(x_nchw, params):
    x = jnp.transpose(x_nchw, (0, 2, 3, 1))
    x = _ref_layer(x, params["w1"], params["g1"], params["b1"])
    x = _ref_layer(x, params["w2"], params["g2"], params["b2"])
    return jnp.transpose(x, (0, 3, 1, 2))


def init_params(key, in_channels, out_channels):
    k1, k2, k3, k4, k5, k6 = jax.random.split(key, 6)
    std1 = (2.0 / (in_channels * 9)) ** 0.5
    std2 = (2.0 / (out_channels * 9)) ** 0.5
    return {
        "w1": std1 * jax.random.normal(k1, (3, 3, in_channels, out_channels), jnp.float32),
        "g1": jax.random.uniform(k2, (out_channels,), jnp.float32, 0.5, 1.5),
        "b1": 0.1 * jax.random.normal(k3, (out_channels,), jnp.float32),
        "w2": std2 * jax.random.normal(k4, (3, 3, out_channels, out_channels), jnp.float32),
        "g2": jax.random.uniform(k5, (out_channels,), jnp.float32, 0.5, 1.5),
        "b2": 0.1 * jax.random.normal(k6, (out_channels,), jnp.float32),
    }


if __name__ == "__main__":
    key = jax.random.PRNGKey(0)
    kx, kp = jax.random.split(key)

    N, C_IN, C_OUT, H, W = 2, 4, 8, 16, 16
    x = jax.random.normal(kx, (N, C_IN, H, W), jnp.float32)    # NCHW like PyTorch
    params = init_params(kp, C_IN, C_OUT)

    out = jax.block_until_ready(jax.jit(block_forward)(x, params))
    assert out.shape == (N, C_OUT, H, W), out.shape

    ref = jax.block_until_ready(_ref_block(x, params))
    max_err = float(jnp.max(jnp.abs(out - ref)))
    assert jnp.allclose(out, ref, rtol=5e-4, atol=5e-4), max_err

    print("KERNEL_OK")
</pallas_src>

<mosaic_0001>
module attributes {stable_mosaic.version = 11 : i64} {
  func.func @kernel(%arg0: i32, %arg1: memref<1x456x16xf32, #tpu.memory_space<vmem>>, %arg2: memref<3x16x128xf32, #tpu.memory_space<vmem>>, %arg3: memref<384x1xf32, #tpu.memory_space<vmem>>, %arg4: memref<1x456x128xf32, #tpu.memory_space<vmem>>, %arg5: memref<1x1x128xf32, #tpu.memory_space<vmem>>, %arg6: memref<1x1x128xf32, #tpu.memory_space<vmem>>) attributes {dimension_semantics = [#tpu.dimension_semantics<parallel>], iteration_bounds = array<i64: 2>, scalar_prefetch = 0 : i64, scratch_operands = 0 : i64, tpu.core_type = #tpu.core_type<tc>, window_params = [{transform_indices = @transform_0, window_bounds = array<i64: 1, 456, 16>}, {pipeline_mode = #tpu.pipeline_mode<synchronous>, transform_indices = @transform_1, window_bounds = array<i64: 3, 16, 128>}, {pipeline_mode = #tpu.pipeline_mode<synchronous>, transform_indices = @transform_2, window_bounds = array<i64: 384, 1>}, {transform_indices = @transform_3, window_bounds = array<i64: 1, 456, 128>}, {transform_indices = @transform_4, window_bounds = array<i64: 1, 1, 128>}, {transform_indices = @transform_5, window_bounds = array<i64: 1, 1, 128>}]} {
    %c0 = arith.constant 0 : index
    %c0_0 = arith.constant 0 : index
    %c0_1 = arith.constant 0 : index
    %0 = vector.load %arg1[%c0, %c0_0, %c0_1] : memref<1x456x16xf32, #tpu.memory_space<vmem>>, vector<1x384x16xf32>
    %1 = vector.shape_cast %0 : vector<1x384x16xf32> to vector<384x16xf32>
    %c0_2 = arith.constant 0 : index
    %c0_3 = arith.constant 0 : index
    %c0_4 = arith.constant 0 : index
    %2 = vector.load %arg2[%c0_2, %c0_3, %c0_4] : memref<3x16x128xf32, #tpu.memory_space<vmem>>, vector<1x16x128xf32>
    %3 = vector.shape_cast %2 : vector<1x16x128xf32> to vector<16x128xf32>
    %cst = arith.constant dense<0.000000e+00> : vector<384x128xf32>
    %4 = tpu.matmul %1, %3, %cst {dimension_numbers = #tpu.dot_dimension_numbers<[1], [0], [0], [1], [0, 0, 1, 1], [], []>} : vector<384x16xf32>, vector<16x128xf32>, vector<384x128xf32> -> vector<384x128xf32>
    %c0_5 = arith.constant 0 : index
    %c24 = arith.constant 24 : index
    %c0_6 = arith.constant 0 : index
    %5 = vector.load %arg1[%c0_5, %c24, %c0_6] : memref<1x456x16xf32, #tpu.memory_space<vmem>>, vector<1x384x16xf32>
    %6 = vector.shape_cast %5 : vector<1x384x16xf32> to vector<384x16xf32>
    %c1 = arith.constant 1 : index
    %c0_7 = arith.constant 0 : index
    %c0_8 = arith.constant 0 : index
    %7 = vector.load %arg2[%c1, %c0_7, %c0_8] : memref<3x16x128xf32, #tpu.memory_space<vmem>>, vector<1x16x128xf32>
    %8 = vector.shape_cast %7 : vector<1x16x128xf32> to vector<16x128xf32>
    %cst_9 = arith.constant dense<0.000000e+00> : vector<384x128xf32>
    %9 = tpu.matmul %6, %8, %cst_9 {dimension_numbers = #tpu.dot_dimension_numbers<[1], [0], [0], [1], [0, 0, 1, 1], [], []>} : vector<384x16xf32>, vector<16x128xf32>, vector<384x128xf32> -> vector<384x128xf32>
    %10 = arith.addf %4, %9 : vector<384x128xf32>
    %c0_10 = arith.constant 0 : index
    %c48 = arith.constant 48 : index
    %c0_11 = arith.constant 0 : index
    %11 = vector.load %arg1[%c0_10, %c48, %c0_11] : memref<1x456x16xf32, #tpu.memory_space<vmem>>, vector<1x384x16xf32>
    %12 = vector.shape_cast %11 : vector<1x384x16xf32> to vector<384x16xf32>
    %c2 = arith.constant 2 : index
    %c0_12 = arith.constant 0 : index
    %c0_13 = arith.constant 0 : index
    %13 = vector.load %arg2[%c2, %c0_12, %c0_13] : memref<3x16x128xf32, #tpu.memory_space<vmem>>, vector<1x16x128xf32>
    %14 = vector.shape_cast %13 : vector<1x16x128xf32> to vector<16x128xf32>
    %cst_14 = arith.constant dense<0.000000e+00> : vector<384x128xf32>
    %15 = tpu.matmul %12, %14, %cst_14 {dimension_numbers = #tpu.dot_dimension_numbers<[1], [0], [0], [1], [0, 0, 1, 1], [], []>} : vector<384x16xf32>, vector<16x128xf32>, vector<384x128xf32> -> vector<384x128xf32>
    %16 = arith.addf %10, %15 : vector<384x128xf32>
    %cst_15 = arith.constant 0.000000e+00 : f32
    %17 = vector.broadcast %cst_15 : f32 to vector<24x128xf32>
    %c0_16 = arith.constant 0 : index
    %c0_17 = arith.constant 0 : index
    %c0_18 = arith.constant 0 : index
    %18 = vector.load %arg4[%c0_16, %c0_17, %c0_18] : memref<1x456x128xf32, #tpu.memory_space<vmem>>, vector<1x24x128xf32>
    %19 = vector.shape_cast %18 : vector<1x24x128xf32> to vector<24x128xf32>
    %20 = vector.shape_cast %17 : vector<24x128xf32> to vector<1x24x128xf32>
    tpu.vector_store %arg4[%c0_16, %c0_17, %c0_18], %20 {strides = array<i32>} : memref<1x456x128xf32, #tpu.memory_space<vmem>>, vector<1x24x128xf32>,
    %c0_19 = arith.constant 0 : index
    %c24_20 = arith.constant 24 : index
    %c0_21 = arith.constant 0 : index
    %21 = vector.load %arg4[%c0_19, %c24_20, %c0_21] : memref<1x456x128xf32, #tpu.memory_space<vmem>>, vector<1x384x128xf32>
    %22 = vector.shape_cast %21 : vector<1x384x128xf32> to vector<384x128xf32>
    %23 = vector.shape_cast %16 : vector<384x128xf32> to vector<1x384x128xf32>
    tpu.vector_store %arg4[%c0_19, %c24_20, %c0_21], %23 {strides = array<i32>} : memref<1x456x128xf32, #tpu.memory_space<vmem>>, vector<1x384x128xf32>,
    %cst_22 = arith.constant 0.000000e+00 : f32
    %24 = vector.broadcast %cst_22 : f32 to vector<48x128xf32>
    %c0_23 = arith.constant 0 : index
    %c408 = arith.constant 408 : index
    %c0_24 = arith.constant 0 : index
    %25 = vector.load %arg4[%c0_23, %c408, %c0_24] : memref<1x456x128xf32, #tpu.memory_space<vmem>>, vector<1x48x128xf32>
    %26 = vector.shape_cast %25 : vector<1x48x128xf32> to vector<48x128xf32>
    %27 = vector.shape_cast %24 : vector<48x128xf32> to vector<1x48x128xf32>
    tpu.vector_store %arg4[%c0_23, %c408, %c0_24], %27 {strides = array<i32>} : memref<1x456x128xf32, #tpu.memory_space<vmem>>, vector<1x48x128xf32>,
    %c0_25 = arith.constant 0 : index
    %c0_26 = arith.constant 0 : index
    %28 = vector.load %arg3[%c0_25, %c0_26] : memref<384x1xf32, #tpu.memory_space<vmem>>, vector<384x1xf32>
    %29 = vector.broadcast %28 : vector<384x1xf32> to vector<384x128xf32>
    %30 = arith.mulf %16, %29 : vector<384x128xf32>
    %cst_27 = arith.constant dense<0.000000e+00> : vector<128xf32>
    %31 = vector.multi_reduction <add>, %30, %cst_27 [0] : vector<384x128xf32> to vector<128xf32>
    %32 = vector.shape_cast %31 : vector<128xf32> to vector<1x128xf32>
    %c0_28 = arith.constant 0 : index
    %c0_29 = arith.constant 0 : index
    %c0_30 = arith.constant 0 : index
    %33 = vector.load %arg5[%c0_28, %c0_29, %c0_30] : memref<1x1x128xf32, #tpu.memory_space<vmem>>, vector<1x1x128xf32>
    %34 = vector.shape_cast %33 : vector<1x1x128xf32> to vector<1x128xf32>
    %35 = vector.shape_cast %32 : vector<1x128xf32> to vector<1x1x128xf32>
    tpu.vector_store %arg5[%c0_28, %c0_29, %c0_30], %35 {strides = array<i32>} : memref<1x1x128xf32, #tpu.memory_space<vmem>>, vector<1x1x128xf32>,
    %36 = arith.mulf %30, %16 : vector<384x128xf32>
    %cst_31 = arith.constant dense<0.000000e+00> : vector<128xf32>
    %37 = vector.multi_reduction <add>, %36, %cst_31 [0] : vector<384x128xf32> to vector<128xf32>
    %38 = vector.shape_cast %37 : vector<128xf32> to vector<1x128xf32>
    %c0_32 = arith.constant 0 : index
    %c0_33 = arith.constant 0 : index
    %c0_34 = arith.constant 0 : index
    %39 = vector.load %arg6[%c0_32, %c0_33, %c0_34] : memref<1x1x128xf32, #tpu.memory_space<vmem>>, vector<1x1x128xf32>
    %40 = vector.shape_cast %39 : vector<1x1x128xf32> to vector<1x128xf32>
    %41 = vector.shape_cast %38 : vector<1x128xf32> to vector<1x1x128xf32>
    tpu.vector_store %arg6[%c0_32, %c0_33, %c0_34], %41 {strides = array<i32>} : memref<1x1x128xf32, #tpu.memory_space<vmem>>, vector<1x1x128xf32>,
    return
  }
  func.func @transform_0(%arg0: i32) -> (i32, i32, i32) {
    %c0_i32 = arith.constant 0 : i32
    %c0_i32_0 = arith.constant 0 : i32
    %c0_i32_1 = arith.constant 0 : i32
    return %arg0, %c0_i32, %c0_i32_0 : i32, i32, i32
  }
  func.func @transform_1(%arg0: i32) -> (i32, i32, i32) {
    %c0_i32 = arith.constant 0 : i32
    %c0_i32_0 = arith.constant 0 : i32
    %c0_i32_1 = arith.constant 0 : i32
    %c0_i32_2 = arith.constant 0 : i32
    return %c0_i32, %c0_i32_0, %c0_i32_1 : i32, i32, i32
  }
  func.func @transform_2(%arg0: i32) -> (i32, i32) {
    %c0_i32 = arith.constant 0 : i32
    %c0_i32_0 = arith.constant 0 : i32
    %c0_i32_1 = arith.constant 0 : i32
    return %c0_i32, %c0_i32_0 : i32, i32
  }
  func.func @transform_3(%arg0: i32) -> (i32, i32, i32) {
    %c0_i32 = arith.constant 0 : i32
    %c0_i32_0 = arith.constant 0 : i32
    %c0_i32_1 = arith.constant 0 : i32
    return %arg0, %c0_i32, %c0_i32_0 : i32, i32, i32
  }
  func.func @transform_4(%arg0: i32) -> (i32, i32, i32) {
    %c0_i32 = arith.constant 0 : i32
    %c0_i32_0 = arith.constant 0 : i32
    %c0_i32_1 = arith.constant 0 : i32
    return %arg0, %c0_i32, %c0_i32_0 : i32, i32, i32
  }
  func.func @transform_5(%arg0: i32) -> (i32, i32, i32) {
    %c0_i32 = arith.constant 0 : i32
    %c0_i32_0 = arith.constant 0 : i32
    %c0_i32_1 = arith.constant 0 : i32
    return %arg0, %c0_i32, %c0_i32_0 : i32, i32, i32
  }
}

module attributes {stable_mosaic.version = 11 : i64} {
  func.func @kernel(%arg0: i32, %arg1: memref<1x456x128xf32, #tpu.memory_space<vmem>>, %arg2: memref<9x128x128xf32, #tpu.memory_space<vmem>>, %arg3: memref<1x128xf32, #tpu.memory_space<vmem>>, %arg4: memref<1x128xf32, #tpu.memory_space<vmem>>, %arg5: memref<456x1xf32, #tpu.memory_space<vmem>>, %arg6: memref<384x1xf32, #tpu.memory_space<vmem>>, %arg7: memref<1x456x128xf32, #tpu.memory_space<vmem>>, %arg8: memref<1x1x128xf32, #tpu.memory_space<vmem>>, %arg9: memref<1x1x128xf32, #tpu.memory_space<vmem>>, %arg10: memref<456x128xf32, #tpu.memory_space<vmem>>) attributes {dimension_semantics = [#tpu.dimension_semantics<parallel>], iteration_bounds = array<i64: 2>, scalar_prefetch = 0 : i64, scratch_operands = 1 : i64, tpu.core_type = #tpu.core_type<tc>, window_params = [{transform_indices = @transform_0, window_bounds = array<i64: 1, 456, 128>}, {pipeline_mode = #tpu.pipeline_mode<synchronous>, transform_indices = @transform_1, window_bounds = array<i64: 9, 128, 128>}, {pipeline_mode = #tpu.pipeline_mode<synchronous>, transform_indices = @transform_2, window_bounds = array<i64: 1, 128>}, {pipeline_mode = #tpu.pipeline_mode<synchronous>, transform_indices = @transform_3, window_bounds = array<i64: 1, 128>}, {pipeline_mode = #tpu.pipeline_mode<synchronous>, transform_indices = @transform_4, window_bounds = array<i64: 456, 1>}, {pipeline_mode = #tpu.pipeline_mode<synchronous>, transform_indices = @transform_5, window_bounds = array<i64: 384, 1>}, {transform_indices = @transform_6, window_bounds = array<i64: 1, 456, 128>}, {transform_indices = @transform_7, window_bounds = array<i64: 1, 1, 128>}, {transform_indices = @transform_8, window_bounds = array<i64: 1, 1, 128>}]} {
    %c0 = arith.constant 0 : index
    %c0_0 = arith.constant 0 : index
    %c0_1 = arith.constant 0 : index
    %0 = vector.load %arg1[%c0, %c0_0, %c0_1] : memref<1x456x128xf32, #tpu.memory_space<vmem>>, vector<1x456x128xf32>
    %1 = vector.shape_cast %0 : vector<1x456x128xf32> to vector<456x128xf32>
    %c0_2 = arith.constant 0 : index
    %c0_3 = arith.constant 0 : index
    %2 = vector.load %arg3[%c0_2, %c0_3] : memref<1x128xf32, #tpu.memory_space<vmem>>, vector<1x128xf32>
    %3 = vector.broadcast %2 : vector<1x128xf32> to vector<456x128xf32>
    %4 = arith.mulf %1, %3 : vector<456x128xf32>
    %c0_4 = arith.constant 0 : index
    %c0_5 = arith.constant 0 : index
    %5 = vector.load %arg4[%c0_4, %c0_5] : memref<1x128xf32, #tpu.memory_space<vmem>>, vector<1x128xf32>
    %6 = vector.broadcast %5 : vector<1x128xf32> to vector<456x128xf32>
    %7 = arith.addf %4, %6 : vector<456x128xf32>
    %cst = arith.constant 0.000000e+00 : f32
    %8 = vector.broadcast %cst : f32 to vector<456x128xf32>
    %9 = arith.maximumf %7, %8 : vector<456x128xf32>
    %c0_6 = arith.constant 0 : index
    %c0_7 = arith.constant 0 : index
    %10 = vector.load %arg5[%c0_6, %c0_7] : memref<456x1xf32, #tpu.memory_space<vmem>>, vector<456x1xf32>
    %11 = vector.broadcast %10 : vector<456x1xf32> to vector<456x128xf32>
    %12 = arith.mulf %9, %11 : vector<456x128xf32>
    %c0_8 = arith.constant 0 : index
    %c0_9 = arith.constant 0 : index
    %13 = vector.load %arg10[%c0_8, %c0_9] : memref<456x128xf32, #tpu.memory_space<vmem>>, vector<456x128xf32>
    tpu.vector_store %arg10[%c0_8, %c0_9], %12 {strides = array<i32>} : memref<456x128xf32, #tpu.memory_space<vmem>>, vector<456x128xf32>,
    %c0_10 = arith.constant 0 : index
    %c0_11 = arith.constant 0 : index
    %14 = vector.load %arg10[%c0_10, %c0_11] : memref<456x128xf32, #tpu.memory_space<vmem>>, vector<384x128xf32>
    %c0_12 = arith.constant 0 : index
    %c0_13 = arith.constant 0 : index
    %c0_14 = arith.constant 0 : index
    %15 = vector.load %arg2[%c0_12, %c0_13, %c0_14] : memref<9x128x128xf32, #tpu.memory_space<vmem>>, vector<1x128x128xf32>
    %16 = vector.shape_cast %15 : vector<1x128x128xf32> to vector<128x128xf32>
    %cst_15 = arith.constant dense<0.000000e+00> : vector<384x128xf32>
    %17 = tpu.matmul %14, %16, %cst_15 {dimension_numbers = #tpu.dot_dimension_numbers<[1], [0], [0], [1], [0, 0, 1, 1], [], []>} : vector<384x128xf32>, vector<128x128xf32>, vector<384x128xf32> -> vector<384x128xf32>
    %c1 = arith.constant 1 : index
    %c0_16 = arith.constant 0 : index
    %18 = vector.load %arg10[%c1, %c0_16] : memref<456x128xf32, #tpu.memory_space<vmem>>, vector<384x128xf32>
    %c1_17 = arith.constant 1 : index
    %c0_18 = arith.constant 0 : index
    %c0_19 = arith.constant 0 : index
    %19 = vector.load %arg2[%c1_17, %c0_18, %c0_19] : memref<9x128x128xf32, #tpu.memory_space<vmem>>, vector<1x128x128xf32>
    %20 = vector.shape_cast %19 : vector<1x128x128xf32> to vector<128x128xf32>
    %cst_20 = arith.constant dense<0.000000e+00> : vector<384x128xf32>
    %21 = tpu.matmul %18, %20, %cst_20 {dimension_numbers = #tpu.dot_dimension_numbers<[1], [0], [0], [1], [0, 0, 1, 1], [], []>} : vector<384x128xf32>, vector<128x128xf32>, vector<384x128xf32> -> vector<384x128xf32>
    %22 = arith.addf %17, %21 : vector<384x128xf32>
    %c2 = arith.constant 2 : index
    %c0_21 = arith.constant 0 : index
    %23 = vector.load %arg10[%c2, %c0_21] : memref<456x128xf32, #tpu.memory_space<vmem>>, vector<384x128xf32>
    %c2_22 = arith.constant 2 : index
    %c0_23 = arith.constant 0 : index
    %c0_24 = arith.constant 0 : index
    %24 = vector.load %arg2[%c2_22, %c0_23, %c0_24] : memref<9x128x128xf32, #tpu.memory_space<vmem>>, vector<1x128x128xf32>
    %25 = vector.shape_cast %24 : vector<1x128x128xf32> to vector<128x128xf32>
    %cst_25 = arith.constant dense<0.000000e+00> : vector<384x128xf32>
    %26 = tpu.matmul %23, %25, %cst_25 {dimension_numbers = #tpu.dot_dimension_numbers<[1], [0], [0], [1], [0, 0, 1, 1], [], []>} : vector<384x128xf32>, vector<128x128xf32>, vector<384x128xf32> -> vector<384x128xf32>
    %27 = arith.addf %22, %26 : vector<384x128xf32>
    %c24 = arith.constant 24 : index
    %c0_26 = arith.constant 0 : index
    %28 = vector.load %arg10[%c24, %c0_26] : memref<456x128xf32, #tpu.memory_space<vmem>>, vector<384x128xf32>
    %c3 = arith.constant 3 : index
    %c0_27 = arith.constant 0 : index
    %c0_28 = arith.constant 0 : index
    %29 = vector.load %arg2[%c3, %c0_27, %c0_28] : memref<9x128x128xf32, #tpu.memory_space<vmem>>, vector<1x128x128xf32>
    %30 = vector.shape_cast %29 : vector<1x128x128xf32> to vector<128x128xf32>
    %cst_29 = arith.constant dense<0.000000e+00> : vector<384x128xf32>
    %31 = tpu.matmul %28, %30, %cst_29 {dimension_numbers = #tpu.dot_dimension_numbers<[1], [0], [0], [1], [0, 0, 1, 1], [], []>} : vector<384x128xf32>, vector<128x128xf32>, vector<384x128xf32> -> vector<384x128xf32>
    %32 = arith.addf %27, %31 : vector<384x128xf32>
    %c25 = arith.constant 25 : index
    %c0_30 = arith.constant 0 : index
    %33 = vector.load %arg10[%c25, %c0_30] : memref<456x128xf32, #tpu.memory_space<vmem>>, vector<384x128xf32>
    %c4 = arith.constant 4 : index
    %c0_31 = arith.constant 0 : index
    %c0_32 = arith.constant 0 : index
    %34 = vector.load %arg2[%c4, %c0_31, %c0_32] : memref<9x128x128xf32, #tpu.memory_space<vmem>>, vector<1x128x128xf32>
    %35 = vector.shape_cast %34 : vector<1x128x128xf32> to vector<128x128xf32>
    %cst_33 = arith.constant dense<0.000000e+00> : vector<384x128xf32>
    %36 = tpu.matmul %33, %35, %cst_33 {dimension_numbers = #tpu.dot_dimension_numbers<[1], [0], [0], [1], [0, 0, 1, 1], [], []>} : vector<384x128xf32>, vector<128x128xf32>, vector<384x128xf32> -> vector<384x128xf32>
    %37 = arith.addf %32, %36 : vector<384x128xf32>
    %c26 = arith.constant 26 : index
    %c0_34 = arith.constant 0 : index
    %38 = vector.load %arg10[%c26, %c0_34] : memref<456x128xf32, #tpu.memory_space<vmem>>, vector<384x128xf32>
    %c5 = arith.constant 5 : index
    %c0_35 = arith.constant 0 : index
    %c0_36 = arith.constant 0 : index
    %39 = vector.load %arg2[%c5, %c0_35, %c0_36] : memref<9x128x128xf32, #tpu.memory_space<vmem>>, vector<1x128x128xf32>
    %40 = vector.shape_cast %39 : vector<1x128x128xf32> to vector<128x128xf32>
    %cst_37 = arith.constant dense<0.000000e+00> : vector<384x128xf32>
    %41 = tpu.matmul %38, %40, %cst_37 {dimension_numbers = #tpu.dot_dimension_numbers<[1], [0], [0], [1], [0, 0, 1, 1], [], []>} : vector<384x128xf32>, vector<128x128xf32>, vector<384x128xf32> -> vector<384x128xf32>
    %42 = arith.addf %37, %41 : vector<384x128xf32>
    %c48 = arith.constant 48 : index
    %c0_38 = arith.constant 0 : index
    %43 = vector.load %arg10[%c48, %c0_38] : memref<456x128xf32, #tpu.memory_space<vmem>>, vector<384x128xf32>
    %c6 = arith.constant 6 : index
    %c0_39 = arith.constant 0 : index
    %c0_40 = arith.constant 0 : index
    %44 = vector.load %arg2[%c6, %c0_39, %c0_40] : memref<9x128x128xf32, #tpu.memory_space<vmem>>, vector<1x128x128xf32>
    %45 = vector.shape_cast %44 : vector<1x128x128xf32> to vector<128x128xf32>
    %cst_41 = arith.constant dense<0.000000e+00> : vector<384x128xf32>
    %46 = tpu.matmul %43, %45, %cst_41 {dimension_numbers = #tpu.dot_dimension_numbers<[1], [0], [0], [1], [0, 0, 1, 1], [], []>} : vector<384x128xf32>, vector<128x128xf32>, vector<384x128xf32> -> vector<384x128xf32>
    %47 = arith.addf %42, %46 : vector<384x128xf32>
    %c49 = arith.constant 49 : index
    %c0_42 = arith.constant 0 : index
    %48 = vector.load %arg10[%c49, %c0_42] : memref<456x128xf32, #tpu.memory_space<vmem>>, vector<384x128xf32>
    %c7 = arith.constant 7 : index
    %c0_43 = arith.constant 0 : index
    %c0_44 = arith.constant 0 : index
    %49 = vector.load %arg2[%c7, %c0_43, %c0_44] : memref<9x128x128xf32, #tpu.memory_space<vmem>>, vector<1x128x128xf32>
    %50 = vector.shape_cast %49 : vector<1x128x128xf32> to vector<128x128xf32>
    %cst_45 = arith.constant dense<0.000000e+00> : vector<384x128xf32>
    %51 = tpu.matmul %48, %50, %cst_45 {dimension_numbers = #tpu.dot_dimension_numbers<[1], [0], [0], [1], [0, 0, 1, 1], [], []>} : vector<384x128xf32>, vector<128x128xf32>, vector<384x128xf32> -> vector<384x128xf32>
    %52 = arith.addf %47, %51 : vector<384x128xf32>
    %c50 = arith.constant 50 : index
    %c0_46 = arith.constant 0 : index
    %53 = vector.load %arg10[%c50, %c0_46] : memref<456x128xf32, #tpu.memory_space<vmem>>, vector<384x128xf32>
    %c8 = arith.constant 8 : index
    %c0_47 = arith.constant 0 : index
    %c0_48 = arith.constant 0 : index
    %54 = vector.load %arg2[%c8, %c0_47, %c0_48] : memref<9x128x128xf32, #tpu.memory_space<vmem>>, vector<1x128x128xf32>
    %55 = vector.shape_cast %54 : vector<1x128x128xf32> to vector<128x128xf32>
    %cst_49 = arith.constant dense<0.000000e+00> : vector<384x128xf32>
    %56 = tpu.matmul %53, %55, %cst_49 {dimension_numbers = #tpu.dot_dimension_numbers<[1], [0], [0], [1], [0, 0, 1, 1], [], []>} : vector<384x128xf32>, vector<128x128xf32>, vector<384x128xf32> -> vector<384x128xf32>
    %57 = arith.addf %52, %56 : vector<384x128xf32>
    %cst_50 = arith.constant 0.000000e+00 : f32
    %58 = vector.broadcast %cst_50 : f32 to vector<24x128xf32>
    %c0_51 = arith.constant 0 : index
    %c0_52 = arith.constant 0 : index
    %c0_53 = arith.constant 0 : index
    %59 = vector.load %arg7[%c0_51, %c0_52, %c0_53] : memref<1x456x128xf32, #tpu.memory_space<vmem>>, vector<1x24x128xf32>
    %60 = vector.shape_cast %59 : vector<1x24x128xf32> to vector<24x128xf32>
    %61 = vector.shape_cast %58 : vector<24x128xf32> to vector<1x24x128xf32>
    tpu.vector_store %arg7[%c0_51, %c0_52, %c0_53], %61 {strides = array<i32>} : memref<1x456x128xf32, #tpu.memory_space<vmem>>, vector<1x24x128xf32>,
    %c0_54 = arith.constant 0 : index
    %c24_55 = arith.constant 24 : index
    %c0_56 = arith.constant 0 : index
    %62 = vector.load %arg7[%c0_54, %c24_55, %c0_56] : memref<1x456x128xf32, #tpu.memory_space<vmem>>, vector<1x384x128xf32>
    %63 = vector.shape_cast %62 : vector<1x384x128xf32> to vector<384x128xf32>
    %64 = vector.shape_cast %57 : vector<384x128xf32> to vector<1x384x128xf32>
    tpu.vector_store %arg7[%c0_54, %c24_55, %c0_56], %64 {strides = array<i32>} : memref<1x456x128xf32, #tpu.memory_space<vmem>>, vector<1x384x128xf32>,
    %cst_57 = arith.constant 0.000000e+00 : f32
    %65 = vector.broadcast %cst_57 : f32 to vector<48x128xf32>
    %c0_58 = arith.constant 0 : index
    %c408 = arith.constant 408 : index
    %c0_59 = arith.constant 0 : index
    %66 = vector.load %arg7[%c0_58, %c408, %c0_59] : memref<1x456x128xf32, #tpu.memory_space<vmem>>, vector<1x48x128xf32>
    %67 = vector.shape_cast %66 : vector<1x48x128xf32> to vector<48x128xf32>
    %68 = vector.shape_cast %65 : vector<48x128xf32> to vector<1x48x128xf32>
    tpu.vector_store %arg7[%c0_58, %c408, %c0_59], %68 {strides = array<i32>} : memref<1x456x128xf32, #tpu.memory_space<vmem>>, vector<1x48x128xf32>,
    %c0_60 = arith.constant 0 : index
    %c0_61 = arith.constant 0 : index
    %69 = vector.load %arg6[%c0_60, %c0_61] : memref<384x1xf32, #tpu.memory_space<vmem>>, vector<384x1xf32>
    %70 = vector.broadcast %69 : vector<384x1xf32> to vector<384x128xf32>
    %71 = arith.mulf %57, %70 : vector<384x128xf32>
    %cst_62 = arith.constant dense<0.000000e+00> : vector<128xf32>
    %72 = vector.multi_reduction <add>, %71, %cst_62 [0] : vector<384x128xf32> to vector<128xf32>
    %73 = vector.shape_cast %72 : vector<128xf32> to vector<1x128xf32>
    %c0_63 = arith.constant 0 : index
    %c0_64 = arith.constant 0 : index
    %c0_65 = arith.constant 0 : index
    %74 = vector.load %arg8[%c0_63, %c0_64, %c0_65] : memref<1x1x128xf32, #tpu.memory_space<vmem>>, vector<1x1x128xf32>
    %75 = vector.shape_cast %74 : vector<1x1x128xf32> to vector<1x128xf32>
    %76 = vector.shape_cast %73 : vector<1x128xf32> to vector<1x1x128xf32>
    tpu.vector_store %arg8[%c0_63, %c0_64, %c0_65], %76 {strides = array<i32>} : memref<1x1x128xf32, #tpu.memory_space<vmem>>, vector<1x1x128xf32>,
    %77 = arith.mulf %71, %57 : vector<384x128xf32>
    %cst_66 = arith.constant dense<0.000000e+00> : vector<128xf32>
    %78 = vector.multi_reduction <add>, %77, %cst_66 [0] : vector<384x128xf32> to vector<128xf32>
    %79 = vector.shape_cast %78 : vector<128xf32> to vector<1x128xf32>
    %c0_67 = arith.constant 0 : index
    %c0_68 = arith.constant 0 : index
    %c0_69 = arith.constant 0 : index
    %80 = vector.load %arg9[%c0_67, %c0_68, %c0_69] : memref<1x1x128xf32, #tpu.memory_space<vmem>>, vector<1x1x128xf32>
    %81 = vector.shape_cast %80 : vector<1x1x128xf32> to vector<1x128xf32>
    %82 = vector.shape_cast %79 : vector<1x128xf32> to vector<1x1x128xf32>
    tpu.vector_store %arg9[%c0_67, %c0_68, %c0_69], %82 {strides = array<i32>} : memref<1x1x128xf32, #tpu.memory_space<vmem>>, vector<1x1x128xf32>,
    return
  }
  func.func @transform_0(%arg0: i32) -> (i32, i32, i32) {
    %c0_i32 = arith.constant 0 : i32
    %c0_i32_0 = arith.constant 0 : i32
    %c0_i32_1 = arith.constant 0 : i32
    return %arg0, %c0_i32, %c0_i32_0 : i32, i32, i32
  }
  func.func @transform_1(%arg0: i32) -> (i32, i32, i32) {
    %c0_i32 = arith.constant 0 : i32
    %c0_i32_0 = arith.constant 0 : i32
    %c0_i32_1 = arith.constant 0 : i32
    %c0_i32_2 = arith.constant 0 : i32
    return %c0_i32, %c0_i32_0, %c0_i32_1 : i32, i32, i32
  }
  func.func @transform_2(%arg0: i32) -> (i32, i32) {
    %c0_i32 = arith.constant 0 : i32
    %c0_i32_0 = arith.constant 0 : i32
    %c0_i32_1 = arith.constant 0 : i32
    return %c0_i32, %c0_i32_0 : i32, i32
  }
  func.func @transform_3(%arg0: i32) -> (i32, i32) {
    %c0_i32 = arith.constant 0 : i32
    %c0_i32_0 = arith.constant 0 : i32
    %c0_i32_1 = arith.constant 0 : i32
    return %c0_i32, %c0_i32_0 : i32, i32
  }
  func.func @transform_4(%arg0: i32) -> (i32, i32) {
    %c0_i32 = arith.constant 0 : i32
    %c0_i32_0 = arith.constant 0 : i32
    %c0_i32_1 = arith.constant 0 : i32
    return %c0_i32, %c0_i32_0 : i32, i32
  }
  func.func @transform_5(%arg0: i32) -> (i32, i32) {
    %c0_i32 = arith.constant 0 : i32
    %c0_i32_0 = arith.constant 0 : i32
    %c0_i32_1 = arith.constant 0 : i32
    return %c0_i32, %c0_i32_0 : i32, i32
  }
  func.func @transform_6(%arg0: i32) -> (i32, i32, i32) {
    %c0_i32 = arith.constant 0 : i32
    %c0_i32_0 = arith.constant 0 : i32
    %c0_i32_1 = arith.constant 0 : i32
    return %arg0, %c0_i32, %c0_i32_0 : i32, i32, i32
  }
  func.func @transform_7(%arg0: i32) -> (i32, i32, i32) {
    %c0_i32 = arith.constant 0 : i32
    %c0_i32_0 = arith.constant 0 : i32
    %c0_i32_1 = arith.constant 0 : i32
    return %arg0, %c0_i32, %c0_i32_0 : i32, i32, i32
  }
  func.func @transform_8(%arg0: i32) -> (i32, i32, i32) {
    %c0_i32 = arith.constant 0 : i32
    %c0_i32_0 = arith.constant 0 : i32
    %c0_i32_1 = arith.constant 0 : i32
    return %arg0, %c0_i32, %c0_i32_0 : i32, i32, i32
  }
}

module attributes {stable_mosaic.version = 11 : i64} {
  func.func @_bn_relu_mask_kernel(%arg0: i32, %arg1: memref<1x456x128xf32, #tpu.memory_space<vmem>>, %arg2: memref<1x128xf32, #tpu.memory_space<vmem>>, %arg3: memref<1x128xf32, #tpu.memory_space<vmem>>, %arg4: memref<456x1xf32, #tpu.memory_space<vmem>>, %arg5: memref<1x456x128xf32, #tpu.memory_space<vmem>>) attributes {dimension_semantics = [#tpu.dimension_semantics<parallel>], iteration_bounds = array<i64: 2>, scalar_prefetch = 0 : i64, scratch_operands = 0 : i64, tpu.core_type = #tpu.core_type<tc>, window_params = [{transform_indices = @transform_0, window_bounds = array<i64: 1, 456, 128>}, {pipeline_mode = #tpu.pipeline_mode<synchronous>, transform_indices = @transform_1, window_bounds = array<i64: 1, 128>}, {pipeline_mode = #tpu.pipeline_mode<synchronous>, transform_indices = @transform_2, window_bounds = array<i64: 1, 128>}, {pipeline_mode = #tpu.pipeline_mode<synchronous>, transform_indices = @transform_3, window_bounds = array<i64: 456, 1>}, {transform_indices = @transform_4, window_bounds = array<i64: 1, 456, 128>}]} {
    %c0 = arith.constant 0 : index
    %c0_0 = arith.constant 0 : index
    %c0_1 = arith.constant 0 : index
    %0 = vector.load %arg1[%c0, %c0_0, %c0_1] : memref<1x456x128xf32, #tpu.memory_space<vmem>>, vector<1x456x128xf32>
    %1 = vector.shape_cast %0 : vector<1x456x128xf32> to vector<456x128xf32>
    %c0_2 = arith.constant 0 : index
    %c0_3 = arith.constant 0 : index
    %2 = vector.load %arg2[%c0_2, %c0_3] : memref<1x128xf32, #tpu.memory_space<vmem>>, vector<1x128xf32>
    %3 = vector.broadcast %2 : vector<1x128xf32> to vector<456x128xf32>
    %4 = arith.mulf %1, %3 : vector<456x128xf32>
    %c0_4 = arith.constant 0 : index
    %c0_5 = arith.constant 0 : index
    %5 = vector.load %arg3[%c0_4, %c0_5] : memref<1x128xf32, #tpu.memory_space<vmem>>, vector<1x128xf32>
    %6 = vector.broadcast %5 : vector<1x128xf32> to vector<456x128xf32>
    %7 = arith.addf %4, %6 : vector<456x128xf32>
    %cst = arith.constant 0.000000e+00 : f32
    %8 = vector.broadcast %cst : f32 to vector<456x128xf32>
    %9 = arith.maximumf %7, %8 : vector<456x128xf32>
    %c0_6 = arith.constant 0 : index
    %c0_7 = arith.constant 0 : index
    %10 = vector.load %arg4[%c0_6, %c0_7] : memref<456x1xf32, #tpu.memory_space<vmem>>, vector<456x1xf32>
    %11 = vector.broadcast %10 : vector<456x1xf32> to vector<456x128xf32>
    %12 = arith.mulf %9, %11 : vector<456x128xf32>
    %c0_8 = arith.constant 0 : index
    %c0_9 = arith.constant 0 : index
    %c0_10 = arith.constant 0 : index
    %13 = vector.load %arg5[%c0_8, %c0_9, %c0_10] : memref<1x456x128xf32, #tpu.memory_space<vmem>>, vector<1x456x128xf32>
    %14 = vector.shape_cast %13 : vector<1x456x128xf32> to vector<456x128xf32>
    %15 = vector.shape_cast %12 : vector<456x128xf32> to vector<1x456x128xf32>
    tpu.vector_store %arg5[%c0_8, %c0_9, %c0_10], %15 {strides = array<i32>} : memref<1x456x128xf32, #tpu.memory_space<vmem>>, vector<1x456x128xf32>,
    return
  }
  func.func @transform_0(%arg0: i32) -> (i32, i32, i32) {
    %c0_i32 = arith.constant 0 : i32
    %c0_i32_0 = arith.constant 0 : i32
    %c0_i32_1 = arith.constant 0 : i32
    return %arg0, %c0_i32, %c0_i32_0 : i32, i32, i32
  }
  func.func @transform_1(%arg0: i32) -> (i32, i32) {
    %c0_i32 = arith.constant 0 : i32
    %c0_i32_0 = arith.constant 0 : i32
    %c0_i32_1 = arith.constant 0 : i32
    return %c0_i32, %c0_i32_0 : i32, i32
  }
  func.func @transform_2(%arg0: i32) -> (i32, i32) {
    %c0_i32 = arith.constant 0 : i32
    %c0_i32_0 = arith.constant 0 : i32
    %c0_i32_1 = arith.constant 0 : i32
    return %c0_i32, %c0_i32_0 : i32, i32
  }
  func.func @transform_3(%arg0: i32) -> (i32, i32) {
    %c0_i32 = arith.constant 0 : i32
    %c0_i32_0 = arith.constant 0 : i32
    %c0_i32_1 = arith.constant 0 : i32
    return %c0_i32, %c0_i32_0 : i32, i32
  }
  func.func @transform_4(%arg0: i32) -> (i32, i32, i32) {
    %c0_i32 = arith.constant 0 : i32
    %c0_i32_0 = arith.constant 0 : i32
    %c0_i32_1 = arith.constant 0 : i32
    return %arg0, %c0_i32, %c0_i32_0 : i32, i32, i32
  }
}

</mosaic_0001>

<llo_original>
// kernel: block_forward.3
$region0: #{block_forward.3}
  #allocation0 [shape = 'u32[]', space=smem, size = 0x4, offset = 0x4, fixed_abs, tag = 'smem constant byte address 0x4 - core index']
  #allocation1 [shape = 'u32[144,128]{1,0:T(1,128)}', space=vmem, size = 0x12000, scoped, tag = 'internal scratch']
  %s0 = inlined_call_operand.vmem [shape: f32[2,456,16], index: 0, kind: input, shape index: {}]
  %s1 = inlined_call_operand.vmem [shape: f32[3,16,128], index: 1, kind: input, shape index: {}]
  %s2 = inlined_call_operand.vmem [shape: f32[384,1], index: 2, kind: input, shape index: {}]
  %s3 = inlined_call_operand.vmem [shape: f32[2,456,128], index: 3, kind: output, shape index: {0}]
  %s4 = inlined_call_operand.vmem [shape: f32[2,1,128], index: 4, kind: output, shape index: {1}]
  %s5 = inlined_call_operand.vmem [shape: f32[2,1,128], index: 5, kind: output, shape index: {2}]
  %6 = xla_tuple %s3, %s4, %s5
  %s7 = sld [smem:[#allocation0]]
  $region61: #{block_forward.3} parent=0
    _
  %s9 = ssub.s32 1, %s7
  %s10 = scalar_select 0, %s9, %s7
  loop: start=0, step=1, limit=4
  $region2: #{block_forward.3} parent=0 // loop_pre_header
    _
  $region3: #{block_forward.3} parent=0 // loop_header
    %s12 = sphi 0, %s16
    %p13 = scmp.ge.s32.totalorder %s12, 4
    %s22 = sphi 0, %s24
    %s25 = sphi 0, %s22
    %s26 = sphi 0, %s25
    %s42 = sphi 0, %s26
    %s46 = sphi 0, %s46
    %s48 = sphi 0, %s46
    %s49 = sphi 0, %s48
    %s63 = sphi 0, %s49
    %s67 = sphi 0, %s67
    %s69 = sphi 0, %s67
    %s70 = sphi 0, %s69
    %s84 = sphi 0, %s70
    %s90 = sphi 0, %s92
    %s93 = sphi 0, %s90
    %s94 = sphi 0, %s93
    %s110 = sphi 0, %s94
    %s116 = sphi 0, %s118
    %s119 = sphi 0, %s116
    %s120 = sphi 0, %s119
    %s136 = sphi 0, %s120
    %s142 = sphi 0, %s144
    %s145 = sphi 0, %s142
    %s146 = sphi 0, %s145
    %s162 = sphi 0, %s146
  $region4: #{block_forward.3} parent=0 // loop_header_branch
    %15 = sbr.rel (%p13) target = $region8
  $region5: #{block_forward.3} parent=0 // loop_body
    %s17 = ssub.s32 %s12, 1
    %s18 = ssub.s32 %s12, 2
    %s19 = sadd.s32 %s12, 1
    %s20 = ssub.s32 %s12, %s19
    %p21 = scmp.eq.s32.totalorder %s20, 0
    %s23 = sadd.s32 %s22, 1
    %s24 = scalar_select %p21, %s22, %s23
    %p27 = pneg %p21
    %p28 = scmp.eq.s32.totalorder %s12, 1
    %p29 = por %p27, %p28
    %p30 = scmp.ne.s32.totalorder %s22, %s25
    %p31 = scmp.eq.s32.totalorder %s12, 0
    %p32 = por %p30, %p31
    %p33 = scmp.ne.s32.totalorder %s22, %s25
    %p34 = scmp.eq.s32.totalorder %s17, 1
    %p35 = por %p33, %p34
    %p36 = scmp.ne.s32.totalorder %s25, %s26
    %p37 = scmp.eq.s32.totalorder %s17, 0
    %p38 = por %p36, %p37
    %p39 = scmp.ne.s32.totalorder %s25, %s26
    %p40 = scmp.eq.s32.totalorder %s18, 1
    %p41 = por %p39, %p40
    %p43 = scmp.ne.s32.totalorder %s26, %s42
    %p44 = scmp.eq.s32.totalorder %s18, 0
    %p45 = por %p43, %p44
    %s47 = sadd.s32 %s46, 1
    %p50 = scmp.eq.s32.totalorder %s12, 1
    %p51 = scmp.ne.s32.totalorder %s46, %s48
    %p52 = scmp.eq.s32.totalorder %s12, 0
    %p53 = por %p51, %p52
    %p54 = scmp.ne.s32.totalorder %s46, %s48
    %p55 = scmp.eq.s32.totalorder %s17, 1
    %p56 = por %p54, %p55
    %p57 = scmp.ne.s32.totalorder %s48, %s49
    %p58 = scmp.eq.s32.totalorder %s17, 0
    %p59 = por %p57, %p58
    %p60 = scmp.ne.s32.totalorder %s48, %s49
    %p61 = scmp.eq.s32.totalorder %s18, 1
    %p62 = por %p60, %p61
    %p64 = scmp.ne.s32.totalorder %s49, %s63
    %p65 = scmp.eq.s32.totalorder %s18, 0
    %p66 = por %p64, %p65
    %s68 = sadd.s32 %s67, 1
    %p71 = scmp.eq.s32.totalorder %s12, 1
    %p72 = scmp.ne.s32.totalorder %s67, %s69
    %p73 = scmp.eq.s32.totalorder %s12, 0
    %p74 = por %p72, %p73
    %p75 = scmp.ne.s32.totalorder %s67, %s69
    %p76 = scmp.eq.s32.totalorder %s17, 1
    %p77 = por %p75, %p76
    %p78 = scmp.ne.s32.totalorder %s69, %s70
    %p79 = scmp.eq.s32.totalorder %s17, 0
    %p80 = por %p78, %p79
    %p81 = scmp.ne.s32.totalorder %s69, %s70
    %p82 = scmp.eq.s32.totalorder %s18, 1
    %p83 = por %p81, %p82
    %p85 = scmp.ne.s32.totalorder %s70, %s84
    %p86 = scmp.eq.s32.totalorder %s18, 0
    %p87 = por %p85, %p86
    %s88 = ssub.s32 %s12, %s19
    %p89 = scmp.eq.s32.totalorder %s88, 0
    %s91 = sadd.s32 %s90, 1
    %s92 = scalar_select %p89, %s90, %s91
    %p95 = pneg %p89
    %p96 = scmp.eq.s32.totalorder %s12, 1
    %p97 = por %p95, %p96
    %p98 = scmp.ne.s32.totalorder %s90, %s93
    %p99 = scmp.eq.s32.totalorder %s12, 0
    %p100 = por %p98, %p99
    %p101 = scmp.ne.s32.totalorder %s90, %s93
    %p102 = scmp.eq.s32.totalorder %s17, 1
    %p103 = por %p101, %p102
    %p104 = scmp.ne.s32.totalorder %s93, %s94
    %p105 = scmp.eq.s32.totalorder %s17, 0
    %p106 = por %p104, %p105
    %p107 = scmp.ne.s32.totalorder %s93, %s94
    %p108 = scmp.eq.s32.totalorder %s18, 1
    %p109 = por %p107, %p108
    %p111 = scmp.ne.s32.totalorder %s94, %s110
    %p112 = scmp.eq.s32.totalorder %s18, 0
    %p113 = por %p111, %p112
    %s114 = ssub.s32 %s12, %s19
    %p115 = scmp.eq.s32.totalorder %s114, 0
    %s117 = sadd.s32 %s116, 1
    %s118 = scalar_select %p115, %s116, %s117
    %p121 = pneg %p115
    %p122 = scmp.eq.s32.totalorder %s12, 1
    %p123 = por %p121, %p122
    %p124 = scmp.ne.s32.totalorder %s116, %s119
    %p125 = scmp.eq.s32.totalorder %s12, 0
    %p126 = por %p124, %p125
    %p127 = scmp.ne.s32.totalorder %s116, %s119
    %p128 = scmp.eq.s32.totalorder %s17, 1
    %p129 = por %p127, %p128
    %p130 = scmp.ne.s32.totalorder %s119, %s120
    %p131 = scmp.eq.s32.totalorder %s17, 0
    %p132 = por %p130, %p131
    %p133 = scmp.ne.s32.totalorder %s119, %s120
    %p134 = scmp.eq.s32.totalorder %s18, 1
    %p135 = por %p133, %p134
    %p137 = scmp.ne.s32.totalorder %s120, %s136
    %p138 = scmp.eq.s32.totalorder %s18, 0
    %p139 = por %p137, %p138
    %s140 = ssub.s32 %s12, %s19
    %p141 = scmp.eq.s32.totalorder %s140, 0
    %s143 = sadd.s32 %s142, 1
    %s144 = scalar_select %p141, %s142, %s143
    %p147 = pneg %p141
    %p148 = scmp.eq.s32.totalorder %s12, 1
    %p149 = por %p147, %p148
    %p150 = scmp.ne.s32.totalorder %s142, %s145
    %p151 = scmp.eq.s32.totalorder %s12, 0
    %p152 = por %p150, %p151
    %p153 = scmp.ne.s32.totalorder %s142, %s145
    %p154 = scmp.eq.s32.totalorder %s17, 1
    %p155 = por %p153, %p154
    %p156 = scmp.ne.s32.totalorder %s145, %s146
    %p157 = scmp.eq.s32.totalorder %s17, 0
    %p158 = por %p156, %p157
    %p159 = scmp.ne.s32.totalorder %s145, %s146
    %p160 = scmp.eq.s32.totalorder %s18, 1
    %p161 = por %p159, %p160
    %p163 = scmp.ne.s32.totalorder %s146, %s162
    %p164 = scmp.eq.s32.totalorder %s18, 0
    %p165 = por %p163, %p164
    %p166 = scmp.le.s32.totalorder 1, %s12
    %p167 = scmp.lt.s32.totalorder %s12, 3
    %p168 = pnand %p166, %p167
    %p169 = pneg %p168
    // Predicated region
    $region9: #{block_forward.3} parent=5 // pred_check
      _
    $region10: #{block_forward.3} parent=5 // pred_check_branch
      %171 = sbr.rel (%p168) target = $region12
    $region11: #{block_forward.3} parent=5 // pred_region
      %s172 = ssub.s32 %s12, 1
      // Predicated region
      $region13: #{block_forward.3} parent=11 // pred_check
        %p173 = pneg %p59
      $region14: #{block_forward.3} parent=11 // pred_check_branch
        %175 = sbr.rel (%p173) target = $region16
      $region15: #{block_forward.3} parent=11 // pred_region
        _
      $region16: #{block_forward.3} parent=11 // pred_fallthru
        _
      // Predicated region
      $region17: #{block_forward.3} parent=11 // pred_check
        %p176 = pneg %p80
      $region18: #{block_forward.3} parent=11 // pred_check_branch
        %178 = sbr.rel (%p176) target = $region20
      $region19: #{block_forward.3} parent=11 // pred_region
        _
      $region20: #{block_forward.3} parent=11 // pred_fallthru
        _
    $region12: #{block_forward.3} parent=5 // pred_fallthru
      _
    %p179 = scmp.lt.s32.totalorder %s12, 2
    // Predicated region
    $region21: #{block_forward.3} parent=5 // pred_check
      %p180 = pneg %p179
    $region22: #{block_forward.3} parent=5 // pred_check_branch
      %182 = sbr.rel (%p180) target = $region24
    $region23: #{block_forward.3} parent=5 // pred_region
      // Predicated region
      $region25: #{block_forward.3} parent=23 // pred_check
        %p183 = pneg %p32
      $region26: #{block_forward.3} parent=23 // pred_check_branch
        %185 = sbr.rel (%p183) target = $region28
      $region27: #{block_forward.3} parent=23 // pred_region
        %p186 = scmp.lt.s32.totalorder %s12, 1
        %s187 = scalar_select %p186, %s12, 1
        %s188 = smul.addr %s187, 57
        %s189 = smul.addr %s188, 8
        %s190 = scalar_lea.vmem %s0, %s189
      $region28: #{block_forward.3} parent=23 // pred_fallthru
        _
    $region24: #{block_forward.3} parent=5 // pred_fallthru
      _
    %p191 = scmp.le.s32.totalorder 1, %s12
    %p192 = scmp.lt.s32.totalorder %s12, 3
    %p193 = pnand %p191, %p192
    %p194 = pneg %p193
    // Predicated region
    $region29: #{block_forward.3} parent=5 // pred_check
      _
    $region30: #{block_forward.3} parent=5 // pred_check_branch
      %196 = sbr.rel (%p193) target = $region32
    $region31: #{block_forward.3} parent=5 // pred_region
      %s197 = ssub.s32 %s12, 1
      %p198 = scmp.lt.s32.totalorder %s17, 1
      %s199 = scalar_select %p198, %s17, 1
      %s200 = smul.addr %s199, 57
      %s201 = smul.addr %s200, 8
      %s202 = scalar_lea.vmem %s0, %s201
      %p203 = pneg %p38
      %p204 = pneg %p35
      %p205 = pneg %p59
      %p206 = pneg %p56
      %p207 = pneg %p80
      %p208 = pneg %p77
      %p209 = pneg %p106
      %p210 = pneg %p103
      %p211 = scmp.lt.s32.totalorder %s17, 1
      %s212 = scalar_select %p211, %s17, 1
      %s213 = smul.addr %s212, 57
      %s214 = smul.addr %s213, 8
      %s215 = scalar_lea.vmem %s3, %s214
      %p216 = pneg %p132
      %p217 = pneg %p129
      %p218 = scmp.lt.s32.totalorder %s17, 1
      %s219 = scalar_select %p218, %s17, 1
      %s220 = scalar_lea.vmem %s4, %s219
      %p221 = pneg %p158
      %p222 = pneg %p155
      %p223 = scmp.lt.s32.totalorder %s17, 1
      %s224 = scalar_select %p223, %s17, 1
      %s225 = scalar_lea.vmem %s5, %s224
      %p226 = scmp.lt.s32.totalorder %s17, 1
      %s227 = scalar_select %p226, %s17, 1
      %s228 = smul.addr %s227, 57
      %s229 = smul.addr %s228, 8
      %s230 = scalar_lea.vmem %s0, %s229
      %p231 = scmp.lt.s32.totalorder %s17, 1
      %s232 = scalar_select %p231, %s17, 1
      %s233 = smul.addr %s232, 57
      %s234 = smul.addr %s233, 8
      %s235 = scalar_lea.vmem %s3, %s234
      %p236 = scmp.lt.s32.totalorder %s17, 1
      %s237 = scalar_select %p236, %s17, 1
      %s238 = scalar_lea.vmem %s4, %s237
      %p239 = scmp.lt.s32.totalorder %s17, 1
      %s240 = scalar_select %p239, %s17, 1
      %s241 = scalar_lea.vmem %s5, %s240
      %v242 = vld [vmem:[%s230] sm:$0xff]
      %v243 = vld [vmem:[%s230 + $0x8] sm:$0xff]
      %v244 = vld [vmem:[%s230 + $0x10] sm:$0xff]
      %v245 = vld [vmem:[%s230 + $0x18] sm:$0xff]
      %v246 = vld [vmem:[%s230 + $0x20] sm:$0xff]
      %v247 = vld [vmem:[%s230 + $0x28] sm:$0xff]
      %v248 = vld [vmem:[%s230 + $0x30] sm:$0xff]
      %v249 = vld [vmem:[%s230 + $0x38] sm:$0xff]
      %v250 = vld [vmem:[%s230 + $0x40] sm:$0xff]
      %v251 = vld [vmem:[%s230 + $0x48] sm:$0xff]
      %v252 = vld [vmem:[%s230 + $0x50] sm:$0xff]
      %v253 = vld [vmem:[%s230 + $0x58] sm:$0xff]
      %v254 = vld [vmem:[%s230 + $0x60] sm:$0xff]
      %v255 = vld [vmem:[%s230 + $0x68] sm:$0xff]
      %v256 = vld [vmem:[%s230 + $0x70] sm:$0xff]
      %v257 = vld [vmem:[%s230 + $0x78] sm:$0xff]
      %v258 = vld [vmem:[%s230 + $0x80] sm:$0xff]
      %v259 = vld [vmem:[%s230 + $0x88] sm:$0xff]
      %v260 = vld [vmem:[%s230 + $0x90] sm:$0xff]
      %v261 = vld [vmem:[%s230 + $0x98] sm:$0xff]
      %v262 = vld [vmem:[%s230 + $0xa0] sm:$0xff]
      %v263 = vld [vmem:[%s230 + $0xa8] sm:$0xff]
      %v264 = vld [vmem:[%s230 + $0xb0] sm:$0xff]
      %v265 = vld [vmem:[%s230 + $0xb8] sm:$0xff]
      %v266 = vld [vmem:[%s230 + $0xc0] sm:$0xff]
      %v267 = vld [vmem:[%s230 + $0xc8] sm:$0xff]
      %v268 = vld [vmem:[%s230 + $0xd0] sm:$0xff]
      %v269 = vld [vmem:[%s230 + $0xd8] sm:$0xff]
      %v270 = vld [vmem:[%s230 + $0xe0] sm:$0xff]
      %v271 = vld [vmem:[%s230 + $0xe8] sm:$0xff]
      %v272 = vld [vmem:[%s230 + $0xf0] sm:$0xff]
      %v273 = vld [vmem:[%s230 + $0xf8] sm:$0xff]
      %v274 = vld [vmem:[%s230 + $0x100] sm:$0xff]
      %v275 = vld [vmem:[%s230 + $0x108] sm:$0xff]
      %v276 = vld [vmem:[%s230 + $0x110] sm:$0xff]
      %v277 = vld [vmem:[%s230 + $0x118] sm:$0xff]
      %v278 = vld [vmem:[%s230 + $0x120] sm:$0xff]
      %v279 = vld [vmem:[%s230 + $0x128] sm:$0xff]
      %v280 = vld [vmem:[%s230 + $0x130] sm:$0xff]
      %v281 = vld [vmem:[%s230 + $0x138] sm:$0xff]
      %v282 = vld [vmem:[%s230 + $0x140] sm:$0xff]
      %v283 = vld [vmem:[%s230 + $0x148] sm:$0xff]
      %v284 = vld [vmem:[%s230 + $0x150] sm:$0xff]
      %v285 = vld [vmem:[%s230 + $0x158] sm:$0xff]
      %v286 = vld [vmem:[%s230 + $0x160] sm:$0xff]
      %v287 = vld [vmem:[%s230 + $0x168] sm:$0xff]
      %v288 = vld [vmem:[%s230 + $0x170] sm:$0xff]
      %v289 = vld [vmem:[%s230 + $0x178] sm:$0xff]
      %v290 = vld [vmem:[%s1] sm:$0xff]
      %v291 = vld [vmem:[%s1 + $0x8] sm:$0xff]
      %v292 = vld [vmem:[%s230 + $0x180] sm:$0xff]
      %v293 = vld [vmem:[%s230 + $0x188] sm:$0xff]
      %v294 = vld [vmem:[%s230 + $0x190] sm:$0xff]
      %s295 = scalar_lea.vmem %s1, 16
      %v296 = vld [vmem:[%s295] sm:$0xff]
      %v297 = vld [vmem:[%s295 + $0x8] sm:$0xff]
      %vm298 = vcmask 130048
      %v300 = vsel %vm298, %v245, 0
      %v303 = vsel %vm298, %v246, 0
      %v306 = vsel %vm298, %v247, 0
      %v309 = vsel %vm298, %v248, 0
      %v312 = vsel %vm298, %v249, 0
      %v315 = vsel %vm298, %v250, 0
      %v318 = vsel %vm298, %v251, 0
      %v321 = vsel %vm298, %v252, 0
      %v324 = vsel %vm298, %v253, 0
      %v327 = vsel %vm298, %v254, 0
      %v330 = vsel %vm298, %v255, 0
      %v333 = vsel %vm298, %v256, 0
      %v336 = vsel %vm298, %v257, 0
      %v339 = vsel %vm298, %v258, 0
      %v342 = vsel %vm298, %v259, 0
      %v345 = vsel %vm298, %v260, 0
      %v348 = vsel %vm298, %v261, 0
      %v351 = vsel %vm298, %v262, 0
      %v354 = vsel %vm298, %v263, 0
      %v357 = vsel %vm298, %v264, 0
      %v360 = vsel %vm298, %v265, 0
      %v363 = vsel %vm298, %v266, 0
      %v366 = vsel %vm298, %v267, 0
      %v369 = vsel %vm298, %v268, 0
      %v372 = vsel %vm298, %v269, 0
      %v375 = vsel %vm298, %v270, 0
      %v378 = vsel %vm298, %v271, 0
      %v381 = vsel %vm298, %v272, 0
      %v384 = vsel %vm298, %v273, 0
      %v387 = vsel %vm298, %v274, 0
      %v390 = vsel %vm298, %v275, 0
      %v393 = vsel %vm298, %v276, 0
      %v396 = vsel %vm298, %v277, 0
      %v399 = vsel %vm298, %v278, 0
      %v402 = vsel %vm298, %v279, 0
      %v405 = vsel %vm298, %v280, 0
      %v408 = vsel %vm298, %v281, 0
      %v411 = vsel %vm298, %v282, 0
      %v414 = vsel %vm298, %v283, 0
      %v417 = vsel %vm298, %v284, 0
      %v420 = vsel %vm298, %v285, 0
      %v423 = vsel %vm298, %v286, 0
      %v426 = vsel %vm298, %v287, 0
      %v429 = vsel %vm298, %v288, 0
      %v432 = vsel %vm298, %v289, 0
      %v435 = vsel %vm298, %v292, 0
      %v438 = vsel %vm298, %v293, 0
      %v441 = vsel %vm298, %v294, 0
      %443 = vmatprep.subr.mxu0 0.0
      %444 = vmatpush1.msra.mxu0 0.0
      %445 = vmatprep.subr.mxu0 0.0
      %446 = vmatpush1.msra.mxu0 0.0
      %447 = vmatprep.subr.mxu0 0.0
      %448 = vmatpush1.msra.mxu0 0.0
      %449 = vmatprep.subr.mxu0 0.0
      %450 = vmatpush1.msra.mxu0 0.0
      %451 = vmatprep.subr.mxu0 0.0
      %452 = vmatpush1.msra.mxu0 0.0
      %453 = vmatprep.subr.mxu0 0.0
      %454 = vmatpush1.msra.mxu0 0.0
      %455 = vmatprep.subr.mxu0 0.0
      %456 = vmatpush1.msra.mxu0 0.0
      %457 = vmatprep.subr.mxu0 0.0
      %458 = vmatpush1.msra.mxu0 0.0
      %459 = vmatprep.subr.mxu0 0.0
      %460 = vmatpush1.msra.mxu0 0.0
      %461 = vmatprep.subr.mxu0 0.0
      %462 = vmatpush1.msra.mxu0 0.0
      %463 = vmatprep.subr.mxu0 0.0
      %464 = vmatpush1.msra.mxu0 0.0
      %465 = vmatprep.subr.mxu0 0.0
      %466 = vmatpush1.msra.mxu0 0.0
      %467 = vmatprep.subr.mxu0 0.0
      %468 = vmatpush1.msra.mxu0 0.0
      %469 = vmatprep.subr.mxu0 0.0
      %470 = vmatpush1.msra.mxu0 0.0
      %471 = vmatprep.subr.mxu0 0.0
      %472 = vmatpush1.msra.mxu0 %v297
      %473 = vmatprep.subr.mxu0 0.0
      %474 = vmatpush1.msra.mxu0 %v296
      %475 = vmatprep.subr.mxu0 0.0
      %476 = vmatpush2.msra.mxu0 0.0
      %477 = vmatprep.subr.mxu0 0.0
      %478 = vmatpush2.msra.mxu0 0.0
      %479 = vmatprep.subr.mxu0 0.0
      %480 = vmatpush2.msra.mxu0 0.0
      %481 = vmatprep.subr.mxu0 0.0
      %482 = vmatpush2.msra.mxu0 0.0
      %483 = vmatprep.subr.mxu0 0.0
      %484 = vmatpush2.msra.mxu0 0.0
      %485 = vmatprep.subr.mxu0 0.0
      %486 = vmatpush2.msra.mxu0 0.0
      %487 = vmatprep.subr.mxu0 0.0
      %488 = vmatpush2.msra.mxu0 0.0
      %489 = vmatprep.subr.mxu0 0.0
      %490 = vmatpush2.msra.mxu0 0.0
      %491 = vmatprep.subr.mxu0 0.0
      %492 = vmatpush2.msra.mxu0 0.0
      %493 = vmatprep.subr.mxu0 0.0
      %494 = vmatpush2.msra.mxu0 0.0
      %495 = vmatprep.subr.mxu0 0.0
      %496 = vmatpush2.msra.mxu0 0.0
      %497 = vmatprep.subr.mxu0 0.0
      %498 = vmatpush2.msra.mxu0 0.0
      %499 = vmatprep.subr.mxu0 0.0
      %500 = vmatpush2.msra.mxu0 0.0
      %501 = vmatprep.subr.mxu0 0.0
      %502 = vmatpush2.msra.mxu0 0.0
      %503 = vmatprep.subr.mxu0 0.0
      %504 = vmatpush2.msra.mxu0 0.0
      %505 = vmatprep.subr.mxu0 0.0
      %506 = vmatpush2.msra.mxu0 0.0
      %507 = vmatprep.mubr.f32.mxu0 0.0
      %508 = vmatmul.mubr.f32.gmra.mxu0 %v300
      %v509 = vpop.f32.mrf.mxu0
      %v510 = vadd.f32 0.0, %v509
      %v511 = vpop.f32.mrf.mxu0
      %512 = vmatprep.mubr.f32.mxu0 0.0
      %513 = vmatmul.mubr.f32.gmra.mxu0 %v303
      %v514 = vpop.f32.mrf.mxu0
      %v515 = vadd.f32 0.0, %v514
      %v516 = vpop.f32.mrf.mxu0
      %517 = vmatprep.mubr.f32.mxu0 0.0
      %518 = vmatmul.mubr.f32.gmra.mxu0 %v306
      %v519 = vpop.f32.mrf.mxu0
      %v520 = vadd.f32 0.0, %v519
      %v521 = vpop.f32.mrf.mxu0
      %522 = vmatprep.mubr.f32.mxu0 0.0
      %523 = vmatmul.mubr.f32.gmra.mxu0 %v309
      %v524 = vpop.f32.mrf.mxu0
      %v525 = vadd.f32 0.0, %v524
      %v526 = vpop.f32.mrf.mxu0
      %527 = vmatprep.mubr.f32.mxu0 0.0
      %528 = vmatmul.mubr.f32.gmra.mxu0 %v312
      %v529 = vpop.f32.mrf.mxu0
      %v530 = vadd.f32 0.0, %v529
      %v531 = vpop.f32.mrf.mxu0
      %532 = vmatprep.mubr.f32.mxu0 0.0
      %533 = vmatmul.mubr.f32.gmra.mxu0 %v315
      %v534 = vpop.f32.mrf.mxu0
      %v535 = vadd.f32 0.0, %v534
      %v536 = vpop.f32.mrf.mxu0
      %537 = vmatprep.mubr.f32.mxu0 0.0
      %538 = vmatmul.mubr.f32.gmra.mxu0 %v318
      %v539 = vpop.f32.mrf.mxu0
      %v540 = vadd.f32 0.0, %v539
      %v541 = vpop.f32.mrf.mxu0
      %542 = vmatprep.mubr.f32.mxu0 0.0
      %543 = vmatmul.mubr.f32.gmra.mxu0 %v321
      %v544 = vpop.f32.mrf.mxu0
      %v545 = vadd.f32 0.0, %v544
      %v546 = vpop.f32.mrf.mxu0
      %547 = vmatprep.mubr.f32.mxu0 0.0
      %548 = vmatmul.mubr.f32.gmra.mxu0 %v324
      %v549 = vpop.f32.mrf.mxu0
      %v550 = vadd.f32 0.0, %v549
      %v551 = vpop.f32.mrf.mxu0
      %552 = vmatprep.mubr.f32.mxu0 0.0
      %553 = vmatmul.mubr.f32.gmra.mxu0 %v327
      %v554 = vpop.f32.mrf.mxu0
      %v555 = vadd.f32 0.0, %v554
      %v556 = vpop.f32.mrf.mxu0
      %557 = vmatprep.mubr.f32.mxu0 0.0
      %558 = vmatmul.mubr.f32.gmra.mxu0 %v330
      %v559 = vpop.f32.mrf.mxu0
      %v560 = vadd.f32 0.0, %v559
      %v561 = vpop.f32.mrf.mxu0
      %562 = vmatprep.mubr.f32.mxu0 0.0
      %563 = vmatmul.mubr.f32.gmra.mxu0 %v333
      %v564 = vpop.f32.mrf.mxu0
      %v565 = vadd.f32 0.0, %v564
      %v566 = vpop.f32.mrf.mxu0
      %567 = vmatprep.mubr.f32.mxu0 0.0
      %568 = vmatmul.mubr.f32.gmra.mxu0 %v336
      %v569 = vpop.f32.mrf.mxu0
      %v570 = vadd.f32 0.0, %v569
      %v571 = vpop.f32.mrf.mxu0
      %572 = vmatprep.mubr.f32.mxu0 0.0
      %573 = vmatmul.mubr.f32.gmra.mxu0 %v339
      %v574 = vpop.f32.mrf.mxu0
      %v575 = vadd.f32 0.0, %v574
      %v576 = vpop.f32.mrf.mxu0
      %577 = vmatprep.mubr.f32.mxu0 0.0
      %578 = vmatmul.mubr.f32.gmra.mxu0 %v342
      %v579 = vpop.f32.mrf.mxu0
      %v580 = vadd.f32 0.0, %v579
      %v581 = vpop.f32.mrf.mxu0
      %582 = vmatprep.mubr.f32.mxu0 0.0
      %583 = vmatmul.mubr.f32.gmra.mxu0 %v345
      %v584 = vpop.f32.mrf.mxu0
      %v585 = vadd.f32 0.0, %v584
      %v586 = vpop.f32.mrf.mxu0
      %587 = vmatprep.mubr.f32.mxu0 0.0
      %588 = vmatmul.mubr.f32.gmra.mxu0 %v348
      %v589 = vpop.f32.mrf.mxu0
      %v590 = vadd.f32 0.0, %v589
      %v591 = vpop.f32.mrf.mxu0
      %592 = vmatprep.mubr.f32.mxu0 0.0
      %593 = vmatmul.mubr.f32.gmra.mxu0 %v351
      %v594 = vpop.f32.mrf.mxu0
      %v595 = vadd.f32 0.0, %v594
      %v596 = vpop.f32.mrf.mxu0
      %597 = vmatprep.mubr.f32.mxu0 0.0
      %598 = vmatmul.mubr.f32.gmra.mxu0 %v354
      %v599 = vpop.f32.mrf.mxu0
      %v600 = vadd.f32 0.0, %v599
      %v601 = vpop.f32.mrf.mxu0
      %602 = vmatprep.mubr.f32.mxu0 0.0
      %603 = vmatmul.mubr.f32.gmra.mxu0 %v357
      %v604 = vpop.f32.mrf.mxu0
      %v605 = vadd.f32 0.0, %v604
      %v606 = vpop.f32.mrf.mxu0
      %607 = vmatprep.mubr.f32.mxu0 0.0
      %608 = vmatmul.mubr.f32.gmra.mxu0 %v360
      %v609 = vpop.f32.mrf.mxu0
      %v610 = vadd.f32 0.0, %v609
      %v611 = vpop.f32.mrf.mxu0
      %612 = vmatprep.mubr.f32.mxu0 0.0
      %613 = vmatmul.mubr.f32.gmra.mxu0 %v363
      %v614 = vpop.f32.mrf.mxu0
      %v615 = vadd.f32 0.0, %v614
      %v616 = vpop.f32.mrf.mxu0
      %617 = vmatprep.mubr.f32.mxu0 0.0
      %618 = vmatmul.mubr.f32.gmra.mxu0 %v366
      %v619 = vpop.f32.mrf.mxu0
      %v620 = vadd.f32 0.0, %v619
      %v621 = vpop.f32.mrf.mxu0
      %622 = vmatprep.mubr.f32.mxu0 0.0
      %623 = vmatmul.mubr.f32.gmra.mxu0 %v369
      %v624 = vpop.f32.mrf.mxu0
      %v625 = vadd.f32 0.0, %v624
      %v626 = vpop.f32.mrf.mxu0
      %627 = vmatprep.mubr.f32.mxu0 0.0
      %628 = vmatmul.mubr.f32.gmra.mxu0 %v372
      %v629 = vpop.f32.mrf.mxu0
      %v630 = vadd.f32 0.0, %v629
      %v631 = vpop.f32.mrf.mxu0
      %632 = vmatprep.mubr.f32.mxu0 0.0
      %633 = vmatmul.mubr.f32.gmra.mxu0 %v375
      %v634 = vpop.f32.mrf.mxu0
      %v635 = vadd.f32 0.0, %v634
      %v636 = vpop.f32.mrf.mxu0
      %637 = vmatprep.mubr.f32.mxu0 0.0
      %638 = vmatmul.mubr.f32.gmra.mxu0 %v378
      %v639 = vpop.f32.mrf.mxu0
      %v640 = vadd.f32 0.0, %v639
      %v641 = vpop.f32.mrf.mxu0
      %642 = vmatprep.mubr.f32.mxu0 0.0
      %643 = vmatmul.mubr.f32.gmra.mxu0 %v381
      %v644 = vpop.f32.mrf.mxu0
      %v645 = vadd.f32 0.0, %v644
      %v646 = vpop.f32.mrf.mxu0
      %647 = vmatprep.mubr.f32.mxu0 0.0
      %648 = vmatmul.mubr.f32.gmra.mxu0 %v384
      %v649 = vpop.f32.mrf.mxu0
      %v650 = vadd.f32 0.0, %v649
      %v651 = vpop.f32.mrf.mxu0
      %652 = vmatprep.mubr.f32.mxu0 0.0
      %653 = vmatmul.mubr.f32.gmra.mxu0 %v387
      %v654 = vpop.f32.mrf.mxu0
      %v655 = vadd.f32 0.0, %v654
      %v656 = vpop.f32.mrf.mxu0
      %657 = vmatprep.mubr.f32.mxu0 0.0
      %658 = vmatmul.mubr.f32.gmra.mxu0 %v390
      %v659 = vpop.f32.mrf.mxu0
      %v660 = vadd.f32 0.0, %v659
      %v661 = vpop.f32.mrf.mxu0
      %662 = vmatprep.mubr.f32.mxu0 0.0
      %663 = vmatmul.mubr.f32.gmra.mxu0 %v393
      %v664 = vpop.f32.mrf.mxu0
      %v665 = vadd.f32 0.0, %v664
      %v666 = vpop.f32.mrf.mxu0
      %667 = vmatprep.mubr.f32.mxu0 0.0
      %668 = vmatmul.mubr.f32.gmra.mxu0 %v396
      %v669 = vpop.f32.mrf.mxu0
      %v670 = vadd.f32 0.0, %v669
      %v671 = vpop.f32.mrf.mxu0
      %672 = vmatprep.mubr.f32.mxu0 0.0
      %673 = vmatmul.mubr.f32.gmra.mxu0 %v399
      %v674 = vpop.f32.mrf.mxu0
      %v675 = vadd.f32 0.0, %v674
      %v676 = vpop.f32.mrf.mxu0
      %677 = vmatprep.mubr.f32.mxu0 0.0
      %678 = vmatmul.mubr.f32.gmra.mxu0 %v402
      %v679 = vpop.f32.mrf.mxu0
      %v680 = vadd.f32 0.0, %v679
      %v681 = vpop.f32.mrf.mxu0
      %682 = vmatprep.mubr.f32.mxu0 0.0
      %683 = vmatmul.mubr.f32.gmra.mxu0 %v405
      %v684 = vpop.f32.mrf.mxu0
      %v685 = vadd.f32 0.0, %v684
      %v686 = vpop.f32.mrf.mxu0
      %687 = vmatprep.mubr.f32.mxu0 0.0
      %688 = vmatmul.mubr.f32.gmra.mxu0 %v408
      %v689 = vpop.f32.mrf.mxu0
      %v690 = vadd.f32 0.0, %v689
      %v691 = vpop.f32.mrf.mxu0
      %692 = vmatprep.mubr.f32.mxu0 0.0
      %693 = vmatmul.mubr.f32.gmra.mxu0 %v411
      %v694 = vpop.f32.mrf.mxu0
      %v695 = vadd.f32 0.0, %v694
      %v696 = vpop.f32.mrf.mxu0
      %697 = vmatprep.mubr.f32.mxu0 0.0
      %698 = vmatmul.mubr.f32.gmra.mxu0 %v414
      %v699 = vpop.f32.mrf.mxu0
      %v700 = vadd.f32 0.0, %v699
      %v701 = vpop.f32.mrf.mxu0
      %702 = vmatprep.mubr.f32.mxu0 0.0
      %703 = vmatmul.mubr.f32.gmra.mxu0 %v417
      %v704 = vpop.f32.mrf.mxu0
      %v705 = vadd.f32 0.0, %v704
      %v706 = vpop.f32.mrf.mxu0
      %707 = vmatprep.mubr.f32.mxu0 0.0
      %708 = vmatmul.mubr.f32.gmra.mxu0 %v420
      %v709 = vpop.f32.mrf.mxu0
      %v710 = vadd.f32 0.0, %v709
      %v711 = vpop.f32.mrf.mxu0
      %712 = vmatprep.mubr.f32.mxu0 0.0
      %713 = vmatmul.mubr.f32.gmra.mxu0 %v423
      %v714 = vpop.f32.mrf.mxu0
      %v715 = vadd.f32 0.0, %v714
      %v716 = vpop.f32.mrf.mxu0
      %717 = vmatprep.mubr.f32.mxu0 0.0
      %718 = vmatmul.mubr.f32.gmra.mxu0 %v426
      %v719 = vpop.f32.mrf.mxu0
      %v720 = vadd.f32 0.0, %v719
      %v721 = vpop.f32.mrf.mxu0
      %722 = vmatprep.mubr.f32.mxu0 0.0
      %723 = vmatmul.mubr.f32.gmra.mxu0 %v429
      %v724 = vpop.f32.mrf.mxu0
      %v725 = vadd.f32 0.0, %v724
      %v726 = vpop.f32.mrf.mxu0
      %727 = vmatprep.mubr.f32.mxu0 0.0
      %728 = vmatmul.mubr.f32.gmra.mxu0 %v432
      %v729 = vpop.f32.mrf.mxu0
      %v730 = vadd.f32 0.0, %v729
      %v731 = vpop.f32.mrf.mxu0
      %732 = vmatprep.mubr.f32.mxu0 0.0
      %733 = vmatmul.mubr.f32.gmra.mxu0 %v435
      %v734 = vpop.f32.mrf.mxu0
      %v735 = vadd.f32 0.0, %v734
      %v736 = vpop.f32.mrf.mxu0
      %737 = vmatprep.mubr.f32.mxu0 0.0
      %738 = vmatmul.mubr.f32.gmra.mxu0 %v438
      %v739 = vpop.f32.mrf.mxu0
      %v740 = vadd.f32 0.0, %v739
      %v741 = vpop.f32.mrf.mxu0
      %742 = vmatprep.mubr.f32.mxu0 0.0
      %743 = vmatmul.mubr.f32.gmra.mxu0 %v441
      %v744 = vpop.f32.mrf.mxu0
      %v745 = vadd.f32 0.0, %v744
      %v746 = vpop.f32.mrf.mxu0
      %747 = vdwg.mxu0
      %v749 = vsel %vm298, %v242, 0
      %v752 = vsel %vm298, %v243, 0
      %v755 = vsel %vm298, %v244, 0
      %757 = vmatprep.subr.mxu0 0.0
      %758 = vmatpush1.msra.mxu0 0.0
      %759 = vmatprep.subr.mxu0 0.0
      %760 = vmatpush1.msra.mxu0 0.0
      %761 = vmatprep.subr.mxu0 0.0
      %762 = vmatpush1.msra.mxu0 0.0
      %763 = vmatprep.subr.mxu0 0.0
      %764 = vmatpush1.msra.mxu0 0.0
      %765 = vmatprep.subr.mxu0 0.0
      %766 = vmatpush1.msra.mxu0 0.0
      %767 = vmatprep.subr.mxu0 0.0
      %768 = vmatpush1.msra.mxu0 0.0
      %769 = vmatprep.subr.mxu0 0.0
      %770 = vmatpush1.msra.mxu0 0.0
      %771 = vmatprep.subr.mxu0 0.0
      %772 = vmatpush1.msra.mxu0 0.0
      %773 = vmatprep.subr.mxu0 0.0
      %774 = vmatpush1.msra.mxu0 0.0
      %775 = vmatprep.subr.mxu0 0.0
      %776 = vmatpush1.msra.mxu0 0.0
      %777 = vmatprep.subr.mxu0 0.0
      %778 = vmatpush1.msra.mxu0 0.0
      %779 = vmatprep.subr.mxu0 0.0
      %780 = vmatpush1.msra.mxu0 0.0
      %781 = vmatprep.subr.mxu0 0.0
      %782 = vmatpush1.msra.mxu0 0.0
      %783 = vmatprep.subr.mxu0 0.0
      %784 = vmatpush1.msra.mxu0 0.0
      %785 = vmatprep.subr.mxu0 0.0
      %786 = vmatpush1.msra.mxu0 %v291
      %787 = vmatprep.subr.mxu0 0.0
      %788 = vmatpush1.msra.mxu0 %v290
      %789 = vmatprep.subr.mxu0 0.0
      %790 = vmatpush2.msra.mxu0 0.0
      %791 = vmatprep.subr.mxu0 0.0
      %792 = vmatpush2.msra.mxu0 0.0
      %793 = vmatprep.subr.mxu0 0.0
      %794 = vmatpush2.msra.mxu0 0.0
      %795 = vmatprep.subr.mxu0 0.0
      %796 = vmatpush2.msra.mxu0 0.0
      %797 = vmatprep.subr.mxu0 0.0
      %798 = vmatpush2.msra.mxu0 0.0
      %799 = vmatprep.subr.mxu0 0.0
      %800 = vmatpush2.msra.mxu0 0.0
      %801 = vmatprep.subr.mxu0 0.0
      %802 = vmatpush2.msra.mxu0 0.0
      %803 = vmatprep.subr.mxu0 0.0
      %804 = vmatpush2.msra.mxu0 0.0
      %805 = vmatprep.subr.mxu0 0.0
      %806 = vmatpush2.msra.mxu0 0.0
      %807 = vmatprep.subr.mxu0 0.0
      %808 = vmatpush2.msra.mxu0 0.0
      %809 = vmatprep.subr.mxu0 0.0
      %810 = vmatpush2.msra.mxu0 0.0
      %811 = vmatprep.subr.mxu0 0.0
      %812 = vmatpush2.msra.mxu0 0.0
      %813 = vmatprep.subr.mxu0 0.0
      %814 = vmatpush2.msra.mxu0 0.0
      %815 = vmatprep.subr.mxu0 0.0
      %816 = vmatpush2.msra.mxu0 0.0
      %817 = vmatprep.subr.mxu0 0.0
      %818 = vmatpush2.msra.mxu0 0.0
      %819 = vmatprep.subr.mxu0 0.0
      %820 = vmatpush2.msra.mxu0 0.0
      %821 = vmatprep.mubr.f32.mxu0 0.0
      %822 = vmatmul.mubr.f32.gmra.mxu0 %v749
      %v823 = vpop.f32.mrf.mxu0
      %v824 = vadd.f32 %v510, %v823
      %v825 = vpop.f32.mrf.mxu0
      %826 = vmatprep.mubr.f32.mxu0 0.0
      %827 = vmatmul.mubr.f32.gmra.mxu0 %v752
      %v828 = vpop.f32.mrf.mxu0
      %v829 = vadd.f32 %v515, %v828
      %v830 = vpop.f32.mrf.mxu0
      %831 = vmatprep.mubr.f32.mxu0 0.0
      %832 = vmatmul.mubr.f32.gmra.mxu0 %v755
      %v833 = vpop.f32.mrf.mxu0
      %v834 = vadd.f32 %v520, %v833
      %v835 = vpop.f32.mrf.mxu0
      %836 = vmatprep.mubr.f32.mxu0 0.0
      %837 = vmatmul.mubr.f32.gmra.mxu0 %v300
      %v838 = vpop.f32.mrf.mxu0
      %v839 = vadd.f32 %v525, %v838
      %v840 = vpop.f32.mrf.mxu0
      %841 = vmatprep.mubr.f32.mxu0 0.0
      %842 = vmatmul.mubr.f32.gmra.mxu0 %v303
      %v843 = vpop.f32.mrf.mxu0
      %v844 = vadd.f32 %v530, %v843
      %v845 = vpop.f32.mrf.mxu0
      %846 = vmatprep.mubr.f32.mxu0 0.0
      %847 = vmatmul.mubr.f32.gmra.mxu0 %v306
      %v848 = vpop.f32.mrf.mxu0
      %v849 = vadd.f32 %v535, %v848
      %v850 = vpop.f32.mrf.mxu0
      %851 = vmatprep.mubr.f32.mxu0 0.0
      %852 = vmatmul.mubr.f32.gmra.mxu0 %v309
      %v853 = vpop.f32.mrf.mxu0
      %v854 = vadd.f32 %v540, %v853
      %v855 = vpop.f32.mrf.mxu0
      %856 = vmatprep.mubr.f32.mxu0 0.0
      %857 = vmatmul.mubr.f32.gmra.mxu0 %v312
      %v858 = vpop.f32.mrf.mxu0
      %v859 = vadd.f32 %v545, %v858
      %v860 = vpop.f32.mrf.mxu0
      %861 = vmatprep.mubr.f32.mxu0 0.0
      %862 = vmatmul.mubr.f32.gmra.mxu0 %v315
      %v863 = vpop.f32.mrf.mxu0
      %v864 = vadd.f32 %v550, %v863
      %v865 = vpop.f32.mrf.mxu0
      %866 = vmatprep.mubr.f32.mxu0 0.0
      %867 = vmatmul.mubr.f32.gmra.mxu0 %v318
      %v868 = vpop.f32.mrf.mxu0
      %v869 = vadd.f32 %v555, %v868
      %v870 = vpop.f32.mrf.mxu0
      %871 = vmatprep.mubr.f32.mxu0 0.0
      %872 = vmatmul.mubr.f32.gmra.mxu0 %v321
      %v873 = vpop.f32.mrf.mxu0
      %v874 = vadd.f32 %v560, %v873
      %v875 = vpop.f32.mrf.mxu0
      %876 = vmatprep.mubr.f32.mxu0 0.0
      %877 = vmatmul.mubr.f32.gmra.mxu0 %v324
      %v878 = vpop.f32.mrf.mxu0
      %v879 = vadd.f32 %v565, %v878
      %v880 = vpop.f32.mrf.mxu0
      %881 = vmatprep.mubr.f32.mxu0 0.0
      %882 = vmatmul.mubr.f32.gmra.mxu0 %v327
      %v883 = vpop.f32.mrf.mxu0
      %v884 = vadd.f32 %v570, %v883
      %v885 = vpop.f32.mrf.mxu0
      %886 = vmatprep.mubr.f32.mxu0 0.0
      %887 = vmatmul.mubr.f32.gmra.mxu0 %v330
      %v888 = vpop.f32.mrf.mxu0
      %v889 = vadd.f32 %v575, %v888
      %v890 = vpop.f32.mrf.mxu0
      %891 = vmatprep.mubr.f32.mxu0 0.0
      %892 = vmatmul.mubr.f32.gmra.mxu0 %v333
      %v893 = vpop.f32.mrf.mxu0
      %v894 = vadd.f32 %v580, %v893
      %v895 = vpop.f32.mrf.mxu0
      %896 = vmatprep.mubr.f32.mxu0 0.0
      %897 = vmatmul.mubr.f32.gmra.mxu0 %v336
      %v898 = vpop.f32.mrf.mxu0
      %v899 = vadd.f32 %v585, %v898
      %v900 = vpop.f32.mrf.mxu0
      %901 = vmatprep.mubr.f32.mxu0 0.0
      %902 = vmatmul.mubr.f32.gmra.mxu0 %v339
      %v903 = vpop.f32.mrf.mxu0
      %v904 = vadd.f32 %v590, %v903
      %v905 = vpop.f32.mrf.mxu0
      %906 = vmatprep.mubr.f32.mxu0 0.0
      %907 = vmatmul.mubr.f32.gmra.mxu0 %v342
      %v908 = vpop.f32.mrf.mxu0
      %v909 = vadd.f32 %v595, %v908
      %v910 = vpop.f32.mrf.mxu0
      %911 = vmatprep.mubr.f32.mxu0 0.0
      %912 = vmatmul.mubr.f32.gmra.mxu0 %v345
      %v913 = vpop.f32.mrf.mxu0
      %v914 = vadd.f32 %v600, %v913
      %v915 = vpop.f32.mrf.mxu0
      %916 = vmatprep.mubr.f32.mxu0 0.0
      %917 = vmatmul.mubr.f32.gmra.mxu0 %v348
      %v918 = vpop.f32.mrf.mxu0
      %v919 = vadd.f32 %v605, %v918
      %v920 = vpop.f32.mrf.mxu0
      %921 = vmatprep.mubr.f32.mxu0 0.0
      %922 = vmatmul.mubr.f32.gmra.mxu0 %v351
      %v923 = vpop.f32.mrf.mxu0
      %v924 = vadd.f32 %v610, %v923
      %v925 = vpop.f32.mrf.mxu0
      %926 = vmatprep.mubr.f32.mxu0 0.0
      %927 = vmatmul.mubr.f32.gmra.mxu0 %v354
      %v928 = vpop.f32.mrf.mxu0
      %v929 = vadd.f32 %v615, %v928
      %v930 = vpop.f32.mrf.mxu0
      %931 = vmatprep.mubr.f32.mxu0 0.0
      %932 = vmatmul.mubr.f32.gmra.mxu0 %v357
      %v933 = vpop.f32.mrf.mxu0
      %v934 = vadd.f32 %v620, %v933
      %v935 = vpop.f32.mrf.mxu0
      %936 = vmatprep.mubr.f32.mxu0 0.0
      %937 = vmatmul.mubr.f32.gmra.mxu0 %v360
      %v938 = vpop.f32.mrf.mxu0
      %v939 = vadd.f32 %v625, %v938
      %v940 = vpop.f32.mrf.mxu0
      %941 = vmatprep.mubr.f32.mxu0 0.0
      %942 = vmatmul.mubr.f32.gmra.mxu0 %v363
      %v943 = vpop.f32.mrf.mxu0
      %v944 = vadd.f32 %v630, %v943
      %v945 = vpop.f32.mrf.mxu0
      %946 = vmatprep.mubr.f32.mxu0 0.0
      %947 = vmatmul.mubr.f32.gmra.mxu0 %v366
      %v948 = vpop.f32.mrf.mxu0
      %v949 = vadd.f32 %v635, %v948
      %v950 = vpop.f32.mrf.mxu0
      %951 = vmatprep.mubr.f32.mxu0 0.0
      %952 = vmatmul.mubr.f32.gmra.mxu0 %v369
      %v953 = vpop.f32.mrf.mxu0
      %v954 = vadd.f32 %v640, %v953
      %v955 = vpop.f32.mrf.mxu0
      %956 = vmatprep.mubr.f32.mxu0 0.0
      %957 = vmatmul.mubr.f32.gmra.mxu0 %v372
      %v958 = vpop.f32.mrf.mxu0
      %v959 = vadd.f32 %v645, %v958
      %v960 = vpop.f32.mrf.mxu0
      %961 = vmatprep.mubr.f32.mxu0 0.0
      %962 = vmatmul.mubr.f32.gmra.mxu0 %v375
      %v963 = vpop.f32.mrf.mxu0
      %v964 = vadd.f32 %v650, %v963
      %v965 = vpop.f32.mrf.mxu0
      %966 = vmatprep.mubr.f32.mxu0 0.0
      %967 = vmatmul.mubr.f32.gmra.mxu0 %v378
      %v968 = vpop.f32.mrf.mxu0
      %v969 = vadd.f32 %v655, %v968
      %v970 = vpop.f32.mrf.mxu0
      %971 = vmatprep.mubr.f32.mxu0 0.0
      %972 = vmatmul.mubr.f32.gmra.mxu0 %v381
      %v973 = vpop.f32.mrf.mxu0
      %v974 = vadd.f32 %v660, %v973
      %v975 = vpop.f32.mrf.mxu0
      %976 = vmatprep.mubr.f32.mxu0 0.0
      %977 = vmatmul.mubr.f32.gmra.mxu0 %v384
      %v978 = vpop.f32.mrf.mxu0
      %v979 = vadd.f32 %v665, %v978
      %v980 = vpop.f32.mrf.mxu0
      %981 = vmatprep.mubr.f32.mxu0 0.0
      %982 = vmatmul.mubr.f32.gmra.mxu0 %v387
      %v983 = vpop.f32.mrf.mxu0
      %v984 = vadd.f32 %v670, %v983
      %v985 = vpop.f32.mrf.mxu0
      %986 = vmatprep.mubr.f32.mxu0 0.0
      %987 = vmatmul.mubr.f32.gmra.mxu0 %v390
      %v988 = vpop.f32.mrf.mxu0
      %v989 = vadd.f32 %v675, %v988
      %v990 = vpop.f32.mrf.mxu0
      %991 = vmatprep.mubr.f32.mxu0 0.0
      %992 = vmatmul.mubr.f32.gmra.mxu0 %v393
      %v993 = vpop.f32.mrf.mxu0
      %v994 = vadd.f32 %v680, %v993
      %v995 = vpop.f32.mrf.mxu0
      %996 = vmatprep.mubr.f32.mxu0 0.0
      %997 = vmatmul.mubr.f32.gmra.mxu0 %v396
      %v998 = vpop.f32.mrf.mxu0
      %v999 = vadd.f32 %v685, %v998
      %v1000 = vpop.f32.mrf.mxu0
      %1001 = vmatprep.mubr.f32.mxu0 0.0
      %1002 = vmatmul.mubr.f32.gmra.mxu0 %v399
      %v1003 = vpop.f32.mrf.mxu0
      %v1004 = vadd.f32 %v690, %v1003
      %v1005 = vpop.f32.mrf.mxu0
      %1006 = vmatprep.mubr.f32.mxu0 0.0
      %1007 = vmatmul.mubr.f32.gmra.mxu0 %v402
      %v1008 = vpop.f32.mrf.mxu0
      %v1009 = vadd.f32 %v695, %v1008
      %v1010 = vpop.f32.mrf.mxu0
      %1011 = vmatprep.mubr.f32.mxu0 0.0
      %1012 = vmatmul.mubr.f32.gmra.mxu0 %v405
      %v1013 = vpop.f32.mrf.mxu0
      %v1014 = vadd.f32 %v700, %v1013
      %v1015 = vpop.f32.mrf.mxu0
      %1016 = vmatprep.mubr.f32.mxu0 0.0
      %1017 = vmatmul.mubr.f32.gmra.mxu0 %v408
      %v1018 = vpop.f32.mrf.mxu0
      %v1019 = vadd.f32 %v705, %v1018
      %v1020 = vpop.f32.mrf.mxu0
      %1021 = vmatprep.mubr.f32.mxu0 0.0
      %1022 = vmatmul.mubr.f32.gmra.mxu0 %v411
      %v1023 = vpop.f32.mrf.mxu0
      %v1024 = vadd.f32 %v710, %v1023
      %v1025 = vpop.f32.mrf.mxu0
      %1026 = vmatprep.mubr.f32.mxu0 0.0
      %1027 = vmatmul.mubr.f32.gmra.mxu0 %v414
      %v1028 = vpop.f32.mrf.mxu0
      %v1029 = vadd.f32 %v715, %v1028
      %v1030 = vpop.f32.mrf.mxu0
      %1031 = vmatprep.mubr.f32.mxu0 0.0
      %1032 = vmatmul.mubr.f32.gmra.mxu0 %v417
      %v1033 = vpop.f32.mrf.mxu0
      %v1034 = vadd.f32 %v720, %v1033
      %v1035 = vpop.f32.mrf.mxu0
      %1036 = vmatprep.mubr.f32.mxu0 0.0
      %1037 = vmatmul.mubr.f32.gmra.mxu0 %v420
      %v1038 = vpop.f32.mrf.mxu0
      %v1039 = vadd.f32 %v725, %v1038
      %v1040 = vpop.f32.mrf.mxu0
      %1041 = vmatprep.mubr.f32.mxu0 0.0
      %1042 = vmatmul.mubr.f32.gmra.mxu0 %v423
      %v1043 = vpop.f32.mrf.mxu0
      %v1044 = vadd.f32 %v730, %v1043
      %v1045 = vpop.f32.mrf.mxu0
      %1046 = vmatprep.mubr.f32.mxu0 0.0
      %1047 = vmatmul.mubr.f32.gmra.mxu0 %v426
      %v1048 = vpop.f32.mrf.mxu0
      %v1049 = vadd.f32 %v735, %v1048
      %v1050 = vpop.f32.mrf.mxu0
      %1051 = vmatprep.mubr.f32.mxu0 0.0
      %1052 = vmatmul.mubr.f32.gmra.mxu0 %v429
      %v1053 = vpop.f32.mrf.mxu0
      %v1054 = vadd.f32 %v740, %v1053
      %v1055 = vpop.f32.mrf.mxu0
      %1056 = vmatprep.mubr.f32.mxu0 0.0
      %1057 = vmatmul.mubr.f32.gmra.mxu0 %v432
      %v1058 = vpop.f32.mrf.mxu0
      %v1059 = vadd.f32 %v745, %v1058
      %v1060 = vpop.f32.mrf.mxu0
      %1061 = vdwg.mxu0
      %v1062 = vld [vmem:[%s230 + $0x30] sm:$0xff]
      %v1063 = vld [vmem:[%s230 + $0x38] sm:$0xff]
      %v1064 = vld [vmem:[%s230 + $0x40] sm:$0xff]
      %v1065 = vld [vmem:[%s230 + $0x48] sm:$0xff]
      %v1066 = vld [vmem:[%s230 + $0x50] sm:$0xff]
      %v1067 = vld [vmem:[%s230 + $0x58] sm:$0xff]
      %v1068 = vld [vmem:[%s230 + $0x60] sm:$0xff]
      %v1069 = vld [vmem:[%s230 + $0x68] sm:$0xff]
      %v1070 = vld [vmem:[%s230 + $0x70] sm:$0xff]
      %v1071 = vld [vmem:[%s230 + $0x78] sm:$0xff]
      %v1072 = vld [vmem:[%s230 + $0x80] sm:$0xff]
      %v1073 = vld [vmem:[%s230 + $0x88] sm:$0xff]
      %v1074 = vld [vmem:[%s230 + $0x90] sm:$0xff]
      %v1075 = vld [vmem:[%s230 + $0x98] sm:$0xff]
      %v1076 = vld [vmem:[%s230 + $0xa0] sm:$0xff]
      %v1077 = vld [vmem:[%s230 + $0xa8] sm:$0xff]
      %v1078 = vld [vmem:[%s230 + $0xb0] sm:$0xff]
      %v1079 = vld [vmem:[%s230 + $0xb8] sm:$0xff]
      %v1080 = vld [vmem:[%s230 + $0xc0] sm:$0xff]
      %v1081 = vld [vmem:[%s230 + $0xc8] sm:$0xff]
      %v1082 = vld [vmem:[%s230 + $0xd0] sm:$0xff]
      %v1083 = vld [vmem:[%s230 + $0xd8] sm:$0xff]
      %v1084 = vld [vmem:[%s230 + $0xe0] sm:$0xff]
      %v1085 = vld [vmem:[%s230 + $0xe8] sm:$0xff]
      %v1086 = vld [vmem:[%s230 + $0xf0] sm:$0xff]
      %v1087 = vld [vmem:[%s230 + $0xf8] sm:$0xff]
      %v1088 = vld [vmem:[%s230 + $0x100] sm:$0xff]
      %v1089 = vld [vmem:[%s230 + $0x108] sm:$0xff]
      %v1090 = vld [vmem:[%s230 + $0x110] sm:$0xff]
      %v1091 = vld [vmem:[%s230 + $0x118] sm:$0xff]
      %v1092 = vld [vmem:[%s230 + $0x120] sm:$0xff]
      %v1093 = vld [vmem:[%s230 + $0x128] sm:$0xff]
      %v1094 = vld [vmem:[%s230 + $0x130] sm:$0xff]
      %v1095 = vld [vmem:[%s230 + $0x138] sm:$0xff]
      %v1096 = vld [vmem:[%s230 + $0x140] sm:$0xff]
      %v1097 = vld [vmem:[%s230 + $0x148] sm:$0xff]
      %v1098 = vld [vmem:[%s230 + $0x150] sm:$0xff]
      %v1099 = vld [vmem:[%s230 + $0x158] sm:$0xff]
      %v1100 = vld [vmem:[%s230 + $0x160] sm:$0xff]
      %v1101 = vld [vmem:[%s230 + $0x168] sm:$0xff]
      %v1102 = vld [vmem:[%s230 + $0x170] sm:$0xff]
      %v1103 = vld [vmem:[%s230 + $0x178] sm:$0xff]
      %v1104 = vld [vmem:[%s230 + $0x180] sm:$0xff]
      %v1105 = vld [vmem:[%s230 + $0x188] sm:$0xff]
      %v1106 = vld [vmem:[%s230 + $0x190] sm:$0xff]
      %v1107 = vld [vmem:[%s230 + $0x198] sm:$0xff]
      %v1108 = vld [vmem:[%s230 + $0x1a0] sm:$0xff]
      %v1109 = vld [vmem:[%s230 + $0x1a8] sm:$0xff]
      %s1110 = scalar_lea.vmem %s1, 32
      %v1111 = vld [vmem:[%s1110] sm:$0xff]
      %v1112 = vld [vmem:[%s1110 + $0x8] sm:$0xff]
      %v1114 = vsel %vm298, %v1062, 0
      %v1117 = vsel %vm298, %v1063, 0
      %v1120 = vsel %vm298, %v1064, 0
      %v1123 = vsel %vm298, %v1065, 0
      %v1126 = vsel %vm298, %v1066, 0
      %v1129 = vsel %vm298, %v1067, 0
      %v1132 = vsel %vm298, %v1068, 0
      %v1135 = vsel %vm298, %v1069, 0
      %v1138 = vsel %vm298, %v1070, 0
      %v1141 = vsel %vm298, %v1071, 0
      %v1144 = vsel %vm298, %v1072, 0
      %v1147 = vsel %vm298, %v1073, 0
      %v1150 = vsel %vm298, %v1074, 0
      %v1153 = vsel %vm298, %v1075, 0
      %v1156 = vsel %vm298, %v1076, 0
      %v1159 = vsel %vm298, %v1077, 0
      %v1162 = vsel %vm298, %v1078, 0
      %v1165 = vsel %vm298, %v1079, 0
      %v1168 = vsel %vm298, %v1080, 0
      %v1171 = vsel %vm298, %v1081, 0
      %v1174 = vsel %vm298, %v1082, 0
      %v1177 = vsel %vm298, %v1083, 0
      %v1180 = vsel %vm298, %v1084, 0
      %v1183 = vsel %vm298, %v1085, 0
      %v1186 = vsel %vm298, %v1086, 0
      %v1189 = vsel %vm298, %v1087, 0
      %v1192 = vsel %vm298, %v1088, 0
      %v1195 = vsel %vm298, %v1089, 0
      %v1198 = vsel %vm298, %v1090, 0
      %v1201 = vsel %vm298, %v1091, 0
      %v1204 = vsel %vm298, %v1092, 0
      %v1207 = vsel %vm298, %v1093, 0
      %v1210 = vsel %vm298, %v1094, 0
      %v1213 = vsel %vm298, %v1095, 0
      %v1216 = vsel %vm298, %v1096, 0
      %v1219 = vsel %vm298, %v1097, 0
      %v1222 = vsel %vm298, %v1098, 0
      %v1225 = vsel %vm298, %v1099, 0
      %v1228 = vsel %vm298, %v1100, 0
      %v1231 = vsel %vm298, %v1101, 0
      %v1234 = vsel %vm298, %v1102, 0
      %v1237 = vsel %vm298, %v1103, 0
      %v1240 = vsel %vm298, %v1104, 0
      %v1243 = vsel %vm298, %v1105, 0
      %v1246 = vsel %vm298, %v1106, 0
      %v1249 = vsel %vm298, %v1107, 0
      %v1252 = vsel %vm298, %v1108, 0
      %v1255 = vsel %vm298, %v1109, 0
      %1257 = vmatprep.subr.mxu0 0.0
      %1258 = vmatpush1.msra.mxu0 0.0
      %1259 = vmatprep.subr.mxu0 0.0
      %1260 = vmatpush1.msra.mxu0 0.0
      %1261 = vmatprep.subr.mxu0 0.0
      %1262 = vmatpush1.msra.mxu0 0.0
      %1263 = vmatprep.subr.mxu0 0.0
      %1264 = vmatpush1.msra.mxu0 0.0
      %1265 = vmatprep.subr.mxu0 0.0
      %1266 = vmatpush1.msra.mxu0 0.0
      %1267 = vmatprep.subr.mxu0 0.0
      %1268 = vmatpush1.msra.mxu0 0.0
      %1269 = vmatprep.subr.mxu0 0.0
      %1270 = vmatpush1.msra.mxu0 0.0
      %1271 = vmatprep.subr.mxu0 0.0
      %1272 = vmatpush1.msra.mxu0 0.0
      %1273 = vmatprep.subr.mxu0 0.0
      %1274 = vmatpush1.msra.mxu0 0.0
      %1275 = vmatprep.subr.mxu0 0.0
      %1276 = vmatpush1.msra.mxu0 0.0
      %1277 = vmatprep.subr.mxu0 0.0
      %1278 = vmatpush1.msra.mxu0 0.0
      %1279 = vmatprep.subr.mxu0 0.0
      %1280 = vmatpush1.msra.mxu0 0.0
      %1281 = vmatprep.subr.mxu0 0.0
      %1282 = vmatpush1.msra.mxu0 0.0
      %1283 = vmatprep.subr.mxu0 0.0
      %1284 = vmatpush1.msra.mxu0 0.0
      %1285 = vmatprep.subr.mxu0 0.0
      %1286 = vmatpush1.msra.mxu0 %v1112
      %1287 = vmatprep.subr.mxu0 0.0
      %1288 = vmatpush1.msra.mxu0 %v1111
      %1289 = vmatprep.subr.mxu0 0.0
      %1290 = vmatpush2.msra.mxu0 0.0
      %1291 = vmatprep.subr.mxu0 0.0
      %1292 = vmatpush2.msra.mxu0 0.0
      %1293 = vmatprep.subr.mxu0 0.0
      %1294 = vmatpush2.msra.mxu0 0.0
      %1295 = vmatprep.subr.mxu0 0.0
      %1296 = vmatpush2.msra.mxu0 0.0
      %1297 = vmatprep.subr.mxu0 0.0
      %1298 = vmatpush2.msra.mxu0 0.0
      %1299 = vmatprep.subr.mxu0 0.0
      %1300 = vmatpush2.msra.mxu0 0.0
      %1301 = vmatprep.subr.mxu0 0.0
      %1302 = vmatpush2.msra.mxu0 0.0
      %1303 = vmatprep.subr.mxu0 0.0
      %1304 = vmatpush2.msra.mxu0 0.0
      %1305 = vmatprep.subr.mxu0 0.0
      %1306 = vmatpush2.msra.mxu0 0.0
      %1307 = vmatprep.subr.mxu0 0.0
      %1308 = vmatpush2.msra.mxu0 0.0
      %1309 = vmatprep.subr.mxu0 0.0
      %1310 = vmatpush2.msra.mxu0 0.0
      %1311 = vmatprep.subr.mxu0 0.0
      %1312 = vmatpush2.msra.mxu0 0.0
      %1313 = vmatprep.subr.mxu0 0.0
      %1314 = vmatpush2.msra.mxu0 0.0
      %1315 = vmatprep.subr.mxu0 0.0
      %1316 = vmatpush2.msra.mxu0 0.0
      %1317 = vmatprep.subr.mxu0 0.0
      %1318 = vmatpush2.msra.mxu0 0.0
      %1319 = vmatprep.subr.mxu0 0.0
      %1320 = vmatpush2.msra.mxu0 0.0
      %1321 = vmatprep.mubr.f32.mxu0 0.0
      %1322 = vmatmul.mubr.f32.gmra.mxu0 %v1114
      %v1323 = vpop.f32.mrf.mxu0
      %v1324 = vadd.f32 0.0, %v1323
      %v1325 = vpop.f32.mrf.mxu0
      %1326 = vmatprep.mubr.f32.mxu0 0.0
      %1327 = vmatmul.mubr.f32.gmra.mxu0 %v1117
      %v1328 = vpop.f32.mrf.mxu0
      %v1329 = vadd.f32 0.0, %v1328
      %v1330 = vpop.f32.mrf.mxu0
      %1331 = vmatprep.mubr.f32.mxu0 0.0
      %1332 = vmatmul.mubr.f32.gmra.mxu0 %v1120
      %v1333 = vpop.f32.mrf.mxu0
      %v1334 = vadd.f32 0.0, %v1333
      %v1335 = vpop.f32.mrf.mxu0
      %1336 = vmatprep.mubr.f32.mxu0 0.0
      %1337 = vmatmul.mubr.f32.gmra.mxu0 %v1123
      %v1338 = vpop.f32.mrf.mxu0
      %v1339 = vadd.f32 0.0, %v1338
      %v1340 = vpop.f32.mrf.mxu0
      %1341 = vmatprep.mubr.f32.mxu0 0.0
      %1342 = vmatmul.mubr.f32.gmra.mxu0 %v1126
      %v1343 = vpop.f32.mrf.mxu0
      %v1344 = vadd.f32 0.0, %v1343
      %v1345 = vpop.f32.mrf.mxu0
      %1346 = vmatprep.mubr.f32.mxu0 0.0
      %1347 = vmatmul.mubr.f32.gmra.mxu0 %v1129
      %v1348 = vpop.f32.mrf.mxu0
      %v1349 = vadd.f32 0.0, %v1348
      %v1350 = vpop.f32.mrf.mxu0
      %1351 = vmatprep.mubr.f32.mxu0 0.0
      %1352 = vmatmul.mubr.f32.gmra.mxu0 %v1132
      %v1353 = vpop.f32.mrf.mxu0
      %v1354 = vadd.f32 0.0, %v1353
      %v1355 = vpop.f32.mrf.mxu0
      %1356 = vmatprep.mubr.f32.mxu0 0.0
      %1357 = vmatmul.mubr.f32.gmra.mxu0 %v1135
      %v1358 = vpop.f32.mrf.mxu0
      %v1359 = vadd.f32 0.0, %v1358
      %v1360 = vpop.f32.mrf.mxu0
      %1361 = vmatprep.mubr.f32.mxu0 0.0
      %1362 = vmatmul.mubr.f32.gmra.mxu0 %v1138
      %v1363 = vpop.f32.mrf.mxu0
      %v1364 = vadd.f32 0.0, %v1363
      %v1365 = vpop.f32.mrf.mxu0
      %1366 = vmatprep.mubr.f32.mxu0 0.0
      %1367 = vmatmul.mubr.f32.gmra.mxu0 %v1141
      %v1368 = vpop.f32.mrf.mxu0
      %v1369 = vadd.f32 0.0, %v1368
      %v1370 = vpop.f32.mrf.mxu0
      %1371 = vmatprep.mubr.f32.mxu0 0.0
      %1372 = vmatmul.mubr.f32.gmra.mxu0 %v1144
      %v1373 = vpop.f32.mrf.mxu0
      %v1374 = vadd.f32 0.0, %v1373
      %v1375 = vpop.f32.mrf.mxu0
      %1376 = vmatprep.mubr.f32.mxu0 0.0
      %1377 = vmatmul.mubr.f32.gmra.mxu0 %v1147
      %v1378 = vpop.f32.mrf.mxu0
      %v1379 = vadd.f32 0.0, %v1378
      %v1380 = vpop.f32.mrf.mxu0
      %1381 = vmatprep.mubr.f32.mxu0 0.0
      %1382 = vmatmul.mubr.f32.gmra.mxu0 %v1150
      %v1383 = vpop.f32.mrf.mxu0
      %v1384 = vadd.f32 0.0, %v1383
      %v1385 = vpop.f32.mrf.mxu0
      %1386 = vmatprep.mubr.f32.mxu0 0.0
      %1387 = vmatmul.mubr.f32.gmra.mxu0 %v1153
      %v1388 = vpop.f32.mrf.mxu0
      %v1389 = vadd.f32 0.0, %v1388
      %v1390 = vpop.f32.mrf.mxu0
      %1391 = vmatprep.mubr.f32.mxu0 0.0
      %1392 = vmatmul.mubr.f32.gmra.mxu0 %v1156
      %v1393 = vpop.f32.mrf.mxu0
      %v1394 = vadd.f32 0.0, %v1393
      %v1395 = vpop.f32.mrf.mxu0
      %1396 = vmatprep.mubr.f32.mxu0 0.0
      %1397 = vmatmul.mubr.f32.gmra.mxu0 %v1159
      %v1398 = vpop.f32.mrf.mxu0
      %v1399 = vadd.f32 0.0, %v1398
      %v1400 = vpop.f32.mrf.mxu0
      %1401 = vmatprep.mubr.f32.mxu0 0.0
      %1402 = vmatmul.mubr.f32.gmra.mxu0 %v1162
      %v1403 = vpop.f32.mrf.mxu0
      %v1404 = vadd.f32 0.0, %v1403
      %v1405 = vpop.f32.mrf.mxu0
      %1406 = vmatprep.mubr.f32.mxu0 0.0
      %1407 = vmatmul.mubr.f32.gmra.mxu0 %v1165
      %v1408 = vpop.f32.mrf.mxu0
      %v1409 = vadd.f32 0.0, %v1408
      %v1410 = vpop.f32.mrf.mxu0
      %1411 = vmatprep.mubr.f32.mxu0 0.0
      %1412 = vmatmul.mubr.f32.gmra.mxu0 %v1168
      %v1413 = vpop.f32.mrf.mxu0
      %v1414 = vadd.f32 0.0, %v1413
      %v1415 = vpop.f32.mrf.mxu0
      %1416 = vmatprep.mubr.f32.mxu0 0.0
      %1417 = vmatmul.mubr.f32.gmra.mxu0 %v1171
      %v1418 = vpop.f32.mrf.mxu0
      %v1419 = vadd.f32 0.0, %v1418
      %v1420 = vpop.f32.mrf.mxu0
      %1421 = vmatprep.mubr.f32.mxu0 0.0
      %1422 = vmatmul.mubr.f32.gmra.mxu0 %v1174
      %v1423 = vpop.f32.mrf.mxu0
      %v1424 = vadd.f32 0.0, %v1423
      %v1425 = vpop.f32.mrf.mxu0
      %1426 = vmatprep.mubr.f32.mxu0 0.0
      %1427 = vmatmul.mubr.f32.gmra.mxu0 %v1177
      %v1428 = vpop.f32.mrf.mxu0
      %v1429 = vadd.f32 0.0, %v1428
      %v1430 = vpop.f32.mrf.mxu0
      %1431 = vmatprep.mubr.f32.mxu0 0.0
      %1432 = vmatmul.mubr.f32.gmra.mxu0 %v1180
      %v1433 = vpop.f32.mrf.mxu0
      %v1434 = vadd.f32 0.0, %v1433
      %v1435 = vpop.f32.mrf.mxu0
      %1436 = vmatprep.mubr.f32.mxu0 0.0
      %1437 = vmatmul.mubr.f32.gmra.mxu0 %v1183
      %v1438 = vpop.f32.mrf.mxu0
      %v1439 = vadd.f32 0.0, %v1438
      %v1440 = vpop.f32.mrf.mxu0
      %1441 = vmatprep.mubr.f32.mxu0 0.0
      %1442 = vmatmul.mubr.f32.gmra.mxu0 %v1186
      %v1443 = vpop.f32.mrf.mxu0
      %v1444 = vadd.f32 0.0, %v1443
      %v1445 = vpop.f32.mrf.mxu0
      %1446 = vmatprep.mubr.f32.mxu0 0.0
      %1447 = vmatmul.mubr.f32.gmra.mxu0 %v1189
      %v1448 = vpop.f32.mrf.mxu0
      %v1449 = vadd.f32 0.0, %v1448
      %v1450 = vpop.f32.mrf.mxu0
      %1451 = vmatprep.mubr.f32.mxu0 0.0
      %1452 = vmatmul.mubr.f32.gmra.mxu0 %v1192
      %v1453 = vpop.f32.mrf.mxu0
      %v1454 = vadd.f32 0.0, %v1453
      %v1455 = vpop.f32.mrf.mxu0
      %1456 = vmatprep.mubr.f32.mxu0 0.0
      %1457 = vmatmul.mubr.f32.gmra.mxu0 %v1195
      %v1458 = vpop.f32.mrf.mxu0
      %v1459 = vadd.f32 0.0, %v1458
      %v1460 = vpop.f32.mrf.mxu0
      %1461 = vmatprep.mubr.f32.mxu0 0.0
      %1462 = vmatmul.mubr.f32.gmra.mxu0 %v1198
      %v1463 = vpop.f32.mrf.mxu0
      %v1464 = vadd.f32 0.0, %v1463
      %v1465 = vpop.f32.mrf.mxu0
      %1466 = vmatprep.mubr.f32.mxu0 0.0
      %1467 = vmatmul.mubr.f32.gmra.mxu0 %v1201
      %v1468 = vpop.f32.mrf.mxu0
      %v1469 = vadd.f32 0.0, %v1468
      %v1470 = vpop.f32.mrf.mxu0
      %1471 = vmatprep.mubr.f32.mxu0 0.0
      %1472 = vmatmul.mubr.f32.gmra.mxu0 %v1204
      %v1473 = vpop.f32.mrf.mxu0
      %v1474 = vadd.f32 0.0, %v1473
      %v1475 = vpop.f32.mrf.mxu0
      %1476 = vmatprep.mubr.f32.mxu0 0.0
      %1477 = vmatmul.mubr.f32.gmra.mxu0 %v1207
      %v1478 = vpop.f32.mrf.mxu0
      %v1479 = vadd.f32 0.0, %v1478
      %v1480 = vpop.f32.mrf.mxu0
      %1481 = vmatprep.mubr.f32.mxu0 0.0
      %1482 = vmatmul.mubr.f32.gmra.mxu0 %v1210
      %v1483 = vpop.f32.mrf.mxu0
      %v1484 = vadd.f32 0.0, %v1483
      %v1485 = vpop.f32.mrf.mxu0
      %1486 = vmatprep.mubr.f32.mxu0 0.0
      %1487 = vmatmul.mubr.f32.gmra.mxu0 %v1213
      %v1488 = vpop.f32.mrf.mxu0
      %v1489 = vadd.f32 0.0, %v1488
      %v1490 = vpop.f32.mrf.mxu0
      %1491 = vmatprep.mubr.f32.mxu0 0.0
      %1492 = vmatmul.mubr.f32.gmra.mxu0 %v1216
      %v1493 = vpop.f32.mrf.mxu0
      %v1494 = vadd.f32 0.0, %v1493
      %v1495 = vpop.f32.mrf.mxu0
      %1496 = vmatprep.mubr.f32.mxu0 0.0
      %1497 = vmatmul.mubr.f32.gmra.mxu0 %v1219
      %v1498 = vpop.f32.mrf.mxu0
      %v1499 = vadd.f32 0.0, %v1498
      %v1500 = vpop.f32.mrf.mxu0
      %1501 = vmatprep.mubr.f32.mxu0 0.0
      %1502 = vmatmul.mubr.f32.gmra.mxu0 %v1222
      %v1503 = vpop.f32.mrf.mxu0
      %v1504 = vadd.f32 0.0, %v1503
      %v1505 = vpop.f32.mrf.mxu0
      %1506 = vmatprep.mubr.f32.mxu0 0.0
      %1507 = vmatmul.mubr.f32.gmra.mxu0 %v1225
      %v1508 = vpop.f32.mrf.mxu0
      %v1509 = vadd.f32 0.0, %v1508
      %v1510 = vpop.f32.mrf.mxu0
      %1511 = vmatprep.mubr.f32.mxu0 0.0
      %1512 = vmatmul.mubr.f32.gmra.mxu0 %v1228
      %v1513 = vpop.f32.mrf.mxu0
      %v1514 = vadd.f32 0.0, %v1513
      %v1515 = vpop.f32.mrf.mxu0
      %1516 = vmatprep.mubr.f32.mxu0 0.0
      %1517 = vmatmul.mubr.f32.gmra.mxu0 %v1231
      %v1518 = vpop.f32.mrf.mxu0
      %v1519 = vadd.f32 0.0, %v1518
      %v1520 = vpop.f32.mrf.mxu0
      %1521 = vmatprep.mubr.f32.mxu0 0.0
      %1522 = vmatmul.mubr.f32.gmra.mxu0 %v1234
      %v1523 = vpop.f32.mrf.mxu0
      %v1524 = vadd.f32 0.0, %v1523
      %v1525 = vpop.f32.mrf.mxu0
      %1526 = vmatprep.mubr.f32.mxu0 0.0
      %1527 = vmatmul.mubr.f32.gmra.mxu0 %v1237
      %v1528 = vpop.f32.mrf.mxu0
      %v1529 = vadd.f32 0.0, %v1528
      %v1530 = vpop.f32.mrf.mxu0
      %1531 = vmatprep.mubr.f32.mxu0 0.0
      %1532 = vmatmul.mubr.f32.gmra.mxu0 %v1240
      %v1533 = vpop.f32.mrf.mxu0
      %v1534 = vadd.f32 0.0, %v1533
      %v1535 = vpop.f32.mrf.mxu0
      %1536 = vmatprep.mubr.f32.mxu0 0.0
      %1537 = vmatmul.mubr.f32.gmra.mxu0 %v1243
      %v1538 = vpop.f32.mrf.mxu0
      %v1539 = vadd.f32 0.0, %v1538
      %v1540 = vpop.f32.mrf.mxu0
      %1541 = vmatprep.mubr.f32.mxu0 0.0
      %1542 = vmatmul.mubr.f32.gmra.mxu0 %v1246
      %v1543 = vpop.f32.mrf.mxu0
      %v1544 = vadd.f32 0.0, %v1543
      %v1545 = vpop.f32.mrf.mxu0
      %1546 = vmatprep.mubr.f32.mxu0 0.0
      %1547 = vmatmul.mubr.f32.gmra.mxu0 %v1249
      %v1548 = vpop.f32.mrf.mxu0
      %v1549 = vadd.f32 0.0, %v1548
      %v1550 = vpop.f32.mrf.mxu0
      %1551 = vmatprep.mubr.f32.mxu0 0.0
      %1552 = vmatmul.mubr.f32.gmra.mxu0 %v1252
      %v1553 = vpop.f32.mrf.mxu0
      %v1554 = vadd.f32 0.0, %v1553
      %v1555 = vpop.f32.mrf.mxu0
      %1556 = vmatprep.mubr.f32.mxu0 0.0
      %1557 = vmatmul.mubr.f32.gmra.mxu0 %v1255
      %v1558 = vpop.f32.mrf.mxu0
      %v1559 = vadd.f32 0.0, %v1558
      %v1560 = vpop.f32.mrf.mxu0
      %1561 = vdwg.mxu0
      %v1562 = vadd.f32 %v824, %v1324
      %v1563 = vadd.f32 %v829, %v1329
      %v1564 = vadd.f32 %v834, %v1334
      %v1565 = vadd.f32 %v839, %v1339
      %v1566 = vadd.f32 %v844, %v1344
      %v1567 = vadd.f32 %v849, %v1349
      %v1568 = vadd.f32 %v854, %v1354
      %v1569 = vadd.f32 %v859, %v1359
      %v1570 = vadd.f32 %v864, %v1364
      %v1571 = vadd.f32 %v869, %v1369
      %v1572 = vadd.f32 %v874, %v1374
      %v1573 = vadd.f32 %v879, %v1379
      %v1574 = vadd.f32 %v884, %v1384
      %v1575 = vadd.f32 %v889, %v1389
      %v1576 = vadd.f32 %v894, %v1394
      %v1577 = vadd.f32 %v899, %v1399
      %v1578 = vadd.f32 %v904, %v1404
      %v1579 = vadd.f32 %v909, %v1409
      %v1580 = vadd.f32 %v914, %v1414
      %v1581 = vadd.f32 %v919, %v1419
      %v1582 = vadd.f32 %v924, %v1424
      %v1583 = vadd.f32 %v929, %v1429
      %v1584 = vadd.f32 %v934, %v1434
      %v1585 = vadd.f32 %v939, %v1439
      %v1586 = vadd.f32 %v944, %v1444
      %v1587 = vadd.f32 %v949, %v1449
      %v1588 = vadd.f32 %v954, %v1454
      %v1589 = vadd.f32 %v959, %v1459
      %v1590 = vadd.f32 %v964, %v1464
      %v1591 = vadd.f32 %v969, %v1469
      %v1592 = vadd.f32 %v974, %v1474
      %v1593 = vadd.f32 %v979, %v1479
      %v1594 = vadd.f32 %v984, %v1484
      %v1595 = vadd.f32 %v989, %v1489
      %v1596 = vadd.f32 %v994, %v1494
      %v1597 = vadd.f32 %v999, %v1499
      %v1598 = vadd.f32 %v1004, %v1504
      %v1599 = vadd.f32 %v1009, %v1509
      %v1600 = vadd.f32 %v1014, %v1514
      %v1601 = vadd.f32 %v1019, %v1519
      %v1602 = vadd.f32 %v1024, %v1524
      %v1603 = vadd.f32 %v1029, %v1529
      %v1604 = vadd.f32 %v1034, %v1534
      %v1605 = vadd.f32 %v1039, %v1539
      %v1606 = vadd.f32 %v1044, %v1544
      %v1607 = vadd.f32 %v1049, %v1549
      %v1608 = vadd.f32 %v1054, %v1554
      %v1609 = vadd.f32 %v1059, %v1559
      %1610 = vst [vmem:[%s235] sm:$0xff] 0.0
      %1611 = vst [vmem:[%s235 + $0x8] sm:$0xff] 0.0
      %1612 = vst [vmem:[%s235 + $0x10] sm:$0xff] 0.0
      %1613 = vst [vmem:[%s235 + $0x18] sm:$0xff] %v1562
      %1614 = vst [vmem:[%s235 + $0x20] sm:$0xff] %v1563
      %1615 = vst [vmem:[%s235 + $0x28] sm:$0xff] %v1564
      %1616 = vst [vmem:[%s235 + $0x30] sm:$0xff] %v1565
      %1617 = vst [vmem:[%s235 + $0x38] sm:$0xff] %v1566
      %1618 = vst [vmem:[%s235 + $0x40] sm:$0xff] %v1567
      %1619 = vst [vmem:[%s235 + $0x48] sm:$0xff] %v1568
      %1620 = vst [vmem:[%s235 + $0x50] sm:$0xff] %v1569
      %1621 = vst [vmem:[%s235 + $0x58] sm:$0xff] %v1570
      %1622 = vst [vmem:[%s235 + $0x60] sm:$0xff] %v1571
      %1623 = vst [vmem:[%s235 + $0x68] sm:$0xff] %v1572
      %1624 = vst [vmem:[%s235 + $0x70] sm:$0xff] %v1573
      %1625 = vst [vmem:[%s235 + $0x78] sm:$0xff] %v1574
      %1626 = vst [vmem:[%s235 + $0x80] sm:$0xff] %v1575
      %1627 = vst [vmem:[%s235 + $0x88] sm:$0xff] %v1576
      %1628 = vst [vmem:[%s235 + $0x90] sm:$0xff] %v1577
      %1629 = vst [vmem:[%s235 + $0x98] sm:$0xff] %v1578
      %1630 = vst [vmem:[%s235 + $0xa0] sm:$0xff] %v1579
      %1631 = vst [vmem:[%s235 + $0xa8] sm:$0xff] %v1580
      %1632 = vst [vmem:[%s235 + $0xb0] sm:$0xff] %v1581
      %1633 = vst [vmem:[%s235 + $0xb8] sm:$0xff] %v1582
      %1634 = vst [vmem:[%s235 + $0xc0] sm:$0xff] %v1583
      %1635 = vst [vmem:[%s235 + $0xc8] sm:$0xff] %v1584
      %1636 = vst [vmem:[%s235 + $0xd0] sm:$0xff] %v1585
      %1637 = vst [vmem:[%s235 + $0xd8] sm:$0xff] %v1586
      %1638 = vst [vmem:[%s235 + $0xe0] sm:$0xff] %v1587
      %1639 = vst [vmem:[%s235 + $0xe8] sm:$0xff] %v1588
      %1640 = vst [vmem:[%s235 + $0xf0] sm:$0xff] %v1589
      %1641 = vst [vmem:[%s235 + $0xf8] sm:$0xff] %v1590
      %1642 = vst [vmem:[%s235 + $0x100] sm:$0xff] %v1591
      %1643 = vst [vmem:[%s235 + $0x108] sm:$0xff] %v1592
      %1644 = vst [vmem:[%s235 + $0x110] sm:$0xff] %v1593
      %1645 = vst [vmem:[%s235 + $0x118] sm:$0xff] %v1594
      %1646 = vst [vmem:[%s235 + $0x120] sm:$0xff] %v1595
      %1647 = vst [vmem:[%s235 + $0x128] sm:$0xff] %v1596
      %1648 = vst [vmem:[%s235 + $0x130] sm:$0xff] %v1597
      %1649 = vst [vmem:[%s235 + $0x138] sm:$0xff] %v1598
      %1650 = vst [vmem:[%s235 + $0x140] sm:$0xff] %v1599
      %1651 = vst [vmem:[%s235 + $0x148] sm:$0xff] %v1600
      %1652 = vst [vmem:[%s235 + $0x150] sm:$0xff] %v1601
      %1653 = vst [vmem:[%s235 + $0x158] sm:$0xff] %v1602
      %1654 = vst [vmem:[%s235 + $0x160] sm:$0xff] %v1603
      %1655 = vst [vmem:[%s235 + $0x168] sm:$0xff] %v1604
      %1656 = vst [vmem:[%s235 + $0x170] sm:$0xff] %v1605
      %1657 = vst [vmem:[%s235 + $0x178] sm:$0xff] %v1606
      %1658 = vst [vmem:[%s235 + $0x180] sm:$0xff] %v1607
      %1659 = vst [vmem:[%s235 + $0x188] sm:$0xff] %v1608
      %1660 = vst [vmem:[%s235 + $0x190] sm:$0xff] %v1609
      %1661 = vst [vmem:[%s235 + $0x198] sm:$0xff] 0.0
      %1662 = vst [vmem:[%s235 + $0x1a0] sm:$0xff] 0.0
      %1663 = vst [vmem:[%s235 + $0x1a8] sm:$0xff] 0.0
      %1664 = vst [vmem:[%s235 + $0x1b0] sm:$0xff] 0.0
      %1665 = vst [vmem:[%s235 + $0x1b8] sm:$0xff] 0.0
      %1666 = vst [vmem:[%s235 + $0x1c0] sm:$0xff] 0.0
      %v1667 = vld [vmem:[%s2] sm:$0xff]
      %v1668 = vld [vmem:[%s2 + $0x8] sm:$0xff]
      %v1669 = vld [vmem:[%s2 + $0x10] sm:$0xff]
      %v1670 = vld [vmem:[%s2 + $0x18] sm:$0xff]
      %v1671 = vld [vmem:[%s2 + $0x20] sm:$0xff]
      %v1672 = vld [vmem:[%s2 + $0x28] sm:$0xff]
      %v1673 = vld [vmem:[%s2 + $0x30] sm:$0xff]
      %v1674 = vld [vmem:[%s2 + $0x38] sm:$0xff]
      %v1675 = vld [vmem:[%s2 + $0x40] sm:$0xff]
      %v1676 = vld [vmem:[%s2 + $0x48] sm:$0xff]
      %v1677 = vld [vmem:[%s2 + $0x50] sm:$0xff]
      %v1678 = vld [vmem:[%s2 + $0x58] sm:$0xff]
      %v1679 = vld [vmem:[%s2 + $0x60] sm:$0xff]
      %v1680 = vld [vmem:[%s2 + $0x68] sm:$0xff]
      %v1681 = vld [vmem:[%s2 + $0x70] sm:$0xff]
      %v1682 = vld [vmem:[%s2 + $0x78] sm:$0xff]
      %v1683 = vld [vmem:[%s2 + $0x80] sm:$0xff]
      %v1684 = vld [vmem:[%s2 + $0x88] sm:$0xff]
      %v1685 = vld [vmem:[%s2 + $0x90] sm:$0xff]
      %v1686 = vld [vmem:[%s2 + $0x98] sm:$0xff]
      %v1687 = vld [vmem:[%s2 + $0xa0] sm:$0xff]
      %v1688 = vld [vmem:[%s2 + $0xa8] sm:$0xff]
      %v1689 = vld [vmem:[%s2 + $0xb0] sm:$0xff]
      %v1690 = vld [vmem:[%s2 + $0xb8] sm:$0xff]
      %v1691 = vld [vmem:[%s2 + $0xc0] sm:$0xff]
      %v1692 = vld [vmem:[%s2 + $0xc8] sm:$0xff]
      %v1693 = vld [vmem:[%s2 + $0xd0] sm:$0xff]
      %v1694 = vld [vmem:[%s2 + $0xd8] sm:$0xff]
      %v1695 = vld [vmem:[%s2 + $0xe0] sm:$0xff]
      %v1696 = vld [vmem:[%s2 + $0xe8] sm:$0xff]
      %v1697 = vld [vmem:[%s2 + $0xf0] sm:$0xff]
      %v1698 = vld [vmem:[%s2 + $0xf8] sm:$0xff]
      %v1699 = vld [vmem:[%s2 + $0x100] sm:$0xff]
      %v1700 = vld [vmem:[%s2 + $0x108] sm:$0xff]
      %v1701 = vld [vmem:[%s2 + $0x110] sm:$0xff]
      %v1702 = vld [vmem:[%s2 + $0x118] sm:$0xff]
      %v1703 = vld [vmem:[%s2 + $0x120] sm:$0xff]
      %v1704 = vld [vmem:[%s2 + $0x128] sm:$0xff]
      %v1705 = vld [vmem:[%s2 + $0x130] sm:$0xff]
      %v1706 = vld [vmem:[%s2 + $0x138] sm:$0xff]
      %v1707 = vld [vmem:[%s2 + $0x140] sm:$0xff]
      %v1708 = vld [vmem:[%s2 + $0x148] sm:$0xff]
      %v1709 = vld [vmem:[%s2 + $0x150] sm:$0xff]
      %v1710 = vld [vmem:[%s2 + $0x158] sm:$0xff]
      %v1711 = vld [vmem:[%s2 + $0x160] sm:$0xff]
      %v1712 = vld [vmem:[%s2 + $0x168] sm:$0xff]
      %v1713 = vld [vmem:[%s2 + $0x170] sm:$0xff]
      %v1714 = vld [vmem:[%s2 + $0x178] sm:$0xff]
      %1716 = vset.pattern.permute.xlu0 0
      %1717 = vperm.xlu0 %1716, %v1667
      %v1718 = vpop.permute.xlu0 %1717
      %1721 = vset.pattern.permute.xlu0 0
      %1722 = vperm.xlu0 %1721, %v1668
      %v1723 = vpop.permute.xlu0 %1722
      %1726 = vset.pattern.permute.xlu0 0
      %1727 = vperm.xlu0 %1726, %v1669
      %v1728 = vpop.permute.xlu0 %1727
      %1731 = vset.pattern.permute.xlu0 0
      %1732 = vperm.xlu0 %1731, %v1670
      %v1733 = vpop.permute.xlu0 %1732
      %1736 = vset.pattern.permute.xlu0 0
      %1737 = vperm.xlu0 %1736, %v1671
      %v1738 = vpop.permute.xlu0 %1737
      %1741 = vset.pattern.permute.xlu0 0
      %1742 = vperm.xlu0 %1741, %v1672
      %v1743 = vpop.permute.xlu0 %1742
      %1746 = vset.pattern.permute.xlu0 0
      %1747 = vperm.xlu0 %1746, %v1673
      %v1748 = vpop.permute.xlu0 %1747
      %1751 = vset.pattern.permute.xlu0 0
      %1752 = vperm.xlu0 %1751, %v1674
      %v1753 = vpop.permute.xlu0 %1752
      %1756 = vset.pattern.permute.xlu0 0
      %1757 = vperm.xlu0 %1756, %v1675
      %v1758 = vpop.permute.xlu0 %1757
      %1761 = vset.pattern.permute.xlu0 0
      %1762 = vperm.xlu0 %1761, %v1676
      %v1763 = vpop.permute.xlu0 %1762
      %1766 = vset.pattern.permute.xlu0 0
      %1767 = vperm.xlu0 %1766, %v1677
      %v1768 = vpop.permute.xlu0 %1767
      %1771 = vset.pattern.permute.xlu0 0
      %1772 = vperm.xlu0 %1771, %v1678
      %v1773 = vpop.permute.xlu0 %1772
      %1776 = vset.pattern.permute.xlu0 0
      %1777 = vperm.xlu0 %1776, %v1679
      %v1778 = vpop.permute.xlu0 %1777
      %1781 = vset.pattern.permute.xlu0 0
      %1782 = vperm.xlu0 %1781, %v1680
      %v1783 = vpop.permute.xlu0 %1782
      %1786 = vset.pattern.permute.xlu0 0
      %1787 = vperm.xlu0 %1786, %v1681
      %v1788 = vpop.permute.xlu0 %1787
      %1791 = vset.pattern.permute.xlu0 0
      %1792 = vperm.xlu0 %1791, %v1682
      %v1793 = vpop.permute.xlu0 %1792
      %1796 = vset.pattern.permute.xlu0 0
      %1797 = vperm.xlu0 %1796, %v1683
      %v1798 = vpop.permute.xlu0 %1797
      %1801 = vset.pattern.permute.xlu0 0
      %1802 = vperm.xlu0 %1801, %v1684
      %v1803 = vpop.permute.xlu0 %1802
      %1806 = vset.pattern.permute.xlu0 0
      %1807 = vperm.xlu0 %1806, %v1685
      %v1808 = vpop.permute.xlu0 %1807
      %1811 = vset.pattern.permute.xlu0 0
      %1812 = vperm.xlu0 %1811, %v1686
      %v1813 = vpop.permute.xlu0 %1812
      %1816 = vset.pattern.permute.xlu0 0
      %1817 = vperm.xlu0 %1816, %v1687
      %v1818 = vpop.permute.xlu0 %1817
      %1821 = vset.pattern.permute.xlu0 0
      %1822 = vperm.xlu0 %1821, %v1688
      %v1823 = vpop.permute.xlu0 %1822
      %1826 = vset.pattern.permute.xlu0 0
      %1827 = vperm.xlu0 %1826, %v1689
      %v1828 = vpop.permute.xlu0 %1827
      %1831 = vset.pattern.permute.xlu0 0
      %1832 = vperm.xlu0 %1831, %v1690
      %v1833 = vpop.permute.xlu0 %1832
      %1836 = vset.pattern.permute.xlu0 0
      %1837 = vperm.xlu0 %1836, %v1691
      %v1838 = vpop.permute.xlu0 %1837
      %1841 = vset.pattern.permute.xlu0 0
      %1842 = vperm.xlu0 %1841, %v1692
      %v1843 = vpop.permute.xlu0 %1842
      %1846 = vset.pattern.permute.xlu0 0
      %1847 = vperm.xlu0 %1846, %v1693
      %v1848 = vpop.permute.xlu0 %1847
      %1851 = vset.pattern.permute.xlu0 0
      %1852 = vperm.xlu0 %1851, %v1694
      %v1853 = vpop.permute.xlu0 %1852
      %1856 = vset.pattern.permute.xlu0 0
      %1857 = vperm.xlu0 %1856, %v1695
      %v1858 = vpop.permute.xlu0 %1857
      %1861 = vset.pattern.permute.xlu0 0
      %1862 = vperm.xlu0 %1861, %v1696
      %v1863 = vpop.permute.xlu0 %1862
      %1866 = vset.pattern.permute.xlu0 0
      %1867 = vperm.xlu0 %1866, %v1697
      %v1868 = vpop.permute.xlu0 %1867
      %1871 = vset.pattern.permute.xlu0 0
      %1872 = vperm.xlu0 %1871, %v1698
      %v1873 = vpop.permute.xlu0 %1872
      %1876 = vset.pattern.permute.xlu0 0
      %1877 = vperm.xlu0 %1876, %v1699
      %v1878 = vpop.permute.xlu0 %1877
      %1881 = vset.pattern.permute.xlu0 0
      %1882 = vperm.xlu0 %1881, %v1700
      %v1883 = vpop.permute.xlu0 %1882
      %1886 = vset.pattern.permute.xlu0 0
      %1887 = vperm.xlu0 %1886, %v1701
      %v1888 = vpop.permute.xlu0 %1887
      %1891 = vset.pattern.permute.xlu0 0
      %1892 = vperm.xlu0 %1891, %v1702
      %v1893 = vpop.permute.xlu0 %1892
      %1896 = vset.pattern.permute.xlu0 0
      %1897 = vperm.xlu0 %1896, %v1703
      %v1898 = vpop.permute.xlu0 %1897
      %1901 = vset.pattern.permute.xlu0 0
      %1902 = vperm.xlu0 %1901, %v1704
      %v1903 = vpop.permute.xlu0 %1902
      %1906 = vset.pattern.permute.xlu0 0
      %1907 = vperm.xlu0 %1906, %v1705
      %v1908 = vpop.permute.xlu0 %1907
      %1911 = vset.pattern.permute.xlu0 0
      %1912 = vperm.xlu0 %1911, %v1706
      %v1913 = vpop.permute.xlu0 %1912
      %1916 = vset.pattern.permute.xlu0 0
      %1917 = vperm.xlu0 %1916, %v1707
      %v1918 = vpop.permute.xlu0 %1917
      %1921 = vset.pattern.permute.xlu0 0
      %1922 = vperm.xlu0 %1921, %v1708
      %v1923 = vpop.permute.xlu0 %1922
      %1926 = vset.pattern.permute.xlu0 0
      %1927 = vperm.xlu0 %1926, %v1709
      %v1928 = vpop.permute.xlu0 %1927
      %1931 = vset.pattern.permute.xlu0 0
      %1932 = vperm.xlu0 %1931, %v1710
      %v1933 = vpop.permute.xlu0 %1932
      %1936 = vset.pattern.permute.xlu0 0
      %1937 = vperm.xlu0 %1936, %v1711
      %v1938 = vpop.permute.xlu0 %1937
      %1941 = vset.pattern.permute.xlu0 0
      %1942 = vperm.xlu0 %1941, %v1712
      %v1943 = vpop.permute.xlu0 %1942
      %1946 = vset.pattern.permute.xlu0 0
      %1947 = vperm.xlu0 %1946, %v1713
      %v1948 = vpop.permute.xlu0 %1947
      %1951 = vset.pattern.permute.xlu0 0
      %1952 = vperm.xlu0 %1951, %v1714
      %v1953 = vpop.permute.xlu0 %1952
      %v1955 = vmul.f32 %v1562, %v1718
      %v1956 = vmul.f32 %v1563, %v1723
      %v1957 = vmul.f32 %v1564, %v1728
      %v1958 = vmul.f32 %v1565, %v1733
      %v1959 = vmul.f32 %v1566, %v1738
      %v1960 = vmul.f32 %v1567, %v1743
      %v1961 = vmul.f32 %v1568, %v1748
      %v1962 = vmul.f32 %v1569, %v1753
      %v1963 = vmul.f32 %v1570, %v1758
      %v1964 = vmul.f32 %v1571, %v1763
      %v1965 = vmul.f32 %v1572, %v1768
      %v1966 = vmul.f32 %v1573, %v1773
      %v1967 = vmul.f32 %v1574, %v1778
      %v1968 = vmul.f32 %v1575, %v1783
      %v1969 = vmul.f32 %v1576, %v1788
      %v1970 = vmul.f32 %v1577, %v1793
      %v1971 = vmul.f32 %v1578, %v1798
      %v1972 = vmul.f32 %v1579, %v1803
      %v1973 = vmul.f32 %v1580, %v1808
      %v1974 = vmul.f32 %v1581, %v1813
      %v1975 = vmul.f32 %v1582, %v1818
      %v1976 = vmul.f32 %v1583, %v1823
      %v1977 = vmul.f32 %v1584, %v1828
      %v1978 = vmul.f32 %v1585, %v1833
      %v1979 = vmul.f32 %v1586, %v1838
      %v1980 = vmul.f32 %v1587, %v1843
      %v1981 = vmul.f32 %v1588, %v1848
      %v1982 = vmul.f32 %v1589, %v1853
      %v1983 = vmul.f32 %v1590, %v1858
      %v1984 = vmul.f32 %v1591, %v1863
      %v1985 = vmul.f32 %v1592, %v1868
      %v1986 = vmul.f32 %v1593, %v1873
      %v1987 = vmul.f32 %v1594, %v1878
      %v1988 = vmul.f32 %v1595, %v1883
      %v1989 = vmul.f32 %v1596, %v1888
      %v1990 = vmul.f32 %v1597, %v1893
      %v1991 = vmul.f32 %v1598, %v1898
      %v1992 = vmul.f32 %v1599, %v1903
      %v1993 = vmul.f32 %v1600, %v1908
      %v1994 = vmul.f32 %v1601, %v1913
      %v1995 = vmul.f32 %v1602, %v1918
      %v1996 = vmul.f32 %v1603, %v1923
      %v1997 = vmul.f32 %v1604, %v1928
      %v1998 = vmul.f32 %v1605, %v1933
      %v1999 = vmul.f32 %v1606, %v1938
      %v2000 = vmul.f32 %v1607, %v1943
      %v2001 = vmul.f32 %v1608, %v1948
      %v2002 = vmul.f32 %v1609, %v1953
      %v2003 = vadd.f32 %v1955, %v1956
      %v2004 = vadd.f32 %v2003, %v1957
      %v2005 = vadd.f32 %v2004, %v1958
      %v2006 = vadd.f32 %v2005, %v1959
      %v2007 = vadd.f32 %v2006, %v1960
      %v2008 = vadd.f32 %v2007, %v1961
      %v2009 = vadd.f32 %v2008, %v1962
      %v2010 = vadd.f32 %v2009, %v1963
      %v2011 = vadd.f32 %v2010, %v1964
      %v2012 = vadd.f32 %v2011, %v1965
      %v2013 = vadd.f32 %v2012, %v1966
      %v2014 = vadd.f32 %v2013, %v1967
      %v2015 = vadd.f32 %v2014, %v1968
      %v2016 = vadd.f32 %v2015, %v1969
      %v2017 = vadd.f32 %v2016, %v1970
      %v2018 = vadd.f32 %v2017, %v1971
      %v2019 = vadd.f32 %v2018, %v1972
      %v2020 = vadd.f32 %v2019, %v1973
      %v2021 = vadd.f32 %v2020, %v1974
      %v2022 = vadd.f32 %v2021, %v1975
      %v2023 = vadd.f32 %v2022, %v1976
      %v2024 = vadd.f32 %v2023, %v1977
      %v2025 = vadd.f32 %v2024, %v1978
      %v2026 = vadd.f32 %v2025, %v1979
      %v2027 = vadd.f32 %v2026, %v1980
      %v2028 = vadd.f32 %v2027, %v1981
      %v2029 = vadd.f32 %v2028, %v1982
      %v2030 = vadd.f32 %v2029, %v1983
      %v2031 = vadd.f32 %v2030, %v1984
      %v2032 = vadd.f32 %v2031, %v1985
      %v2033 = vadd.f32 %v2032, %v1986
      %v2034 = vadd.f32 %v2033, %v1987
      %v2035 = vadd.f32 %v2034, %v1988
      %v2036 = vadd.f32 %v2035, %v1989
      %v2037 = vadd.f32 %v2036, %v1990
      %v2038 = vadd.f32 %v2037, %v1991
      %v2039 = vadd.f32 %v2038, %v1992
      %v2040 = vadd.f32 %v2039, %v1993
      %v2041 = vadd.f32 %v2040, %v1994
      %v2042 = vadd.f32 %v2041, %v1995
      %v2043 = vadd.f32 %v2042, %v1996
      %v2044 = vadd.f32 %v2043, %v1997
      %v2045 = vadd.f32 %v2044, %v1998
      %v2046 = vadd.f32 %v2045, %v1999
      %v2047 = vadd.f32 %v2046, %v2000
      %v2048 = vadd.f32 %v2047, %v2001
      %v2049 = vadd.f32 %v2048, %v2002
      %v2050 = vrot.slane %v2049, 4
      %v2051 = vadd.f32 %v2049, %v2050
      %v2052 = vrot.slane %v2051, 2
      %v2053 = vadd.f32 %v2051, %v2052
      %v2054 = vrot.slane %v2053, 1
      %v2055 = vadd.f32 %v2053, %v2054
      %2056 = vst [vmem:[%s238] sm:$0x1] %v2055
      %v2057 = vmul.f32 %v1955, %v1562
      %v2058 = vmul.f32 %v1956, %v1563
      %v2059 = vmul.f32 %v1957, %v1564
      %v2060 = vmul.f32 %v1958, %v1565
      %v2061 = vmul.f32 %v1959, %v1566
      %v2062 = vmul.f32 %v1960, %v1567
      %v2063 = vmul.f32 %v1961, %v1568
      %v2064 = vmul.f32 %v1962, %v1569
      %v2065 = vmul.f32 %v1963, %v1570
      %v2066 = vmul.f32 %v1964, %v1571
      %v2067 = vmul.f32 %v1965, %v1572
      %v2068 = vmul.f32 %v1966, %v1573
      %v2069 = vmul.f32 %v1967, %v1574
      %v2070 = vmul.f32 %v1968, %v1575
      %v2071 = vmul.f32 %v1969, %v1576
      %v2072 = vmul.f32 %v1970, %v1577
      %v2073 = vmul.f32 %v1971, %v1578
      %v2074 = vmul.f32 %v1972, %v1579
      %v2075 = vmul.f32 %v1973, %v1580
      %v2076 = vmul.f32 %v1974, %v1581
      %v2077 = vmul.f32 %v1975, %v1582
      %v2078 = vmul.f32 %v1976, %v1583
      %v2079 = vmul.f32 %v1977, %v1584
      %v2080 = vmul.f32 %v1978, %v1585
      %v2081 = vmul.f32 %v1979, %v1586
      %v2082 = vmul.f32 %v1980, %v1587
      %v2083 = vmul.f32 %v1981, %v1588
      %v2084 = vmul.f32 %v1982, %v1589
      %v2085 = vmul.f32 %v1983, %v1590
      %v2086 = vmul.f32 %v1984, %v1591
      %v2087 = vmul.f32 %v1985, %v1592
      %v2088 = vmul.f32 %v1986, %v1593
      %v2089 = vmul.f32 %v1987, %v1594
      %v2090 = vmul.f32 %v1988, %v1595
      %v2091 = vmul.f32 %v1989, %v1596
      %v2092 = vmul.f32 %v1990, %v1597
      %v2093 = vmul.f32 %v1991, %v1598
      %v2094 = vmul.f32 %v1992, %v1599
      %v2095 = vmul.f32 %v1993, %v1600
      %v2096 = vmul.f32 %v1994, %v1601
      %v2097 = vmul.f32 %v1995, %v1602
      %v2098 = vmul.f32 %v1996, %v1603
      %v2099 = vmul.f32 %v1997, %v1604
      %v2100 = vmul.f32 %v1998, %v1605
      %v2101 = vmul.f32 %v1999, %v1606
      %v2102 = vmul.f32 %v2000, %v1607
      %v2103 = vmul.f32 %v2001, %v1608
      %v2104 = vmul.f32 %v2002, %v1609
      %v2105 = vadd.f32 %v2057, %v2058
      %v2106 = vadd.f32 %v2105, %v2059
      %v2107 = vadd.f32 %v2106, %v2060
      %v2108 = vadd.f32 %v2107, %v2061
      %v2109 = vadd.f32 %v2108, %v2062
      %v2110 = vadd.f32 %v2109, %v2063
      %v2111 = vadd.f32 %v2110, %v2064
      %v2112 = vadd.f32 %v2111, %v2065
      %v2113 = vadd.f32 %v2112, %v2066
      %v2114 = vadd.f32 %v2113, %v2067
      %v2115 = vadd.f32 %v2114, %v2068
      %v2116 = vadd.f32 %v2115, %v2069
      %v2117 = vadd.f32 %v2116, %v2070
      %v2118 = vadd.f32 %v2117, %v2071
      %v2119 = vadd.f32 %v2118, %v2072
      %v2120 = vadd.f32 %v2119, %v2073
      %v2121 = vadd.f32 %v2120, %v2074
      %v2122 = vadd.f32 %v2121, %v2075
      %v2123 = vadd.f32 %v2122, %v2076
      %v2124 = vadd.f32 %v2123, %v2077
      %v2125 = vadd.f32 %v2124, %v2078
      %v2126 = vadd.f32 %v2125, %v2079
      %v2127 = vadd.f32 %v2126, %v2080
      %v2128 = vadd.f32 %v2127, %v2081
      %v2129 = vadd.f32 %v2128, %v2082
      %v2130 = vadd.f32 %v2129, %v2083
      %v2131 = vadd.f32 %v2130, %v2084
      %v2132 = vadd.f32 %v2131, %v2085
      %v2133 = vadd.f32 %v2132, %v2086
      %v2134 = vadd.f32 %v2133, %v2087
      %v2135 = vadd.f32 %v2134, %v2088
      %v2136 = vadd.f32 %v2135, %v2089
      %v2137 = vadd.f32 %v2136, %v2090
      %v2138 = vadd.f32 %v2137, %v2091
      %v2139 = vadd.f32 %v2138, %v2092
      %v2140 = vadd.f32 %v2139, %v2093
      %v2141 = vadd.f32 %v2140, %v2094
      %v2142 = vadd.f32 %v2141, %v2095
      %v2143 = vadd.f32 %v2142, %v2096
      %v2144 = vadd.f32 %v2143, %v2097
      %v2145 = vadd.f32 %v2144, %v2098
      %v2146 = vadd.f32 %v2145, %v2099
      %v2147 = vadd.f32 %v2146, %v2100
      %v2148 = vadd.f32 %v2147, %v2101
      %v2149 = vadd.f32 %v2148, %v2102
      %v2150 = vadd.f32 %v2149, %v2103
      %v2151 = vadd.f32 %v2150, %v2104
      %v2152 = vrot.slane %v2151, 4
      %v2153 = vadd.f32 %v2151, %v2152
      %v2154 = vrot.slane %v2153, 2
      %v2155 = vadd.f32 %v2153, %v2154
      %v2156 = vrot.slane %v2155, 1
      %v2157 = vadd.f32 %v2155, %v2156
      %2158 = vst [vmem:[%s241] sm:$0x1] %v2157
      %p2159 = scmp.lt.s32.totalorder %s17, 1
      %s2160 = scalar_select %p2159, %s17, 1
      %s2161 = smul.addr %s2160, 57
      %s2162 = smul.addr %s2161, 8
      %s2163 = scalar_lea.vmem %s3, %s2162
      %p2164 = scmp.lt.s32.totalorder %s17, 1
      %s2165 = scalar_select %p2164, %s17, 1
      %s2166 = scalar_lea.vmem %s4, %s2165
      %p2167 = scmp.lt.s32.totalorder %s17, 1
      %s2168 = scalar_select %p2167, %s17, 1
      %s2169 = scalar_lea.vmem %s5, %s2168
      // Predicated region
      $region33: #{block_forward.3} parent=31 // pred_check
        %p2170 = pneg %p103
      $region34: #{block_forward.3} parent=31 // pred_check_branch
        %2172 = sbr.rel (%p2170) target = $region36
      $region35: #{block_forward.3} parent=31 // pred_region
        _
      $region36: #{block_forward.3} parent=31 // pred_fallthru
        _
      // Predicated region
      $region37: #{block_forward.3} parent=31 // pred_check
        %p2173 = pneg %p129
      $region38: #{block_forward.3} parent=31 // pred_check_branch
        %2175 = sbr.rel (%p2173) target = $region40
      $region39: #{block_forward.3} parent=31 // pred_region
        _
      $region40: #{block_forward.3} parent=31 // pred_fallthru
        _
      // Predicated region
      $region41: #{block_forward.3} parent=31 // pred_check
        %p2176 = pneg %p155
      $region42: #{block_forward.3} parent=31 // pred_check_branch
        %2178 = sbr.rel (%p2176) target = $region44
      $region43: #{block_forward.3} parent=31 // pred_region
        _
      $region44: #{block_forward.3} parent=31 // pred_fallthru
        _
    $region32: #{block_forward.3} parent=5 // pred_fallthru
      _
    %p2179 = scmp.le.s32.totalorder 2, %s12
    // Predicated region
    $region45: #{block_forward.3} parent=5 // pred_check
      %p2180 = pneg %p2179
    $region46: #{block_forward.3} parent=5 // pred_check_branch
      %2182 = sbr.rel (%p2180) target = $region48
    $region47: #{block_forward.3} parent=5 // pred_region
      %s2183 = ssub.s32 %s12, 2
      // Predicated region
      $region49: #{block_forward.3} parent=47 // pred_check
        %p2184 = pneg %p109
      $region50: #{block_forward.3} parent=47 // pred_check_branch
        %2186 = sbr.rel (%p2184) target = $region52
      $region51: #{block_forward.3} parent=47 // pred_region
        %p2187 = scmp.lt.s32.totalorder %s18, 1
        %s2188 = scalar_select %p2187, %s18, 1
        %s2189 = smul.addr %s2188, 57
        %s2190 = smul.addr %s2189, 8
        %s2191 = scalar_lea.vmem %s3, %s2190
      $region52: #{block_forward.3} parent=47 // pred_fallthru
        _
      // Predicated region
      $region53: #{block_forward.3} parent=47 // pred_check
        %p2192 = pneg %p135
      $region54: #{block_forward.3} parent=47 // pred_check_branch
        %2194 = sbr.rel (%p2192) target = $region56
      $region55: #{block_forward.3} parent=47 // pred_region
        %p2195 = scmp.lt.s32.totalorder %s18, 1
        %s2196 = scalar_select %p2195, %s18, 1
        %s2197 = scalar_lea.vmem %s4, %s2196
      $region56: #{block_forward.3} parent=47 // pred_fallthru
        _
      // Predicated region
      $region57: #{block_forward.3} parent=47 // pred_check
        %p2198 = pneg %p161
      $region58: #{block_forward.3} parent=47 // pred_check_branch
        %2200 = sbr.rel (%p2198) target = $region60
      $region59: #{block_forward.3} parent=47 // pred_region
        %p2201 = scmp.lt.s32.totalorder %s18, 1
        %s2202 = scalar_select %p2201, %s18, 1
        %s2203 = scalar_lea.vmem %s5, %s2202
      $region60: #{block_forward.3} parent=47 // pred_fallthru
        _
    $region48: #{block_forward.3} parent=5 // pred_fallthru
      _
  $region6: #{block_forward.3} parent=0 // loop_footer
    %s16 = sadd.s32 1, %s12
  $region7: #{block_forward.3} parent=0 // loop_footer_branch
    %11 = sbr.rel target = $region3
  $region8: #{block_forward.3} parent=0 // loop_exit
    _

// kernel: block_forward.5
$region0: #{block_forward.5}
  #allocation0 [shape = 'u32[]', space=smem, size = 0x4, offset = 0x4, fixed_abs, tag = 'smem constant byte address 0x4 - core index']
  #allocation1 [shape = 'u32[144,128]{1,0:T(1,128)}', space=vmem, size = 0x12000, scoped, tag = 'internal scratch']
  %s0 = inlined_call_operand.vmem [shape: f32[2,456,128], index: 0, kind: input, shape index: {}, may-alias: {0,4}]
  %s1 = inlined_call_operand.vmem [shape: f32[1,128], index: 1, kind: input, shape index: {}]
  %s2 = inlined_call_operand.vmem [shape: f32[1,128], index: 2, kind: input, shape index: {}]
  %s3 = inlined_call_operand.vmem [shape: f32[456,1], index: 3, kind: input, shape index: {}]
  %s4 = inlined_call_operand.vmem [shape: f32[2,456,128], index: 4, kind: output, shape index: {}, may-alias: {0,4}]
  %s5 = sld [smem:[#allocation0]]
  $region49: #{block_forward.5} parent=0
    _
  %s7 = ssub.s32 1, %s5
  %s8 = scalar_select 0, %s7, %s5
  loop: start=0, step=1, limit=4
  $region2: #{block_forward.5} parent=0 // loop_pre_header
    _
  $region3: #{block_forward.5} parent=0 // loop_header
    %s10 = sphi 0, %s14
    %p11 = scmp.ge.s32.totalorder %s10, 4
    %s20 = sphi 0, %s22
    %s23 = sphi 0, %s20
    %s24 = sphi 0, %s23
    %s40 = sphi 0, %s24
    %s44 = sphi 0, %s44
    %s46 = sphi 0, %s44
    %s47 = sphi 0, %s46
    %s61 = sphi 0, %s47
    %s65 = sphi 0, %s65
    %s67 = sphi 0, %s65
    %s68 = sphi 0, %s67
    %s82 = sphi 0, %s68
    %s86 = sphi 0, %s86
    %s88 = sphi 0, %s86
    %s89 = sphi 0, %s88
    %s103 = sphi 0, %s89
    %s109 = sphi 0, %s111
    %s112 = sphi 0, %s109
    %s113 = sphi 0, %s112
    %s129 = sphi 0, %s113
  $region4: #{block_forward.5} parent=0 // loop_header_branch
    %13 = sbr.rel (%p11) target = $region8
  $region5: #{block_forward.5} parent=0 // loop_body
    %s15 = ssub.s32 %s10, 1
    %s16 = ssub.s32 %s10, 2
    %s17 = sadd.s32 %s10, 1
    %s18 = ssub.s32 %s10, %s17
    %p19 = scmp.eq.s32.totalorder %s18, 0
    %s21 = sadd.s32 %s20, 1
    %s22 = scalar_select %p19, %s20, %s21
    %p25 = pneg %p19
    %p26 = scmp.eq.s32.totalorder %s10, 1
    %p27 = por %p25, %p26
    %p28 = scmp.ne.s32.totalorder %s20, %s23
    %p29 = scmp.eq.s32.totalorder %s10, 0
    %p30 = por %p28, %p29
    %p31 = scmp.ne.s32.totalorder %s20, %s23
    %p32 = scmp.eq.s32.totalorder %s15, 1
    %p33 = por %p31, %p32
    %p34 = scmp.ne.s32.totalorder %s23, %s24
    %p35 = scmp.eq.s32.totalorder %s15, 0
    %p36 = por %p34, %p35
    %p37 = scmp.ne.s32.totalorder %s23, %s24
    %p38 = scmp.eq.s32.totalorder %s16, 1
    %p39 = por %p37, %p38
    %p41 = scmp.ne.s32.totalorder %s24, %s40
    %p42 = scmp.eq.s32.totalorder %s16, 0
    %p43 = por %p41, %p42
    %s45 = sadd.s32 %s44, 1
    %p48 = scmp.eq.s32.totalorder %s10, 1
    %p49 = scmp.ne.s32.totalorder %s44, %s46
    %p50 = scmp.eq.s32.totalorder %s10, 0
    %p51 = por %p49, %p50
    %p52 = scmp.ne.s32.totalorder %s44, %s46
    %p53 = scmp.eq.s32.totalorder %s15, 1
    %p54 = por %p52, %p53
    %p55 = scmp.ne.s32.totalorder %s46, %s47
    %p56 = scmp.eq.s32.totalorder %s15, 0
    %p57 = por %p55, %p56
    %p58 = scmp.ne.s32.totalorder %s46, %s47
    %p59 = scmp.eq.s32.totalorder %s16, 1
    %p60 = por %p58, %p59
    %p62 = scmp.ne.s32.totalorder %s47, %s61
    %p63 = scmp.eq.s32.totalorder %s16, 0
    %p64 = por %p62, %p63
    %s66 = sadd.s32 %s65, 1
    %p69 = scmp.eq.s32.totalorder %s10, 1
    %p70 = scmp.ne.s32.totalorder %s65, %s67
    %p71 = scmp.eq.s32.totalorder %s10, 0
    %p72 = por %p70, %p71
    %p73 = scmp.ne.s32.totalorder %s65, %s67
    %p74 = scmp.eq.s32.totalorder %s15, 1
    %p75 = por %p73, %p74
    %p76 = scmp.ne.s32.totalorder %s67, %s68
    %p77 = scmp.eq.s32.totalorder %s15, 0
    %p78 = por %p76, %p77
    %p79 = scmp.ne.s32.totalorder %s67, %s68
    %p80 = scmp.eq.s32.totalorder %s16, 1
    %p81 = por %p79, %p80
    %p83 = scmp.ne.s32.totalorder %s68, %s82
    %p84 = scmp.eq.s32.totalorder %s16, 0
    %p85 = por %p83, %p84
    %s87 = sadd.s32 %s86, 1
    %p90 = scmp.eq.s32.totalorder %s10, 1
    %p91 = scmp.ne.s32.totalorder %s86, %s88
    %p92 = scmp.eq.s32.totalorder %s10, 0
    %p93 = por %p91, %p92
    %p94 = scmp.ne.s32.totalorder %s86, %s88
    %p95 = scmp.eq.s32.totalorder %s15, 1
    %p96 = por %p94, %p95
    %p97 = scmp.ne.s32.totalorder %s88, %s89
    %p98 = scmp.eq.s32.totalorder %s15, 0
    %p99 = por %p97, %p98
    %p100 = scmp.ne.s32.totalorder %s88, %s89
    %p101 = scmp.eq.s32.totalorder %s16, 1
    %p102 = por %p100, %p101
    %p104 = scmp.ne.s32.totalorder %s89, %s103
    %p105 = scmp.eq.s32.totalorder %s16, 0
    %p106 = por %p104, %p105
    %s107 = ssub.s32 %s10, %s17
    %p108 = scmp.eq.s32.totalorder %s107, 0
    %s110 = sadd.s32 %s109, 1
    %s111 = scalar_select %p108, %s109, %s110
    %p114 = pneg %p108
    %p115 = scmp.eq.s32.totalorder %s10, 1
    %p116 = por %p114, %p115
    %p117 = scmp.ne.s32.totalorder %s109, %s112
    %p118 = scmp.eq.s32.totalorder %s10, 0
    %p119 = por %p117, %p118
    %p120 = scmp.ne.s32.totalorder %s109, %s112
    %p121 = scmp.eq.s32.totalorder %s15, 1
    %p122 = por %p120, %p121
    %p123 = scmp.ne.s32.totalorder %s112, %s113
    %p124 = scmp.eq.s32.totalorder %s15, 0
    %p125 = por %p123, %p124
    %p126 = scmp.ne.s32.totalorder %s112, %s113
    %p127 = scmp.eq.s32.totalorder %s16, 1
    %p128 = por %p126, %p127
    %p130 = scmp.ne.s32.totalorder %s113, %s129
    %p131 = scmp.eq.s32.totalorder %s16, 0
    %p132 = por %p130, %p131
    %p133 = scmp.le.s32.totalorder 1, %s10
    %p134 = scmp.lt.s32.totalorder %s10, 3
    %p135 = pnand %p133, %p134
    %p136 = pneg %p135
    // Predicated region
    $region9: #{block_forward.5} parent=5 // pred_check
      _
    $region10: #{block_forward.5} parent=5 // pred_check_branch
      %138 = sbr.rel (%p135) target = $region12
    $region11: #{block_forward.5} parent=5 // pred_region
      %s139 = ssub.s32 %s10, 1
      // Predicated region
      $region13: #{block_forward.5} parent=11 // pred_check
        %p140 = pneg %p57
      $region14: #{block_forward.5} parent=11 // pred_check_branch
        %142 = sbr.rel (%p140) target = $region16
      $region15: #{block_forward.5} parent=11 // pred_region
        _
      $region16: #{block_forward.5} parent=11 // pred_fallthru
        _
      // Predicated region
      $region17: #{block_forward.5} parent=11 // pred_check
        %p143 = pneg %p78
      $region18: #{block_forward.5} parent=11 // pred_check_branch
        %145 = sbr.rel (%p143) target = $region20
      $region19: #{block_forward.5} parent=11 // pred_region
        _
      $region20: #{block_forward.5} parent=11 // pred_fallthru
        _
      // Predicated region
      $region21: #{block_forward.5} parent=11 // pred_check
        %p146 = pneg %p99
      $region22: #{block_forward.5} parent=11 // pred_check_branch
        %148 = sbr.rel (%p146) target = $region24
      $region23: #{block_forward.5} parent=11 // pred_region
        _
      $region24: #{block_forward.5} parent=11 // pred_fallthru
        _
    $region12: #{block_forward.5} parent=5 // pred_fallthru
      _
    %p149 = scmp.lt.s32.totalorder %s10, 2
    // Predicated region
    $region25: #{block_forward.5} parent=5 // pred_check
      %p150 = pneg %p149
    $region26: #{block_forward.5} parent=5 // pred_check_branch
      %152 = sbr.rel (%p150) target = $region28
    $region27: #{block_forward.5} parent=5 // pred_region
      // Predicated region
      $region29: #{block_forward.5} parent=27 // pred_check
        %p153 = pneg %p30
      $region30: #{block_forward.5} parent=27 // pred_check_branch
        %155 = sbr.rel (%p153) target = $region32
      $region31: #{block_forward.5} parent=27 // pred_region
        %p156 = scmp.lt.s32.totalorder %s10, 1
        %s157 = scalar_select %p156, %s10, 1
        %s158 = smul.addr %s157, 57
        %s159 = smul.addr %s158, 8
        %s160 = scalar_lea.vmem %s0, %s159
      $region32: #{block_forward.5} parent=27 // pred_fallthru
        _
    $region28: #{block_forward.5} parent=5 // pred_fallthru
      _
    %p161 = scmp.le.s32.totalorder 1, %s10
    %p162 = scmp.lt.s32.totalorder %s10, 3
    %p163 = pnand %p161, %p162
    %p164 = pneg %p163
    // Predicated region
    $region33: #{block_forward.5} parent=5 // pred_check
      _
    $region34: #{block_forward.5} parent=5 // pred_check_branch
      %166 = sbr.rel (%p163) target = $region36
    $region35: #{block_forward.5} parent=5 // pred_region
      %s167 = ssub.s32 %s10, 1
      %p168 = scmp.lt.s32.totalorder %s15, 1
      %s169 = scalar_select %p168, %s15, 1
      %s170 = smul.addr %s169, 57
      %s171 = smul.addr %s170, 8
      %s172 = scalar_lea.vmem %s0, %s171
      %p173 = pneg %p36
      %p174 = pneg %p33
      %p175 = pneg %p57
      %p176 = pneg %p54
      %p177 = pneg %p78
      %p178 = pneg %p75
      %p179 = pneg %p99
      %p180 = pneg %p96
      %p181 = pneg %p125
      %p182 = pneg %p122
      %p183 = scmp.lt.s32.totalorder %s15, 1
      %s184 = scalar_select %p183, %s15, 1
      %s185 = smul.addr %s184, 57
      %s186 = smul.addr %s185, 8
      %s187 = scalar_lea.vmem %s4, %s186
      %p188 = scmp.lt.s32.totalorder %s15, 1
      %s189 = scalar_select %p188, %s15, 1
      %s190 = smul.addr %s189, 57
      %s191 = smul.addr %s190, 8
      %s192 = scalar_lea.vmem %s0, %s191
      %p193 = scmp.lt.s32.totalorder %s15, 1
      %s194 = scalar_select %p193, %s15, 1
      %s195 = smul.addr %s194, 57
      %s196 = smul.addr %s195, 8
      %s197 = scalar_lea.vmem %s4, %s196
      %v198 = vld [vmem:[%s192] sm:$0xff]
      %v199 = vld [vmem:[%s192 + $0x8] sm:$0xff]
      %v200 = vld [vmem:[%s192 + $0x10] sm:$0xff]
      %v201 = vld [vmem:[%s192 + $0x18] sm:$0xff]
      %v202 = vld [vmem:[%s192 + $0x20] sm:$0xff]
      %v203 = vld [vmem:[%s192 + $0x28] sm:$0xff]
      %v204 = vld [vmem:[%s192 + $0x30] sm:$0xff]
      %v205 = vld [vmem:[%s192 + $0x38] sm:$0xff]
      %v206 = vld [vmem:[%s192 + $0x40] sm:$0xff]
      %v207 = vld [vmem:[%s192 + $0x48] sm:$0xff]
      %v208 = vld [vmem:[%s192 + $0x50] sm:$0xff]
      %v209 = vld [vmem:[%s192 + $0x58] sm:$0xff]
      %v210 = vld [vmem:[%s192 + $0x60] sm:$0xff]
      %v211 = vld [vmem:[%s192 + $0x68] sm:$0xff]
      %v212 = vld [vmem:[%s192 + $0x70] sm:$0xff]
      %v213 = vld [vmem:[%s192 + $0x78] sm:$0xff]
      %v214 = vld [vmem:[%s192 + $0x80] sm:$0xff]
      %v215 = vld [vmem:[%s192 + $0x88] sm:$0xff]
      %v216 = vld [vmem:[%s192 + $0x90] sm:$0xff]
      %v217 = vld [vmem:[%s192 + $0x98] sm:$0xff]
      %v218 = vld [vmem:[%s192 + $0xa0] sm:$0xff]
      %v219 = vld [vmem:[%s192 + $0xa8] sm:$0xff]
      %v220 = vld [vmem:[%s192 + $0xb0] sm:$0xff]
      %v221 = vld [vmem:[%s192 + $0xb8] sm:$0xff]
      %v222 = vld [vmem:[%s192 + $0xc0] sm:$0xff]
      %v223 = vld [vmem:[%s192 + $0xc8] sm:$0xff]
      %v224 = vld [vmem:[%s192 + $0xd0] sm:$0xff]
      %v225 = vld [vmem:[%s192 + $0xd8] sm:$0xff]
      %v226 = vld [vmem:[%s192 + $0xe0] sm:$0xff]
      %v227 = vld [vmem:[%s192 + $0xe8] sm:$0xff]
      %v228 = vld [vmem:[%s192 + $0xf0] sm:$0xff]
      %v229 = vld [vmem:[%s192 + $0xf8] sm:$0xff]
      %v230 = vld [vmem:[%s192 + $0x100] sm:$0xff]
      %v231 = vld [vmem:[%s192 + $0x108] sm:$0xff]
      %v232 = vld [vmem:[%s192 + $0x110] sm:$0xff]
      %v233 = vld [vmem:[%s192 + $0x118] sm:$0xff]
      %v234 = vld [vmem:[%s192 + $0x120] sm:$0xff]
      %v235 = vld [vmem:[%s192 + $0x128] sm:$0xff]
      %v236 = vld [vmem:[%s192 + $0x130] sm:$0xff]
      %v237 = vld [vmem:[%s192 + $0x138] sm:$0xff]
      %v238 = vld [vmem:[%s192 + $0x140] sm:$0xff]
      %v239 = vld [vmem:[%s192 + $0x148] sm:$0xff]
      %v240 = vld [vmem:[%s192 + $0x150] sm:$0xff]
      %v241 = vld [vmem:[%s192 + $0x158] sm:$0xff]
      %v242 = vld [vmem:[%s192 + $0x160] sm:$0xff]
      %v243 = vld [vmem:[%s192 + $0x168] sm:$0xff]
      %v244 = vld [vmem:[%s192 + $0x170] sm:$0xff]
      %v245 = vld [vmem:[%s192 + $0x178] sm:$0xff]
      %v246 = vld [vmem:[%s192 + $0x180] sm:$0xff]
      %v247 = vld [vmem:[%s192 + $0x188] sm:$0xff]
      %v248 = vld [vmem:[%s192 + $0x190] sm:$0xff]
      %v249 = vld [vmem:[%s192 + $0x198] sm:$0xff]
      %v250 = vld [vmem:[%s192 + $0x1a0] sm:$0xff]
      %v251 = vld [vmem:[%s192 + $0x1a8] sm:$0xff]
      %v252 = vld [vmem:[%s192 + $0x1b0] sm:$0xff]
      %v253 = vld [vmem:[%s192 + $0x1b8] sm:$0xff]
      %v254 = vld [vmem:[%s192 + $0x1c0] sm:$0xff]
      %v255 = vld [vmem:[%s1] sm:$0x1]
      %v257 = vlaneseq
      %v258 = vshrl.u32 %v257, 7
      %v259 = vsub.s32 0, %v258
      %v260 = vrot.slane %v255, %v259
      %v262 = vmul.f32 %v198, %v260
      %v263 = vmul.f32 %v199, %v260
      %v264 = vmul.f32 %v200, %v260
      %v265 = vmul.f32 %v201, %v260
      %v266 = vmul.f32 %v202, %v260
      %v267 = vmul.f32 %v203, %v260
      %v268 = vmul.f32 %v204, %v260
      %v269 = vmul.f32 %v205, %v260
      %v270 = vmul.f32 %v206, %v260
      %v271 = vmul.f32 %v207, %v260
      %v272 = vmul.f32 %v208, %v260
      %v273 = vmul.f32 %v209, %v260
      %v274 = vmul.f32 %v210, %v260
      %v275 = vmul.f32 %v211, %v260
      %v276 = vmul.f32 %v212, %v260
      %v277 = vmul.f32 %v213, %v260
      %v278 = vmul.f32 %v214, %v260
      %v279 = vmul.f32 %v215, %v260
      %v280 = vmul.f32 %v216, %v260
      %v281 = vmul.f32 %v217, %v260
      %v282 = vmul.f32 %v218, %v260
      %v283 = vmul.f32 %v219, %v260
      %v284 = vmul.f32 %v220, %v260
      %v285 = vmul.f32 %v221, %v260
      %v286 = vmul.f32 %v222, %v260
      %v287 = vmul.f32 %v223, %v260
      %v288 = vmul.f32 %v224, %v260
      %v289 = vmul.f32 %v225, %v260
      %v290 = vmul.f32 %v226, %v260
      %v291 = vmul.f32 %v227, %v260
      %v292 = vmul.f32 %v228, %v260
      %v293 = vmul.f32 %v229, %v260
      %v294 = vmul.f32 %v230, %v260
      %v295 = vmul.f32 %v231, %v260
      %v296 = vmul.f32 %v232, %v260
      %v297 = vmul.f32 %v233, %v260
      %v298 = vmul.f32 %v234, %v260
      %v299 = vmul.f32 %v235, %v260
      %v300 = vmul.f32 %v236, %v260
      %v301 = vmul.f32 %v237, %v260
      %v302 = vmul.f32 %v238, %v260
      %v303 = vmul.f32 %v239, %v260
      %v304 = vmul.f32 %v240, %v260
      %v305 = vmul.f32 %v241, %v260
      %v306 = vmul.f32 %v242, %v260
      %v307 = vmul.f32 %v243, %v260
      %v308 = vmul.f32 %v244, %v260
      %v309 = vmul.f32 %v245, %v260
      %v310 = vmul.f32 %v246, %v260
      %v311 = vmul.f32 %v247, %v260
      %v312 = vmul.f32 %v248, %v260
      %v313 = vmul.f32 %v249, %v260
      %v314 = vmul.f32 %v250, %v260
      %v315 = vmul.f32 %v251, %v260
      %v316 = vmul.f32 %v252, %v260
      %v317 = vmul.f32 %v253, %v260
      %v318 = vmul.f32 %v254, %v260
      %v319 = vld [vmem:[%s2] sm:$0x1]
      %v321 = vlaneseq
      %v322 = vshrl.u32 %v321, 7
      %v323 = vsub.s32 0, %v322
      %v324 = vrot.slane %v319, %v323
      %v326 = vadd.f32 %v262, %v324
      %v327 = vadd.f32 %v263, %v324
      %v328 = vadd.f32 %v264, %v324
      %v329 = vadd.f32 %v265, %v324
      %v330 = vadd.f32 %v266, %v324
      %v331 = vadd.f32 %v267, %v324
      %v332 = vadd.f32 %v268, %v324
      %v333 = vadd.f32 %v269, %v324
      %v334 = vadd.f32 %v270, %v324
      %v335 = vadd.f32 %v271, %v324
      %v336 = vadd.f32 %v272, %v324
      %v337 = vadd.f32 %v273, %v324
      %v338 = vadd.f32 %v274, %v324
      %v339 = vadd.f32 %v275, %v324
      %v340 = vadd.f32 %v276, %v324
      %v341 = vadd.f32 %v277, %v324
      %v342 = vadd.f32 %v278, %v324
      %v343 = vadd.f32 %v279, %v324
      %v344 = vadd.f32 %v280, %v324
      %v345 = vadd.f32 %v281, %v324
      %v346 = vadd.f32 %v282, %v324
      %v347 = vadd.f32 %v283, %v324
      %v348 = vadd.f32 %v284, %v324
      %v349 = vadd.f32 %v285, %v324
      %v350 = vadd.f32 %v286, %v324
      %v351 = vadd.f32 %v287, %v324
      %v352 = vadd.f32 %v288, %v324
      %v353 = vadd.f32 %v289, %v324
      %v354 = vadd.f32 %v290, %v324
      %v355 = vadd.f32 %v291, %v324
      %v356 = vadd.f32 %v292, %v324
      %v357 = vadd.f32 %v293, %v324
      %v358 = vadd.f32 %v294, %v324
      %v359 = vadd.f32 %v295, %v324
      %v360 = vadd.f32 %v296, %v324
      %v361 = vadd.f32 %v297, %v324
      %v362 = vadd.f32 %v298, %v324
      %v363 = vadd.f32 %v299, %v324
      %v364 = vadd.f32 %v300, %v324
      %v365 = vadd.f32 %v301, %v324
      %v366 = vadd.f32 %v302, %v324
      %v367 = vadd.f32 %v303, %v324
      %v368 = vadd.f32 %v304, %v324
      %v369 = vadd.f32 %v305, %v324
      %v370 = vadd.f32 %v306, %v324
      %v371 = vadd.f32 %v307, %v324
      %v372 = vadd.f32 %v308, %v324
      %v373 = vadd.f32 %v309, %v324
      %v374 = vadd.f32 %v310, %v324
      %v375 = vadd.f32 %v311, %v324
      %v376 = vadd.f32 %v312, %v324
      %v377 = vadd.f32 %v313, %v324
      %v378 = vadd.f32 %v314, %v324
      %v379 = vadd.f32 %v315, %v324
      %v380 = vadd.f32 %v316, %v324
      %v381 = vadd.f32 %v317, %v324
      %v382 = vadd.f32 %v318, %v324
      %v383 = vmax.f32 %v326, 0.0
      %v384 = vmax.f32 %v327, 0.0
      %v385 = vmax.f32 %v328, 0.0
      %v386 = vmax.f32 %v329, 0.0
      %v387 = vmax.f32 %v330, 0.0
      %v388 = vmax.f32 %v331, 0.0
      %v389 = vmax.f32 %v332, 0.0
      %v390 = vmax.f32 %v333, 0.0
      %v391 = vmax.f32 %v334, 0.0
      %v392 = vmax.f32 %v335, 0.0
      %v393 = vmax.f32 %v336, 0.0
      %v394 = vmax.f32 %v337, 0.0
      %v395 = vmax.f32 %v338, 0.0
      %v396 = vmax.f32 %v339, 0.0
      %v397 = vmax.f32 %v340, 0.0
      %v398 = vmax.f32 %v341, 0.0
      %v399 = vmax.f32 %v342, 0.0
      %v400 = vmax.f32 %v343, 0.0
      %v401 = vmax.f32 %v344, 0.0
      %v402 = vmax.f32 %v345, 0.0
      %v403 = vmax.f32 %v346, 0.0
      %v404 = vmax.f32 %v347, 0.0
      %v405 = vmax.f32 %v348, 0.0
      %v406 = vmax.f32 %v349, 0.0
      %v407 = vmax.f32 %v350, 0.0
      %v408 = vmax.f32 %v351, 0.0
      %v409 = vmax.f32 %v352, 0.0
      %v410 = vmax.f32 %v353, 0.0
      %v411 = vmax.f32 %v354, 0.0
      %v412 = vmax.f32 %v355, 0.0
      %v413 = vmax.f32 %v356, 0.0
      %v414 = vmax.f32 %v357, 0.0
      %v415 = vmax.f32 %v358, 0.0
      %v416 = vmax.f32 %v359, 0.0
      %v417 = vmax.f32 %v360, 0.0
      %v418 = vmax.f32 %v361, 0.0
      %v419 = vmax.f32 %v362, 0.0
      %v420 = vmax.f32 %v363, 0.0
      %v421 = vmax.f32 %v364, 0.0
      %v422 = vmax.f32 %v365, 0.0
      %v423 = vmax.f32 %v366, 0.0
      %v424 = vmax.f32 %v367, 0.0
      %v425 = vmax.f32 %v368, 0.0
      %v426 = vmax.f32 %v369, 0.0
      %v427 = vmax.f32 %v370, 0.0
      %v428 = vmax.f32 %v371, 0.0
      %v429 = vmax.f32 %v372, 0.0
      %v430 = vmax.f32 %v373, 0.0
      %v431 = vmax.f32 %v374, 0.0
      %v432 = vmax.f32 %v375, 0.0
      %v433 = vmax.f32 %v376, 0.0
      %v434 = vmax.f32 %v377, 0.0
      %v435 = vmax.f32 %v378, 0.0
      %v436 = vmax.f32 %v379, 0.0
      %v437 = vmax.f32 %v380, 0.0
      %v438 = vmax.f32 %v381, 0.0
      %v439 = vmax.f32 %v382, 0.0
      %v440 = vld [vmem:[%s3] sm:$0xff]
      %v441 = vld [vmem:[%s3 + $0x8] sm:$0xff]
      %v442 = vld [vmem:[%s3 + $0x10] sm:$0xff]
      %v443 = vld [vmem:[%s3 + $0x18] sm:$0xff]
      %v444 = vld [vmem:[%s3 + $0x20] sm:$0xff]
      %v445 = vld [vmem:[%s3 + $0x28] sm:$0xff]
      %v446 = vld [vmem:[%s3 + $0x30] sm:$0xff]
      %v447 = vld [vmem:[%s3 + $0x38] sm:$0xff]
      %v448 = vld [vmem:[%s3 + $0x40] sm:$0xff]
      %v449 = vld [vmem:[%s3 + $0x48] sm:$0xff]
      %v450 = vld [vmem:[%s3 + $0x50] sm:$0xff]
      %v451 = vld [vmem:[%s3 + $0x58] sm:$0xff]
      %v452 = vld [vmem:[%s3 + $0x60] sm:$0xff]
      %v453 = vld [vmem:[%s3 + $0x68] sm:$0xff]
      %v454 = vld [vmem:[%s3 + $0x70] sm:$0xff]
      %v455 = vld [vmem:[%s3 + $0x78] sm:$0xff]
      %v456 = vld [vmem:[%s3 + $0x80] sm:$0xff]
      %v457 = vld [vmem:[%s3 + $0x88] sm:$0xff]
      %v458 = vld [vmem:[%s3 + $0x90] sm:$0xff]
      %v459 = vld [vmem:[%s3 + $0x98] sm:$0xff]
      %v460 = vld [vmem:[%s3 + $0xa0] sm:$0xff]
      %v461 = vld [vmem:[%s3 + $0xa8] sm:$0xff]
      %v462 = vld [vmem:[%s3 + $0xb0] sm:$0xff]
      %v463 = vld [vmem:[%s3 + $0xb8] sm:$0xff]
      %v464 = vld [vmem:[%s3 + $0xc0] sm:$0xff]
      %v465 = vld [vmem:[%s3 + $0xc8] sm:$0xff]
      %v466 = vld [vmem:[%s3 + $0xd0] sm:$0xff]
      %v467 = vld [vmem:[%s3 + $0xd8] sm:$0xff]
      %v468 = vld [vmem:[%s3 + $0xe0] sm:$0xff]
      %v469 = vld [vmem:[%s3 + $0xe8] sm:$0xff]
      %v470 = vld [vmem:[%s3 + $0xf0] sm:$0xff]
      %v471 = vld [vmem:[%s3 + $0xf8] sm:$0xff]
      %v472 = vld [vmem:[%s3 + $0x100] sm:$0xff]
      %v473 = vld [vmem:[%s3 + $0x108] sm:$0xff]
      %v474 = vld [vmem:[%s3 + $0x110] sm:$0xff]
      %v475 = vld [vmem:[%s3 + $0x118] sm:$0xff]
      %v476 = vld [vmem:[%s3 + $0x120] sm:$0xff]
      %v477 = vld [vmem:[%s3 + $0x128] sm:$0xff]
      %v478 = vld [vmem:[%s3 + $0x130] sm:$0xff]
      %v479 = vld [vmem:[%s3 + $0x138] sm:$0xff]
      %v480 = vld [vmem:[%s3 + $0x140] sm:$0xff]
      %v481 = vld [vmem:[%s3 + $0x148] sm:$0xff]
      %v482 = vld [vmem:[%s3 + $0x150] sm:$0xff]
      %v483 = vld [vmem:[%s3 + $0x158] sm:$0xff]
      %v484 = vld [vmem:[%s3 + $0x160] sm:$0xff]
      %v485 = vld [vmem:[%s3 + $0x168] sm:$0xff]
      %v486 = vld [vmem:[%s3 + $0x170] sm:$0xff]
      %v487 = vld [vmem:[%s3 + $0x178] sm:$0xff]
      %v488 = vld [vmem:[%s3 + $0x180] sm:$0xff]
      %v489 = vld [vmem:[%s3 + $0x188] sm:$0xff]
      %v490 = vld [vmem:[%s3 + $0x190] sm:$0xff]
      %v491 = vld [vmem:[%s3 + $0x198] sm:$0xff]
      %v492 = vld [vmem:[%s3 + $0x1a0] sm:$0xff]
      %v493 = vld [vmem:[%s3 + $0x1a8] sm:$0xff]
      %v494 = vld [vmem:[%s3 + $0x1b0] sm:$0xff]
      %v495 = vld [vmem:[%s3 + $0x1b8] sm:$0xff]
      %v496 = vld [vmem:[%s3 + $0x1c0] sm:$0xff]
      %498 = vset.pattern.permute.xlu0 0
      %499 = vperm.xlu0 %498, %v440
      %v500 = vpop.permute.xlu0 %499
      %503 = vset.pattern.permute.xlu0 0
      %504 = vperm.xlu0 %503, %v441
      %v505 = vpop.permute.xlu0 %504
      %508 = vset.pattern.permute.xlu0 0
      %509 = vperm.xlu0 %508, %v442
      %v510 = vpop.permute.xlu0 %509
      %513 = vset.pattern.permute.xlu0 0
      %514 = vperm.xlu0 %513, %v443
      %v515 = vpop.permute.xlu0 %514
      %518 = vset.pattern.permute.xlu0 0
      %519 = vperm.xlu0 %518, %v444
      %v520 = vpop.permute.xlu0 %519
      %523 = vset.pattern.permute.xlu0 0
      %524 = vperm.xlu0 %523, %v445
      %v525 = vpop.permute.xlu0 %524
      %528 = vset.pattern.permute.xlu0 0
      %529 = vperm.xlu0 %528, %v446
      %v530 = vpop.permute.xlu0 %529
      %533 = vset.pattern.permute.xlu0 0
      %534 = vperm.xlu0 %533, %v447
      %v535 = vpop.permute.xlu0 %534
      %538 = vset.pattern.permute.xlu0 0
      %539 = vperm.xlu0 %538, %v448
      %v540 = vpop.permute.xlu0 %539
      %543 = vset.pattern.permute.xlu0 0
      %544 = vperm.xlu0 %543, %v449
      %v545 = vpop.permute.xlu0 %544
      %548 = vset.pattern.permute.xlu0 0
      %549 = vperm.xlu0 %548, %v450
      %v550 = vpop.permute.xlu0 %549
      %553 = vset.pattern.permute.xlu0 0
      %554 = vperm.xlu0 %553, %v451
      %v555 = vpop.permute.xlu0 %554
      %558 = vset.pattern.permute.xlu0 0
      %559 = vperm.xlu0 %558, %v452
      %v560 = vpop.permute.xlu0 %559
      %563 = vset.pattern.permute.xlu0 0
      %564 = vperm.xlu0 %563, %v453
      %v565 = vpop.permute.xlu0 %564
      %568 = vset.pattern.permute.xlu0 0
      %569 = vperm.xlu0 %568, %v454
      %v570 = vpop.permute.xlu0 %569
      %573 = vset.pattern.permute.xlu0 0
      %574 = vperm.xlu0 %573, %v455
      %v575 = vpop.permute.xlu0 %574
      %578 = vset.pattern.permute.xlu0 0
      %579 = vperm.xlu0 %578, %v456
      %v580 = vpop.permute.xlu0 %579
      %583 = vset.pattern.permute.xlu0 0
      %584 = vperm.xlu0 %583, %v457
      %v585 = vpop.permute.xlu0 %584
      %588 = vset.pattern.permute.xlu0 0
      %589 = vperm.xlu0 %588, %v458
      %v590 = vpop.permute.xlu0 %589
      %593 = vset.pattern.permute.xlu0 0
      %594 = vperm.xlu0 %593, %v459
      %v595 = vpop.permute.xlu0 %594
      %598 = vset.pattern.permute.xlu0 0
      %599 = vperm.xlu0 %598, %v460
      %v600 = vpop.permute.xlu0 %599
      %603 = vset.pattern.permute.xlu0 0
      %604 = vperm.xlu0 %603, %v461
      %v605 = vpop.permute.xlu0 %604
      %608 = vset.pattern.permute.xlu0 0
      %609 = vperm.xlu0 %608, %v462
      %v610 = vpop.permute.xlu0 %609
      %613 = vset.pattern.permute.xlu0 0
      %614 = vperm.xlu0 %613, %v463
      %v615 = vpop.permute.xlu0 %614
      %618 = vset.pattern.permute.xlu0 0
      %619 = vperm.xlu0 %618, %v464
      %v620 = vpop.permute.xlu0 %619
      %623 = vset.pattern.permute.xlu0 0
      %624 = vperm.xlu0 %623, %v465
      %v625 = vpop.permute.xlu0 %624
      %628 = vset.pattern.permute.xlu0 0
      %629 = vperm.xlu0 %628, %v466
      %v630 = vpop.permute.xlu0 %629
      %633 = vset.pattern.permute.xlu0 0
      %634 = vperm.xlu0 %633, %v467
      %v635 = vpop.permute.xlu0 %634
      %638 = vset.pattern.permute.xlu0 0
      %639 = vperm.xlu0 %638, %v468
      %v640 = vpop.permute.xlu0 %639
      %643 = vset.pattern.permute.xlu0 0
      %644 = vperm.xlu0 %643, %v469
      %v645 = vpop.permute.xlu0 %644
      %648 = vset.pattern.permute.xlu0 0
      %649 = vperm.xlu0 %648, %v470
      %v650 = vpop.permute.xlu0 %649
      %653 = vset.pattern.permute.xlu0 0
      %654 = vperm.xlu0 %653, %v471
      %v655 = vpop.permute.xlu0 %654
      %658 = vset.pattern.permute.xlu0 0
      %659 = vperm.xlu0 %658, %v472
      %v660 = vpop.permute.xlu0 %659
      %663 = vset.pattern.permute.xlu0 0
      %664 = vperm.xlu0 %663, %v473
      %v665 = vpop.permute.xlu0 %664
      %668 = vset.pattern.permute.xlu0 0
      %669 = vperm.xlu0 %668, %v474
      %v670 = vpop.permute.xlu0 %669
      %673 = vset.pattern.permute.xlu0 0
      %674 = vperm.xlu0 %673, %v475
      %v675 = vpop.permute.xlu0 %674
      %678 = vset.pattern.permute.xlu0 0
      %679 = vperm.xlu0 %678, %v476
      %v680 = vpop.permute.xlu0 %679
      %683 = vset.pattern.permute.xlu0 0
      %684 = vperm.xlu0 %683, %v477
      %v685 = vpop.permute.xlu0 %684
      %688 = vset.pattern.permute.xlu0 0
      %689 = vperm.xlu0 %688, %v478
      %v690 = vpop.permute.xlu0 %689
      %693 = vset.pattern.permute.xlu0 0
      %694 = vperm.xlu0 %693, %v479
      %v695 = vpop.permute.xlu0 %694
      %698 = vset.pattern.permute.xlu0 0
      %699 = vperm.xlu0 %698, %v480
      %v700 = vpop.permute.xlu0 %699
      %703 = vset.pattern.permute.xlu0 0
      %704 = vperm.xlu0 %703, %v481
      %v705 = vpop.permute.xlu0 %704
      %708 = vset.pattern.permute.xlu0 0
      %709 = vperm.xlu0 %708, %v482
      %v710 = vpop.permute.xlu0 %709
      %713 = vset.pattern.permute.xlu0 0
      %714 = vperm.xlu0 %713, %v483
      %v715 = vpop.permute.xlu0 %714
      %718 = vset.pattern.permute.xlu0 0
      %719 = vperm.xlu0 %718, %v484
      %v720 = vpop.permute.xlu0 %719
      %723 = vset.pattern.permute.xlu0 0
      %724 = vperm.xlu0 %723, %v485
      %v725 = vpop.permute.xlu0 %724
      %728 = vset.pattern.permute.xlu0 0
      %729 = vperm.xlu0 %728, %v486
      %v730 = vpop.permute.xlu0 %729
      %733 = vset.pattern.permute.xlu0 0
      %734 = vperm.xlu0 %733, %v487
      %v735 = vpop.permute.xlu0 %734
      %738 = vset.pattern.permute.xlu0 0
      %739 = vperm.xlu0 %738, %v488
      %v740 = vpop.permute.xlu0 %739
      %743 = vset.pattern.permute.xlu0 0
      %744 = vperm.xlu0 %743, %v489
      %v745 = vpop.permute.xlu0 %744
      %748 = vset.pattern.permute.xlu0 0
      %749 = vperm.xlu0 %748, %v490
      %v750 = vpop.permute.xlu0 %749
      %753 = vset.pattern.permute.xlu0 0
      %754 = vperm.xlu0 %753, %v491
      %v755 = vpop.permute.xlu0 %754
      %758 = vset.pattern.permute.xlu0 0
      %759 = vperm.xlu0 %758, %v492
      %v760 = vpop.permute.xlu0 %759
      %763 = vset.pattern.permute.xlu0 0
      %764 = vperm.xlu0 %763, %v493
      %v765 = vpop.permute.xlu0 %764
      %768 = vset.pattern.permute.xlu0 0
      %769 = vperm.xlu0 %768, %v494
      %v770 = vpop.permute.xlu0 %769
      %773 = vset.pattern.permute.xlu0 0
      %774 = vperm.xlu0 %773, %v495
      %v775 = vpop.permute.xlu0 %774
      %778 = vset.pattern.permute.xlu0 0
      %779 = vperm.xlu0 %778, %v496
      %v780 = vpop.permute.xlu0 %779
      %v782 = vmul.f32 %v383, %v500
      %v783 = vmul.f32 %v384, %v505
      %v784 = vmul.f32 %v385, %v510
      %v785 = vmul.f32 %v386, %v515
      %v786 = vmul.f32 %v387, %v520
      %v787 = vmul.f32 %v388, %v525
      %v788 = vmul.f32 %v389, %v530
      %v789 = vmul.f32 %v390, %v535
      %v790 = vmul.f32 %v391, %v540
      %v791 = vmul.f32 %v392, %v545
      %v792 = vmul.f32 %v393, %v550
      %v793 = vmul.f32 %v394, %v555
      %v794 = vmul.f32 %v395, %v560
      %v795 = vmul.f32 %v396, %v565
      %v796 = vmul.f32 %v397, %v570
      %v797 = vmul.f32 %v398, %v575
      %v798 = vmul.f32 %v399, %v580
      %v799 = vmul.f32 %v400, %v585
      %v800 = vmul.f32 %v401, %v590
      %v801 = vmul.f32 %v402, %v595
      %v802 = vmul.f32 %v403, %v600
      %v803 = vmul.f32 %v404, %v605
      %v804 = vmul.f32 %v405, %v610
      %v805 = vmul.f32 %v406, %v615
      %v806 = vmul.f32 %v407, %v620
      %v807 = vmul.f32 %v408, %v625
      %v808 = vmul.f32 %v409, %v630
      %v809 = vmul.f32 %v410, %v635
      %v810 = vmul.f32 %v411, %v640
      %v811 = vmul.f32 %v412, %v645
      %v812 = vmul.f32 %v413, %v650
      %v813 = vmul.f32 %v414, %v655
      %v814 = vmul.f32 %v415, %v660
      %v815 = vmul.f32 %v416, %v665
      %v816 = vmul.f32 %v417, %v670
      %v817 = vmul.f32 %v418, %v675
      %v818 = vmul.f32 %v419, %v680
      %v819 = vmul.f32 %v420, %v685
      %v820 = vmul.f32 %v421, %v690
      %v821 = vmul.f32 %v422, %v695
      %v822 = vmul.f32 %v423, %v700
      %v823 = vmul.f32 %v424, %v705
      %v824 = vmul.f32 %v425, %v710
      %v825 = vmul.f32 %v426, %v715
      %v826 = vmul.f32 %v427, %v720
      %v827 = vmul.f32 %v428, %v725
      %v828 = vmul.f32 %v429, %v730
      %v829 = vmul.f32 %v430, %v735
      %v830 = vmul.f32 %v431, %v740
      %v831 = vmul.f32 %v432, %v745
      %v832 = vmul.f32 %v433, %v750
      %v833 = vmul.f32 %v434, %v755
      %v834 = vmul.f32 %v435, %v760
      %v835 = vmul.f32 %v436, %v765
      %v836 = vmul.f32 %v437, %v770
      %v837 = vmul.f32 %v438, %v775
      %v838 = vmul.f32 %v439, %v780
      %839 = vst [vmem:[%s197] sm:$0xff] %v782
      %840 = vst [vmem:[%s197 + $0x8] sm:$0xff] %v783
      %841 = vst [vmem:[%s197 + $0x10] sm:$0xff] %v784
      %842 = vst [vmem:[%s197 + $0x18] sm:$0xff] %v785
      %843 = vst [vmem:[%s197 + $0x20] sm:$0xff] %v786
      %844 = vst [vmem:[%s197 + $0x28] sm:$0xff] %v787
      %845 = vst [vmem:[%s197 + $0x30] sm:$0xff] %v788
      %846 = vst [vmem:[%s197 + $0x38] sm:$0xff] %v789
      %847 = vst [vmem:[%s197 + $0x40] sm:$0xff] %v790
      %848 = vst [vmem:[%s197 + $0x48] sm:$0xff] %v791
      %849 = vst [vmem:[%s197 + $0x50] sm:$0xff] %v792
      %850 = vst [vmem:[%s197 + $0x58] sm:$0xff] %v793
      %851 = vst [vmem:[%s197 + $0x60] sm:$0xff] %v794
      %852 = vst [vmem:[%s197 + $0x68] sm:$0xff] %v795
      %853 = vst [vmem:[%s197 + $0x70] sm:$0xff] %v796
      %854 = vst [vmem:[%s197 + $0x78] sm:$0xff] %v797
      %855 = vst [vmem:[%s197 + $0x80] sm:$0xff] %v798
      %856 = vst [vmem:[%s197 + $0x88] sm:$0xff] %v799
      %857 = vst [vmem:[%s197 + $0x90] sm:$0xff] %v800
      %858 = vst [vmem:[%s197 + $0x98] sm:$0xff] %v801
      %859 = vst [vmem:[%s197 + $0xa0] sm:$0xff] %v802
      %860 = vst [vmem:[%s197 + $0xa8] sm:$0xff] %v803
      %861 = vst [vmem:[%s197 + $0xb0] sm:$0xff] %v804
      %862 = vst [vmem:[%s197 + $0xb8] sm:$0xff] %v805
      %863 = vst [vmem:[%s197 + $0xc0] sm:$0xff] %v806
      %864 = vst [vmem:[%s197 + $0xc8] sm:$0xff] %v807
      %865 = vst [vmem:[%s197 + $0xd0] sm:$0xff] %v808
      %866 = vst [vmem:[%s197 + $0xd8] sm:$0xff] %v809
      %867 = vst [vmem:[%s197 + $0xe0] sm:$0xff] %v810
      %868 = vst [vmem:[%s197 + $0xe8] sm:$0xff] %v811
      %869 = vst [vmem:[%s197 + $0xf0] sm:$0xff] %v812
      %870 = vst [vmem:[%s197 + $0xf8] sm:$0xff] %v813
      %871 = vst [vmem:[%s197 + $0x100] sm:$0xff] %v814
      %872 = vst [vmem:[%s197 + $0x108] sm:$0xff] %v815
      %873 = vst [vmem:[%s197 + $0x110] sm:$0xff] %v816
      %874 = vst [vmem:[%s197 + $0x118] sm:$0xff] %v817
      %875 = vst [vmem:[%s197 + $0x120] sm:$0xff] %v818
      %876 = vst [vmem:[%s197 + $0x128] sm:$0xff] %v819
      %877 = vst [vmem:[%s197 + $0x130] sm:$0xff] %v820
      %878 = vst [vmem:[%s197 + $0x138] sm:$0xff] %v821
      %879 = vst [vmem:[%s197 + $0x140] sm:$0xff] %v822
      %880 = vst [vmem:[%s197 + $0x148] sm:$0xff] %v823
      %881 = vst [vmem:[%s197 + $0x150] sm:$0xff] %v824
      %882 = vst [vmem:[%s197 + $0x158] sm:$0xff] %v825
      %883 = vst [vmem:[%s197 + $0x160] sm:$0xff] %v826
      %884 = vst [vmem:[%s197 + $0x168] sm:$0xff] %v827
      %885 = vst [vmem:[%s197 + $0x170] sm:$0xff] %v828
      %886 = vst [vmem:[%s197 + $0x178] sm:$0xff] %v829
      %887 = vst [vmem:[%s197 + $0x180] sm:$0xff] %v830
      %888 = vst [vmem:[%s197 + $0x188] sm:$0xff] %v831
      %889 = vst [vmem:[%s197 + $0x190] sm:$0xff] %v832
      %890 = vst [vmem:[%s197 + $0x198] sm:$0xff] %v833
      %891 = vst [vmem:[%s197 + $0x1a0] sm:$0xff] %v834
      %892 = vst [vmem:[%s197 + $0x1a8] sm:$0xff] %v835
      %893 = vst [vmem:[%s197 + $0x1b0] sm:$0xff] %v836
      %894 = vst [vmem:[%s197 + $0x1b8] sm:$0xff] %v837
      %895 = vst [vmem:[%s197 + $0x1c0] sm:$0xff] %v838
      %p896 = scmp.lt.s32.totalorder %s15, 1
      %s897 = scalar_select %p896, %s15, 1
      %s898 = smul.addr %s897, 57
      %s899 = smul.addr %s898, 8
      %s900 = scalar_lea.vmem %s4, %s899
      // Predicated region
      $region37: #{block_forward.5} parent=35 // pred_check
        %p901 = pneg %p122
      $region38: #{block_forward.5} parent=35 // pred_check_branch
        %903 = sbr.rel (%p901) target = $region40
      $region39: #{block_forward.5} parent=35 // pred_region
        _
      $region40: #{block_forward.5} parent=35 // pred_fallthru
        _
    $region36: #{block_forward.5} parent=5 // pred_fallthru
      _
    %p904 = scmp.le.s32.totalorder 2, %s10
    // Predicated region
    $region41: #{block_forward.5} parent=5 // pred_check
      %p905 = pneg %p904
    $region42: #{block_forward.5} parent=5 // pred_check_branch
      %907 = sbr.rel (%p905) target = $region44
    $region43: #{block_forward.5} parent=5 // pred_region
      %s908 = ssub.s32 %s10, 2
      // Predicated region
      $region45: #{block_forward.5} parent=43 // pred_check
        %p909 = pneg %p128
      $region46: #{block_forward.5} parent=43 // pred_check_branch
        %911 = sbr.rel (%p909) target = $region48
      $region47: #{block_forward.5} parent=43 // pred_region
        %p912 = scmp.lt.s32.totalorder %s16, 1
        %s913 = scalar_select %p912, %s16, 1
        %s914 = smul.addr %s913, 57
        %s915 = smul.addr %s914, 8
        %s916 = scalar_lea.vmem %s4, %s915
      $region48: #{block_forward.5} parent=43 // pred_fallthru
        _
    $region44: #{block_forward.5} parent=5 // pred_fallthru
      _
  $region6: #{block_forward.5} parent=0 // loop_footer
    %s14 = sadd.s32 1, %s10
  $region7: #{block_forward.5} parent=0 // loop_footer_branch
    %9 = sbr.rel target = $region3
  $region8: #{block_forward.5} parent=0 // loop_exit
    _

// kernel: block_forward.4
$region0: #{block_forward.4}
  #allocation0 [shape = 'u32[]', space=smem, size = 0x4, offset = 0x4, fixed_abs, tag = 'smem constant byte address 0x4 - core index']
  #allocation1 [shape = 'u32[144,128]{1,0:T(1,128)}', space=vmem, size = 0x12000, scoped, tag = 'internal scratch']
  #allocation2 [shape = 'f32[456,128]{1,0:T(8,128)}', space=vmem, size = 0x39000, scoped, tag = 'scratch operand']
  %s0 = inlined_call_operand.vmem [shape: f32[2,456,128], index: 0, kind: input, shape index: {}]
  %s1 = inlined_call_operand.vmem [shape: f32[9,128,128], index: 1, kind: input, shape index: {}]
  %s2 = inlined_call_operand.vmem [shape: f32[1,128], index: 2, kind: input, shape index: {}]
  %s3 = inlined_call_operand.vmem [shape: f32[1,128], index: 3, kind: input, shape index: {}]
  %s4 = inlined_call_operand.vmem [shape: f32[456,1], index: 4, kind: input, shape index: {}]
  %s5 = inlined_call_operand.vmem [shape: f32[384,1], index: 5, kind: input, shape index: {}]
  %s6 = inlined_call_operand.vmem [shape: f32[2,456,128], index: 6, kind: output, shape index: {0}]
  %s7 = inlined_call_operand.vmem [shape: f32[2,1,128], index: 7, kind: output, shape index: {1}]
  %s8 = inlined_call_operand.vmem [shape: f32[2,1,128], index: 8, kind: output, shape index: {2}]
  %9 = xla_tuple %s6, %s7, %s8
  %s10 = sld [smem:[#allocation0]]
  $region73: #{block_forward.4} parent=0
    _
  %s12 = ssub.s32 1, %s10
  %s13 = scalar_select 0, %s12, %s10
  loop: start=0, step=1, limit=4
  $region2: #{block_forward.4} parent=0 // loop_pre_header
    _
  $region3: #{block_forward.4} parent=0 // loop_header
    %s15 = sphi 0, %s19
    %p16 = scmp.ge.s32.totalorder %s15, 4
    %s25 = sphi 0, %s27
    %s28 = sphi 0, %s25
    %s29 = sphi 0, %s28
    %s45 = sphi 0, %s29
    %s49 = sphi 0, %s49
    %s51 = sphi 0, %s49
    %s52 = sphi 0, %s51
    %s66 = sphi 0, %s52
    %s70 = sphi 0, %s70
    %s72 = sphi 0, %s70
    %s73 = sphi 0, %s72
    %s87 = sphi 0, %s73
    %s91 = sphi 0, %s91
    %s93 = sphi 0, %s91
    %s94 = sphi 0, %s93
    %s108 = sphi 0, %s94
    %s112 = sphi 0, %s112
    %s114 = sphi 0, %s112
    %s115 = sphi 0, %s114
    %s129 = sphi 0, %s115
    %s133 = sphi 0, %s133
    %s135 = sphi 0, %s133
    %s136 = sphi 0, %s135
    %s150 = sphi 0, %s136
    %s156 = sphi 0, %s158
    %s159 = sphi 0, %s156
    %s160 = sphi 0, %s159
    %s176 = sphi 0, %s160
    %s182 = sphi 0, %s184
    %s185 = sphi 0, %s182
    %s186 = sphi 0, %s185
    %s202 = sphi 0, %s186
    %s208 = sphi 0, %s210
    %s211 = sphi 0, %s208
    %s212 = sphi 0, %s211
    %s228 = sphi 0, %s212
  $region4: #{block_forward.4} parent=0 // loop_header_branch
    %18 = sbr.rel (%p16) target = $region8
  $region5: #{block_forward.4} parent=0 // loop_body
    %s20 = ssub.s32 %s15, 1
    %s21 = ssub.s32 %s15, 2
    %s22 = sadd.s32 %s15, 1
    %s23 = ssub.s32 %s15, %s22
    %p24 = scmp.eq.s32.totalorder %s23, 0
    %s26 = sadd.s32 %s25, 1
    %s27 = scalar_select %p24, %s25, %s26
    %p30 = pneg %p24
    %p31 = scmp.eq.s32.totalorder %s15, 1
    %p32 = por %p30, %p31
    %p33 = scmp.ne.s32.totalorder %s25, %s28
    %p34 = scmp.eq.s32.totalorder %s15, 0
    %p35 = por %p33, %p34
    %p36 = scmp.ne.s32.totalorder %s25, %s28
    %p37 = scmp.eq.s32.totalorder %s20, 1
    %p38 = por %p36, %p37
    %p39 = scmp.ne.s32.totalorder %s28, %s29
    %p40 = scmp.eq.s32.totalorder %s20, 0
    %p41 = por %p39, %p40
    %p42 = scmp.ne.s32.totalorder %s28, %s29
    %p43 = scmp.eq.s32.totalorder %s21, 1
    %p44 = por %p42, %p43
    %p46 = scmp.ne.s32.totalorder %s29, %s45
    %p47 = scmp.eq.s32.totalorder %s21, 0
    %p48 = por %p46, %p47
    %s50 = sadd.s32 %s49, 1
    %p53 = scmp.eq.s32.totalorder %s15, 1
    %p54 = scmp.ne.s32.totalorder %s49, %s51
    %p55 = scmp.eq.s32.totalorder %s15, 0
    %p56 = por %p54, %p55
    %p57 = scmp.ne.s32.totalorder %s49, %s51
    %p58 = scmp.eq.s32.totalorder %s20, 1
    %p59 = por %p57, %p58
    %p60 = scmp.ne.s32.totalorder %s51, %s52
    %p61 = scmp.eq.s32.totalorder %s20, 0
    %p62 = por %p60, %p61
    %p63 = scmp.ne.s32.totalorder %s51, %s52
    %p64 = scmp.eq.s32.totalorder %s21, 1
    %p65 = por %p63, %p64
    %p67 = scmp.ne.s32.totalorder %s52, %s66
    %p68 = scmp.eq.s32.totalorder %s21, 0
    %p69 = por %p67, %p68
    %s71 = sadd.s32 %s70, 1
    %p74 = scmp.eq.s32.totalorder %s15, 1
    %p75 = scmp.ne.s32.totalorder %s70, %s72
    %p76 = scmp.eq.s32.totalorder %s15, 0
    %p77 = por %p75, %p76
    %p78 = scmp.ne.s32.totalorder %s70, %s72
    %p79 = scmp.eq.s32.totalorder %s20, 1
    %p80 = por %p78, %p79
    %p81 = scmp.ne.s32.totalorder %s72, %s73
    %p82 = scmp.eq.s32.totalorder %s20, 0
    %p83 = por %p81, %p82
    %p84 = scmp.ne.s32.totalorder %s72, %s73
    %p85 = scmp.eq.s32.totalorder %s21, 1
    %p86 = por %p84, %p85
    %p88 = scmp.ne.s32.totalorder %s73, %s87
    %p89 = scmp.eq.s32.totalorder %s21, 0
    %p90 = por %p88, %p89
    %s92 = sadd.s32 %s91, 1
    %p95 = scmp.eq.s32.totalorder %s15, 1
    %p96 = scmp.ne.s32.totalorder %s91, %s93
    %p97 = scmp.eq.s32.totalorder %s15, 0
    %p98 = por %p96, %p97
    %p99 = scmp.ne.s32.totalorder %s91, %s93
    %p100 = scmp.eq.s32.totalorder %s20, 1
    %p101 = por %p99, %p100
    %p102 = scmp.ne.s32.totalorder %s93, %s94
    %p103 = scmp.eq.s32.totalorder %s20, 0
    %p104 = por %p102, %p103
    %p105 = scmp.ne.s32.totalorder %s93, %s94
    %p106 = scmp.eq.s32.totalorder %s21, 1
    %p107 = por %p105, %p106
    %p109 = scmp.ne.s32.totalorder %s94, %s108
    %p110 = scmp.eq.s32.totalorder %s21, 0
    %p111 = por %p109, %p110
    %s113 = sadd.s32 %s112, 1
    %p116 = scmp.eq.s32.totalorder %s15, 1
    %p117 = scmp.ne.s32.totalorder %s112, %s114
    %p118 = scmp.eq.s32.totalorder %s15, 0
    %p119 = por %p117, %p118
    %p120 = scmp.ne.s32.totalorder %s112, %s114
    %p121 = scmp.eq.s32.totalorder %s20, 1
    %p122 = por %p120, %p121
    %p123 = scmp.ne.s32.totalorder %s114, %s115
    %p124 = scmp.eq.s32.totalorder %s20, 0
    %p125 = por %p123, %p124
    %p126 = scmp.ne.s32.totalorder %s114, %s115
    %p127 = scmp.eq.s32.totalorder %s21, 1
    %p128 = por %p126, %p127
    %p130 = scmp.ne.s32.totalorder %s115, %s129
    %p131 = scmp.eq.s32.totalorder %s21, 0
    %p132 = por %p130, %p131
    %s134 = sadd.s32 %s133, 1
    %p137 = scmp.eq.s32.totalorder %s15, 1
    %p138 = scmp.ne.s32.totalorder %s133, %s135
    %p139 = scmp.eq.s32.totalorder %s15, 0
    %p140 = por %p138, %p139
    %p141 = scmp.ne.s32.totalorder %s133, %s135
    %p142 = scmp.eq.s32.totalorder %s20, 1
    %p143 = por %p141, %p142
    %p144 = scmp.ne.s32.totalorder %s135, %s136
    %p145 = scmp.eq.s32.totalorder %s20, 0
    %p146 = por %p144, %p145
    %p147 = scmp.ne.s32.totalorder %s135, %s136
    %p148 = scmp.eq.s32.totalorder %s21, 1
    %p149 = por %p147, %p148
    %p151 = scmp.ne.s32.totalorder %s136, %s150
    %p152 = scmp.eq.s32.totalorder %s21, 0
    %p153 = por %p151, %p152
    %s154 = ssub.s32 %s15, %s22
    %p155 = scmp.eq.s32.totalorder %s154, 0
    %s157 = sadd.s32 %s156, 1
    %s158 = scalar_select %p155, %s156, %s157
    %p161 = pneg %p155
    %p162 = scmp.eq.s32.totalorder %s15, 1
    %p163 = por %p161, %p162
    %p164 = scmp.ne.s32.totalorder %s156, %s159
    %p165 = scmp.eq.s32.totalorder %s15, 0
    %p166 = por %p164, %p165
    %p167 = scmp.ne.s32.totalorder %s156, %s159
    %p168 = scmp.eq.s32.totalorder %s20, 1
    %p169 = por %p167, %p168
    %p170 = scmp.ne.s32.totalorder %s159, %s160
    %p171 = scmp.eq.s32.totalorder %s20, 0
    %p172 = por %p170, %p171
    %p173 = scmp.ne.s32.totalorder %s159, %s160
    %p174 = scmp.eq.s32.totalorder %s21, 1
    %p175 = por %p173, %p174
    %p177 = scmp.ne.s32.totalorder %s160, %s176
    %p178 = scmp.eq.s32.totalorder %s21, 0
    %p179 = por %p177, %p178
    %s180 = ssub.s32 %s15, %s22
    %p181 = scmp.eq.s32.totalorder %s180, 0
    %s183 = sadd.s32 %s182, 1
    %s184 = scalar_select %p181, %s182, %s183
    %p187 = pneg %p181
    %p188 = scmp.eq.s32.totalorder %s15, 1
    %p189 = por %p187, %p188
    %p190 = scmp.ne.s32.totalorder %s182, %s185
    %p191 = scmp.eq.s32.totalorder %s15, 0
    %p192 = por %p190, %p191
    %p193 = scmp.ne.s32.totalorder %s182, %s185
    %p194 = scmp.eq.s32.totalorder %s20, 1
    %p195 = por %p193, %p194
    %p196 = scmp.ne.s32.totalorder %s185, %s186
    %p197 = scmp.eq.s32.totalorder %s20, 0
    %p198 = por %p196, %p197
    %p199 = scmp.ne.s32.totalorder %s185, %s186
    %p200 = scmp.eq.s32.totalorder %s21, 1
    %p201 = por %p199, %p200
    %p203 = scmp.ne.s32.totalorder %s186, %s202
    %p204 = scmp.eq.s32.totalorder %s21, 0
    %p205 = por %p203, %p204
    %s206 = ssub.s32 %s15, %s22
    %p207 = scmp.eq.s32.totalorder %s206, 0
    %s209 = sadd.s32 %s208, 1
    %s210 = scalar_select %p207, %s208, %s209
    %p213 = pneg %p207
    %p214 = scmp.eq.s32.totalorder %s15, 1
    %p215 = por %p213, %p214
    %p216 = scmp.ne.s32.totalorder %s208, %s211
    %p217 = scmp.eq.s32.totalorder %s15, 0
    %p218 = por %p216, %p217
    %p219 = scmp.ne.s32.totalorder %s208, %s211
    %p220 = scmp.eq.s32.totalorder %s20, 1
    %p221 = por %p219, %p220
    %p222 = scmp.ne.s32.totalorder %s211, %s212
    %p223 = scmp.eq.s32.totalorder %s20, 0
    %p224 = por %p222, %p223
    %p225 = scmp.ne.s32.totalorder %s211, %s212
    %p226 = scmp.eq.s32.totalorder %s21, 1
    %p227 = por %p225, %p226
    %p229 = scmp.ne.s32.totalorder %s212, %s228
    %p230 = scmp.eq.s32.totalorder %s21, 0
    %p231 = por %p229, %p230
    %p232 = scmp.le.s32.totalorder 1, %s15
    %p233 = scmp.lt.s32.totalorder %s15, 3
    %p234 = pnand %p232, %p233
    %p235 = pneg %p234
    // Predicated region
    $region9: #{block_forward.4} parent=5 // pred_check
      _
    $region10: #{block_forward.4} parent=5 // pred_check_branch
      %237 = sbr.rel (%p234) target = $region12
    $region11: #{block_forward.4} parent=5 // pred_region
      %s238 = ssub.s32 %s15, 1
      // Predicated region
      $region13: #{block_forward.4} parent=11 // pred_check
        %p239 = pneg %p62
      $region14: #{block_forward.4} parent=11 // pred_check_branch
        %241 = sbr.rel (%p239) target = $region16
      $region15: #{block_forward.4} parent=11 // pred_region
        _
      $region16: #{block_forward.4} parent=11 // pred_fallthru
        _
      // Predicated region
      $region17: #{block_forward.4} parent=11 // pred_check
        %p242 = pneg %p83
      $region18: #{block_forward.4} parent=11 // pred_check_branch
        %244 = sbr.rel (%p242) target = $region20
      $region19: #{block_forward.4} parent=11 // pred_region
        _
      $region20: #{block_forward.4} parent=11 // pred_fallthru
        _
      // Predicated region
      $region21: #{block_forward.4} parent=11 // pred_check
        %p245 = pneg %p104
      $region22: #{block_forward.4} parent=11 // pred_check_branch
        %247 = sbr.rel (%p245) target = $region24
      $region23: #{block_forward.4} parent=11 // pred_region
        _
      $region24: #{block_forward.4} parent=11 // pred_fallthru
        _
      // Predicated region
      $region25: #{block_forward.4} parent=11 // pred_check
        %p248 = pneg %p125
      $region26: #{block_forward.4} parent=11 // pred_check_branch
        %250 = sbr.rel (%p248) target = $region28
      $region27: #{block_forward.4} parent=11 // pred_region
        _
      $region28: #{block_forward.4} parent=11 // pred_fallthru
        _
      // Predicated region
      $region29: #{block_forward.4} parent=11 // pred_check
        %p251 = pneg %p146
      $region30: #{block_forward.4} parent=11 // pred_check_branch
        %253 = sbr.rel (%p251) target = $region32
      $region31: #{block_forward.4} parent=11 // pred_region
        _
      $region32: #{block_forward.4} parent=11 // pred_fallthru
        _
    $region12: #{block_forward.4} parent=5 // pred_fallthru
      _
    %p254 = scmp.lt.s32.totalorder %s15, 2
    // Predicated region
    $region33: #{block_forward.4} parent=5 // pred_check
      %p255 = pneg %p254
    $region34: #{block_forward.4} parent=5 // pred_check_branch
      %257 = sbr.rel (%p255) target = $region36
    $region35: #{block_forward.4} parent=5 // pred_region
      // Predicated region
      $region37: #{block_forward.4} parent=35 // pred_check
        %p258 = pneg %p35
      $region38: #{block_forward.4} parent=35 // pred_check_branch
        %260 = sbr.rel (%p258) target = $region40
      $region39: #{block_forward.4} parent=35 // pred_region
        %p261 = scmp.lt.s32.totalorder %s15, 1
        %s262 = scalar_select %p261, %s15, 1
        %s263 = smul.addr %s262, 57
        %s264 = smul.addr %s263, 8
        %s265 = scalar_lea.vmem %s0, %s264
      $region40: #{block_forward.4} parent=35 // pred_fallthru
        _
    $region36: #{block_forward.4} parent=5 // pred_fallthru
      _
    %p266 = scmp.le.s32.totalorder 1, %s15
    %p267 = scmp.lt.s32.totalorder %s15, 3
    %p268 = pnand %p266, %p267
    %p269 = pneg %p268
    // Predicated region
    $region41: #{block_forward.4} parent=5 // pred_check
      _
    $region42: #{block_forward.4} parent=5 // pred_check_branch
      %271 = sbr.rel (%p268) target = $region44
    $region43: #{block_forward.4} parent=5 // pred_region
      %s272 = ssub.s32 %s15, 1
      %p273 = scmp.lt.s32.totalorder %s20, 1
      %s274 = scalar_select %p273, %s20, 1
      %s275 = smul.addr %s274, 57
      %s276 = smul.addr %s275, 8
      %s277 = scalar_lea.vmem %s0, %s276
      %p278 = pneg %p41
      %p279 = pneg %p38
      %p280 = pneg %p62
      %p281 = pneg %p59
      %p282 = pneg %p83
      %p283 = pneg %p80
      %p284 = pneg %p104
      %p285 = pneg %p101
      %p286 = pneg %p125
      %p287 = pneg %p122
      %p288 = pneg %p146
      %p289 = pneg %p143
      %p290 = pneg %p172
      %p291 = pneg %p169
      %p292 = scmp.lt.s32.totalorder %s20, 1
      %s293 = scalar_select %p292, %s20, 1
      %s294 = smul.addr %s293, 57
      %s295 = smul.addr %s294, 8
      %s296 = scalar_lea.vmem %s6, %s295
      %p297 = pneg %p198
      %p298 = pneg %p195
      %p299 = scmp.lt.s32.totalorder %s20, 1
      %s300 = scalar_select %p299, %s20, 1
      %s301 = scalar_lea.vmem %s7, %s300
      %p302 = pneg %p224
      %p303 = pneg %p221
      %p304 = scmp.lt.s32.totalorder %s20, 1
      %s305 = scalar_select %p304, %s20, 1
      %s306 = scalar_lea.vmem %s8, %s305
      %p307 = scmp.lt.s32.totalorder %s20, 1
      %s308 = scalar_select %p307, %s20, 1
      %s309 = smul.addr %s308, 57
      %s310 = smul.addr %s309, 8
      %s311 = scalar_lea.vmem %s0, %s310
      %p312 = scmp.lt.s32.totalorder %s20, 1
      %s313 = scalar_select %p312, %s20, 1
      %s314 = smul.addr %s313, 57
      %s315 = smul.addr %s314, 8
      %s316 = scalar_lea.vmem %s6, %s315
      %p317 = scmp.lt.s32.totalorder %s20, 1
      %s318 = scalar_select %p317, %s20, 1
      %s319 = scalar_lea.vmem %s7, %s318
      %p320 = scmp.lt.s32.totalorder %s20, 1
      %s321 = scalar_select %p320, %s20, 1
      %s322 = scalar_lea.vmem %s8, %s321
      %v323 = vld [vmem:[%s311] sm:$0xff]
      %v324 = vld [vmem:[%s311 + $0x8] sm:$0xff]
      %v325 = vld [vmem:[%s311 + $0x10] sm:$0xff]
      %v326 = vld [vmem:[%s311 + $0x18] sm:$0xff]
      %v327 = vld [vmem:[%s311 + $0x20] sm:$0xff]
      %v328 = vld [vmem:[%s311 + $0x28] sm:$0xff]
      %v329 = vld [vmem:[%s311 + $0x30] sm:$0xff]
      %v330 = vld [vmem:[%s311 + $0x38] sm:$0xff]
      %v331 = vld [vmem:[%s311 + $0x40] sm:$0xff]
      %v332 = vld [vmem:[%s311 + $0x48] sm:$0xff]
      %v333 = vld [vmem:[%s311 + $0x50] sm:$0xff]
      %v334 = vld [vmem:[%s311 + $0x58] sm:$0xff]
      %v335 = vld [vmem:[%s311 + $0x60] sm:$0xff]
      %v336 = vld [vmem:[%s311 + $0x68] sm:$0xff]
      %v337 = vld [vmem:[%s311 + $0x70] sm:$0xff]
      %v338 = vld [vmem:[%s311 + $0x78] sm:$0xff]
      %v339 = vld [vmem:[%s311 + $0x80] sm:$0xff]
      %v340 = vld [vmem:[%s311 + $0x88] sm:$0xff]
      %v341 = vld [vmem:[%s311 + $0x90] sm:$0xff]
      %v342 = vld [vmem:[%s311 + $0x98] sm:$0xff]
      %v343 = vld [vmem:[%s311 + $0xa0] sm:$0xff]
      %v344 = vld [vmem:[%s311 + $0xa8] sm:$0xff]
      %v345 = vld [vmem:[%s311 + $0xb0] sm:$0xff]
      %v346 = vld [vmem:[%s311 + $0xb8] sm:$0xff]
      %v347 = vld [vmem:[%s311 + $0xc0] sm:$0xff]
      %v348 = vld [vmem:[%s311 + $0xc8] sm:$0xff]
      %v349 = vld [vmem:[%s311 + $0xd0] sm:$0xff]
      %v350 = vld [vmem:[%s311 + $0xd8] sm:$0xff]
      %v351 = vld [vmem:[%s311 + $0xe0] sm:$0xff]
      %v352 = vld [vmem:[%s311 + $0xe8] sm:$0xff]
      %v353 = vld [vmem:[%s311 + $0xf0] sm:$0xff]
      %v354 = vld [vmem:[%s311 + $0xf8] sm:$0xff]
      %v355 = vld [vmem:[%s311 + $0x100] sm:$0xff]
      %v356 = vld [vmem:[%s311 + $0x108] sm:$0xff]
      %v357 = vld [vmem:[%s311 + $0x110] sm:$0xff]
      %v358 = vld [vmem:[%s311 + $0x118] sm:$0xff]
      %v359 = vld [vmem:[%s311 + $0x120] sm:$0xff]
      %v360 = vld [vmem:[%s311 + $0x128] sm:$0xff]
      %v361 = vld [vmem:[%s311 + $0x130] sm:$0xff]
      %v362 = vld [vmem:[%s311 + $0x138] sm:$0xff]
      %v363 = vld [vmem:[%s311 + $0x140] sm:$0xff]
      %v364 = vld [vmem:[%s311 + $0x148] sm:$0xff]
      %v365 = vld [vmem:[%s311 + $0x150] sm:$0xff]
      %v366 = vld [vmem:[%s311 + $0x158] sm:$0xff]
      %v367 = vld [vmem:[%s311 + $0x160] sm:$0xff]
      %v368 = vld [vmem:[%s311 + $0x168] sm:$0xff]
      %v369 = vld [vmem:[%s311 + $0x170] sm:$0xff]
      %v370 = vld [vmem:[%s311 + $0x178] sm:$0xff]
      %v371 = vld [vmem:[%s311 + $0x180] sm:$0xff]
      %v372 = vld [vmem:[%s311 + $0x188] sm:$0xff]
      %v373 = vld [vmem:[%s311 + $0x190] sm:$0xff]
      %v374 = vld [vmem:[%s311 + $0x198] sm:$0xff]
      %v375 = vld [vmem:[%s311 + $0x1a0] sm:$0xff]
      %v376 = vld [vmem:[%s311 + $0x1a8] sm:$0xff]
      %v377 = vld [vmem:[%s311 + $0x1b0] sm:$0xff]
      %v378 = vld [vmem:[%s311 + $0x1b8] sm:$0xff]
      %v379 = vld [vmem:[%s311 + $0x1c0] sm:$0xff]
      %v380 = vld [vmem:[%s2] sm:$0x1]
      %v382 = vlaneseq
      %v383 = vshrl.u32 %v382, 7
      %v384 = vsub.s32 0, %v383
      %v385 = vrot.slane %v380, %v384
      %v387 = vmul.f32 %v323, %v385
      %v388 = vmul.f32 %v324, %v385
      %v389 = vmul.f32 %v325, %v385
      %v390 = vmul.f32 %v326, %v385
      %v391 = vmul.f32 %v327, %v385
      %v392 = vmul.f32 %v328, %v385
      %v393 = vmul.f32 %v329, %v385
      %v394 = vmul.f32 %v330, %v385
      %v395 = vmul.f32 %v331, %v385
      %v396 = vmul.f32 %v332, %v385
      %v397 = vmul.f32 %v333, %v385
      %v398 = vmul.f32 %v334, %v385
      %v399 = vmul.f32 %v335, %v385
      %v400 = vmul.f32 %v336, %v385
      %v401 = vmul.f32 %v337, %v385
      %v402 = vmul.f32 %v338, %v385
      %v403 = vmul.f32 %v339, %v385
      %v404 = vmul.f32 %v340, %v385
      %v405 = vmul.f32 %v341, %v385
      %v406 = vmul.f32 %v342, %v385
      %v407 = vmul.f32 %v343, %v385
      %v408 = vmul.f32 %v344, %v385
      %v409 = vmul.f32 %v345, %v385
      %v410 = vmul.f32 %v346, %v385
      %v411 = vmul.f32 %v347, %v385
      %v412 = vmul.f32 %v348, %v385
      %v413 = vmul.f32 %v349, %v385
      %v414 = vmul.f32 %v350, %v385
      %v415 = vmul.f32 %v351, %v385
      %v416 = vmul.f32 %v352, %v385
      %v417 = vmul.f32 %v353, %v385
      %v418 = vmul.f32 %v354, %v385
      %v419 = vmul.f32 %v355, %v385
      %v420 = vmul.f32 %v356, %v385
      %v421 = vmul.f32 %v357, %v385
      %v422 = vmul.f32 %v358, %v385
      %v423 = vmul.f32 %v359, %v385
      %v424 = vmul.f32 %v360, %v385
      %v425 = vmul.f32 %v361, %v385
      %v426 = vmul.f32 %v362, %v385
      %v427 = vmul.f32 %v363, %v385
      %v428 = vmul.f32 %v364, %v385
      %v429 = vmul.f32 %v365, %v385
      %v430 = vmul.f32 %v366, %v385
      %v431 = vmul.f32 %v367, %v385
      %v432 = vmul.f32 %v368, %v385
      %v433 = vmul.f32 %v369, %v385
      %v434 = vmul.f32 %v370, %v385
      %v435 = vmul.f32 %v371, %v385
      %v436 = vmul.f32 %v372, %v385
      %v437 = vmul.f32 %v373, %v385
      %v438 = vmul.f32 %v374, %v385
      %v439 = vmul.f32 %v375, %v385
      %v440 = vmul.f32 %v376, %v385
      %v441 = vmul.f32 %v377, %v385
      %v442 = vmul.f32 %v378, %v385
      %v443 = vmul.f32 %v379, %v385
      %v444 = vld [vmem:[%s3] sm:$0x1]
      %v446 = vlaneseq
      %v447 = vshrl.u32 %v446, 7
      %v448 = vsub.s32 0, %v447
      %v449 = vrot.slane %v444, %v448
      %v451 = vadd.f32 %v387, %v449
      %v452 = vadd.f32 %v388, %v449
      %v453 = vadd.f32 %v389, %v449
      %v454 = vadd.f32 %v390, %v449
      %v455 = vadd.f32 %v391, %v449
      %v456 = vadd.f32 %v392, %v449
      %v457 = vadd.f32 %v393, %v449
      %v458 = vadd.f32 %v394, %v449
      %v459 = vadd.f32 %v395, %v449
      %v460 = vadd.f32 %v396, %v449
      %v461 = vadd.f32 %v397, %v449
      %v462 = vadd.f32 %v398, %v449
      %v463 = vadd.f32 %v399, %v449
      %v464 = vadd.f32 %v400, %v449
      %v465 = vadd.f32 %v401, %v449
      %v466 = vadd.f32 %v402, %v449
      %v467 = vadd.f32 %v403, %v449
      %v468 = vadd.f32 %v404, %v449
      %v469 = vadd.f32 %v405, %v449
      %v470 = vadd.f32 %v406, %v449
      %v471 = vadd.f32 %v407, %v449
      %v472 = vadd.f32 %v408, %v449
      %v473 = vadd.f32 %v409, %v449
      %v474 = vadd.f32 %v410, %v449
      %v475 = vadd.f32 %v411, %v449
      %v476 = vadd.f32 %v412, %v449
      %v477 = vadd.f32 %v413, %v449
      %v478 = vadd.f32 %v414, %v449
      %v479 = vadd.f32 %v415, %v449
      %v480 = vadd.f32 %v416, %v449
      %v481 = vadd.f32 %v417, %v449
      %v482 = vadd.f32 %v418, %v449
      %v483 = vadd.f32 %v419, %v449
      %v484 = vadd.f32 %v420, %v449
      %v485 = vadd.f32 %v421, %v449
      %v486 = vadd.f32 %v422, %v449
      %v487 = vadd.f32 %v423, %v449
      %v488 = vadd.f32 %v424, %v449
      %v489 = vadd.f32 %v425, %v449
      %v490 = vadd.f32 %v426, %v449
      %v491 = vadd.f32 %v427, %v449
      %v492 = vadd.f32 %v428, %v449
      %v493 = vadd.f32 %v429, %v449
      %v494 = vadd.f32 %v430, %v449
      %v495 = vadd.f32 %v431, %v449
      %v496 = vadd.f32 %v432, %v449
      %v497 = vadd.f32 %v433, %v449
      %v498 = vadd.f32 %v434, %v449
      %v499 = vadd.f32 %v435, %v449
      %v500 = vadd.f32 %v436, %v449
      %v501 = vadd.f32 %v437, %v449
      %v502 = vadd.f32 %v438, %v449
      %v503 = vadd.f32 %v439, %v449
      %v504 = vadd.f32 %v440, %v449
      %v505 = vadd.f32 %v441, %v449
      %v506 = vadd.f32 %v442, %v449
      %v507 = vadd.f32 %v443, %v449
      %v508 = vmax.f32 %v451, 0.0
      %v509 = vmax.f32 %v452, 0.0
      %v510 = vmax.f32 %v453, 0.0
      %v511 = vmax.f32 %v454, 0.0
      %v512 = vmax.f32 %v455, 0.0
      %v513 = vmax.f32 %v456, 0.0
      %v514 = vmax.f32 %v457, 0.0
      %v515 = vmax.f32 %v458, 0.0
      %v516 = vmax.f32 %v459, 0.0
      %v517 = vmax.f32 %v460, 0.0
      %v518 = vmax.f32 %v461, 0.0
      %v519 = vmax.f32 %v462, 0.0
      %v520 = vmax.f32 %v463, 0.0
      %v521 = vmax.f32 %v464, 0.0
      %v522 = vmax.f32 %v465, 0.0
      %v523 = vmax.f32 %v466, 0.0
      %v524 = vmax.f32 %v467, 0.0
      %v525 = vmax.f32 %v468, 0.0
      %v526 = vmax.f32 %v469, 0.0
      %v527 = vmax.f32 %v470, 0.0
      %v528 = vmax.f32 %v471, 0.0
      %v529 = vmax.f32 %v472, 0.0
      %v530 = vmax.f32 %v473, 0.0
      %v531 = vmax.f32 %v474, 0.0
      %v532 = vmax.f32 %v475, 0.0
      %v533 = vmax.f32 %v476, 0.0
      %v534 = vmax.f32 %v477, 0.0
      %v535 = vmax.f32 %v478, 0.0
      %v536 = vmax.f32 %v479, 0.0
      %v537 = vmax.f32 %v480, 0.0
      %v538 = vmax.f32 %v481, 0.0
      %v539 = vmax.f32 %v482, 0.0
      %v540 = vmax.f32 %v483, 0.0
      %v541 = vmax.f32 %v484, 0.0
      %v542 = vmax.f32 %v485, 0.0
      %v543 = vmax.f32 %v486, 0.0
      %v544 = vmax.f32 %v487, 0.0
      %v545 = vmax.f32 %v488, 0.0
      %v546 = vmax.f32 %v489, 0.0
      %v547 = vmax.f32 %v490, 0.0
      %v548 = vmax.f32 %v491, 0.0
      %v549 = vmax.f32 %v492, 0.0
      %v550 = vmax.f32 %v493, 0.0
      %v551 = vmax.f32 %v494, 0.0
      %v552 = vmax.f32 %v495, 0.0
      %v553 = vmax.f32 %v496, 0.0
      %v554 = vmax.f32 %v497, 0.0
      %v555 = vmax.f32 %v498, 0.0
      %v556 = vmax.f32 %v499, 0.0
      %v557 = vmax.f32 %v500, 0.0
      %v558 = vmax.f32 %v501, 0.0
      %v559 = vmax.f32 %v502, 0.0
      %v560 = vmax.f32 %v503, 0.0
      %v561 = vmax.f32 %v504, 0.0
      %v562 = vmax.f32 %v505, 0.0
      %v563 = vmax.f32 %v506, 0.0
      %v564 = vmax.f32 %v507, 0.0
      %v565 = vld [vmem:[%s4] sm:$0xff]
      %v566 = vld [vmem:[%s4 + $0x8] sm:$0xff]
      %v567 = vld [vmem:[%s4 + $0x10] sm:$0xff]
      %v568 = vld [vmem:[%s4 + $0x18] sm:$0xff]
      %v569 = vld [vmem:[%s4 + $0x20] sm:$0xff]
      %v570 = vld [vmem:[%s4 + $0x28] sm:$0xff]
      %v571 = vld [vmem:[%s4 + $0x30] sm:$0xff]
      %v572 = vld [vmem:[%s4 + $0x38] sm:$0xff]
      %v573 = vld [vmem:[%s4 + $0x40] sm:$0xff]
      %v574 = vld [vmem:[%s4 + $0x48] sm:$0xff]
      %v575 = vld [vmem:[%s4 + $0x50] sm:$0xff]
      %v576 = vld [vmem:[%s4 + $0x58] sm:$0xff]
      %v577 = vld [vmem:[%s4 + $0x60] sm:$0xff]
      %v578 = vld [vmem:[%s4 + $0x68] sm:$0xff]
      %v579 = vld [vmem:[%s4 + $0x70] sm:$0xff]
      %v580 = vld [vmem:[%s4 + $0x78] sm:$0xff]
      %v581 = vld [vmem:[%s4 + $0x80] sm:$0xff]
      %v582 = vld [vmem:[%s4 + $0x88] sm:$0xff]
      %v583 = vld [vmem:[%s4 + $0x90] sm:$0xff]
      %v584 = vld [vmem:[%s4 + $0x98] sm:$0xff]
      %v585 = vld [vmem:[%s4 + $0xa0] sm:$0xff]
      %v586 = vld [vmem:[%s4 + $0xa8] sm:$0xff]
      %v587 = vld [vmem:[%s4 + $0xb0] sm:$0xff]
      %v588 = vld [vmem:[%s4 + $0xb8] sm:$0xff]
      %v589 = vld [vmem:[%s4 + $0xc0] sm:$0xff]
      %v590 = vld [vmem:[%s4 + $0xc8] sm:$0xff]
      %v591 = vld [vmem:[%s4 + $0xd0] sm:$0xff]
      %v592 = vld [vmem:[%s4 + $0xd8] sm:$0xff]
      %v593 = vld [vmem:[%s4 + $0xe0] sm:$0xff]
      %v594 = vld [vmem:[%s4 + $0xe8] sm:$0xff]
      %v595 = vld [vmem:[%s4 + $0xf0] sm:$0xff]
      %v596 = vld [vmem:[%s4 + $0xf8] sm:$0xff]
      %v597 = vld [vmem:[%s4 + $0x100] sm:$0xff]
      %v598 = vld [vmem:[%s4 + $0x108] sm:$0xff]
      %v599 = vld [vmem:[%s4 + $0x110] sm:$0xff]
      %v600 = vld [vmem:[%s4 + $0x118] sm:$0xff]
      %v601 = vld [vmem:[%s4 + $0x120] sm:$0xff]
      %v602 = vld [vmem:[%s4 + $0x128] sm:$0xff]
      %v603 = vld [vmem:[%s4 + $0x130] sm:$0xff]
      %v604 = vld [vmem:[%s4 + $0x138] sm:$0xff]
      %v605 = vld [vmem:[%s4 + $0x140] sm:$0xff]
      %v606 = vld [vmem:[%s4 + $0x148] sm:$0xff]
      %v607 = vld [vmem:[%s4 + $0x150] sm:$0xff]
      %v608 = vld [vmem:[%s4 + $0x158] sm:$0xff]
      %v609 = vld [vmem:[%s4 + $0x160] sm:$0xff]
      %v610 = vld [vmem:[%s4 + $0x168] sm:$0xff]
      %v611 = vld [vmem:[%s4 + $0x170] sm:$0xff]
      %v612 = vld [vmem:[%s4 + $0x178] sm:$0xff]
      %v613 = vld [vmem:[%s4 + $0x180] sm:$0xff]
      %v614 = vld [vmem:[%s4 + $0x188] sm:$0xff]
      %v615 = vld [vmem:[%s4 + $0x190] sm:$0xff]
      %v616 = vld [vmem:[%s4 + $0x198] sm:$0xff]
      %v617 = vld [vmem:[%s4 + $0x1a0] sm:$0xff]
      %v618 = vld [vmem:[%s4 + $0x1a8] sm:$0xff]
      %v619 = vld [vmem:[%s4 + $0x1b0] sm:$0xff]
      %v620 = vld [vmem:[%s4 + $0x1b8] sm:$0xff]
      %v621 = vld [vmem:[%s4 + $0x1c0] sm:$0xff]
      %623 = vset.pattern.permute.xlu0 0
      %624 = vperm.xlu0 %623, %v565
      %v625 = vpop.permute.xlu0 %624
      %628 = vset.pattern.permute.xlu0 0
      %629 = vperm.xlu0 %628, %v566
      %v630 = vpop.permute.xlu0 %629
      %633 = vset.pattern.permute.xlu0 0
      %634 = vperm.xlu0 %633, %v567
      %v635 = vpop.permute.xlu0 %634
      %638 = vset.pattern.permute.xlu0 0
      %639 = vperm.xlu0 %638, %v568
      %v640 = vpop.permute.xlu0 %639
      %643 = vset.pattern.permute.xlu0 0
      %644 = vperm.xlu0 %643, %v569
      %v645 = vpop.permute.xlu0 %644
      %648 = vset.pattern.permute.xlu0 0
      %649 = vperm.xlu0 %648, %v570
      %v650 = vpop.permute.xlu0 %649
      %653 = vset.pattern.permute.xlu0 0
      %654 = vperm.xlu0 %653, %v571
      %v655 = vpop.permute.xlu0 %654
      %658 = vset.pattern.permute.xlu0 0
      %659 = vperm.xlu0 %658, %v572
      %v660 = vpop.permute.xlu0 %659
      %663 = vset.pattern.permute.xlu0 0
      %664 = vperm.xlu0 %663, %v573
      %v665 = vpop.permute.xlu0 %664
      %668 = vset.pattern.permute.xlu0 0
      %669 = vperm.xlu0 %668, %v574
      %v670 = vpop.permute.xlu0 %669
      %673 = vset.pattern.permute.xlu0 0
      %674 = vperm.xlu0 %673, %v575
      %v675 = vpop.permute.xlu0 %674
      %678 = vset.pattern.permute.xlu0 0
      %679 = vperm.xlu0 %678, %v576
      %v680 = vpop.permute.xlu0 %679
      %683 = vset.pattern.permute.xlu0 0
      %684 = vperm.xlu0 %683, %v577
      %v685 = vpop.permute.xlu0 %684
      %688 = vset.pattern.permute.xlu0 0
      %689 = vperm.xlu0 %688, %v578
      %v690 = vpop.permute.xlu0 %689
      %693 = vset.pattern.permute.xlu0 0
      %694 = vperm.xlu0 %693, %v579
      %v695 = vpop.permute.xlu0 %694
      %698 = vset.pattern.permute.xlu0 0
      %699 = vperm.xlu0 %698, %v580
      %v700 = vpop.permute.xlu0 %699
      %703 = vset.pattern.permute.xlu0 0
      %704 = vperm.xlu0 %703, %v581
      %v705 = vpop.permute.xlu0 %704
      %708 = vset.pattern.permute.xlu0 0
      %709 = vperm.xlu0 %708, %v582
      %v710 = vpop.permute.xlu0 %709
      %713 = vset.pattern.permute.xlu0 0
      %714 = vperm.xlu0 %713, %v583
      %v715 = vpop.permute.xlu0 %714
      %718 = vset.pattern.permute.xlu0 0
      %719 = vperm.xlu0 %718, %v584
      %v720 = vpop.permute.xlu0 %719
      %723 = vset.pattern.permute.xlu0 0
      %724 = vperm.xlu0 %723, %v585
      %v725 = vpop.permute.xlu0 %724
      %728 = vset.pattern.permute.xlu0 0
      %729 = vperm.xlu0 %728, %v586
      %v730 = vpop.permute.xlu0 %729
      %733 = vset.pattern.permute.xlu0 0
      %734 = vperm.xlu0 %733, %v587
      %v735 = vpop.permute.xlu0 %734
      %738 = vset.pattern.permute.xlu0 0
      %739 = vperm.xlu0 %738, %v588
      %v740 = vpop.permute.xlu0 %739
      %743 = vset.pattern.permute.xlu0 0
      %744 = vperm.xlu0 %743, %v589
      %v745 = vpop.permute.xlu0 %744
      %748 = vset.pattern.permute.xlu0 0
      %749 = vperm.xlu0 %748, %v590
      %v750 = vpop.permute.xlu0 %749
      %753 = vset.pattern.permute.xlu0 0
      %754 = vperm.xlu0 %753, %v591
      %v755 = vpop.permute.xlu0 %754
      %758 = vset.pattern.permute.xlu0 0
      %759 = vperm.xlu0 %758, %v592
      %v760 = vpop.permute.xlu0 %759
      %763 = vset.pattern.permute.xlu0 0
      %764 = vperm.xlu0 %763, %v593
      %v765 = vpop.permute.xlu0 %764
      %768 = vset.pattern.permute.xlu0 0
      %769 = vperm.xlu0 %768, %v594
      %v770 = vpop.permute.xlu0 %769
      %773 = vset.pattern.permute.xlu0 0
      %774 = vperm.xlu0 %773, %v595
      %v775 = vpop.permute.xlu0 %774
      %778 = vset.pattern.permute.xlu0 0
      %779 = vperm.xlu0 %778, %v596
      %v780 = vpop.permute.xlu0 %779
      %783 = vset.pattern.permute.xlu0 0
      %784 = vperm.xlu0 %783, %v597
      %v785 = vpop.permute.xlu0 %784
      %788 = vset.pattern.permute.xlu0 0
      %789 = vperm.xlu0 %788, %v598
      %v790 = vpop.permute.xlu0 %789
      %793 = vset.pattern.permute.xlu0 0
      %794 = vperm.xlu0 %793, %v599
      %v795 = vpop.permute.xlu0 %794
      %798 = vset.pattern.permute.xlu0 0
      %799 = vperm.xlu0 %798, %v600
      %v800 = vpop.permute.xlu0 %799
      %803 = vset.pattern.permute.xlu0 0
      %804 = vperm.xlu0 %803, %v601
      %v805 = vpop.permute.xlu0 %804
      %808 = vset.pattern.permute.xlu0 0
      %809 = vperm.xlu0 %808, %v602
      %v810 = vpop.permute.xlu0 %809
      %813 = vset.pattern.permute.xlu0 0
      %814 = vperm.xlu0 %813, %v603
      %v815 = vpop.permute.xlu0 %814
      %818 = vset.pattern.permute.xlu0 0
      %819 = vperm.xlu0 %818, %v604
      %v820 = vpop.permute.xlu0 %819
      %823 = vset.pattern.permute.xlu0 0
      %824 = vperm.xlu0 %823, %v605
      %v825 = vpop.permute.xlu0 %824
      %828 = vset.pattern.permute.xlu0 0
      %829 = vperm.xlu0 %828, %v606
      %v830 = vpop.permute.xlu0 %829
      %833 = vset.pattern.permute.xlu0 0
      %834 = vperm.xlu0 %833, %v607
      %v835 = vpop.permute.xlu0 %834
      %838 = vset.pattern.permute.xlu0 0
      %839 = vperm.xlu0 %838, %v608
      %v840 = vpop.permute.xlu0 %839
      %843 = vset.pattern.permute.xlu0 0
      %844 = vperm.xlu0 %843, %v609
      %v845 = vpop.permute.xlu0 %844
      %848 = vset.pattern.permute.xlu0 0
      %849 = vperm.xlu0 %848, %v610
      %v850 = vpop.permute.xlu0 %849
      %853 = vset.pattern.permute.xlu0 0
      %854 = vperm.xlu0 %853, %v611
      %v855 = vpop.permute.xlu0 %854
      %858 = vset.pattern.permute.xlu0 0
      %859 = vperm.xlu0 %858, %v612
      %v860 = vpop.permute.xlu0 %859
      %863 = vset.pattern.permute.xlu0 0
      %864 = vperm.xlu0 %863, %v613
      %v865 = vpop.permute.xlu0 %864
      %868 = vset.pattern.permute.xlu0 0
      %869 = vperm.xlu0 %868, %v614
      %v870 = vpop.permute.xlu0 %869
      %873 = vset.pattern.permute.xlu0 0
      %874 = vperm.xlu0 %873, %v615
      %v875 = vpop.permute.xlu0 %874
      %878 = vset.pattern.permute.xlu0 0
      %879 = vperm.xlu0 %878, %v616
      %v880 = vpop.permute.xlu0 %879
      %883 = vset.pattern.permute.xlu0 0
      %884 = vperm.xlu0 %883, %v617
      %v885 = vpop.permute.xlu0 %884
      %888 = vset.pattern.permute.xlu0 0
      %889 = vperm.xlu0 %888, %v618
      %v890 = vpop.permute.xlu0 %889
      %893 = vset.pattern.permute.xlu0 0
      %894 = vperm.xlu0 %893, %v619
      %v895 = vpop.permute.xlu0 %894
      %898 = vset.pattern.permute.xlu0 0
      %899 = vperm.xlu0 %898, %v620
      %v900 = vpop.permute.xlu0 %899
      %903 = vset.pattern.permute.xlu0 0
      %904 = vperm.xlu0 %903, %v621
      %v905 = vpop.permute.xlu0 %904
      %v907 = vmul.f32 %v508, %v625
      %v908 = vmul.f32 %v509, %v630
      %v909 = vmul.f32 %v510, %v635
      %v910 = vmul.f32 %v511, %v640
      %v911 = vmul.f32 %v512, %v645
      %v912 = vmul.f32 %v513, %v650
      %v913 = vmul.f32 %v514, %v655
      %v914 = vmul.f32 %v515, %v660
      %v915 = vmul.f32 %v516, %v665
      %v916 = vmul.f32 %v517, %v670
      %v917 = vmul.f32 %v518, %v675
      %v918 = vmul.f32 %v519, %v680
      %v919 = vmul.f32 %v520, %v685
      %v920 = vmul.f32 %v521, %v690
      %v921 = vmul.f32 %v522, %v695
      %v922 = vmul.f32 %v523, %v700
      %v923 = vmul.f32 %v524, %v705
      %v924 = vmul.f32 %v525, %v710
      %v925 = vmul.f32 %v526, %v715
      %v926 = vmul.f32 %v527, %v720
      %v927 = vmul.f32 %v528, %v725
      %v928 = vmul.f32 %v529, %v730
      %v929 = vmul.f32 %v530, %v735
      %v930 = vmul.f32 %v531, %v740
      %v931 = vmul.f32 %v532, %v745
      %v932 = vmul.f32 %v533, %v750
      %v933 = vmul.f32 %v534, %v755
      %v934 = vmul.f32 %v535, %v760
      %v935 = vmul.f32 %v536, %v765
      %v936 = vmul.f32 %v537, %v770
      %v937 = vmul.f32 %v538, %v775
      %v938 = vmul.f32 %v539, %v780
      %v939 = vmul.f32 %v540, %v785
      %v940 = vmul.f32 %v541, %v790
      %v941 = vmul.f32 %v542, %v795
      %v942 = vmul.f32 %v543, %v800
      %v943 = vmul.f32 %v544, %v805
      %v944 = vmul.f32 %v545, %v810
      %v945 = vmul.f32 %v546, %v815
      %v946 = vmul.f32 %v547, %v820
      %v947 = vmul.f32 %v548, %v825
      %v948 = vmul.f32 %v549, %v830
      %v949 = vmul.f32 %v550, %v835
      %v950 = vmul.f32 %v551, %v840
      %v951 = vmul.f32 %v552, %v845
      %v952 = vmul.f32 %v553, %v850
      %v953 = vmul.f32 %v554, %v855
      %v954 = vmul.f32 %v555, %v860
      %v955 = vmul.f32 %v556, %v865
      %v956 = vmul.f32 %v557, %v870
      %v957 = vmul.f32 %v558, %v875
      %v958 = vmul.f32 %v559, %v880
      %v959 = vmul.f32 %v560, %v885
      %v960 = vmul.f32 %v561, %v890
      %v961 = vmul.f32 %v562, %v895
      %v962 = vmul.f32 %v563, %v900
      %v963 = vmul.f32 %v564, %v905
      %964 = vst [vmem:[#allocation2] sm:$0xff] %v907
      %965 = vst [vmem:[#allocation2 + $0x8] sm:$0xff] %v908
      %966 = vst [vmem:[#allocation2 + $0x10] sm:$0xff] %v909
      %967 = vst [vmem:[#allocation2 + $0x18] sm:$0xff] %v910
      %968 = vst [vmem:[#allocation2 + $0x20] sm:$0xff] %v911
      %969 = vst [vmem:[#allocation2 + $0x28] sm:$0xff] %v912
      %970 = vst [vmem:[#allocation2 + $0x30] sm:$0xff] %v913
      %971 = vst [vmem:[#allocation2 + $0x38] sm:$0xff] %v914
      %972 = vst [vmem:[#allocation2 + $0x40] sm:$0xff] %v915
      %973 = vst [vmem:[#allocation2 + $0x48] sm:$0xff] %v916
      %974 = vst [vmem:[#allocation2 + $0x50] sm:$0xff] %v917
      %975 = vst [vmem:[#allocation2 + $0x58] sm:$0xff] %v918
      %976 = vst [vmem:[#allocation2 + $0x60] sm:$0xff] %v919
      %977 = vst [vmem:[#allocation2 + $0x68] sm:$0xff] %v920
      %978 = vst [vmem:[#allocation2 + $0x70] sm:$0xff] %v921
      %979 = vst [vmem:[#allocation2 + $0x78] sm:$0xff] %v922
      %980 = vst [vmem:[#allocation2 + $0x80] sm:$0xff] %v923
      %981 = vst [vmem:[#allocation2 + $0x88] sm:$0xff] %v924
      %982 = vst [vmem:[#allocation2 + $0x90] sm:$0xff] %v925
      %983 = vst [vmem:[#allocation2 + $0x98] sm:$0xff] %v926
      %984 = vst [vmem:[#allocation2 + $0xa0] sm:$0xff] %v927
      %985 = vst [vmem:[#allocation2 + $0xa8] sm:$0xff] %v928
      %986 = vst [vmem:[#allocation2 + $0xb0] sm:$0xff] %v929
      %987 = vst [vmem:[#allocation2 + $0xb8] sm:$0xff] %v930
      %988 = vst [vmem:[#allocation2 + $0xc0] sm:$0xff] %v931
      %989 = vst [vmem:[#allocation2 + $0xc8] sm:$0xff] %v932
      %990 = vst [vmem:[#allocation2 + $0xd0] sm:$0xff] %v933
      %991 = vst [vmem:[#allocation2 + $0xd8] sm:$0xff] %v934
      %992 = vst [vmem:[#allocation2 + $0xe0] sm:$0xff] %v935
      %993 = vst [vmem:[#allocation2 + $0xe8] sm:$0xff] %v936
      %994 = vst [vmem:[#allocation2 + $0xf0] sm:$0xff] %v937
      %995 = vst [vmem:[#allocation2 + $0xf8] sm:$0xff] %v938
      %996 = vst [vmem:[#allocation2 + $0x100] sm:$0xff] %v939
      %997 = vst [vmem:[#allocation2 + $0x108] sm:$0xff] %v940
      %998 = vst [vmem:[#allocation2 + $0x110] sm:$0xff] %v941
      %999 = vst [vmem:[#allocation2 + $0x118] sm:$0xff] %v942
      %1000 = vst [vmem:[#allocation2 + $0x120] sm:$0xff] %v943
      %1001 = vst [vmem:[#allocation2 + $0x128] sm:$0xff] %v944
      %1002 = vst [vmem:[#allocation2 + $0x130] sm:$0xff] %v945
      %1003 = vst [vmem:[#allocation2 + $0x138] sm:$0xff] %v946
      %1004 = vst [vmem:[#allocation2 + $0x140] sm:$0xff] %v947
      %1005 = vst [vmem:[#allocation2 + $0x148] sm:$0xff] %v948
      %1006 = vst [vmem:[#allocation2 + $0x150] sm:$0xff] %v949
      %1007 = vst [vmem:[#allocation2 + $0x158] sm:$0xff] %v950
      %1008 = vst [vmem:[#allocation2 + $0x160] sm:$0xff] %v951
      %1009 = vst [vmem:[#allocation2 + $0x168] sm:$0xff] %v952
      %1010 = vst [vmem:[#allocation2 + $0x170] sm:$0xff] %v953
      %1011 = vst [vmem:[#allocation2 + $0x178] sm:$0xff] %v954
      %1012 = vst [vmem:[#allocation2 + $0x180] sm:$0xff] %v955
      %1013 = vst [vmem:[#allocation2 + $0x188] sm:$0xff] %v956
      %1014 = vst [vmem:[#allocation2 + $0x190] sm:$0xff] %v957
      %1015 = vst [vmem:[#allocation2 + $0x198] sm:$0xff] %v958
      %1016 = vst [vmem:[#allocation2 + $0x1a0] sm:$0xff] %v959
      %1017 = vst [vmem:[#allocation2 + $0x1a8] sm:$0xff] %v960
      %1018 = vst [vmem:[#allocation2 + $0x1b0] sm:$0xff] %v961
      %1019 = vst [vmem:[#allocation2 + $0x1b8] sm:$0xff] %v962
      %1020 = vst [vmem:[#allocation2 + $0x1c0] sm:$0xff] %v963
      %v1021 = vld [vmem:[#allocation2] sm:$0xff]
      %v1022 = vld [vmem:[#allocation2 + $0x8] sm:$0xff]
      %v1023 = vld [vmem:[#allocation2 + $0x10] sm:$0xff]
      %v1024 = vld [vmem:[#allocation2 + $0x18] sm:$0xff]
      %v1025 = vld [vmem:[#allocation2 + $0x20] sm:$0xff]
      %v1026 = vld [vmem:[#allocation2 + $0x28] sm:$0xff]
      %v1027 = vld [vmem:[#allocation2 + $0x30] sm:$0xff]
      %v1028 = vld [vmem:[#allocation2 + $0x38] sm:$0xff]
      %v1029 = vld [vmem:[#allocation2 + $0x40] sm:$0xff]
      %v1030 = vld [vmem:[#allocation2 + $0x48] sm:$0xff]
      %v1031 = vld [vmem:[#allocation2 + $0x50] sm:$0xff]
      %v1032 = vld [vmem:[#allocation2 + $0x58] sm:$0xff]
      %v1033 = vld [vmem:[#allocation2 + $0x60] sm:$0xff]
      %v1034 = vld [vmem:[#allocation2 + $0x68] sm:$0xff]
      %v1035 = vld [vmem:[#allocation2 + $0x70] sm:$0xff]
      %v1036 = vld [vmem:[#allocation2 + $0x78] sm:$0xff]
      %v1037 = vld [vmem:[#allocation2 + $0x80] sm:$0xff]
      %v1038 = vld [vmem:[#allocation2 + $0x88] sm:$0xff]
      %v1039 = vld [vmem:[#allocation2 + $0x90] sm:$0xff]
      %v1040 = vld [vmem:[#allocation2 + $0x98] sm:$0xff]
      %v1041 = vld [vmem:[#allocation2 + $0xa0] sm:$0xff]
      %v1042 = vld [vmem:[#allocation2 + $0xa8] sm:$0xff]
      %v1043 = vld [vmem:[#allocation2 + $0xb0] sm:$0xff]
      %v1044 = vld [vmem:[#allocation2 + $0xb8] sm:$0xff]
      %v1045 = vld [vmem:[#allocation2 + $0xc0] sm:$0xff]
      %v1046 = vld [vmem:[#allocation2 + $0xc8] sm:$0xff]
      %v1047 = vld [vmem:[#allocation2 + $0xd0] sm:$0xff]
      %v1048 = vld [vmem:[#allocation2 + $0xd8] sm:$0xff]
      %v1049 = vld [vmem:[#allocation2 + $0xe0] sm:$0xff]
      %v1050 = vld [vmem:[#allocation2 + $0xe8] sm:$0xff]
      %v1051 = vld [vmem:[#allocation2 + $0xf0] sm:$0xff]
      %v1052 = vld [vmem:[#allocation2 + $0xf8] sm:$0xff]
      %v1053 = vld [vmem:[#allocation2 + $0x100] sm:$0xff]
      %v1054 = vld [vmem:[#allocation2 + $0x108] sm:$0xff]
      %v1055 = vld [vmem:[#allocation2 + $0x110] sm:$0xff]
      %v1056 = vld [vmem:[#allocation2 + $0x118] sm:$0xff]
      %v1057 = vld [vmem:[#allocation2 + $0x120] sm:$0xff]
      %v1058 = vld [vmem:[#allocation2 + $0x128] sm:$0xff]
      %v1059 = vld [vmem:[#allocation2 + $0x130] sm:$0xff]
      %v1060 = vld [vmem:[#allocation2 + $0x138] sm:$0xff]
      %v1061 = vld [vmem:[#allocation2 + $0x140] sm:$0xff]
      %v1062 = vld [vmem:[#allocation2 + $0x148] sm:$0xff]
      %v1063 = vld [vmem:[#allocation2 + $0x150] sm:$0xff]
      %v1064 = vld [vmem:[#allocation2 + $0x158] sm:$0xff]
      %v1065 = vld [vmem:[#allocation2 + $0x160] sm:$0xff]
      %v1066 = vld [vmem:[#allocation2 + $0x168] sm:$0xff]
      %v1067 = vld [vmem:[#allocation2 + $0x170] sm:$0xff]
      %v1068 = vld [vmem:[#allocation2 + $0x178] sm:$0xff]
      %v1069 = vld [vmem:[%s1] sm:$0xff]
      %v1070 = vld [vmem:[%s1 + $0x8] sm:$0xff]
      %v1071 = vld [vmem:[%s1 + $0x10] sm:$0xff]
      %v1072 = vld [vmem:[%s1 + $0x18] sm:$0xff]
      %v1073 = vld [vmem:[%s1 + $0x20] sm:$0xff]
      %v1074 = vld [vmem:[%s1 + $0x28] sm:$0xff]
      %v1075 = vld [vmem:[%s1 + $0x30] sm:$0xff]
      %v1076 = vld [vmem:[%s1 + $0x38] sm:$0xff]
      %v1077 = vld [vmem:[%s1 + $0x40] sm:$0xff]
      %v1078 = vld [vmem:[%s1 + $0x48] sm:$0xff]
      %v1079 = vld [vmem:[%s1 + $0x50] sm:$0xff]
      %v1080 = vld [vmem:[%s1 + $0x58] sm:$0xff]
      %v1081 = vld [vmem:[%s1 + $0x60] sm:$0xff]
      %v1082 = vld [vmem:[%s1 + $0x68] sm:$0xff]
      %v1083 = vld [vmem:[%s1 + $0x70] sm:$0xff]
      %v1084 = vld [vmem:[%s1 + $0x78] sm:$0xff]
      %v1085 = vld [vmem:[#allocation2 + $0x1] sm:$0xff]
      %v1086 = vld [vmem:[#allocation2 + $0x9] sm:$0xff]
      %v1087 = vld [vmem:[#allocation2 + $0x11] sm:$0xff]
      %v1088 = vld [vmem:[#allocation2 + $0x19] sm:$0xff]
      %v1089 = vld [vmem:[#allocation2 + $0x21] sm:$0xff]
      %v1090 = vld [vmem:[#allocation2 + $0x29] sm:$0xff]
      %v1091 = vld [vmem:[#allocation2 + $0x31] sm:$0xff]
      %v1092 = vld [vmem:[#allocation2 + $0x39] sm:$0xff]
      %v1093 = vld [vmem:[#allocation2 + $0x41] sm:$0xff]
      %v1094 = vld [vmem:[#allocation2 + $0x49] sm:$0xff]
      %v1095 = vld [vmem:[#allocation2 + $0x51] sm:$0xff]
      %v1096 = vld [vmem:[#allocation2 + $0x59] sm:$0xff]
      %v1097 = vld [vmem:[#allocation2 + $0x61] sm:$0xff]
      %v1098 = vld [vmem:[#allocation2 + $0x69] sm:$0xff]
      %v1099 = vld [vmem:[#allocation2 + $0x71] sm:$0xff]
      %v1100 = vld [vmem:[#allocation2 + $0x79] sm:$0xff]
      %v1101 = vld [vmem:[#allocation2 + $0x81] sm:$0xff]
      %v1102 = vld [vmem:[#allocation2 + $0x89] sm:$0xff]
      %v1103 = vld [vmem:[#allocation2 + $0x91] sm:$0xff]
      %v1104 = vld [vmem:[#allocation2 + $0x99] sm:$0xff]
      %v1105 = vld [vmem:[#allocation2 + $0xa1] sm:$0xff]
      %v1106 = vld [vmem:[#allocation2 + $0xa9] sm:$0xff]
      %v1107 = vld [vmem:[#allocation2 + $0xb1] sm:$0xff]
      %v1108 = vld [vmem:[#allocation2 + $0xb9] sm:$0xff]
      %v1109 = vld [vmem:[#allocation2 + $0xc1] sm:$0xff]
      %v1110 = vld [vmem:[#allocation2 + $0xc9] sm:$0xff]
      %v1111 = vld [vmem:[#allocation2 + $0xd1] sm:$0xff]
      %v1112 = vld [vmem:[#allocation2 + $0xd9] sm:$0xff]
      %v1113 = vld [vmem:[#allocation2 + $0xe1] sm:$0xff]
      %v1114 = vld [vmem:[#allocation2 + $0xe9] sm:$0xff]
      %v1115 = vld [vmem:[#allocation2 + $0xf1] sm:$0xff]
      %v1116 = vld [vmem:[#allocation2 + $0xf9] sm:$0xff]
      %v1117 = vld [vmem:[#allocation2 + $0x101] sm:$0xff]
      %v1118 = vld [vmem:[#allocation2 + $0x109] sm:$0xff]
      %v1119 = vld [vmem:[#allocation2 + $0x111] sm:$0xff]
      %v1120 = vld [vmem:[#allocation2 + $0x119] sm:$0xff]
      %v1121 = vld [vmem:[#allocation2 + $0x121] sm:$0xff]
      %v1122 = vld [vmem:[#allocation2 + $0x129] sm:$0xff]
      %v1123 = vld [vmem:[#allocation2 + $0x131] sm:$0xff]
      %v1124 = vld [vmem:[#allocation2 + $0x139] sm:$0xff]
      %v1125 = vld [vmem:[#allocation2 + $0x141] sm:$0xff]
      %v1126 = vld [vmem:[#allocation2 + $0x149] sm:$0xff]
      %v1127 = vld [vmem:[#allocation2 + $0x151] sm:$0xff]
      %v1128 = vld [vmem:[#allocation2 + $0x159] sm:$0xff]
      %v1129 = vld [vmem:[#allocation2 + $0x161] sm:$0xff]
      %v1130 = vld [vmem:[#allocation2 + $0x169] sm:$0xff]
      %v1131 = vld [vmem:[#allocation2 + $0x171] sm:$0xff]
      %v1132 = vld [vmem:[#allocation2 + $0x179] sm:$0xff]
      %s1133 = scalar_lea.vmem %s1, 128
      %v1134 = vld [vmem:[%s1133] sm:$0xff]
      %v1135 = vld [vmem:[%s1133 + $0x8] sm:$0xff]
      %v1136 = vld [vmem:[%s1133 + $0x10] sm:$0xff]
      %v1137 = vld [vmem:[%s1133 + $0x18] sm:$0xff]
      %v1138 = vld [vmem:[%s1133 + $0x20] sm:$0xff]
      %v1139 = vld [vmem:[%s1133 + $0x28] sm:$0xff]
      %v1140 = vld [vmem:[%s1133 + $0x30] sm:$0xff]
      %v1141 = vld [vmem:[%s1133 + $0x38] sm:$0xff]
      %v1142 = vld [vmem:[%s1133 + $0x40] sm:$0xff]
      %v1143 = vld [vmem:[%s1133 + $0x48] sm:$0xff]
      %v1144 = vld [vmem:[%s1133 + $0x50] sm:$0xff]
      %v1145 = vld [vmem:[%s1133 + $0x58] sm:$0xff]
      %v1146 = vld [vmem:[%s1133 + $0x60] sm:$0xff]
      %v1147 = vld [vmem:[%s1133 + $0x68] sm:$0xff]
      %v1148 = vld [vmem:[%s1133 + $0x70] sm:$0xff]
      %v1149 = vld [vmem:[%s1133 + $0x78] sm:$0xff]
      %1150 = vmatprep.subr.mxu0 0.0
      %1151 = vmatpush1.msra.mxu0 %v1149
      %1152 = vmatprep.subr.mxu0 0.0
      %1153 = vmatpush1.msra.mxu0 %v1148
      %1154 = vmatprep.subr.mxu0 0.0
      %1155 = vmatpush1.msra.mxu0 %v1147
      %1156 = vmatprep.subr.mxu0 0.0
      %1157 = vmatpush1.msra.mxu0 %v1146
      %1158 = vmatprep.subr.mxu0 0.0
      %1159 = vmatpush1.msra.mxu0 %v1145
      %1160 = vmatprep.subr.mxu0 0.0
      %1161 = vmatpush1.msra.mxu0 %v1144
      %1162 = vmatprep.subr.mxu0 0.0
      %1163 = vmatpush1.msra.mxu0 %v1143
      %1164 = vmatprep.subr.mxu0 0.0
      %1165 = vmatpush1.msra.mxu0 %v1142
      %1166 = vmatprep.subr.mxu0 0.0
      %1167 = vmatpush1.msra.mxu0 %v1141
      %1168 = vmatprep.subr.mxu0 0.0
      %1169 = vmatpush1.msra.mxu0 %v1140
      %1170 = vmatprep.subr.mxu0 0.0
      %1171 = vmatpush1.msra.mxu0 %v1139
      %1172 = vmatprep.subr.mxu0 0.0
      %1173 = vmatpush1.msra.mxu0 %v1138
      %1174 = vmatprep.subr.mxu0 0.0
      %1175 = vmatpush1.msra.mxu0 %v1137
      %1176 = vmatprep.subr.mxu0 0.0
      %1177 = vmatpush1.msra.mxu0 %v1136
      %1178 = vmatprep.subr.mxu0 0.0
      %1179 = vmatpush1.msra.mxu0 %v1135
      %1180 = vmatprep.subr.mxu0 0.0
      %1181 = vmatpush1.msra.mxu0 %v1134
      %1182 = vmatprep.subr.mxu0 0.0
      %1183 = vmatpush2.msra.mxu0 0.0
      %1184 = vmatprep.subr.mxu0 0.0
      %1185 = vmatpush2.msra.mxu0 0.0
      %1186 = vmatprep.subr.mxu0 0.0
      %1187 = vmatpush2.msra.mxu0 0.0
      %1188 = vmatprep.subr.mxu0 0.0
      %1189 = vmatpush2.msra.mxu0 0.0
      %1190 = vmatprep.subr.mxu0 0.0
      %1191 = vmatpush2.msra.mxu0 0.0
      %1192 = vmatprep.subr.mxu0 0.0
      %1193 = vmatpush2.msra.mxu0 0.0
      %1194 = vmatprep.subr.mxu0 0.0
      %1195 = vmatpush2.msra.mxu0 0.0
      %1196 = vmatprep.subr.mxu0 0.0
      %1197 = vmatpush2.msra.mxu0 0.0
      %1198 = vmatprep.subr.mxu0 0.0
      %1199 = vmatpush2.msra.mxu0 0.0
      %1200 = vmatprep.subr.mxu0 0.0
      %1201 = vmatpush2.msra.mxu0 0.0
      %1202 = vmatprep.subr.mxu0 0.0
      %1203 = vmatpush2.msra.mxu0 0.0
      %1204 = vmatprep.subr.mxu0 0.0
      %1205 = vmatpush2.msra.mxu0 0.0
      %1206 = vmatprep.subr.mxu0 0.0
      %1207 = vmatpush2.msra.mxu0 0.0
      %1208 = vmatprep.subr.mxu0 0.0
      %1209 = vmatpush2.msra.mxu0 0.0
      %1210 = vmatprep.subr.mxu0 0.0
      %1211 = vmatpush2.msra.mxu0 0.0
      %1212 = vmatprep.subr.mxu0 0.0
      %1213 = vmatpush2.msra.mxu0 0.0
      %1214 = vmatprep.mubr.f32.mxu0 0.0
      %1215 = vmatmul.mubr.f32.gmra.mxu0 %v1085
      %v1216 = vpop.f32.mrf.mxu0
      %v1217 = vadd.f32 0.0, %v1216
      %v1218 = vpop.f32.mrf.mxu0
      %1219 = vmatprep.mubr.f32.mxu0 0.0
      %1220 = vmatmul.mubr.f32.gmra.mxu0 %v1086
      %v1221 = vpop.f32.mrf.mxu0
      %v1222 = vadd.f32 0.0, %v1221
      %v1223 = vpop.f32.mrf.mxu0
      %1224 = vmatprep.mubr.f32.mxu0 0.0
      %1225 = vmatmul.mubr.f32.gmra.mxu0 %v1087
      %v1226 = vpop.f32.mrf.mxu0
      %v1227 = vadd.f32 0.0, %v1226
      %v1228 = vpop.f32.mrf.mxu0
      %1229 = vmatprep.mubr.f32.mxu0 0.0
      %1230 = vmatmul.mubr.f32.gmra.mxu0 %v1088
      %v1231 = vpop.f32.mrf.mxu0
      %v1232 = vadd.f32 0.0, %v1231
      %v1233 = vpop.f32.mrf.mxu0
      %1234 = vmatprep.mubr.f32.mxu0 0.0
      %1235 = vmatmul.mubr.f32.gmra.mxu0 %v1089
      %v1236 = vpop.f32.mrf.mxu0
      %v1237 = vadd.f32 0.0, %v1236
      %v1238 = vpop.f32.mrf.mxu0
      %1239 = vmatprep.mubr.f32.mxu0 0.0
      %1240 = vmatmul.mubr.f32.gmra.mxu0 %v1090
      %v1241 = vpop.f32.mrf.mxu0
      %v1242 = vadd.f32 0.0, %v1241
      %v1243 = vpop.f32.mrf.mxu0
      %1244 = vmatprep.mubr.f32.mxu0 0.0
      %1245 = vmatmul.mubr.f32.gmra.mxu0 %v1091
      %v1246 = vpop.f32.mrf.mxu0
      %v1247 = vadd.f32 0.0, %v1246
      %v1248 = vpop.f32.mrf.mxu0
      %1249 = vmatprep.mubr.f32.mxu0 0.0
      %1250 = vmatmul.mubr.f32.gmra.mxu0 %v1092
      %v1251 = vpop.f32.mrf.mxu0
      %v1252 = vadd.f32 0.0, %v1251
      %v1253 = vpop.f32.mrf.mxu0
      %1254 = vmatprep.mubr.f32.mxu0 0.0
      %1255 = vmatmul.mubr.f32.gmra.mxu0 %v1093
      %v1256 = vpop.f32.mrf.mxu0
      %v1257 = vadd.f32 0.0, %v1256
      %v1258 = vpop.f32.mrf.mxu0
      %1259 = vmatprep.mubr.f32.mxu0 0.0
      %1260 = vmatmul.mubr.f32.gmra.mxu0 %v1094
      %v1261 = vpop.f32.mrf.mxu0
      %v1262 = vadd.f32 0.0, %v1261
      %v1263 = vpop.f32.mrf.mxu0
      %1264 = vmatprep.mubr.f32.mxu0 0.0
      %1265 = vmatmul.mubr.f32.gmra.mxu0 %v1095
      %v1266 = vpop.f32.mrf.mxu0
      %v1267 = vadd.f32 0.0, %v1266
      %v1268 = vpop.f32.mrf.mxu0
      %1269 = vmatprep.mubr.f32.mxu0 0.0
      %1270 = vmatmul.mubr.f32.gmra.mxu0 %v1096
      %v1271 = vpop.f32.mrf.mxu0
      %v1272 = vadd.f32 0.0, %v1271
      %v1273 = vpop.f32.mrf.mxu0
      %1274 = vmatprep.mubr.f32.mxu0 0.0
      %1275 = vmatmul.mubr.f32.gmra.mxu0 %v1097
      %v1276 = vpop.f32.mrf.mxu0
      %v1277 = vadd.f32 0.0, %v1276
      %v1278 = vpop.f32.mrf.mxu0
      %1279 = vmatprep.mubr.f32.mxu0 0.0
      %1280 = vmatmul.mubr.f32.gmra.mxu0 %v1098
      %v1281 = vpop.f32.mrf.mxu0
      %v1282 = vadd.f32 0.0, %v1281
      %v1283 = vpop.f32.mrf.mxu0
      %1284 = vmatprep.mubr.f32.mxu0 0.0
      %1285 = vmatmul.mubr.f32.gmra.mxu0 %v1099
      %v1286 = vpop.f32.mrf.mxu0
      %v1287 = vadd.f32 0.0, %v1286
      %v1288 = vpop.f32.mrf.mxu0
      %1289 = vmatprep.mubr.f32.mxu0 0.0
      %1290 = vmatmul.mubr.f32.gmra.mxu0 %v1100
      %v1291 = vpop.f32.mrf.mxu0
      %v1292 = vadd.f32 0.0, %v1291
      %v1293 = vpop.f32.mrf.mxu0
      %1294 = vmatprep.mubr.f32.mxu0 0.0
      %1295 = vmatmul.mubr.f32.gmra.mxu0 %v1101
      %v1296 = vpop.f32.mrf.mxu0
      %v1297 = vadd.f32 0.0, %v1296
      %v1298 = vpop.f32.mrf.mxu0
      %1299 = vmatprep.mubr.f32.mxu0 0.0
      %1300 = vmatmul.mubr.f32.gmra.mxu0 %v1102
      %v1301 = vpop.f32.mrf.mxu0
      %v1302 = vadd.f32 0.0, %v1301
      %v1303 = vpop.f32.mrf.mxu0
      %1304 = vmatprep.mubr.f32.mxu0 0.0
      %1305 = vmatmul.mubr.f32.gmra.mxu0 %v1103
      %v1306 = vpop.f32.mrf.mxu0
      %v1307 = vadd.f32 0.0, %v1306
      %v1308 = vpop.f32.mrf.mxu0
      %1309 = vmatprep.mubr.f32.mxu0 0.0
      %1310 = vmatmul.mubr.f32.gmra.mxu0 %v1104
      %v1311 = vpop.f32.mrf.mxu0
      %v1312 = vadd.f32 0.0, %v1311
      %v1313 = vpop.f32.mrf.mxu0
      %1314 = vmatprep.mubr.f32.mxu0 0.0
      %1315 = vmatmul.mubr.f32.gmra.mxu0 %v1105
      %v1316 = vpop.f32.mrf.mxu0
      %v1317 = vadd.f32 0.0, %v1316
      %v1318 = vpop.f32.mrf.mxu0
      %1319 = vmatprep.mubr.f32.mxu0 0.0
      %1320 = vmatmul.mubr.f32.gmra.mxu0 %v1106
      %v1321 = vpop.f32.mrf.mxu0
      %v1322 = vadd.f32 0.0, %v1321
      %v1323 = vpop.f32.mrf.mxu0
      %1324 = vmatprep.mubr.f32.mxu0 0.0
      %1325 = vmatmul.mubr.f32.gmra.mxu0 %v1107
      %v1326 = vpop.f32.mrf.mxu0
      %v1327 = vadd.f32 0.0, %v1326
      %v1328 = vpop.f32.mrf.mxu0
      %1329 = vmatprep.mubr.f32.mxu0 0.0
      %1330 = vmatmul.mubr.f32.gmra.mxu0 %v1108
      %v1331 = vpop.f32.mrf.mxu0
      %v1332 = vadd.f32 0.0, %v1331
      %v1333 = vpop.f32.mrf.mxu0
      %1334 = vmatprep.mubr.f32.mxu0 0.0
      %1335 = vmatmul.mubr.f32.gmra.mxu0 %v1109
      %v1336 = vpop.f32.mrf.mxu0
      %v1337 = vadd.f32 0.0, %v1336
      %v1338 = vpop.f32.mrf.mxu0
      %1339 = vmatprep.mubr.f32.mxu0 0.0
      %1340 = vmatmul.mubr.f32.gmra.mxu0 %v1110
      %v1341 = vpop.f32.mrf.mxu0
      %v1342 = vadd.f32 0.0, %v1341
      %v1343 = vpop.f32.mrf.mxu0
      %1344 = vmatprep.mubr.f32.mxu0 0.0
      %1345 = vmatmul.mubr.f32.gmra.mxu0 %v1111
      %v1346 = vpop.f32.mrf.mxu0
      %v1347 = vadd.f32 0.0, %v1346
      %v1348 = vpop.f32.mrf.mxu0
      %1349 = vmatprep.mubr.f32.mxu0 0.0
      %1350 = vmatmul.mubr.f32.gmra.mxu0 %v1112
      %v1351 = vpop.f32.mrf.mxu0
      %v1352 = vadd.f32 0.0, %v1351
      %v1353 = vpop.f32.mrf.mxu0
      %1354 = vmatprep.mubr.f32.mxu0 0.0
      %1355 = vmatmul.mubr.f32.gmra.mxu0 %v1113
      %v1356 = vpop.f32.mrf.mxu0
      %v1357 = vadd.f32 0.0, %v1356
      %v1358 = vpop.f32.mrf.mxu0
      %1359 = vmatprep.mubr.f32.mxu0 0.0
      %1360 = vmatmul.mubr.f32.gmra.mxu0 %v1114
      %v1361 = vpop.f32.mrf.mxu0
      %v1362 = vadd.f32 0.0, %v1361
      %v1363 = vpop.f32.mrf.mxu0
      %1364 = vmatprep.mubr.f32.mxu0 0.0
      %1365 = vmatmul.mubr.f32.gmra.mxu0 %v1115
      %v1366 = vpop.f32.mrf.mxu0
      %v1367 = vadd.f32 0.0, %v1366
      %v1368 = vpop.f32.mrf.mxu0
      %1369 = vmatprep.mubr.f32.mxu0 0.0
      %1370 = vmatmul.mubr.f32.gmra.mxu0 %v1116
      %v1371 = vpop.f32.mrf.mxu0
      %v1372 = vadd.f32 0.0, %v1371
      %v1373 = vpop.f32.mrf.mxu0
      %1374 = vmatprep.mubr.f32.mxu0 0.0
      %1375 = vmatmul.mubr.f32.gmra.mxu0 %v1117
      %v1376 = vpop.f32.mrf.mxu0
      %v1377 = vadd.f32 0.0, %v1376
      %v1378 = vpop.f32.mrf.mxu0
      %1379 = vmatprep.mubr.f32.mxu0 0.0
      %1380 = vmatmul.mubr.f32.gmra.mxu0 %v1118
      %v1381 = vpop.f32.mrf.mxu0
      %v1382 = vadd.f32 0.0, %v1381
      %v1383 = vpop.f32.mrf.mxu0
      %1384 = vmatprep.mubr.f32.mxu0 0.0
      %1385 = vmatmul.mubr.f32.gmra.mxu0 %v1119
      %v1386 = vpop.f32.mrf.mxu0
      %v1387 = vadd.f32 0.0, %v1386
      %v1388 = vpop.f32.mrf.mxu0
      %1389 = vmatprep.mubr.f32.mxu0 0.0
      %1390 = vmatmul.mubr.f32.gmra.mxu0 %v1120
      %v1391 = vpop.f32.mrf.mxu0
      %v1392 = vadd.f32 0.0, %v1391
      %v1393 = vpop.f32.mrf.mxu0
      %1394 = vmatprep.mubr.f32.mxu0 0.0
      %1395 = vmatmul.mubr.f32.gmra.mxu0 %v1121
      %v1396 = vpop.f32.mrf.mxu0
      %v1397 = vadd.f32 0.0, %v1396
      %v1398 = vpop.f32.mrf.mxu0
      %1399 = vmatprep.mubr.f32.mxu0 0.0
      %1400 = vmatmul.mubr.f32.gmra.mxu0 %v1122
      %v1401 = vpop.f32.mrf.mxu0
      %v1402 = vadd.f32 0.0, %v1401
      %v1403 = vpop.f32.mrf.mxu0
      %1404 = vmatprep.mubr.f32.mxu0 0.0
      %1405 = vmatmul.mubr.f32.gmra.mxu0 %v1123
      %v1406 = vpop.f32.mrf.mxu0
      %v1407 = vadd.f32 0.0, %v1406
      %v1408 = vpop.f32.mrf.mxu0
      %1409 = vmatprep.mubr.f32.mxu0 0.0
      %1410 = vmatmul.mubr.f32.gmra.mxu0 %v1124
      %v1411 = vpop.f32.mrf.mxu0
      %v1412 = vadd.f32 0.0, %v1411
      %v1413 = vpop.f32.mrf.mxu0
      %1414 = vmatprep.mubr.f32.mxu0 0.0
      %1415 = vmatmul.mubr.f32.gmra.mxu0 %v1125
      %v1416 = vpop.f32.mrf.mxu0
      %v1417 = vadd.f32 0.0, %v1416
      %v1418 = vpop.f32.mrf.mxu0
      %1419 = vmatprep.mubr.f32.mxu0 0.0
      %1420 = vmatmul.mubr.f32.gmra.mxu0 %v1126
      %v1421 = vpop.f32.mrf.mxu0
      %v1422 = vadd.f32 0.0, %v1421
      %v1423 = vpop.f32.mrf.mxu0
      %1424 = vmatprep.mubr.f32.mxu0 0.0
      %1425 = vmatmul.mubr.f32.gmra.mxu0 %v1127
      %v1426 = vpop.f32.mrf.mxu0
      %v1427 = vadd.f32 0.0, %v1426
      %v1428 = vpop.f32.mrf.mxu0
      %1429 = vmatprep.mubr.f32.mxu0 0.0
      %1430 = vmatmul.mubr.f32.gmra.mxu0 %v1128
      %v1431 = vpop.f32.mrf.mxu0
      %v1432 = vadd.f32 0.0, %v1431
      %v1433 = vpop.f32.mrf.mxu0
      %1434 = vmatprep.mubr.f32.mxu0 0.0
      %1435 = vmatmul.mubr.f32.gmra.mxu0 %v1129
      %v1436 = vpop.f32.mrf.mxu0
      %v1437 = vadd.f32 0.0, %v1436
      %v1438 = vpop.f32.mrf.mxu0
      %1439 = vmatprep.mubr.f32.mxu0 0.0
      %1440 = vmatmul.mubr.f32.gmra.mxu0 %v1130
      %v1441 = vpop.f32.mrf.mxu0
      %v1442 = vadd.f32 0.0, %v1441
      %v1443 = vpop.f32.mrf.mxu0
      %1444 = vmatprep.mubr.f32.mxu0 0.0
      %1445 = vmatmul.mubr.f32.gmra.mxu0 %v1131
      %v1446 = vpop.f32.mrf.mxu0
      %v1447 = vadd.f32 0.0, %v1446
      %v1448 = vpop.f32.mrf.mxu0
      %1449 = vmatprep.mubr.f32.mxu0 0.0
      %1450 = vmatmul.mubr.f32.gmra.mxu0 %v1132
      %v1451 = vpop.f32.mrf.mxu0
      %v1452 = vadd.f32 0.0, %v1451
      %v1453 = vpop.f32.mrf.mxu0
      %1454 = vdwg.mxu0
      %1455 = vmatprep.subr.mxu0 0.0
      %1456 = vmatpush1.msra.mxu0 %v1084
      %1457 = vmatprep.subr.mxu0 0.0
      %1458 = vmatpush1.msra.mxu0 %v1083
      %1459 = vmatprep.subr.mxu0 0.0
      %1460 = vmatpush1.msra.mxu0 %v1082
      %1461 = vmatprep.subr.mxu0 0.0
      %1462 = vmatpush1.msra.mxu0 %v1081
      %1463 = vmatprep.subr.mxu0 0.0
      %1464 = vmatpush1.msra.mxu0 %v1080
      %1465 = vmatprep.subr.mxu0 0.0
      %1466 = vmatpush1.msra.mxu0 %v1079
      %1467 = vmatprep.subr.mxu0 0.0
      %1468 = vmatpush1.msra.mxu0 %v1078
      %1469 = vmatprep.subr.mxu0 0.0
      %1470 = vmatpush1.msra.mxu0 %v1077
      %1471 = vmatprep.subr.mxu0 0.0
      %1472 = vmatpush1.msra.mxu0 %v1076
      %1473 = vmatprep.subr.mxu0 0.0
      %1474 = vmatpush1.msra.mxu0 %v1075
      %1475 = vmatprep.subr.mxu0 0.0
      %1476 = vmatpush1.msra.mxu0 %v1074
      %1477 = vmatprep.subr.mxu0 0.0
      %1478 = vmatpush1.msra.mxu0 %v1073
      %1479 = vmatprep.subr.mxu0 0.0
      %1480 = vmatpush1.msra.mxu0 %v1072
      %1481 = vmatprep.subr.mxu0 0.0
      %1482 = vmatpush1.msra.mxu0 %v1071
      %1483 = vmatprep.subr.mxu0 0.0
      %1484 = vmatpush1.msra.mxu0 %v1070
      %1485 = vmatprep.subr.mxu0 0.0
      %1486 = vmatpush1.msra.mxu0 %v1069
      %1487 = vmatprep.subr.mxu0 0.0
      %1488 = vmatpush2.msra.mxu0 0.0
      %1489 = vmatprep.subr.mxu0 0.0
      %1490 = vmatpush2.msra.mxu0 0.0
      %1491 = vmatprep.subr.mxu0 0.0
      %1492 = vmatpush2.msra.mxu0 0.0
      %1493 = vmatprep.subr.mxu0 0.0
      %1494 = vmatpush2.msra.mxu0 0.0
      %1495 = vmatprep.subr.mxu0 0.0
      %1496 = vmatpush2.msra.mxu0 0.0
      %1497 = vmatprep.subr.mxu0 0.0
      %1498 = vmatpush2.msra.mxu0 0.0
      %1499 = vmatprep.subr.mxu0 0.0
      %1500 = vmatpush2.msra.mxu0 0.0
      %1501 = vmatprep.subr.mxu0 0.0
      %1502 = vmatpush2.msra.mxu0 0.0
      %1503 = vmatprep.subr.mxu0 0.0
      %1504 = vmatpush2.msra.mxu0 0.0
      %1505 = vmatprep.subr.mxu0 0.0
      %1506 = vmatpush2.msra.mxu0 0.0
      %1507 = vmatprep.subr.mxu0 0.0
      %1508 = vmatpush2.msra.mxu0 0.0
      %1509 = vmatprep.subr.mxu0 0.0
      %1510 = vmatpush2.msra.mxu0 0.0
      %1511 = vmatprep.subr.mxu0 0.0
      %1512 = vmatpush2.msra.mxu0 0.0
      %1513 = vmatprep.subr.mxu0 0.0
      %1514 = vmatpush2.msra.mxu0 0.0
      %1515 = vmatprep.subr.mxu0 0.0
      %1516 = vmatpush2.msra.mxu0 0.0
      %1517 = vmatprep.subr.mxu0 0.0
      %1518 = vmatpush2.msra.mxu0 0.0
      %1519 = vmatprep.mubr.f32.mxu0 0.0
      %1520 = vmatmul.mubr.f32.gmra.mxu0 %v1021
      %v1521 = vpop.f32.mrf.mxu0
      %v1522 = vadd.f32 %v1217, %v1521
      %v1523 = vpop.f32.mrf.mxu0
      %1524 = vmatprep.mubr.f32.mxu0 0.0
      %1525 = vmatmul.mubr.f32.gmra.mxu0 %v1022
      %v1526 = vpop.f32.mrf.mxu0
      %v1527 = vadd.f32 %v1222, %v1526
      %v1528 = vpop.f32.mrf.mxu0
      %1529 = vmatprep.mubr.f32.mxu0 0.0
      %1530 = vmatmul.mubr.f32.gmra.mxu0 %v1023
      %v1531 = vpop.f32.mrf.mxu0
      %v1532 = vadd.f32 %v1227, %v1531
      %v1533 = vpop.f32.mrf.mxu0
      %1534 = vmatprep.mubr.f32.mxu0 0.0
      %1535 = vmatmul.mubr.f32.gmra.mxu0 %v1024
      %v1536 = vpop.f32.mrf.mxu0
      %v1537 = vadd.f32 %v1232, %v1536
      %v1538 = vpop.f32.mrf.mxu0
      %1539 = vmatprep.mubr.f32.mxu0 0.0
      %1540 = vmatmul.mubr.f32.gmra.mxu0 %v1025
      %v1541 = vpop.f32.mrf.mxu0
      %v1542 = vadd.f32 %v1237, %v1541
      %v1543 = vpop.f32.mrf.mxu0
      %1544 = vmatprep.mubr.f32.mxu0 0.0
      %1545 = vmatmul.mubr.f32.gmra.mxu0 %v1026
      %v1546 = vpop.f32.mrf.mxu0
      %v1547 = vadd.f32 %v1242, %v1546
      %v1548 = vpop.f32.mrf.mxu0
      %1549 = vmatprep.mubr.f32.mxu0 0.0
      %1550 = vmatmul.mubr.f32.gmra.mxu0 %v1027
      %v1551 = vpop.f32.mrf.mxu0
      %v1552 = vadd.f32 %v1247, %v1551
      %v1553 = vpop.f32.mrf.mxu0
      %1554 = vmatprep.mubr.f32.mxu0 0.0
      %1555 = vmatmul.mubr.f32.gmra.mxu0 %v1028
      %v1556 = vpop.f32.mrf.mxu0
      %v1557 = vadd.f32 %v1252, %v1556
      %v1558 = vpop.f32.mrf.mxu0
      %1559 = vmatprep.mubr.f32.mxu0 0.0
      %1560 = vmatmul.mubr.f32.gmra.mxu0 %v1029
      %v1561 = vpop.f32.mrf.mxu0
      %v1562 = vadd.f32 %v1257, %v1561
      %v1563 = vpop.f32.mrf.mxu0
      %1564 = vmatprep.mubr.f32.mxu0 0.0
      %1565 = vmatmul.mubr.f32.gmra.mxu0 %v1030
      %v1566 = vpop.f32.mrf.mxu0
      %v1567 = vadd.f32 %v1262, %v1566
      %v1568 = vpop.f32.mrf.mxu0
      %1569 = vmatprep.mubr.f32.mxu0 0.0
      %1570 = vmatmul.mubr.f32.gmra.mxu0 %v1031
      %v1571 = vpop.f32.mrf.mxu0
      %v1572 = vadd.f32 %v1267, %v1571
      %v1573 = vpop.f32.mrf.mxu0
      %1574 = vmatprep.mubr.f32.mxu0 0.0
      %1575 = vmatmul.mubr.f32.gmra.mxu0 %v1032
      %v1576 = vpop.f32.mrf.mxu0
      %v1577 = vadd.f32 %v1272, %v1576
      %v1578 = vpop.f32.mrf.mxu0
      %1579 = vmatprep.mubr.f32.mxu0 0.0
      %1580 = vmatmul.mubr.f32.gmra.mxu0 %v1033
      %v1581 = vpop.f32.mrf.mxu0
      %v1582 = vadd.f32 %v1277, %v1581
      %v1583 = vpop.f32.mrf.mxu0
      %1584 = vmatprep.mubr.f32.mxu0 0.0
      %1585 = vmatmul.mubr.f32.gmra.mxu0 %v1034
      %v1586 = vpop.f32.mrf.mxu0
      %v1587 = vadd.f32 %v1282, %v1586
      %v1588 = vpop.f32.mrf.mxu0
      %1589 = vmatprep.mubr.f32.mxu0 0.0
      %1590 = vmatmul.mubr.f32.gmra.mxu0 %v1035
      %v1591 = vpop.f32.mrf.mxu0
      %v1592 = vadd.f32 %v1287, %v1591
      %v1593 = vpop.f32.mrf.mxu0
      %1594 = vmatprep.mubr.f32.mxu0 0.0
      %1595 = vmatmul.mubr.f32.gmra.mxu0 %v1036
      %v1596 = vpop.f32.mrf.mxu0
      %v1597 = vadd.f32 %v1292, %v1596
      %v1598 = vpop.f32.mrf.mxu0
      %1599 = vmatprep.mubr.f32.mxu0 0.0
      %1600 = vmatmul.mubr.f32.gmra.mxu0 %v1037
      %v1601 = vpop.f32.mrf.mxu0
      %v1602 = vadd.f32 %v1297, %v1601
      %v1603 = vpop.f32.mrf.mxu0
      %1604 = vmatprep.mubr.f32.mxu0 0.0
      %1605 = vmatmul.mubr.f32.gmra.mxu0 %v1038
      %v1606 = vpop.f32.mrf.mxu0
      %v1607 = vadd.f32 %v1302, %v1606
      %v1608 = vpop.f32.mrf.mxu0
      %1609 = vmatprep.mubr.f32.mxu0 0.0
      %1610 = vmatmul.mubr.f32.gmra.mxu0 %v1039
      %v1611 = vpop.f32.mrf.mxu0
      %v1612 = vadd.f32 %v1307, %v1611
      %v1613 = vpop.f32.mrf.mxu0
      %1614 = vmatprep.mubr.f32.mxu0 0.0
      %1615 = vmatmul.mubr.f32.gmra.mxu0 %v1040
      %v1616 = vpop.f32.mrf.mxu0
      %v1617 = vadd.f32 %v1312, %v1616
      %v1618 = vpop.f32.mrf.mxu0
      %1619 = vmatprep.mubr.f32.mxu0 0.0
      %1620 = vmatmul.mubr.f32.gmra.mxu0 %v1041
      %v1621 = vpop.f32.mrf.mxu0
      %v1622 = vadd.f32 %v1317, %v1621
      %v1623 = vpop.f32.mrf.mxu0
      %1624 = vmatprep.mubr.f32.mxu0 0.0
      %1625 = vmatmul.mubr.f32.gmra.mxu0 %v1042
      %v1626 = vpop.f32.mrf.mxu0
      %v1627 = vadd.f32 %v1322, %v1626
      %v1628 = vpop.f32.mrf.mxu0
      %1629 = vmatprep.mubr.f32.mxu0 0.0
      %1630 = vmatmul.mubr.f32.gmra.mxu0 %v1043
      %v1631 = vpop.f32.mrf.mxu0
      %v1632 = vadd.f32 %v1327, %v1631
      %v1633 = vpop.f32.mrf.mxu0
      %1634 = vmatprep.mubr.f32.mxu0 0.0
      %1635 = vmatmul.mubr.f32.gmra.mxu0 %v1044
      %v1636 = vpop.f32.mrf.mxu0
      %v1637 = vadd.f32 %v1332, %v1636
      %v1638 = vpop.f32.mrf.mxu0
      %1639 = vmatprep.mubr.f32.mxu0 0.0
      %1640 = vmatmul.mubr.f32.gmra.mxu0 %v1045
      %v1641 = vpop.f32.mrf.mxu0
      %v1642 = vadd.f32 %v1337, %v1641
      %v1643 = vpop.f32.mrf.mxu0
      %1644 = vmatprep.mubr.f32.mxu0 0.0
      %1645 = vmatmul.mubr.f32.gmra.mxu0 %v1046
      %v1646 = vpop.f32.mrf.mxu0
      %v1647 = vadd.f32 %v1342, %v1646
      %v1648 = vpop.f32.mrf.mxu0
      %1649 = vmatprep.mubr.f32.mxu0 0.0
      %1650 = vmatmul.mubr.f32.gmra.mxu0 %v1047
      %v1651 = vpop.f32.mrf.mxu0
      %v1652 = vadd.f32 %v1347, %v1651
      %v1653 = vpop.f32.mrf.mxu0
      %1654 = vmatprep.mubr.f32.mxu0 0.0
      %1655 = vmatmul.mubr.f32.gmra.mxu0 %v1048
      %v1656 = vpop.f32.mrf.mxu0
      %v1657 = vadd.f32 %v1352, %v1656
      %v1658 = vpop.f32.mrf.mxu0
      %1659 = vmatprep.mubr.f32.mxu0 0.0
      %1660 = vmatmul.mubr.f32.gmra.mxu0 %v1049
      %v1661 = vpop.f32.mrf.mxu0
      %v1662 = vadd.f32 %v1357, %v1661
      %v1663 = vpop.f32.mrf.mxu0
      %1664 = vmatprep.mubr.f32.mxu0 0.0
      %1665 = vmatmul.mubr.f32.gmra.mxu0 %v1050
      %v1666 = vpop.f32.mrf.mxu0
      %v1667 = vadd.f32 %v1362, %v1666
      %v1668 = vpop.f32.mrf.mxu0
      %1669 = vmatprep.mubr.f32.mxu0 0.0
      %1670 = vmatmul.mubr.f32.gmra.mxu0 %v1051
      %v1671 = vpop.f32.mrf.mxu0
      %v1672 = vadd.f32 %v1367, %v1671
      %v1673 = vpop.f32.mrf.mxu0
      %1674 = vmatprep.mubr.f32.mxu0 0.0
      %1675 = vmatmul.mubr.f32.gmra.mxu0 %v1052
      %v1676 = vpop.f32.mrf.mxu0
      %v1677 = vadd.f32 %v1372, %v1676
      %v1678 = vpop.f32.mrf.mxu0
      %1679 = vmatprep.mubr.f32.mxu0 0.0
      %1680 = vmatmul.mubr.f32.gmra.mxu0 %v1053
      %v1681 = vpop.f32.mrf.mxu0
      %v1682 = vadd.f32 %v1377, %v1681
      %v1683 = vpop.f32.mrf.mxu0
      %1684 = vmatprep.mubr.f32.mxu0 0.0
      %1685 = vmatmul.mubr.f32.gmra.mxu0 %v1054
      %v1686 = vpop.f32.mrf.mxu0
      %v1687 = vadd.f32 %v1382, %v1686
      %v1688 = vpop.f32.mrf.mxu0
      %1689 = vmatprep.mubr.f32.mxu0 0.0
      %1690 = vmatmul.mubr.f32.gmra.mxu0 %v1055
      %v1691 = vpop.f32.mrf.mxu0
      %v1692 = vadd.f32 %v1387, %v1691
      %v1693 = vpop.f32.mrf.mxu0
      %1694 = vmatprep.mubr.f32.mxu0 0.0
      %1695 = vmatmul.mubr.f32.gmra.mxu0 %v1056
      %v1696 = vpop.f32.mrf.mxu0
      %v1697 = vadd.f32 %v1392, %v1696
      %v1698 = vpop.f32.mrf.mxu0
      %1699 = vmatprep.mubr.f32.mxu0 0.0
      %1700 = vmatmul.mubr.f32.gmra.mxu0 %v1057
      %v1701 = vpop.f32.mrf.mxu0
      %v1702 = vadd.f32 %v1397, %v1701
      %v1703 = vpop.f32.mrf.mxu0
      %1704 = vmatprep.mubr.f32.mxu0 0.0
      %1705 = vmatmul.mubr.f32.gmra.mxu0 %v1058
      %v1706 = vpop.f32.mrf.mxu0
      %v1707 = vadd.f32 %v1402, %v1706
      %v1708 = vpop.f32.mrf.mxu0
      %1709 = vmatprep.mubr.f32.mxu0 0.0
      %1710 = vmatmul.mubr.f32.gmra.mxu0 %v1059
      %v1711 = vpop.f32.mrf.mxu0
      %v1712 = vadd.f32 %v1407, %v1711
      %v1713 = vpop.f32.mrf.mxu0
      %1714 = vmatprep.mubr.f32.mxu0 0.0
      %1715 = vmatmul.mubr.f32.gmra.mxu0 %v1060
      %v1716 = vpop.f32.mrf.mxu0
      %v1717 = vadd.f32 %v1412, %v1716
      %v1718 = vpop.f32.mrf.mxu0
      %1719 = vmatprep.mubr.f32.mxu0 0.0
      %1720 = vmatmul.mubr.f32.gmra.mxu0 %v1061
      %v1721 = vpop.f32.mrf.mxu0
      %v1722 = vadd.f32 %v1417, %v1721
      %v1723 = vpop.f32.mrf.mxu0
      %1724 = vmatprep.mubr.f32.mxu0 0.0
      %1725 = vmatmul.mubr.f32.gmra.mxu0 %v1062
      %v1726 = vpop.f32.mrf.mxu0
      %v1727 = vadd.f32 %v1422, %v1726
      %v1728 = vpop.f32.mrf.mxu0
      %1729 = vmatprep.mubr.f32.mxu0 0.0
      %1730 = vmatmul.mubr.f32.gmra.mxu0 %v1063
      %v1731 = vpop.f32.mrf.mxu0
      %v1732 = vadd.f32 %v1427, %v1731
      %v1733 = vpop.f32.mrf.mxu0
      %1734 = vmatprep.mubr.f32.mxu0 0.0
      %1735 = vmatmul.mubr.f32.gmra.mxu0 %v1064
      %v1736 = vpop.f32.mrf.mxu0
      %v1737 = vadd.f32 %v1432, %v1736
      %v1738 = vpop.f32.mrf.mxu0
      %1739 = vmatprep.mubr.f32.mxu0 0.0
      %1740 = vmatmul.mubr.f32.gmra.mxu0 %v1065
      %v1741 = vpop.f32.mrf.mxu0
      %v1742 = vadd.f32 %v1437, %v1741
      %v1743 = vpop.f32.mrf.mxu0
      %1744 = vmatprep.mubr.f32.mxu0 0.0
      %1745 = vmatmul.mubr.f32.gmra.mxu0 %v1066
      %v1746 = vpop.f32.mrf.mxu0
      %v1747 = vadd.f32 %v1442, %v1746
      %v1748 = vpop.f32.mrf.mxu0
      %1749 = vmatprep.mubr.f32.mxu0 0.0
      %1750 = vmatmul.mubr.f32.gmra.mxu0 %v1067
      %v1751 = vpop.f32.mrf.mxu0
      %v1752 = vadd.f32 %v1447, %v1751
      %v1753 = vpop.f32.mrf.mxu0
      %1754 = vmatprep.mubr.f32.mxu0 0.0
      %1755 = vmatmul.mubr.f32.gmra.mxu0 %v1068
      %v1756 = vpop.f32.mrf.mxu0
      %v1757 = vadd.f32 %v1452, %v1756
      %v1758 = vpop.f32.mrf.mxu0
      %1759 = vdwg.mxu0
      %v1760 = vld [vmem:[#allocation2 + $0x2] sm:$0xff]
      %v1761 = vld [vmem:[#allocation2 + $0xa] sm:$0xff]
      %v1762 = vld [vmem:[#allocation2 + $0x12] sm:$0xff]
      %v1763 = vld [vmem:[#allocation2 + $0x1a] sm:$0xff]
      %v1764 = vld [vmem:[#allocation2 + $0x22] sm:$0xff]
      %v1765 = vld [vmem:[#allocation2 + $0x2a] sm:$0xff]
      %v1766 = vld [vmem:[#allocation2 + $0x32] sm:$0xff]
      %v1767 = vld [vmem:[#allocation2 + $0x3a] sm:$0xff]
      %v1768 = vld [vmem:[#allocation2 + $0x42] sm:$0xff]
      %v1769 = vld [vmem:[#allocation2 + $0x4a] sm:$0xff]
      %v1770 = vld [vmem:[#allocation2 + $0x52] sm:$0xff]
      %v1771 = vld [vmem:[#allocation2 + $0x5a] sm:$0xff]
      %v1772 = vld [vmem:[#allocation2 + $0x62] sm:$0xff]
      %v1773 = vld [vmem:[#allocation2 + $0x6a] sm:$0xff]
      %v1774 = vld [vmem:[#allocation2 + $0x72] sm:$0xff]
      %v1775 = vld [vmem:[#allocation2 + $0x7a] sm:$0xff]
      %v1776 = vld [vmem:[#allocation2 + $0x82] sm:$0xff]
      %v1777 = vld [vmem:[#allocation2 + $0x8a] sm:$0xff]
      %v1778 = vld [vmem:[#allocation2 + $0x92] sm:$0xff]
      %v1779 = vld [vmem:[#allocation2 + $0x9a] sm:$0xff]
      %v1780 = vld [vmem:[#allocation2 + $0xa2] sm:$0xff]
      %v1781 = vld [vmem:[#allocation2 + $0xaa] sm:$0xff]
      %v1782 = vld [vmem:[#allocation2 + $0xb2] sm:$0xff]
      %v1783 = vld [vmem:[#allocation2 + $0xba] sm:$0xff]
      %v1784 = vld [vmem:[#allocation2 + $0xc2] sm:$0xff]
      %v1785 = vld [vmem:[#allocation2 + $0xca] sm:$0xff]
      %v1786 = vld [vmem:[#allocation2 + $0xd2] sm:$0xff]
      %v1787 = vld [vmem:[#allocation2 + $0xda] sm:$0xff]
      %v1788 = vld [vmem:[#allocation2 + $0xe2] sm:$0xff]
      %v1789 = vld [vmem:[#allocation2 + $0xea] sm:$0xff]
      %v1790 = vld [vmem:[#allocation2 + $0xf2] sm:$0xff]
      %v1791 = vld [vmem:[#allocation2 + $0xfa] sm:$0xff]
      %v1792 = vld [vmem:[#allocation2 + $0x102] sm:$0xff]
      %v1793 = vld [vmem:[#allocation2 + $0x10a] sm:$0xff]
      %v1794 = vld [vmem:[#allocation2 + $0x112] sm:$0xff]
      %v1795 = vld [vmem:[#allocation2 + $0x11a] sm:$0xff]
      %v1796 = vld [vmem:[#allocation2 + $0x122] sm:$0xff]
      %v1797 = vld [vmem:[#allocation2 + $0x12a] sm:$0xff]
      %v1798 = vld [vmem:[#allocation2 + $0x132] sm:$0xff]
      %v1799 = vld [vmem:[#allocation2 + $0x13a] sm:$0xff]
      %v1800 = vld [vmem:[#allocation2 + $0x142] sm:$0xff]
      %v1801 = vld [vmem:[#allocation2 + $0x14a] sm:$0xff]
      %v1802 = vld [vmem:[#allocation2 + $0x152] sm:$0xff]
      %v1803 = vld [vmem:[#allocation2 + $0x15a] sm:$0xff]
      %v1804 = vld [vmem:[#allocation2 + $0x162] sm:$0xff]
      %v1805 = vld [vmem:[#allocation2 + $0x16a] sm:$0xff]
      %v1806 = vld [vmem:[#allocation2 + $0x172] sm:$0xff]
      %v1807 = vld [vmem:[#allocation2 + $0x17a] sm:$0xff]
      %s1808 = scalar_lea.vmem %s1, 256
      %v1809 = vld [vmem:[%s1808] sm:$0xff]
      %v1810 = vld [vmem:[%s1808 + $0x8] sm:$0xff]
      %v1811 = vld [vmem:[%s1808 + $0x10] sm:$0xff]
      %v1812 = vld [vmem:[%s1808 + $0x18] sm:$0xff]
      %v1813 = vld [vmem:[%s1808 + $0x20] sm:$0xff]
      %v1814 = vld [vmem:[%s1808 + $0x28] sm:$0xff]
      %v1815 = vld [vmem:[%s1808 + $0x30] sm:$0xff]
      %v1816 = vld [vmem:[%s1808 + $0x38] sm:$0xff]
      %v1817 = vld [vmem:[%s1808 + $0x40] sm:$0xff]
      %v1818 = vld [vmem:[%s1808 + $0x48] sm:$0xff]
      %v1819 = vld [vmem:[%s1808 + $0x50] sm:$0xff]
      %v1820 = vld [vmem:[%s1808 + $0x58] sm:$0xff]
      %v1821 = vld [vmem:[%s1808 + $0x60] sm:$0xff]
      %v1822 = vld [vmem:[%s1808 + $0x68] sm:$0xff]
      %v1823 = vld [vmem:[%s1808 + $0x70] sm:$0xff]
      %v1824 = vld [vmem:[%s1808 + $0x78] sm:$0xff]
      %1825 = vmatprep.subr.mxu0 0.0
      %1826 = vmatpush1.msra.mxu0 %v1824
      %1827 = vmatprep.subr.mxu0 0.0
      %1828 = vmatpush1.msra.mxu0 %v1823
      %1829 = vmatprep.subr.mxu0 0.0
      %1830 = vmatpush1.msra.mxu0 %v1822
      %1831 = vmatprep.subr.mxu0 0.0
      %1832 = vmatpush1.msra.mxu0 %v1821
      %1833 = vmatprep.subr.mxu0 0.0
      %1834 = vmatpush1.msra.mxu0 %v1820
      %1835 = vmatprep.subr.mxu0 0.0
      %1836 = vmatpush1.msra.mxu0 %v1819
      %1837 = vmatprep.subr.mxu0 0.0
      %1838 = vmatpush1.msra.mxu0 %v1818
      %1839 = vmatprep.subr.mxu0 0.0
      %1840 = vmatpush1.msra.mxu0 %v1817
      %1841 = vmatprep.subr.mxu0 0.0
      %1842 = vmatpush1.msra.mxu0 %v1816
      %1843 = vmatprep.subr.mxu0 0.0
      %1844 = vmatpush1.msra.mxu0 %v1815
      %1845 = vmatprep.subr.mxu0 0.0
      %1846 = vmatpush1.msra.mxu0 %v1814
      %1847 = vmatprep.subr.mxu0 0.0
      %1848 = vmatpush1.msra.mxu0 %v1813
      %1849 = vmatprep.subr.mxu0 0.0
      %1850 = vmatpush1.msra.mxu0 %v1812
      %1851 = vmatprep.subr.mxu0 0.0
      %1852 = vmatpush1.msra.mxu0 %v1811
      %1853 = vmatprep.subr.mxu0 0.0
      %1854 = vmatpush1.msra.mxu0 %v1810
      %1855 = vmatprep.subr.mxu0 0.0
      %1856 = vmatpush1.msra.mxu0 %v1809
      %1857 = vmatprep.subr.mxu0 0.0
      %1858 = vmatpush2.msra.mxu0 0.0
      %1859 = vmatprep.subr.mxu0 0.0
      %1860 = vmatpush2.msra.mxu0 0.0
      %1861 = vmatprep.subr.mxu0 0.0
      %1862 = vmatpush2.msra.mxu0 0.0
      %1863 = vmatprep.subr.mxu0 0.0
      %1864 = vmatpush2.msra.mxu0 0.0
      %1865 = vmatprep.subr.mxu0 0.0
      %1866 = vmatpush2.msra.mxu0 0.0
      %1867 = vmatprep.subr.mxu0 0.0
      %1868 = vmatpush2.msra.mxu0 0.0
      %1869 = vmatprep.subr.mxu0 0.0
      %1870 = vmatpush2.msra.mxu0 0.0
      %1871 = vmatprep.subr.mxu0 0.0
      %1872 = vmatpush2.msra.mxu0 0.0
      %1873 = vmatprep.subr.mxu0 0.0
      %1874 = vmatpush2.msra.mxu0 0.0
      %1875 = vmatprep.subr.mxu0 0.0
      %1876 = vmatpush2.msra.mxu0 0.0
      %1877 = vmatprep.subr.mxu0 0.0
      %1878 = vmatpush2.msra.mxu0 0.0
      %1879 = vmatprep.subr.mxu0 0.0
      %1880 = vmatpush2.msra.mxu0 0.0
      %1881 = vmatprep.subr.mxu0 0.0
      %1882 = vmatpush2.msra.mxu0 0.0
      %1883 = vmatprep.subr.mxu0 0.0
      %1884 = vmatpush2.msra.mxu0 0.0
      %1885 = vmatprep.subr.mxu0 0.0
      %1886 = vmatpush2.msra.mxu0 0.0
      %1887 = vmatprep.subr.mxu0 0.0
      %1888 = vmatpush2.msra.mxu0 0.0
      %1889 = vmatprep.mubr.f32.mxu0 0.0
      %1890 = vmatmul.mubr.f32.gmra.mxu0 %v1760
      %v1891 = vpop.f32.mrf.mxu0
      %v1892 = vadd.f32 0.0, %v1891
      %v1893 = vpop.f32.mrf.mxu0
      %1894 = vmatprep.mubr.f32.mxu0 0.0
      %1895 = vmatmul.mubr.f32.gmra.mxu0 %v1761
      %v1896 = vpop.f32.mrf.mxu0
      %v1897 = vadd.f32 0.0, %v1896
      %v1898 = vpop.f32.mrf.mxu0
      %1899 = vmatprep.mubr.f32.mxu0 0.0
      %1900 = vmatmul.mubr.f32.gmra.mxu0 %v1762
      %v1901 = vpop.f32.mrf.mxu0
      %v1902 = vadd.f32 0.0, %v1901
      %v1903 = vpop.f32.mrf.mxu0
      %1904 = vmatprep.mubr.f32.mxu0 0.0
      %1905 = vmatmul.mubr.f32.gmra.mxu0 %v1763
      %v1906 = vpop.f32.mrf.mxu0
      %v1907 = vadd.f32 0.0, %v1906
      %v1908 = vpop.f32.mrf.mxu0
      %1909 = vmatprep.mubr.f32.mxu0 0.0
      %1910 = vmatmul.mubr.f32.gmra.mxu0 %v1764
      %v1911 = vpop.f32.mrf.mxu0
      %v1912 = vadd.f32 0.0, %v1911
      %v1913 = vpop.f32.mrf.mxu0
      %1914 = vmatprep.mubr.f32.mxu0 0.0
      %1915 = vmatmul.mubr.f32.gmra.mxu0 %v1765
      %v1916 = vpop.f32.mrf.mxu0
      %v1917 = vadd.f32 0.0, %v1916
      %v1918 = vpop.f32.mrf.mxu0
      %1919 = vmatprep.mubr.f32.mxu0 0.0
      %1920 = vmatmul.mubr.f32.gmra.mxu0 %v1766
      %v1921 = vpop.f32.mrf.mxu0
      %v1922 = vadd.f32 0.0, %v1921
      %v1923 = vpop.f32.mrf.mxu0
      %1924 = vmatprep.mubr.f32.mxu0 0.0
      %1925 = vmatmul.mubr.f32.gmra.mxu0 %v1767
      %v1926 = vpop.f32.mrf.mxu0
      %v1927 = vadd.f32 0.0, %v1926
      %v1928 = vpop.f32.mrf.mxu0
      %1929 = vmatprep.mubr.f32.mxu0 0.0
      %1930 = vmatmul.mubr.f32.gmra.mxu0 %v1768
      %v1931 = vpop.f32.mrf.mxu0
      %v1932 = vadd.f32 0.0, %v1931
      %v1933 = vpop.f32.mrf.mxu0
      %1934 = vmatprep.mubr.f32.mxu0 0.0
      %1935 = vmatmul.mubr.f32.gmra.mxu0 %v1769
      %v1936 = vpop.f32.mrf.mxu0
      %v1937 = vadd.f32 0.0, %v1936
      %v1938 = vpop.f32.mrf.mxu0
      %1939 = vmatprep.mubr.f32.mxu0 0.0
      %1940 = vmatmul.mubr.f32.gmra.mxu0 %v1770
      %v1941 = vpop.f32.mrf.mxu0
      %v1942 = vadd.f32 0.0, %v1941
      %v1943 = vpop.f32.mrf.mxu0
      %1944 = vmatprep.mubr.f32.mxu0 0.0
      %1945 = vmatmul.mubr.f32.gmra.mxu0 %v1771
      %v1946 = vpop.f32.mrf.mxu0
      %v1947 = vadd.f32 0.0, %v1946
      %v1948 = vpop.f32.mrf.mxu0
      %1949 = vmatprep.mubr.f32.mxu0 0.0
      %1950 = vmatmul.mubr.f32.gmra.mxu0 %v1772
      %v1951 = vpop.f32.mrf.mxu0
      %v1952 = vadd.f32 0.0, %v1951
      %v1953 = vpop.f32.mrf.mxu0
      %1954 = vmatprep.mubr.f32.mxu0 0.0
      %1955 = vmatmul.mubr.f32.gmra.mxu0 %v1773
      %v1956 = vpop.f32.mrf.mxu0
      %v1957 = vadd.f32 0.0, %v1956
      %v1958 = vpop.f32.mrf.mxu0
      %1959 = vmatprep.mubr.f32.mxu0 0.0
      %1960 = vmatmul.mubr.f32.gmra.mxu0 %v1774
      %v1961 = vpop.f32.mrf.mxu0
      %v1962 = vadd.f32 0.0, %v1961
      %v1963 = vpop.f32.mrf.mxu0
      %1964 = vmatprep.mubr.f32.mxu0 0.0
      %1965 = vmatmul.mubr.f32.gmra.mxu0 %v1775
      %v1966 = vpop.f32.mrf.mxu0
      %v1967 = vadd.f32 0.0, %v1966
      %v1968 = vpop.f32.mrf.mxu0
      %1969 = vmatprep.mubr.f32.mxu0 0.0
      %1970 = vmatmul.mubr.f32.gmra.mxu0 %v1776
      %v1971 = vpop.f32.mrf.mxu0
      %v1972 = vadd.f32 0.0, %v1971
      %v1973 = vpop.f32.mrf.mxu0
      %1974 = vmatprep.mubr.f32.mxu0 0.0
      %1975 = vmatmul.mubr.f32.gmra.mxu0 %v1777
      %v1976 = vpop.f32.mrf.mxu0
      %v1977 = vadd.f32 0.0, %v1976
      %v1978 = vpop.f32.mrf.mxu0
      %1979 = vmatprep.mubr.f32.mxu0 0.0
      %1980 = vmatmul.mubr.f32.gmra.mxu0 %v1778
      %v1981 = vpop.f32.mrf.mxu0
      %v1982 = vadd.f32 0.0, %v1981
      %v1983 = vpop.f32.mrf.mxu0
      %1984 = vmatprep.mubr.f32.mxu0 0.0
      %1985 = vmatmul.mubr.f32.gmra.mxu0 %v1779
      %v1986 = vpop.f32.mrf.mxu0
      %v1987 = vadd.f32 0.0, %v1986
      %v1988 = vpop.f32.mrf.mxu0
      %1989 = vmatprep.mubr.f32.mxu0 0.0
      %1990 = vmatmul.mubr.f32.gmra.mxu0 %v1780
      %v1991 = vpop.f32.mrf.mxu0
      %v1992 = vadd.f32 0.0, %v1991
      %v1993 = vpop.f32.mrf.mxu0
      %1994 = vmatprep.mubr.f32.mxu0 0.0
      %1995 = vmatmul.mubr.f32.gmra.mxu0 %v1781
      %v1996 = vpop.f32.mrf.mxu0
      %v1997 = vadd.f32 0.0, %v1996
      %v1998 = vpop.f32.mrf.mxu0
      %1999 = vmatprep.mubr.f32.mxu0 0.0
      %2000 = vmatmul.mubr.f32.gmra.mxu0 %v1782
      %v2001 = vpop.f32.mrf.mxu0
      %v2002 = vadd.f32 0.0, %v2001
      %v2003 = vpop.f32.mrf.mxu0
      %2004 = vmatprep.mubr.f32.mxu0 0.0
      %2005 = vmatmul.mubr.f32.gmra.mxu0 %v1783
      %v2006 = vpop.f32.mrf.mxu0
      %v2007 = vadd.f32 0.0, %v2006
      %v2008 = vpop.f32.mrf.mxu0
      %2009 = vmatprep.mubr.f32.mxu0 0.0
      %2010 = vmatmul.mubr.f32.gmra.mxu0 %v1784
      %v2011 = vpop.f32.mrf.mxu0
      %v2012 = vadd.f32 0.0, %v2011
      %v2013 = vpop.f32.mrf.mxu0
      %2014 = vmatprep.mubr.f32.mxu0 0.0
      %2015 = vmatmul.mubr.f32.gmra.mxu0 %v1785
      %v2016 = vpop.f32.mrf.mxu0
      %v2017 = vadd.f32 0.0, %v2016
      %v2018 = vpop.f32.mrf.mxu0
      %2019 = vmatprep.mubr.f32.mxu0 0.0
      %2020 = vmatmul.mubr.f32.gmra.mxu0 %v1786
      %v2021 = vpop.f32.mrf.mxu0
      %v2022 = vadd.f32 0.0, %v2021
      %v2023 = vpop.f32.mrf.mxu0
      %2024 = vmatprep.mubr.f32.mxu0 0.0
      %2025 = vmatmul.mubr.f32.gmra.mxu0 %v1787
      %v2026 = vpop.f32.mrf.mxu0
      %v2027 = vadd.f32 0.0, %v2026
      %v2028 = vpop.f32.mrf.mxu0
      %2029 = vmatprep.mubr.f32.mxu0 0.0
      %2030 = vmatmul.mubr.f32.gmra.mxu0 %v1788
      %v2031 = vpop.f32.mrf.mxu0
      %v2032 = vadd.f32 0.0, %v2031
      %v2033 = vpop.f32.mrf.mxu0
      %2034 = vmatprep.mubr.f32.mxu0 0.0
      %2035 = vmatmul.mubr.f32.gmra.mxu0 %v1789
      %v2036 = vpop.f32.mrf.mxu0
      %v2037 = vadd.f32 0.0, %v2036
      %v2038 = vpop.f32.mrf.mxu0
      %2039 = vmatprep.mubr.f32.mxu0 0.0
      %2040 = vmatmul.mubr.f32.gmra.mxu0 %v1790
      %v2041 = vpop.f32.mrf.mxu0
      %v2042 = vadd.f32 0.0, %v2041
      %v2043 = vpop.f32.mrf.mxu0
      %2044 = vmatprep.mubr.f32.mxu0 0.0
      %2045 = vmatmul.mubr.f32.gmra.mxu0 %v1791
      %v2046 = vpop.f32.mrf.mxu0
      %v2047 = vadd.f32 0.0, %v2046
      %v2048 = vpop.f32.mrf.mxu0
      %2049 = vmatprep.mubr.f32.mxu0 0.0
      %2050 = vmatmul.mubr.f32.gmra.mxu0 %v1792
      %v2051 = vpop.f32.mrf.mxu0
      %v2052 = vadd.f32 0.0, %v2051
      %v2053 = vpop.f32.mrf.mxu0
      %2054 = vmatprep.mubr.f32.mxu0 0.0
      %2055 = vmatmul.mubr.f32.gmra.mxu0 %v1793
      %v2056 = vpop.f32.mrf.mxu0
      %v2057 = vadd.f32 0.0, %v2056
      %v2058 = vpop.f32.mrf.mxu0
      %2059 = vmatprep.mubr.f32.mxu0 0.0
      %2060 = vmatmul.mubr.f32.gmra.mxu0 %v1794
      %v2061 = vpop.f32.mrf.mxu0
      %v2062 = vadd.f32 0.0, %v2061
      %v2063 = vpop.f32.mrf.mxu0
      %2064 = vmatprep.mubr.f32.mxu0 0.0
      %2065 = vmatmul.mubr.f32.gmra.mxu0 %v1795
      %v2066 = vpop.f32.mrf.mxu0
      %v2067 = vadd.f32 0.0, %v2066
      %v2068 = vpop.f32.mrf.mxu0
      %2069 = vmatprep.mubr.f32.mxu0 0.0
      %2070 = vmatmul.mubr.f32.gmra.mxu0 %v1796
      %v2071 = vpop.f32.mrf.mxu0
      %v2072 = vadd.f32 0.0, %v2071
      %v2073 = vpop.f32.mrf.mxu0
      %2074 = vmatprep.mubr.f32.mxu0 0.0
      %2075 = vmatmul.mubr.f32.gmra.mxu0 %v1797
      %v2076 = vpop.f32.mrf.mxu0
      %v2077 = vadd.f32 0.0, %v2076
      %v2078 = vpop.f32.mrf.mxu0
      %2079 = vmatprep.mubr.f32.mxu0 0.0
      %2080 = vmatmul.mubr.f32.gmra.mxu0 %v1798
      %v2081 = vpop.f32.mrf.mxu0
      %v2082 = vadd.f32 0.0, %v2081
      %v2083 = vpop.f32.mrf.mxu0
      %2084 = vmatprep.mubr.f32.mxu0 0.0
      %2085 = vmatmul.mubr.f32.gmra.mxu0 %v1799
      %v2086 = vpop.f32.mrf.mxu0
      %v2087 = vadd.f32 0.0, %v2086
      %v2088 = vpop.f32.mrf.mxu0
      %2089 = vmatprep.mubr.f32.mxu0 0.0
      %2090 = vmatmul.mubr.f32.gmra.mxu0 %v1800
      %v2091 = vpop.f32.mrf.mxu0
      %v2092 = vadd.f32 0.0, %v2091
      %v2093 = vpop.f32.mrf.mxu0
      %2094 = vmatprep.mubr.f32.mxu0 0.0
      %2095 = vmatmul.mubr.f32.gmra.mxu0 %v1801
      %v2096 = vpop.f32.mrf.mxu0
      %v2097 = vadd.f32 0.0, %v2096
      %v2098 = vpop.f32.mrf.mxu0
      %2099 = vmatprep.mubr.f32.mxu0 0.0
      %2100 = vmatmul.mubr.f32.gmra.mxu0 %v1802
      %v2101 = vpop.f32.mrf.mxu0
      %v2102 = vadd.f32 0.0, %v2101
      %v2103 = vpop.f32.mrf.mxu0
      %2104 = vmatprep.mubr.f32.mxu0 0.0
      %2105 = vmatmul.mubr.f32.gmra.mxu0 %v1803
      %v2106 = vpop.f32.mrf.mxu0
      %v2107 = vadd.f32 0.0, %v2106
      %v2108 = vpop.f32.mrf.mxu0
      %2109 = vmatprep.mubr.f32.mxu0 0.0
      %2110 = vmatmul.mubr.f32.gmra.mxu0 %v1804
      %v2111 = vpop.f32.mrf.mxu0
      %v2112 = vadd.f32 0.0, %v2111
      %v2113 = vpop.f32.mrf.mxu0
      %2114 = vmatprep.mubr.f32.mxu0 0.0
      %2115 = vmatmul.mubr.f32.gmra.mxu0 %v1805
      %v2116 = vpop.f32.mrf.mxu0
      %v2117 = vadd.f32 0.0, %v2116
      %v2118 = vpop.f32.mrf.mxu0
      %2119 = vmatprep.mubr.f32.mxu0 0.0
      %2120 = vmatmul.mubr.f32.gmra.mxu0 %v1806
      %v2121 = vpop.f32.mrf.mxu0
      %v2122 = vadd.f32 0.0, %v2121
      %v2123 = vpop.f32.mrf.mxu0
      %2124 = vmatprep.mubr.f32.mxu0 0.0
      %2125 = vmatmul.mubr.f32.gmra.mxu0 %v1807
      %v2126 = vpop.f32.mrf.mxu0
      %v2127 = vadd.f32 0.0, %v2126
      %v2128 = vpop.f32.mrf.mxu0
      %2129 = vdwg.mxu0
      %v2130 = vadd.f32 %v1522, %v1892
      %v2131 = vadd.f32 %v1527, %v1897
      %v2132 = vadd.f32 %v1532, %v1902
      %v2133 = vadd.f32 %v1537, %v1907
      %v2134 = vadd.f32 %v1542, %v1912
      %v2135 = vadd.f32 %v1547, %v1917
      %v2136 = vadd.f32 %v1552, %v1922
      %v2137 = vadd.f32 %v1557, %v1927
      %v2138 = vadd.f32 %v1562, %v1932
      %v2139 = vadd.f32 %v1567, %v1937
      %v2140 = vadd.f32 %v1572, %v1942
      %v2141 = vadd.f32 %v1577, %v1947
      %v2142 = vadd.f32 %v1582, %v1952
      %v2143 = vadd.f32 %v1587, %v1957
      %v2144 = vadd.f32 %v1592, %v1962
      %v2145 = vadd.f32 %v1597, %v1967
      %v2146 = vadd.f32 %v1602, %v1972
      %v2147 = vadd.f32 %v1607, %v1977
      %v2148 = vadd.f32 %v1612, %v1982
      %v2149 = vadd.f32 %v1617, %v1987
      %v2150 = vadd.f32 %v1622, %v1992
      %v2151 = vadd.f32 %v1627, %v1997
      %v2152 = vadd.f32 %v1632, %v2002
      %v2153 = vadd.f32 %v1637, %v2007
      %v2154 = vadd.f32 %v1642, %v2012
      %v2155 = vadd.f32 %v1647, %v2017
      %v2156 = vadd.f32 %v1652, %v2022
      %v2157 = vadd.f32 %v1657, %v2027
      %v2158 = vadd.f32 %v1662, %v2032
      %v2159 = vadd.f32 %v1667, %v2037
      %v2160 = vadd.f32 %v1672, %v2042
      %v2161 = vadd.f32 %v1677, %v2047
      %v2162 = vadd.f32 %v1682, %v2052
      %v2163 = vadd.f32 %v1687, %v2057
      %v2164 = vadd.f32 %v1692, %v2062
      %v2165 = vadd.f32 %v1697, %v2067
      %v2166 = vadd.f32 %v1702, %v2072
      %v2167 = vadd.f32 %v1707, %v2077
      %v2168 = vadd.f32 %v1712, %v2082
      %v2169 = vadd.f32 %v1717, %v2087
      %v2170 = vadd.f32 %v1722, %v2092
      %v2171 = vadd.f32 %v1727, %v2097
      %v2172 = vadd.f32 %v1732, %v2102
      %v2173 = vadd.f32 %v1737, %v2107
      %v2174 = vadd.f32 %v1742, %v2112
      %v2175 = vadd.f32 %v1747, %v2117
      %v2176 = vadd.f32 %v1752, %v2122
      %v2177 = vadd.f32 %v1757, %v2127
      %v2178 = vld [vmem:[#allocation2 + $0x18] sm:$0xff]
      %v2179 = vld [vmem:[#allocation2 + $0x20] sm:$0xff]
      %v2180 = vld [vmem:[#allocation2 + $0x28] sm:$0xff]
      %v2181 = vld [vmem:[#allocation2 + $0x30] sm:$0xff]
      %v2182 = vld [vmem:[#allocation2 + $0x38] sm:$0xff]
      %v2183 = vld [vmem:[#allocation2 + $0x40] sm:$0xff]
      %v2184 = vld [vmem:[#allocation2 + $0x48] sm:$0xff]
      %v2185 = vld [vmem:[#allocation2 + $0x50] sm:$0xff]
      %v2186 = vld [vmem:[#allocation2 + $0x58] sm:$0xff]
      %v2187 = vld [vmem:[#allocation2 + $0x60] sm:$0xff]
      %v2188 = vld [vmem:[#allocation2 + $0x68] sm:$0xff]
      %v2189 = vld [vmem:[#allocation2 + $0x70] sm:$0xff]
      %v2190 = vld [vmem:[#allocation2 + $0x78] sm:$0xff]
      %v2191 = vld [vmem:[#allocation2 + $0x80] sm:$0xff]
      %v2192 = vld [vmem:[#allocation2 + $0x88] sm:$0xff]
      %v2193 = vld [vmem:[#allocation2 + $0x90] sm:$0xff]
      %v2194 = vld [vmem:[#allocation2 + $0x98] sm:$0xff]
      %v2195 = vld [vmem:[#allocation2 + $0xa0] sm:$0xff]
      %v2196 = vld [vmem:[#allocation2 + $0xa8] sm:$0xff]
      %v2197 = vld [vmem:[#allocation2 + $0xb0] sm:$0xff]
      %v2198 = vld [vmem:[#allocation2 + $0xb8] sm:$0xff]
      %v2199 = vld [vmem:[#allocation2 + $0xc0] sm:$0xff]
      %v2200 = vld [vmem:[#allocation2 + $0xc8] sm:$0xff]
      %v2201 = vld [vmem:[#allocation2 + $0xd0] sm:$0xff]
      %v2202 = vld [vmem:[#allocation2 + $0xd8] sm:$0xff]
      %v2203 = vld [vmem:[#allocation2 + $0xe0] sm:$0xff]
      %v2204 = vld [vmem:[#allocation2 + $0xe8] sm:$0xff]
      %v2205 = vld [vmem:[#allocation2 + $0xf0] sm:$0xff]
      %v2206 = vld [vmem:[#allocation2 + $0xf8] sm:$0xff]
      %v2207 = vld [vmem:[#allocation2 + $0x100] sm:$0xff]
      %v2208 = vld [vmem:[#allocation2 + $0x108] sm:$0xff]
      %v2209 = vld [vmem:[#allocation2 + $0x110] sm:$0xff]
      %v2210 = vld [vmem:[#allocation2 + $0x118] sm:$0xff]
      %v2211 = vld [vmem:[#allocation2 + $0x120] sm:$0xff]
      %v2212 = vld [vmem:[#allocation2 + $0x128] sm:$0xff]
      %v2213 = vld [vmem:[#allocation2 + $0x130] sm:$0xff]
      %v2214 = vld [vmem:[#allocation2 + $0x138] sm:$0xff]
      %v2215 = vld [vmem:[#allocation2 + $0x140] sm:$0xff]
      %v2216 = vld [vmem:[#allocation2 + $0x148] sm:$0xff]
      %v2217 = vld [vmem:[#allocation2 + $0x150] sm:$0xff]
      %v2218 = vld [vmem:[#allocation2 + $0x158] sm:$0xff]
      %v2219 = vld [vmem:[#allocation2 + $0x160] sm:$0xff]
      %v2220 = vld [vmem:[#allocation2 + $0x168] sm:$0xff]
      %v2221 = vld [vmem:[#allocation2 + $0x170] sm:$0xff]
      %v2222 = vld [vmem:[#allocation2 + $0x178] sm:$0xff]
      %v2223 = vld [vmem:[#allocation2 + $0x180] sm:$0xff]
      %v2224 = vld [vmem:[#allocation2 + $0x188] sm:$0xff]
      %v2225 = vld [vmem:[#allocation2 + $0x190] sm:$0xff]
      %s2226 = scalar_lea.vmem %s1, 384
      %v2227 = vld [vmem:[%s2226] sm:$0xff]
      %v2228 = vld [vmem:[%s2226 + $0x8] sm:$0xff]
      %v2229 = vld [vmem:[%s2226 + $0x10] sm:$0xff]
      %v2230 = vld [vmem:[%s2226 + $0x18] sm:$0xff]
      %v2231 = vld [vmem:[%s2226 + $0x20] sm:$0xff]
      %v2232 = vld [vmem:[%s2226 + $0x28] sm:$0xff]
      %v2233 = vld [vmem:[%s2226 + $0x30] sm:$0xff]
      %v2234 = vld [vmem:[%s2226 + $0x38] sm:$0xff]
      %v2235 = vld [vmem:[%s2226 + $0x40] sm:$0xff]
      %v2236 = vld [vmem:[%s2226 + $0x48] sm:$0xff]
      %v2237 = vld [vmem:[%s2226 + $0x50] sm:$0xff]
      %v2238 = vld [vmem:[%s2226 + $0x58] sm:$0xff]
      %v2239 = vld [vmem:[%s2226 + $0x60] sm:$0xff]
      %v2240 = vld [vmem:[%s2226 + $0x68] sm:$0xff]
      %v2241 = vld [vmem:[%s2226 + $0x70] sm:$0xff]
      %v2242 = vld [vmem:[%s2226 + $0x78] sm:$0xff]
      %2243 = vmatprep.subr.mxu0 0.0
      %2244 = vmatpush1.msra.mxu0 %v2242
      %2245 = vmatprep.subr.mxu0 0.0
      %2246 = vmatpush1.msra.mxu0 %v2241
      %2247 = vmatprep.subr.mxu0 0.0
      %2248 = vmatpush1.msra.mxu0 %v2240
      %2249 = vmatprep.subr.mxu0 0.0
      %2250 = vmatpush1.msra.mxu0 %v2239
      %2251 = vmatprep.subr.mxu0 0.0
      %2252 = vmatpush1.msra.mxu0 %v2238
      %2253 = vmatprep.subr.mxu0 0.0
      %2254 = vmatpush1.msra.mxu0 %v2237
      %2255 = vmatprep.subr.mxu0 0.0
      %2256 = vmatpush1.msra.mxu0 %v2236
      %2257 = vmatprep.subr.mxu0 0.0
      %2258 = vmatpush1.msra.mxu0 %v2235
      %2259 = vmatprep.subr.mxu0 0.0
      %2260 = vmatpush1.msra.mxu0 %v2234
      %2261 = vmatprep.subr.mxu0 0.0
      %2262 = vmatpush1.msra.mxu0 %v2233
      %2263 = vmatprep.subr.mxu0 0.0
      %2264 = vmatpush1.msra.mxu0 %v2232
      %2265 = vmatprep.subr.mxu0 0.0
      %2266 = vmatpush1.msra.mxu0 %v2231
      %2267 = vmatprep.subr.mxu0 0.0
      %2268 = vmatpush1.msra.mxu0 %v2230
      %2269 = vmatprep.subr.mxu0 0.0
      %2270 = vmatpush1.msra.mxu0 %v2229
      %2271 = vmatprep.subr.mxu0 0.0
      %2272 = vmatpush1.msra.mxu0 %v2228
      %2273 = vmatprep.subr.mxu0 0.0
      %2274 = vmatpush1.msra.mxu0 %v2227
      %2275 = vmatprep.subr.mxu0 0.0
      %2276 = vmatpush2.msra.mxu0 0.0
      %2277 = vmatprep.subr.mxu0 0.0
      %2278 = vmatpush2.msra.mxu0 0.0
      %2279 = vmatprep.subr.mxu0 0.0
      %2280 = vmatpush2.msra.mxu0 0.0
      %2281 = vmatprep.subr.mxu0 0.0
      %2282 = vmatpush2.msra.mxu0 0.0
      %2283 = vmatprep.subr.mxu0 0.0
      %2284 = vmatpush2.msra.mxu0 0.0
      %2285 = vmatprep.subr.mxu0 0.0
      %2286 = vmatpush2.msra.mxu0 0.0
      %2287 = vmatprep.subr.mxu0 0.0
      %2288 = vmatpush2.msra.mxu0 0.0
      %2289 = vmatprep.subr.mxu0 0.0
      %2290 = vmatpush2.msra.mxu0 0.0
      %2291 = vmatprep.subr.mxu0 0.0
      %2292 = vmatpush2.msra.mxu0 0.0
      %2293 = vmatprep.subr.mxu0 0.0
      %2294 = vmatpush2.msra.mxu0 0.0
      %2295 = vmatprep.subr.mxu0 0.0
      %2296 = vmatpush2.msra.mxu0 0.0
      %2297 = vmatprep.subr.mxu0 0.0
      %2298 = vmatpush2.msra.mxu0 0.0
      %2299 = vmatprep.subr.mxu0 0.0
      %2300 = vmatpush2.msra.mxu0 0.0
      %2301 = vmatprep.subr.mxu0 0.0
      %2302 = vmatpush2.msra.mxu0 0.0
      %2303 = vmatprep.subr.mxu0 0.0
      %2304 = vmatpush2.msra.mxu0 0.0
      %2305 = vmatprep.subr.mxu0 0.0
      %2306 = vmatpush2.msra.mxu0 0.0
      %2307 = vmatprep.mubr.f32.mxu0 0.0
      %2308 = vmatmul.mubr.f32.gmra.mxu0 %v2178
      %v2309 = vpop.f32.mrf.mxu0
      %v2310 = vadd.f32 0.0, %v2309
      %v2311 = vpop.f32.mrf.mxu0
      %2312 = vmatprep.mubr.f32.mxu0 0.0
      %2313 = vmatmul.mubr.f32.gmra.mxu0 %v2179
      %v2314 = vpop.f32.mrf.mxu0
      %v2315 = vadd.f32 0.0, %v2314
      %v2316 = vpop.f32.mrf.mxu0
      %2317 = vmatprep.mubr.f32.mxu0 0.0
      %2318 = vmatmul.mubr.f32.gmra.mxu0 %v2180
      %v2319 = vpop.f32.mrf.mxu0
      %v2320 = vadd.f32 0.0, %v2319
      %v2321 = vpop.f32.mrf.mxu0
      %2322 = vmatprep.mubr.f32.mxu0 0.0
      %2323 = vmatmul.mubr.f32.gmra.mxu0 %v2181
      %v2324 = vpop.f32.mrf.mxu0
      %v2325 = vadd.f32 0.0, %v2324
      %v2326 = vpop.f32.mrf.mxu0
      %2327 = vmatprep.mubr.f32.mxu0 0.0
      %2328 = vmatmul.mubr.f32.gmra.mxu0 %v2182
      %v2329 = vpop.f32.mrf.mxu0
      %v2330 = vadd.f32 0.0, %v2329
      %v2331 = vpop.f32.mrf.mxu0
      %2332 = vmatprep.mubr.f32.mxu0 0.0
      %2333 = vmatmul.mubr.f32.gmra.mxu0 %v2183
      %v2334 = vpop.f32.mrf.mxu0
      %v2335 = vadd.f32 0.0, %v2334
      %v2336 = vpop.f32.mrf.mxu0
      %2337 = vmatprep.mubr.f32.mxu0 0.0
      %2338 = vmatmul.mubr.f32.gmra.mxu0 %v2184
      %v2339 = vpop.f32.mrf.mxu0
      %v2340 = vadd.f32 0.0, %v2339
      %v2341 = vpop.f32.mrf.mxu0
      %2342 = vmatprep.mubr.f32.mxu0 0.0
      %2343 = vmatmul.mubr.f32.gmra.mxu0 %v2185
      %v2344 = vpop.f32.mrf.mxu0
      %v2345 = vadd.f32 0.0, %v2344
      %v2346 = vpop.f32.mrf.mxu0
      %2347 = vmatprep.mubr.f32.mxu0 0.0
      %2348 = vmatmul.mubr.f32.gmra.mxu0 %v2186
      %v2349 = vpop.f32.mrf.mxu0
      %v2350 = vadd.f32 0.0, %v2349
      %v2351 = vpop.f32.mrf.mxu0
      %2352 = vmatprep.mubr.f32.mxu0 0.0
      %2353 = vmatmul.mubr.f32.gmra.mxu0 %v2187
      %v2354 = vpop.f32.mrf.mxu0
      %v2355 = vadd.f32 0.0, %v2354
      %v2356 = vpop.f32.mrf.mxu0
      %2357 = vmatprep.mubr.f32.mxu0 0.0
      %2358 = vmatmul.mubr.f32.gmra.mxu0 %v2188
      %v2359 = vpop.f32.mrf.mxu0
      %v2360 = vadd.f32 0.0, %v2359
      %v2361 = vpop.f32.mrf.mxu0
      %2362 = vmatprep.mubr.f32.mxu0 0.0
      %2363 = vmatmul.mubr.f32.gmra.mxu0 %v2189
      %v2364 = vpop.f32.mrf.mxu0
      %v2365 = vadd.f32 0.0, %v2364
      %v2366 = vpop.f32.mrf.mxu0
      %2367 = vmatprep.mubr.f32.mxu0 0.0
      %2368 = vmatmul.mubr.f32.gmra.mxu0 %v2190
      %v2369 = vpop.f32.mrf.mxu0
      %v2370 = vadd.f32 0.0, %v2369
      %v2371 = vpop.f32.mrf.mxu0
      %2372 = vmatprep.mubr.f32.mxu0 0.0
      %2373 = vmatmul.mubr.f32.gmra.mxu0 %v2191
      %v2374 = vpop.f32.mrf.mxu0
      %v2375 = vadd.f32 0.0, %v2374
      %v2376 = vpop.f32.mrf.mxu0
      %2377 = vmatprep.mubr.f32.mxu0 0.0
      %2378 = vmatmul.mubr.f32.gmra.mxu0 %v2192
      %v2379 = vpop.f32.mrf.mxu0
      %v2380 = vadd.f32 0.0, %v2379
      %v2381 = vpop.f32.mrf.mxu0
      %2382 = vmatprep.mubr.f32.mxu0 0.0
      %2383 = vmatmul.mubr.f32.gmra.mxu0 %v2193
      %v2384 = vpop.f32.mrf.mxu0
      %v2385 = vadd.f32 0.0, %v2384
      %v2386 = vpop.f32.mrf.mxu0
      %2387 = vmatprep.mubr.f32.mxu0 0.0
      %2388 = vmatmul.mubr.f32.gmra.mxu0 %v2194
      %v2389 = vpop.f32.mrf.mxu0
      %v2390 = vadd.f32 0.0, %v2389
      %v2391 = vpop.f32.mrf.mxu0
      %2392 = vmatprep.mubr.f32.mxu0 0.0
      %2393 = vmatmul.mubr.f32.gmra.mxu0 %v2195
      %v2394 = vpop.f32.mrf.mxu0
      %v2395 = vadd.f32 0.0, %v2394
      %v2396 = vpop.f32.mrf.mxu0
      %2397 = vmatprep.mubr.f32.mxu0 0.0
      %2398 = vmatmul.mubr.f32.gmra.mxu0 %v2196
      %v2399 = vpop.f32.mrf.mxu0
      %v2400 = vadd.f32 0.0, %v2399
      %v2401 = vpop.f32.mrf.mxu0
      %2402 = vmatprep.mubr.f32.mxu0 0.0
      %2403 = vmatmul.mubr.f32.gmra.mxu0 %v2197
      %v2404 = vpop.f32.mrf.mxu0
      %v2405 = vadd.f32 0.0, %v2404
      %v2406 = vpop.f32.mrf.mxu0
      %2407 = vmatprep.mubr.f32.mxu0 0.0
      %2408 = vmatmul.mubr.f32.gmra.mxu0 %v2198
      %v2409 = vpop.f32.mrf.mxu0
      %v2410 = vadd.f32 0.0, %v2409
      %v2411 = vpop.f32.mrf.mxu0
      %2412 = vmatprep.mubr.f32.mxu0 0.0
      %2413 = vmatmul.mubr.f32.gmra.mxu0 %v2199
      %v2414 = vpop.f32.mrf.mxu0
      %v2415 = vadd.f32 0.0, %v2414
      %v2416 = vpop.f32.mrf.mxu0
      %2417 = vmatprep.mubr.f32.mxu0 0.0
      %2418 = vmatmul.mubr.f32.gmra.mxu0 %v2200
      %v2419 = vpop.f32.mrf.mxu0
      %v2420 = vadd.f32 0.0, %v2419
      %v2421 = vpop.f32.mrf.mxu0
      %2422 = vmatprep.mubr.f32.mxu0 0.0
      %2423 = vmatmul.mubr.f32.gmra.mxu0 %v2201
      %v2424 = vpop.f32.mrf.mxu0
      %v2425 = vadd.f32 0.0, %v2424
      %v2426 = vpop.f32.mrf.mxu0
      %2427 = vmatprep.mubr.f32.mxu0 0.0
      %2428 = vmatmul.mubr.f32.gmra.mxu0 %v2202
      %v2429 = vpop.f32.mrf.mxu0
      %v2430 = vadd.f32 0.0, %v2429
      %v2431 = vpop.f32.mrf.mxu0
      %2432 = vmatprep.mubr.f32.mxu0 0.0
      %2433 = vmatmul.mubr.f32.gmra.mxu0 %v2203
      %v2434 = vpop.f32.mrf.mxu0
      %v2435 = vadd.f32 0.0, %v2434
      %v2436 = vpop.f32.mrf.mxu0
      %2437 = vmatprep.mubr.f32.mxu0 0.0
      %2438 = vmatmul.mubr.f32.gmra.mxu0 %v2204
      %v2439 = vpop.f32.mrf.mxu0
      %v2440 = vadd.f32 0.0, %v2439
      %v2441 = vpop.f32.mrf.mxu0
      %2442 = vmatprep.mubr.f32.mxu0 0.0
      %2443 = vmatmul.mubr.f32.gmra.mxu0 %v2205
      %v2444 = vpop.f32.mrf.mxu0
      %v2445 = vadd.f32 0.0, %v2444
      %v2446 = vpop.f32.mrf.mxu0
      %2447 = vmatprep.mubr.f32.mxu0 0.0
      %2448 = vmatmul.mubr.f32.gmra.mxu0 %v2206
      %v2449 = vpop.f32.mrf.mxu0
      %v2450 = vadd.f32 0.0, %v2449
      %v2451 = vpop.f32.mrf.mxu0
      %2452 = vmatprep.mubr.f32.mxu0 0.0
      %2453 = vmatmul.mubr.f32.gmra.mxu0 %v2207
      %v2454 = vpop.f32.mrf.mxu0
      %v2455 = vadd.f32 0.0, %v2454
      %v2456 = vpop.f32.mrf.mxu0
      %2457 = vmatprep.mubr.f32.mxu0 0.0
      %2458 = vmatmul.mubr.f32.gmra.mxu0 %v2208
      %v2459 = vpop.f32.mrf.mxu0
      %v2460 = vadd.f32 0.0, %v2459
      %v2461 = vpop.f32.mrf.mxu0
      %2462 = vmatprep.mubr.f32.mxu0 0.0
      %2463 = vmatmul.mubr.f32.gmra.mxu0 %v2209
      %v2464 = vpop.f32.mrf.mxu0
      %v2465 = vadd.f32 0.0, %v2464
      %v2466 = vpop.f32.mrf.mxu0
      %2467 = vmatprep.mubr.f32.mxu0 0.0
      %2468 = vmatmul.mubr.f32.gmra.mxu0 %v2210
      %v2469 = vpop.f32.mrf.mxu0
      %v2470 = vadd.f32 0.0, %v2469
      %v2471 = vpop.f32.mrf.mxu0
      %2472 = vmatprep.mubr.f32.mxu0 0.0
      %2473 = vmatmul.mubr.f32.gmra.mxu0 %v2211
      %v2474 = vpop.f32.mrf.mxu0
      %v2475 = vadd.f32 0.0, %v2474
      %v2476 = vpop.f32.mrf.mxu0
      %2477 = vmatprep.mubr.f32.mxu0 0.0
      %2478 = vmatmul.mubr.f32.gmra.mxu0 %v2212
      %v2479 = vpop.f32.mrf.mxu0
      %v2480 = vadd.f32 0.0, %v2479
      %v2481 = vpop.f32.mrf.mxu0
      %2482 = vmatprep.mubr.f32.mxu0 0.0
      %2483 = vmatmul.mubr.f32.gmra.mxu0 %v2213
      %v2484 = vpop.f32.mrf.mxu0
      %v2485 = vadd.f32 0.0, %v2484
      %v2486 = vpop.f32.mrf.mxu0
      %2487 = vmatprep.mubr.f32.mxu0 0.0
      %2488 = vmatmul.mubr.f32.gmra.mxu0 %v2214
      %v2489 = vpop.f32.mrf.mxu0
      %v2490 = vadd.f32 0.0, %v2489
      %v2491 = vpop.f32.mrf.mxu0
      %2492 = vmatprep.mubr.f32.mxu0 0.0
      %2493 = vmatmul.mubr.f32.gmra.mxu0 %v2215
      %v2494 = vpop.f32.mrf.mxu0
      %v2495 = vadd.f32 0.0, %v2494
      %v2496 = vpop.f32.mrf.mxu0
      %2497 = vmatprep.mubr.f32.mxu0 0.0
      %2498 = vmatmul.mubr.f32.gmra.mxu0 %v2216
      %v2499 = vpop.f32.mrf.mxu0
      %v2500 = vadd.f32 0.0, %v2499
      %v2501 = vpop.f32.mrf.mxu0
      %2502 = vmatprep.mubr.f32.mxu0 0.0
      %2503 = vmatmul.mubr.f32.gmra.mxu0 %v2217
      %v2504 = vpop.f32.mrf.mxu0
      %v2505 = vadd.f32 0.0, %v2504
      %v2506 = vpop.f32.mrf.mxu0
      %2507 = vmatprep.mubr.f32.mxu0 0.0
      %2508 = vmatmul.mubr.f32.gmra.mxu0 %v2218
      %v2509 = vpop.f32.mrf.mxu0
      %v2510 = vadd.f32 0.0, %v2509
      %v2511 = vpop.f32.mrf.mxu0
      %2512 = vmatprep.mubr.f32.mxu0 0.0
      %2513 = vmatmul.mubr.f32.gmra.mxu0 %v2219
      %v2514 = vpop.f32.mrf.mxu0
      %v2515 = vadd.f32 0.0, %v2514
      %v2516 = vpop.f32.mrf.mxu0
      %2517 = vmatprep.mubr.f32.mxu0 0.0
      %2518 = vmatmul.mubr.f32.gmra.mxu0 %v2220
      %v2519 = vpop.f32.mrf.mxu0
      %v2520 = vadd.f32 0.0, %v2519
      %v2521 = vpop.f32.mrf.mxu0
      %2522 = vmatprep.mubr.f32.mxu0 0.0
      %2523 = vmatmul.mubr.f32.gmra.mxu0 %v2221
      %v2524 = vpop.f32.mrf.mxu0
      %v2525 = vadd.f32 0.0, %v2524
      %v2526 = vpop.f32.mrf.mxu0
      %2527 = vmatprep.mubr.f32.mxu0 0.0
      %2528 = vmatmul.mubr.f32.gmra.mxu0 %v2222
      %v2529 = vpop.f32.mrf.mxu0
      %v2530 = vadd.f32 0.0, %v2529
      %v2531 = vpop.f32.mrf.mxu0
      %2532 = vmatprep.mubr.f32.mxu0 0.0
      %2533 = vmatmul.mubr.f32.gmra.mxu0 %v2223
      %v2534 = vpop.f32.mrf.mxu0
      %v2535 = vadd.f32 0.0, %v2534
      %v2536 = vpop.f32.mrf.mxu0
      %2537 = vmatprep.mubr.f32.mxu0 0.0
      %2538 = vmatmul.mubr.f32.gmra.mxu0 %v2224
      %v2539 = vpop.f32.mrf.mxu0
      %v2540 = vadd.f32 0.0, %v2539
      %v2541 = vpop.f32.mrf.mxu0
      %2542 = vmatprep.mubr.f32.mxu0 0.0
      %2543 = vmatmul.mubr.f32.gmra.mxu0 %v2225
      %v2544 = vpop.f32.mrf.mxu0
      %v2545 = vadd.f32 0.0, %v2544
      %v2546 = vpop.f32.mrf.mxu0
      %2547 = vdwg.mxu0
      %v2548 = vadd.f32 %v2130, %v2310
      %v2549 = vadd.f32 %v2131, %v2315
      %v2550 = vadd.f32 %v2132, %v2320
      %v2551 = vadd.f32 %v2133, %v2325
      %v2552 = vadd.f32 %v2134, %v2330
      %v2553 = vadd.f32 %v2135, %v2335
      %v2554 = vadd.f32 %v2136, %v2340
      %v2555 = vadd.f32 %v2137, %v2345
      %v2556 = vadd.f32 %v2138, %v2350
      %v2557 = vadd.f32 %v2139, %v2355
      %v2558 = vadd.f32 %v2140, %v2360
      %v2559 = vadd.f32 %v2141, %v2365
      %v2560 = vadd.f32 %v2142, %v2370
      %v2561 = vadd.f32 %v2143, %v2375
      %v2562 = vadd.f32 %v2144, %v2380
      %v2563 = vadd.f32 %v2145, %v2385
      %v2564 = vadd.f32 %v2146, %v2390
      %v2565 = vadd.f32 %v2147, %v2395
      %v2566 = vadd.f32 %v2148, %v2400
      %v2567 = vadd.f32 %v2149, %v2405
      %v2568 = vadd.f32 %v2150, %v2410
      %v2569 = vadd.f32 %v2151, %v2415
      %v2570 = vadd.f32 %v2152, %v2420
      %v2571 = vadd.f32 %v2153, %v2425
      %v2572 = vadd.f32 %v2154, %v2430
      %v2573 = vadd.f32 %v2155, %v2435
      %v2574 = vadd.f32 %v2156, %v2440
      %v2575 = vadd.f32 %v2157, %v2445
      %v2576 = vadd.f32 %v2158, %v2450
      %v2577 = vadd.f32 %v2159, %v2455
      %v2578 = vadd.f32 %v2160, %v2460
      %v2579 = vadd.f32 %v2161, %v2465
      %v2580 = vadd.f32 %v2162, %v2470
      %v2581 = vadd.f32 %v2163, %v2475
      %v2582 = vadd.f32 %v2164, %v2480
      %v2583 = vadd.f32 %v2165, %v2485
      %v2584 = vadd.f32 %v2166, %v2490
      %v2585 = vadd.f32 %v2167, %v2495
      %v2586 = vadd.f32 %v2168, %v2500
      %v2587 = vadd.f32 %v2169, %v2505
      %v2588 = vadd.f32 %v2170, %v2510
      %v2589 = vadd.f32 %v2171, %v2515
      %v2590 = vadd.f32 %v2172, %v2520
      %v2591 = vadd.f32 %v2173, %v2525
      %v2592 = vadd.f32 %v2174, %v2530
      %v2593 = vadd.f32 %v2175, %v2535
      %v2594 = vadd.f32 %v2176, %v2540
      %v2595 = vadd.f32 %v2177, %v2545
      %v2596 = vld [vmem:[#allocation2 + $0x19] sm:$0xff]
      %v2597 = vld [vmem:[#allocation2 + $0x21] sm:$0xff]
      %v2598 = vld [vmem:[#allocation2 + $0x29] sm:$0xff]
      %v2599 = vld [vmem:[#allocation2 + $0x31] sm:$0xff]
      %v2600 = vld [vmem:[#allocation2 + $0x39] sm:$0xff]
      %v2601 = vld [vmem:[#allocation2 + $0x41] sm:$0xff]
      %v2602 = vld [vmem:[#allocation2 + $0x49] sm:$0xff]
      %v2603 = vld [vmem:[#allocation2 + $0x51] sm:$0xff]
      %v2604 = vld [vmem:[#allocation2 + $0x59] sm:$0xff]
      %v2605 = vld [vmem:[#allocation2 + $0x61] sm:$0xff]
      %v2606 = vld [vmem:[#allocation2 + $0x69] sm:$0xff]
      %v2607 = vld [vmem:[#allocation2 + $0x71] sm:$0xff]
      %v2608 = vld [vmem:[#allocation2 + $0x79] sm:$0xff]
      %v2609 = vld [vmem:[#allocation2 + $0x81] sm:$0xff]
      %v2610 = vld [vmem:[#allocation2 + $0x89] sm:$0xff]
      %v2611 = vld [vmem:[#allocation2 + $0x91] sm:$0xff]
      %v2612 = vld [vmem:[#allocation2 + $0x99] sm:$0xff]
      %v2613 = vld [vmem:[#allocation2 + $0xa1] sm:$0xff]
      %v2614 = vld [vmem:[#allocation2 + $0xa9] sm:$0xff]
      %v2615 = vld [vmem:[#allocation2 + $0xb1] sm:$0xff]
      %v2616 = vld [vmem:[#allocation2 + $0xb9] sm:$0xff]
      %v2617 = vld [vmem:[#allocation2 + $0xc1] sm:$0xff]
      %v2618 = vld [vmem:[#allocation2 + $0xc9] sm:$0xff]
      %v2619 = vld [vmem:[#allocation2 + $0xd1] sm:$0xff]
      %v2620 = vld [vmem:[#allocation2 + $0xd9] sm:$0xff]
      %v2621 = vld [vmem:[#allocation2 + $0xe1] sm:$0xff]
      %v2622 = vld [vmem:[#allocation2 + $0xe9] sm:$0xff]
      %v2623 = vld [vmem:[#allocation2 + $0xf1] sm:$0xff]
      %v2624 = vld [vmem:[#allocation2 + $0xf9] sm:$0xff]
      %v2625 = vld [vmem:[#allocation2 + $0x101] sm:$0xff]
      %v2626 = vld [vmem:[#allocation2 + $0x109] sm:$0xff]
      %v2627 = vld [vmem:[#allocation2 + $0x111] sm:$0xff]
      %v2628 = vld [vmem:[#allocation2 + $0x119] sm:$0xff]
      %v2629 = vld [vmem:[#allocation2 + $0x121] sm:$0xff]
      %v2630 = vld [vmem:[#allocation2 + $0x129] sm:$0xff]
      %v2631 = vld [vmem:[#allocation2 + $0x131] sm:$0xff]
      %v2632 = vld [vmem:[#allocation2 + $0x139] sm:$0xff]
      %v2633 = vld [vmem:[#allocation2 + $0x141] sm:$0xff]
      %v2634 = vld [vmem:[#allocation2 + $0x149] sm:$0xff]
      %v2635 = vld [vmem:[#allocation2 + $0x151] sm:$0xff]
      %v2636 = vld [vmem:[#allocation2 + $0x159] sm:$0xff]
      %v2637 = vld [vmem:[#allocation2 + $0x161] sm:$0xff]
      %v2638 = vld [vmem:[#allocation2 + $0x169] sm:$0xff]
      %v2639 = vld [vmem:[#allocation2 + $0x171] sm:$0xff]
      %v2640 = vld [vmem:[#allocation2 + $0x179] sm:$0xff]
      %v2641 = vld [vmem:[#allocation2 + $0x181] sm:$0xff]
      %v2642 = vld [vmem:[#allocation2 + $0x189] sm:$0xff]
      %v2643 = vld [vmem:[#allocation2 + $0x191] sm:$0xff]
      %s2644 = scalar_lea.vmem %s1, 512
      %v2645 = vld [vmem:[%s2644] sm:$0xff]
      %v2646 = vld [vmem:[%s2644 + $0x8] sm:$0xff]
      %v2647 = vld [vmem:[%s2644 + $0x10] sm:$0xff]
      %v2648 = vld [vmem:[%s2644 + $0x18] sm:$0xff]
      %v2649 = vld [vmem:[%s2644 + $0x20] sm:$0xff]
      %v2650 = vld [vmem:[%s2644 + $0x28] sm:$0xff]
      %v2651 = vld [vmem:[%s2644 + $0x30] sm:$0xff]
      %v2652 = vld [vmem:[%s2644 + $0x38] sm:$0xff]
      %v2653 = vld [vmem:[%s2644 + $0x40] sm:$0xff]
      %v2654 = vld [vmem:[%s2644 + $0x48] sm:$0xff]
      %v2655 = vld [vmem:[%s2644 + $0x50] sm:$0xff]
      %v2656 = vld [vmem:[%s2644 + $0x58] sm:$0xff]
      %v2657 = vld [vmem:[%s2644 + $0x60] sm:$0xff]
      %v2658 = vld [vmem:[%s2644 + $0x68] sm:$0xff]
      %v2659 = vld [vmem:[%s2644 + $0x70] sm:$0xff]
      %v2660 = vld [vmem:[%s2644 + $0x78] sm:$0xff]
      %2661 = vmatprep.subr.mxu0 0.0
      %2662 = vmatpush1.msra.mxu0 %v2660
      %2663 = vmatprep.subr.mxu0 0.0
      %2664 = vmatpush1.msra.mxu0 %v2659
      %2665 = vmatprep.subr.mxu0 0.0
      %2666 = vmatpush1.msra.mxu0 %v2658
      %2667 = vmatprep.subr.mxu0 0.0
      %2668 = vmatpush1.msra.mxu0 %v2657
      %2669 = vmatprep.subr.mxu0 0.0
      %2670 = vmatpush1.msra.mxu0 %v2656
      %2671 = vmatprep.subr.mxu0 0.0
      %2672 = vmatpush1.msra.mxu0 %v2655
      %2673 = vmatprep.subr.mxu0 0.0
      %2674 = vmatpush1.msra.mxu0 %v2654
      %2675 = vmatprep.subr.mxu0 0.0
      %2676 = vmatpush1.msra.mxu0 %v2653
      %2677 = vmatprep.subr.mxu0 0.0
      %2678 = vmatpush1.msra.mxu0 %v2652
      %2679 = vmatprep.subr.mxu0 0.0
      %2680 = vmatpush1.msra.mxu0 %v2651
      %2681 = vmatprep.subr.mxu0 0.0
      %2682 = vmatpush1.msra.mxu0 %v2650
      %2683 = vmatprep.subr.mxu0 0.0
      %2684 = vmatpush1.msra.mxu0 %v2649
      %2685 = vmatprep.subr.mxu0 0.0
      %2686 = vmatpush1.msra.mxu0 %v2648
      %2687 = vmatprep.subr.mxu0 0.0
      %2688 = vmatpush1.msra.mxu0 %v2647
      %2689 = vmatprep.subr.mxu0 0.0
      %2690 = vmatpush1.msra.mxu0 %v2646
      %2691 = vmatprep.subr.mxu0 0.0
      %2692 = vmatpush1.msra.mxu0 %v2645
      %2693 = vmatprep.subr.mxu0 0.0
      %2694 = vmatpush2.msra.mxu0 0.0
      %2695 = vmatprep.subr.mxu0 0.0
      %2696 = vmatpush2.msra.mxu0 0.0
      %2697 = vmatprep.subr.mxu0 0.0
      %2698 = vmatpush2.msra.mxu0 0.0
      %2699 = vmatprep.subr.mxu0 0.0
      %2700 = vmatpush2.msra.mxu0 0.0
      %2701 = vmatprep.subr.mxu0 0.0
      %2702 = vmatpush2.msra.mxu0 0.0
      %2703 = vmatprep.subr.mxu0 0.0
      %2704 = vmatpush2.msra.mxu0 0.0
      %2705 = vmatprep.subr.mxu0 0.0
      %2706 = vmatpush2.msra.mxu0 0.0
      %2707 = vmatprep.subr.mxu0 0.0
      %2708 = vmatpush2.msra.mxu0 0.0
      %2709 = vmatprep.subr.mxu0 0.0
      %2710 = vmatpush2.msra.mxu0 0.0
      %2711 = vmatprep.subr.mxu0 0.0
      %2712 = vmatpush2.msra.mxu0 0.0
      %2713 = vmatprep.subr.mxu0 0.0
      %2714 = vmatpush2.msra.mxu0 0.0
      %2715 = vmatprep.subr.mxu0 0.0
      %2716 = vmatpush2.msra.mxu0 0.0
      %2717 = vmatprep.subr.mxu0 0.0
      %2718 = vmatpush2.msra.mxu0 0.0
      %2719 = vmatprep.subr.mxu0 0.0
      %2720 = vmatpush2.msra.mxu0 0.0
      %2721 = vmatprep.subr.mxu0 0.0
      %2722 = vmatpush2.msra.mxu0 0.0
      %2723 = vmatprep.subr.mxu0 0.0
      %2724 = vmatpush2.msra.mxu0 0.0
      %2725 = vmatprep.mubr.f32.mxu0 0.0
      %2726 = vmatmul.mubr.f32.gmra.mxu0 %v2596
      %v2727 = vpop.f32.mrf.mxu0
      %v2728 = vadd.f32 0.0, %v2727
      %v2729 = vpop.f32.mrf.mxu0
      %2730 = vmatprep.mubr.f32.mxu0 0.0
      %2731 = vmatmul.mubr.f32.gmra.mxu0 %v2597
      %v2732 = vpop.f32.mrf.mxu0
      %v2733 = vadd.f32 0.0, %v2732
      %v2734 = vpop.f32.mrf.mxu0
      %2735 = vmatprep.mubr.f32.mxu0 0.0
      %2736 = vmatmul.mubr.f32.gmra.mxu0 %v2598
      %v2737 = vpop.f32.mrf.mxu0
      %v2738 = vadd.f32 0.0, %v2737
      %v2739 = vpop.f32.mrf.mxu0
      %2740 = vmatprep.mubr.f32.mxu0 0.0
      %2741 = vmatmul.mubr.f32.gmra.mxu0 %v2599
      %v2742 = vpop.f32.mrf.mxu0
      %v2743 = vadd.f32 0.0, %v2742
      %v2744 = vpop.f32.mrf.mxu0
      %2745 = vmatprep.mubr.f32.mxu0 0.0
      %2746 = vmatmul.mubr.f32.gmra.mxu0 %v2600
      %v2747 = vpop.f32.mrf.mxu0
      %v2748 = vadd.f32 0.0, %v2747
      %v2749 = vpop.f32.mrf.mxu0
      %2750 = vmatprep.mubr.f32.mxu0 0.0
      %2751 = vmatmul.mubr.f32.gmra.mxu0 %v2601
      %v2752 = vpop.f32.mrf.mxu0
      %v2753 = vadd.f32 0.0, %v2752
      %v2754 = vpop.f32.mrf.mxu0
      %2755 = vmatprep.mubr.f32.mxu0 0.0
      %2756 = vmatmul.mubr.f32.gmra.mxu0 %v2602
      %v2757 = vpop.f32.mrf.mxu0
      %v2758 = vadd.f32 0.0, %v2757
      %v2759 = vpop.f32.mrf.mxu0
      %2760 = vmatprep.mubr.f32.mxu0 0.0
      %2761 = vmatmul.mubr.f32.gmra.mxu0 %v2603
      %v2762 = vpop.f32.mrf.mxu0
      %v2763 = vadd.f32 0.0, %v2762
      %v2764 = vpop.f32.mrf.mxu0
      %2765 = vmatprep.mubr.f32.mxu0 0.0
      %2766 = vmatmul.mubr.f32.gmra.mxu0 %v2604
      %v2767 = vpop.f32.mrf.mxu0
      %v2768 = vadd.f32 0.0, %v2767
      %v2769 = vpop.f32.mrf.mxu0
      %2770 = vmatprep.mubr.f32.mxu0 0.0
      %2771 = vmatmul.mubr.f32.gmra.mxu0 %v2605
      %v2772 = vpop.f32.mrf.mxu0
      %v2773 = vadd.f32 0.0, %v2772
      %v2774 = vpop.f32.mrf.mxu0
      %2775 = vmatprep.mubr.f32.mxu0 0.0
      %2776 = vmatmul.mubr.f32.gmra.mxu0 %v2606
      %v2777 = vpop.f32.mrf.mxu0
      %v2778 = vadd.f32 0.0, %v2777
      %v2779 = vpop.f32.mrf.mxu0
      %2780 = vmatprep.mubr.f32.mxu0 0.0
      %2781 = vmatmul.mubr.f32.gmra.mxu0 %v2607
      %v2782 = vpop.f32.mrf.mxu0
      %v2783 = vadd.f32 0.0, %v2782
      %v2784 = vpop.f32.mrf.mxu0
      %2785 = vmatprep.mubr.f32.mxu0 0.0
      %2786 = vmatmul.mubr.f32.gmra.mxu0 %v2608
      %v2787 = vpop.f32.mrf.mxu0
      %v2788 = vadd.f32 0.0, %v2787
      %v2789 = vpop.f32.mrf.mxu0
      %2790 = vmatprep.mubr.f32.mxu0 0.0
      %2791 = vmatmul.mubr.f32.gmra.mxu0 %v2609
      %v2792 = vpop.f32.mrf.mxu0
      %v2793 = vadd.f32 0.0, %v2792
      %v2794 = vpop.f32.mrf.mxu0
      %2795 = vmatprep.mubr.f32.mxu0 0.0
      %2796 = vmatmul.mubr.f32.gmra.mxu0 %v2610
      %v2797 = vpop.f32.mrf.mxu0
      %v2798 = vadd.f32 0.0, %v2797
      %v2799 = vpop.f32.mrf.mxu0
      %2800 = vmatprep.mubr.f32.mxu0 0.0
      %2801 = vmatmul.mubr.f32.gmra.mxu0 %v2611
      %v2802 = vpop.f32.mrf.mxu0
      %v2803 = vadd.f32 0.0, %v2802
      %v2804 = vpop.f32.mrf.mxu0
      %2805 = vmatprep.mubr.f32.mxu0 0.0
      %2806 = vmatmul.mubr.f32.gmra.mxu0 %v2612
      %v2807 = vpop.f32.mrf.mxu0
      %v2808 = vadd.f32 0.0, %v2807
      %v2809 = vpop.f32.mrf.mxu0
      %2810 = vmatprep.mubr.f32.mxu0 0.0
      %2811 = vmatmul.mubr.f32.gmra.mxu0 %v2613
      %v2812 = vpop.f32.mrf.mxu0
      %v2813 = vadd.f32 0.0, %v2812
      %v2814 = vpop.f32.mrf.mxu0
      %2815 = vmatprep.mubr.f32.mxu0 0.0
      %2816 = vmatmul.mubr.f32.gmra.mxu0 %v2614
      %v2817 = vpop.f32.mrf.mxu0
      %v2818 = vadd.f32 0.0, %v2817
      %v2819 = vpop.f32.mrf.mxu0
      %2820 = vmatprep.mubr.f32.mxu0 0.0
      %2821 = vmatmul.mubr.f32.gmra.mxu0 %v2615
      %v2822 = vpop.f32.mrf.mxu0
      %v2823 = vadd.f32 0.0, %v2822
      %v2824 = vpop.f32.mrf.mxu0
      %2825 = vmatprep.mubr.f32.mxu0 0.0
      %2826 = vmatmul.mubr.f32.gmra.mxu0 %v2616
      %v2827 = vpop.f32.mrf.mxu0
      %v2828 = vadd.f32 0.0, %v2827
      %v2829 = vpop.f32.mrf.mxu0
      %2830 = vmatprep.mubr.f32.mxu0 0.0
      %2831 = vmatmul.mubr.f32.gmra.mxu0 %v2617
      %v2832 = vpop.f32.mrf.mxu0
      %v2833 = vadd.f32 0.0, %v2832
      %v2834 = vpop.f32.mrf.mxu0
      %2835 = vmatprep.mubr.f32.mxu0 0.0
      %2836 = vmatmul.mubr.f32.gmra.mxu0 %v2618
      %v2837 = vpop.f32.mrf.mxu0
      %v2838 = vadd.f32 0.0, %v2837
      %v2839 = vpop.f32.mrf.mxu0
      %2840 = vmatprep.mubr.f32.mxu0 0.0
      %2841 = vmatmul.mubr.f32.gmra.mxu0 %v2619
      %v2842 = vpop.f32.mrf.mxu0
      %v2843 = vadd.f32 0.0, %v2842
      %v2844 = vpop.f32.mrf.mxu0
      %2845 = vmatprep.mubr.f32.mxu0 0.0
      %2846 = vmatmul.mubr.f32.gmra.mxu0 %v2620
      %v2847 = vpop.f32.mrf.mxu0
      %v2848 = vadd.f32 0.0, %v2847
      %v2849 = vpop.f32.mrf.mxu0
      %2850 = vmatprep.mubr.f32.mxu0 0.0
      %2851 = vmatmul.mubr.f32.gmra.mxu0 %v2621
      %v2852 = vpop.f32.mrf.mxu0
      %v2853 = vadd.f32 0.0, %v2852
      %v2854 = vpop.f32.mrf.mxu0
      %2855 = vmatprep.mubr.f32.mxu0 0.0
      %2856 = vmatmul.mubr.f32.gmra.mxu0 %v2622
      %v2857 = vpop.f32.mrf.mxu0
      %v2858 = vadd.f32 0.0, %v2857
      %v2859 = vpop.f32.mrf.mxu0
      %2860 = vmatprep.mubr.f32.mxu0 0.0
      %2861 = vmatmul.mubr.f32.gmra.mxu0 %v2623
      %v2862 = vpop.f32.mrf.mxu0
      %v2863 = vadd.f32 0.0, %v2862
      %v2864 = vpop.f32.mrf.mxu0
      %2865 = vmatprep.mubr.f32.mxu0 0.0
      %2866 = vmatmul.mubr.f32.gmra.mxu0 %v2624
      %v2867 = vpop.f32.mrf.mxu0
      %v2868 = vadd.f32 0.0, %v2867
      %v2869 = vpop.f32.mrf.mxu0
      %2870 = vmatprep.mubr.f32.mxu0 0.0
      %2871 = vmatmul.mubr.f32.gmra.mxu0 %v2625
      %v2872 = vpop.f32.mrf.mxu0
      %v2873 = vadd.f32 0.0, %v2872
      %v2874 = vpop.f32.mrf.mxu0
      %2875 = vmatprep.mubr.f32.mxu0 0.0
      %2876 = vmatmul.mubr.f32.gmra.mxu0 %v2626
      %v2877 = vpop.f32.mrf.mxu0
      %v2878 = vadd.f32 0.0, %v2877
      %v2879 = vpop.f32.mrf.mxu0
      %2880 = vmatprep.mubr.f32.mxu0 0.0
      %2881 = vmatmul.mubr.f32.gmra.mxu0 %v2627
      %v2882 = vpop.f32.mrf.mxu0
      %v2883 = vadd.f32 0.0, %v2882
      %v2884 = vpop.f32.mrf.mxu0
      %2885 = vmatprep.mubr.f32.mxu0 0.0
      %2886 = vmatmul.mubr.f32.gmra.mxu0 %v2628
      %v2887 = vpop.f32.mrf.mxu0
      %v2888 = vadd.f32 0.0, %v2887
      %v2889 = vpop.f32.mrf.mxu0
      %2890 = vmatprep.mubr.f32.mxu0 0.0
      %2891 = vmatmul.mubr.f32.gmra.mxu0 %v2629
      %v2892 = vpop.f32.mrf.mxu0
      %v2893 = vadd.f32 0.0, %v2892
      %v2894 = vpop.f32.mrf.mxu0
      %2895 = vmatprep.mubr.f32.mxu0 0.0
      %2896 = vmatmul.mubr.f32.gmra.mxu0 %v2630
      %v2897 = vpop.f32.mrf.mxu0
      %v2898 = vadd.f32 0.0, %v2897
      %v2899 = vpop.f32.mrf.mxu0
      %2900 = vmatprep.mubr.f32.mxu0 0.0
      %2901 = vmatmul.mubr.f32.gmra.mxu0 %v2631
      %v2902 = vpop.f32.mrf.mxu0
      %v2903 = vadd.f32 0.0, %v2902
      %v2904 = vpop.f32.mrf.mxu0
      %2905 = vmatprep.mubr.f32.mxu0 0.0
      %2906 = vmatmul.mubr.f32.gmra.mxu0 %v2632
      %v2907 = vpop.f32.mrf.mxu0
      %v2908 = vadd.f32 0.0, %v2907
      %v2909 = vpop.f32.mrf.mxu0
      %2910 = vmatprep.mubr.f32.mxu0 0.0
      %2911 = vmatmul.mubr.f32.gmra.mxu0 %v2633
      %v2912 = vpop.f32.mrf.mxu0
      %v2913 = vadd.f32 0.0, %v2912
      %v2914 = vpop.f32.mrf.mxu0
      %2915 = vmatprep.mubr.f32.mxu0 0.0
      %2916 = vmatmul.mubr.f32.gmra.mxu0 %v2634
      %v2917 = vpop.f32.mrf.mxu0
      %v2918 = vadd.f32 0.0, %v2917
      %v2919 = vpop.f32.mrf.mxu0
      %2920 = vmatprep.mubr.f32.mxu0 0.0
      %2921 = vmatmul.mubr.f32.gmra.mxu0 %v2635
      %v2922 = vpop.f32.mrf.mxu0
      %v2923 = vadd.f32 0.0, %v2922
      %v2924 = vpop.f32.mrf.mxu0
      %2925 = vmatprep.mubr.f32.mxu0 0.0
      %2926 = vmatmul.mubr.f32.gmra.mxu0 %v2636
      %v2927 = vpop.f32.mrf.mxu0
      %v2928 = vadd.f32 0.0, %v2927
      %v2929 = vpop.f32.mrf.mxu0
      %2930 = vmatprep.mubr.f32.mxu0 0.0
      %2931 = vmatmul.mubr.f32.gmra.mxu0 %v2637
      %v2932 = vpop.f32.mrf.mxu0
      %v2933 = vadd.f32 0.0, %v2932
      %v2934 = vpop.f32.mrf.mxu0
      %2935 = vmatprep.mubr.f32.mxu0 0.0
      %2936 = vmatmul.mubr.f32.gmra.mxu0 %v2638
      %v2937 = vpop.f32.mrf.mxu0
      %v2938 = vadd.f32 0.0, %v2937
      %v2939 = vpop.f32.mrf.mxu0
      %2940 = vmatprep.mubr.f32.mxu0 0.0
      %2941 = vmatmul.mubr.f32.gmra.mxu0 %v2639
      %v2942 = vpop.f32.mrf.mxu0
      %v2943 = vadd.f32 0.0, %v2942
      %v2944 = vpop.f32.mrf.mxu0
      %2945 = vmatprep.mubr.f32.mxu0 0.0
      %2946 = vmatmul.mubr.f32.gmra.mxu0 %v2640
      %v2947 = vpop.f32.mrf.mxu0
      %v2948 = vadd.f32 0.0, %v2947
      %v2949 = vpop.f32.mrf.mxu0
      %2950 = vmatprep.mubr.f32.mxu0 0.0
      %2951 = vmatmul.mubr.f32.gmra.mxu0 %v2641
      %v2952 = vpop.f32.mrf.mxu0
      %v2953 = vadd.f32 0.0, %v2952
      %v2954 = vpop.f32.mrf.mxu0
      %2955 = vmatprep.mubr.f32.mxu0 0.0
      %2956 = vmatmul.mubr.f32.gmra.mxu0 %v2642
      %v2957 = vpop.f32.mrf.mxu0
      %v2958 = vadd.f32 0.0, %v2957
      %v2959 = vpop.f32.mrf.mxu0
      %2960 = vmatprep.mubr.f32.mxu0 0.0
      %2961 = vmatmul.mubr.f32.gmra.mxu0 %v2643
      %v2962 = vpop.f32.mrf.mxu0
      %v2963 = vadd.f32 0.0, %v2962
      %v2964 = vpop.f32.mrf.mxu0
      %2965 = vdwg.mxu0
      %v2966 = vadd.f32 %v2548, %v2728
      %v2967 = vadd.f32 %v2549, %v2733
      %v2968 = vadd.f32 %v2550, %v2738
      %v2969 = vadd.f32 %v2551, %v2743
      %v2970 = vadd.f32 %v2552, %v2748
      %v2971 = vadd.f32 %v2553, %v2753
      %v2972 = vadd.f32 %v2554, %v2758
      %v2973 = vadd.f32 %v2555, %v2763
      %v2974 = vadd.f32 %v2556, %v2768
      %v2975 = vadd.f32 %v2557, %v2773
      %v2976 = vadd.f32 %v2558, %v2778
      %v2977 = vadd.f32 %v2559, %v2783
      %v2978 = vadd.f32 %v2560, %v2788
      %v2979 = vadd.f32 %v2561, %v2793
      %v2980 = vadd.f32 %v2562, %v2798
      %v2981 = vadd.f32 %v2563, %v2803
      %v2982 = vadd.f32 %v2564, %v2808
      %v2983 = vadd.f32 %v2565, %v2813
      %v2984 = vadd.f32 %v2566, %v2818
      %v2985 = vadd.f32 %v2567, %v2823
      %v2986 = vadd.f32 %v2568, %v2828
      %v2987 = vadd.f32 %v2569, %v2833
      %v2988 = vadd.f32 %v2570, %v2838
      %v2989 = vadd.f32 %v2571, %v2843
      %v2990 = vadd.f32 %v2572, %v2848
      %v2991 = vadd.f32 %v2573, %v2853
      %v2992 = vadd.f32 %v2574, %v2858
      %v2993 = vadd.f32 %v2575, %v2863
      %v2994 = vadd.f32 %v2576, %v2868
      %v2995 = vadd.f32 %v2577, %v2873
      %v2996 = vadd.f32 %v2578, %v2878
      %v2997 = vadd.f32 %v2579, %v2883
      %v2998 = vadd.f32 %v2580, %v2888
      %v2999 = vadd.f32 %v2581, %v2893
      %v3000 = vadd.f32 %v2582, %v2898
      %v3001 = vadd.f32 %v2583, %v2903
      %v3002 = vadd.f32 %v2584, %v2908
      %v3003 = vadd.f32 %v2585, %v2913
      %v3004 = vadd.f32 %v2586, %v2918
      %v3005 = vadd.f32 %v2587, %v2923
      %v3006 = vadd.f32 %v2588, %v2928
      %v3007 = vadd.f32 %v2589, %v2933
      %v3008 = vadd.f32 %v2590, %v2938
      %v3009 = vadd.f32 %v2591, %v2943
      %v3010 = vadd.f32 %v2592, %v2948
      %v3011 = vadd.f32 %v2593, %v2953
      %v3012 = vadd.f32 %v2594, %v2958
      %v3013 = vadd.f32 %v2595, %v2963
      %v3014 = vld [vmem:[#allocation2 + $0x1a] sm:$0xff]
      %v3015 = vld [vmem:[#allocation2 + $0x22] sm:$0xff]
      %v3016 = vld [vmem:[#allocation2 + $0x2a] sm:$0xff]
      %v3017 = vld [vmem:[#allocation2 + $0x32] sm:$0xff]
      %v3018 = vld [vmem:[#allocation2 + $0x3a] sm:$0xff]
      %v3019 = vld [vmem:[#allocation2 + $0x42] sm:$0xff]
      %v3020 = vld [vmem:[#allocation2 + $0x4a] sm:$0xff]
      %v3021 = vld [vmem:[#allocation2 + $0x52] sm:$0xff]
      %v3022 = vld [vmem:[#allocation2 + $0x5a] sm:$0xff]
      %v3023 = vld [vmem:[#allocation2 + $0x62] sm:$0xff]
      %v3024 = vld [vmem:[#allocation2 + $0x6a] sm:$0xff]
      %v3025 = vld [vmem:[#allocation2 + $0x72] sm:$0xff]
      %v3026 = vld [vmem:[#allocation2 + $0x7a] sm:$0xff]
      %v3027 = vld [vmem:[#allocation2 + $0x82] sm:$0xff]
      %v3028 = vld [vmem:[#allocation2 + $0x8a] sm:$0xff]
      %v3029 = vld [vmem:[#allocation2 + $0x92] sm:$0xff]
      %v3030 = vld [vmem:[#allocation2 + $0x9a] sm:$0xff]
      %v3031 = vld [vmem:[#allocation2 + $0xa2] sm:$0xff]
      %v3032 = vld [vmem:[#allocation2 + $0xaa] sm:$0xff]
      %v3033 = vld [vmem:[#allocation2 + $0xb2] sm:$0xff]
      %v3034 = vld [vmem:[#allocation2 + $0xba] sm:$0xff]
      %v3035 = vld [vmem:[#allocation2 + $0xc2] sm:$0xff]
      %v3036 = vld [vmem:[#allocation2 + $0xca] sm:$0xff]
      %v3037 = vld [vmem:[#allocation2 + $0xd2] sm:$0xff]
      %v3038 = vld [vmem:[#allocation2 + $0xda] sm:$0xff]
      %v3039 = vld [vmem:[#allocation2 + $0xe2] sm:$0xff]
      %v3040 = vld [vmem:[#allocation2 + $0xea] sm:$0xff]
      %v3041 = vld [vmem:[#allocation2 + $0xf2] sm:$0xff]
      %v3042 = vld [vmem:[#allocation2 + $0xfa] sm:$0xff]
      %v3043 = vld [vmem:[#allocation2 + $0x102] sm:$0xff]
      %v3044 = vld [vmem:[#allocation2 + $0x10a] sm:$0xff]
      %v3045 = vld [vmem:[#allocation2 + $0x112] sm:$0xff]
      %v3046 = vld [vmem:[#allocation2 + $0x11a] sm:$0xff]
      %v3047 = vld [vmem:[#allocation2 + $0x122] sm:$0xff]
      %v3048 = vld [vmem:[#allocation2 + $0x12a] sm:$0xff]
      %v3049 = vld [vmem:[#allocation2 + $0x132] sm:$0xff]
      %v3050 = vld [vmem:[#allocation2 + $0x13a] sm:$0xff]
      %v3051 = vld [vmem:[#allocation2 + $0x142] sm:$0xff]
      %v3052 = vld [vmem:[#allocation2 + $0x14a] sm:$0xff]
      %v3053 = vld [vmem:[#allocation2 + $0x152] sm:$0xff]
      %v3054 = vld [vmem:[#allocation2 + $0x15a] sm:$0xff]
      %v3055 = vld [vmem:[#allocation2 + $0x162] sm:$0xff]
      %v3056 = vld [vmem:[#allocation2 + $0x16a] sm:$0xff]
      %v3057 = vld [vmem:[#allocation2 + $0x172] sm:$0xff]
      %v3058 = vld [vmem:[#allocation2 + $0x17a] sm:$0xff]
      %v3059 = vld [vmem:[#allocation2 + $0x182] sm:$0xff]
      %v3060 = vld [vmem:[#allocation2 + $0x18a] sm:$0xff]
      %v3061 = vld [vmem:[#allocation2 + $0x192] sm:$0xff]
      %s3062 = scalar_lea.vmem %s1, 640
      %v3063 = vld [vmem:[%s3062] sm:$0xff]
      %v3064 = vld [vmem:[%s3062 + $0x8] sm:$0xff]
      %v3065 = vld [vmem:[%s3062 + $0x10] sm:$0xff]
      %v3066 = vld [vmem:[%s3062 + $0x18] sm:$0xff]
      %v3067 = vld [vmem:[%s3062 + $0x20] sm:$0xff]
      %v3068 = vld [vmem:[%s3062 + $0x28] sm:$0xff]
      %v3069 = vld [vmem:[%s3062 + $0x30] sm:$0xff]
      %v3070 = vld [vmem:[%s3062 + $0x38] sm:$0xff]
      %v3071 = vld [vmem:[%s3062 + $0x40] sm:$0xff]
      %v3072 = vld [vmem:[%s3062 + $0x48] sm:$0xff]
      %v3073 = vld [vmem:[%s3062 + $0x50] sm:$0xff]
      %v3074 = vld [vmem:[%s3062 + $0x58] sm:$0xff]
      %v3075 = vld [vmem:[%s3062 + $0x60] sm:$0xff]
      %v3076 = vld [vmem:[%s3062 + $0x68] sm:$0xff]
      %v3077 = vld [vmem:[%s3062 + $0x70] sm:$0xff]
      %v3078 = vld [vmem:[%s3062 + $0x78] sm:$0xff]
      %3079 = vmatprep.subr.mxu0 0.0
      %3080 = vmatpush1.msra.mxu0 %v3078
      %3081 = vmatprep.subr.mxu0 0.0
      %3082 = vmatpush1.msra.mxu0 %v3077
      %3083 = vmatprep.subr.mxu0 0.0
      %3084 = vmatpush1.msra.mxu0 %v3076
      %3085 = vmatprep.subr.mxu0 0.0
      %3086 = vmatpush1.msra.mxu0 %v3075
      %3087 = vmatprep.subr.mxu0 0.0
      %3088 = vmatpush1.msra.mxu0 %v3074
      %3089 = vmatprep.subr.mxu0 0.0
      %3090 = vmatpush1.msra.mxu0 %v3073
      %3091 = vmatprep.subr.mxu0 0.0
      %3092 = vmatpush1.msra.mxu0 %v3072
      %3093 = vmatprep.subr.mxu0 0.0
      %3094 = vmatpush1.msra.mxu0 %v3071
      %3095 = vmatprep.subr.mxu0 0.0
      %3096 = vmatpush1.msra.mxu0 %v3070
      %3097 = vmatprep.subr.mxu0 0.0
      %3098 = vmatpush1.msra.mxu0 %v3069
      %3099 = vmatprep.subr.mxu0 0.0
      %3100 = vmatpush1.msra.mxu0 %v3068
      %3101 = vmatprep.subr.mxu0 0.0
      %3102 = vmatpush1.msra.mxu0 %v3067
      %3103 = vmatprep.subr.mxu0 0.0
      %3104 = vmatpush1.msra.mxu0 %v3066
      %3105 = vmatprep.subr.mxu0 0.0
      %3106 = vmatpush1.msra.mxu0 %v3065
      %3107 = vmatprep.subr.mxu0 0.0
      %3108 = vmatpush1.msra.mxu0 %v3064
      %3109 = vmatprep.subr.mxu0 0.0
      %3110 = vmatpush1.msra.mxu0 %v3063
      %3111 = vmatprep.subr.mxu0 0.0
      %3112 = vmatpush2.msra.mxu0 0.0
      %3113 = vmatprep.subr.mxu0 0.0
      %3114 = vmatpush2.msra.mxu0 0.0
      %3115 = vmatprep.subr.mxu0 0.0
      %3116 = vmatpush2.msra.mxu0 0.0
      %3117 = vmatprep.subr.mxu0 0.0
      %3118 = vmatpush2.msra.mxu0 0.0
      %3119 = vmatprep.subr.mxu0 0.0
      %3120 = vmatpush2.msra.mxu0 0.0
      %3121 = vmatprep.subr.mxu0 0.0
      %3122 = vmatpush2.msra.mxu0 0.0
      %3123 = vmatprep.subr.mxu0 0.0
      %3124 = vmatpush2.msra.mxu0 0.0
      %3125 = vmatprep.subr.mxu0 0.0
      %3126 = vmatpush2.msra.mxu0 0.0
      %3127 = vmatprep.subr.mxu0 0.0
      %3128 = vmatpush2.msra.mxu0 0.0
      %3129 = vmatprep.subr.mxu0 0.0
      %3130 = vmatpush2.msra.mxu0 0.0
      %3131 = vmatprep.subr.mxu0 0.0
      %3132 = vmatpush2.msra.mxu0 0.0
      %3133 = vmatprep.subr.mxu0 0.0
      %3134 = vmatpush2.msra.mxu0 0.0
      %3135 = vmatprep.subr.mxu0 0.0
      %3136 = vmatpush2.msra.mxu0 0.0
      %3137 = vmatprep.subr.mxu0 0.0
      %3138 = vmatpush2.msra.mxu0 0.0
      %3139 = vmatprep.subr.mxu0 0.0
      %3140 = vmatpush2.msra.mxu0 0.0
      %3141 = vmatprep.subr.mxu0 0.0
      %3142 = vmatpush2.msra.mxu0 0.0
      %3143 = vmatprep.mubr.f32.mxu0 0.0
      %3144 = vmatmul.mubr.f32.gmra.mxu0 %v3014
      %v3145 = vpop.f32.mrf.mxu0
      %v3146 = vadd.f32 0.0, %v3145
      %v3147 = vpop.f32.mrf.mxu0
      %3148 = vmatprep.mubr.f32.mxu0 0.0
      %3149 = vmatmul.mubr.f32.gmra.mxu0 %v3015
      %v3150 = vpop.f32.mrf.mxu0
      %v3151 = vadd.f32 0.0, %v3150
      %v3152 = vpop.f32.mrf.mxu0
      %3153 = vmatprep.mubr.f32.mxu0 0.0
      %3154 = vmatmul.mubr.f32.gmra.mxu0 %v3016
      %v3155 = vpop.f32.mrf.mxu0
      %v3156 = vadd.f32 0.0, %v3155
      %v3157 = vpop.f32.mrf.mxu0
      %3158 = vmatprep.mubr.f32.mxu0 0.0
      %3159 = vmatmul.mubr.f32.gmra.mxu0 %v3017
      %v3160 = vpop.f32.mrf.mxu0
      %v3161 = vadd.f32 0.0, %v3160
      %v3162 = vpop.f32.mrf.mxu0
      %3163 = vmatprep.mubr.f32.mxu0 0.0
      %3164 = vmatmul.mubr.f32.gmra.mxu0 %v3018
      %v3165 = vpop.f32.mrf.mxu0
      %v3166 = vadd.f32 0.0, %v3165
      %v3167 = vpop.f32.mrf.mxu0
      %3168 = vmatprep.mubr.f32.mxu0 0.0
      %3169 = vmatmul.mubr.f32.gmra.mxu0 %v3019
      %v3170 = vpop.f32.mrf.mxu0
      %v3171 = vadd.f32 0.0, %v3170
      %v3172 = vpop.f32.mrf.mxu0
      %3173 = vmatprep.mubr.f32.mxu0 0.0
      %3174 = vmatmul.mubr.f32.gmra.mxu0 %v3020
      %v3175 = vpop.f32.mrf.mxu0
      %v3176 = vadd.f32 0.0, %v3175
      %v3177 = vpop.f32.mrf.mxu0
      %3178 = vmatprep.mubr.f32.mxu0 0.0
      %3179 = vmatmul.mubr.f32.gmra.mxu0 %v3021
      %v3180 = vpop.f32.mrf.mxu0
      %v3181 = vadd.f32 0.0, %v3180
      %v3182 = vpop.f32.mrf.mxu0
      %3183 = vmatprep.mubr.f32.mxu0 0.0
      %3184 = vmatmul.mubr.f32.gmra.mxu0 %v3022
      %v3185 = vpop.f32.mrf.mxu0
      %v3186 = vadd.f32 0.0, %v3185
      %v3187 = vpop.f32.mrf.mxu0
      %3188 = vmatprep.mubr.f32.mxu0 0.0
      %3189 = vmatmul.mubr.f32.gmra.mxu0 %v3023
      %v3190 = vpop.f32.mrf.mxu0
      %v3191 = vadd.f32 0.0, %v3190
      %v3192 = vpop.f32.mrf.mxu0
      %3193 = vmatprep.mubr.f32.mxu0 0.0
      %3194 = vmatmul.mubr.f32.gmra.mxu0 %v3024
      %v3195 = vpop.f32.mrf.mxu0
      %v3196 = vadd.f32 0.0, %v3195
      %v3197 = vpop.f32.mrf.mxu0
      %3198 = vmatprep.mubr.f32.mxu0 0.0
      %3199 = vmatmul.mubr.f32.gmra.mxu0 %v3025
      %v3200 = vpop.f32.mrf.mxu0
      %v3201 = vadd.f32 0.0, %v3200
      %v3202 = vpop.f32.mrf.mxu0
      %3203 = vmatprep.mubr.f32.mxu0 0.0
      %3204 = vmatmul.mubr.f32.gmra.mxu0 %v3026
      %v3205 = vpop.f32.mrf.mxu0
      %v3206 = vadd.f32 0.0, %v3205
      %v3207 = vpop.f32.mrf.mxu0
      %3208 = vmatprep.mubr.f32.mxu0 0.0
      %3209 = vmatmul.mubr.f32.gmra.mxu0 %v3027
      %v3210 = vpop.f32.mrf.mxu0
      %v3211 = vadd.f32 0.0, %v3210
      %v3212 = vpop.f32.mrf.mxu0
      %3213 = vmatprep.mubr.f32.mxu0 0.0
      %3214 = vmatmul.mubr.f32.gmra.mxu0 %v3028
      %v3215 = vpop.f32.mrf.mxu0
      %v3216 = vadd.f32 0.0, %v3215
      %v3217 = vpop.f32.mrf.mxu0
      %3218 = vmatprep.mubr.f32.mxu0 0.0
      %3219 = vmatmul.mubr.f32.gmra.mxu0 %v3029
      %v3220 = vpop.f32.mrf.mxu0
      %v3221 = vadd.f32 0.0, %v3220
      %v3222 = vpop.f32.mrf.mxu0
      %3223 = vmatprep.mubr.f32.mxu0 0.0
      %3224 = vmatmul.mubr.f32.gmra.mxu0 %v3030
      %v3225 = vpop.f32.mrf.mxu0
      %v3226 = vadd.f32 0.0, %v3225
      %v3227 = vpop.f32.mrf.mxu0
      %3228 = vmatprep.mubr.f32.mxu0 0.0
      %3229 = vmatmul.mubr.f32.gmra.mxu0 %v3031
      %v3230 = vpop.f32.mrf.mxu0
      %v3231 = vadd.f32 0.0, %v3230
      %v3232 = vpop.f32.mrf.mxu0
      %3233 = vmatprep.mubr.f32.mxu0 0.0
      %3234 = vmatmul.mubr.f32.gmra.mxu0 %v3032
      %v3235 = vpop.f32.mrf.mxu0
      %v3236 = vadd.f32 0.0, %v3235
      %v3237 = vpop.f32.mrf.mxu0
      %3238 = vmatprep.mubr.f32.mxu0 0.0
      %3239 = vmatmul.mubr.f32.gmra.mxu0 %v3033
      %v3240 = vpop.f32.mrf.mxu0
      %v3241 = vadd.f32 0.0, %v3240
      %v3242 = vpop.f32.mrf.mxu0
      %3243 = vmatprep.mubr.f32.mxu0 0.0
      %3244 = vmatmul.mubr.f32.gmra.mxu0 %v3034
      %v3245 = vpop.f32.mrf.mxu0
      %v3246 = vadd.f32 0.0, %v3245
      %v3247 = vpop.f32.mrf.mxu0
      %3248 = vmatprep.mubr.f32.mxu0 0.0
      %3249 = vmatmul.mubr.f32.gmra.mxu0 %v3035
      %v3250 = vpop.f32.mrf.mxu0
      %v3251 = vadd.f32 0.0, %v3250
      %v3252 = vpop.f32.mrf.mxu0
      %3253 = vmatprep.mubr.f32.mxu0 0.0
      %3254 = vmatmul.mubr.f32.gmra.mxu0 %v3036
      %v3255 = vpop.f32.mrf.mxu0
      %v3256 = vadd.f32 0.0, %v3255
      %v3257 = vpop.f32.mrf.mxu0
      %3258 = vmatprep.mubr.f32.mxu0 0.0
      %3259 = vmatmul.mubr.f32.gmra.mxu0 %v3037
      %v3260 = vpop.f32.mrf.mxu0
      %v3261 = vadd.f32 0.0, %v3260
      %v3262 = vpop.f32.mrf.mxu0
      %3263 = vmatprep.mubr.f32.mxu0 0.0
      %3264 = vmatmul.mubr.f32.gmra.mxu0 %v3038
      %v3265 = vpop.f32.mrf.mxu0
      %v3266 = vadd.f32 0.0, %v3265
      %v3267 = vpop.f32.mrf.mxu0
      %3268 = vmatprep.mubr.f32.mxu0 0.0
      %3269 = vmatmul.mubr.f32.gmra.mxu0 %v3039
      %v3270 = vpop.f32.mrf.mxu0
      %v3271 = vadd.f32 0.0, %v3270
      %v3272 = vpop.f32.mrf.mxu0
      %3273 = vmatprep.mubr.f32.mxu0 0.0
      %3274 = vmatmul.mubr.f32.gmra.mxu0 %v3040
      %v3275 = vpop.f32.mrf.mxu0
      %v3276 = vadd.f32 0.0, %v3275
      %v3277 = vpop.f32.mrf.mxu0
      %3278 = vmatprep.mubr.f32.mxu0 0.0
      %3279 = vmatmul.mubr.f32.gmra.mxu0 %v3041
      %v3280 = vpop.f32.mrf.mxu0
      %v3281 = vadd.f32 0.0, %v3280
      %v3282 = vpop.f32.mrf.mxu0
      %3283 = vmatprep.mubr.f32.mxu0 0.0
      %3284 = vmatmul.mubr.f32.gmra.mxu0 %v3042
      %v3285 = vpop.f32.mrf.mxu0
      %v3286 = vadd.f32 0.0, %v3285
      %v3287 = vpop.f32.mrf.mxu0
      %3288 = vmatprep.mubr.f32.mxu0 0.0
      %3289 = vmatmul.mubr.f32.gmra.mxu0 %v3043
      %v3290 = vpop.f32.mrf.mxu0
      %v3291 = vadd.f32 0.0, %v3290
      %v3292 = vpop.f32.mrf.mxu0
      %3293 = vmatprep.mubr.f32.mxu0 0.0
      %3294 = vmatmul.mubr.f32.gmra.mxu0 %v3044
      %v3295 = vpop.f32.mrf.mxu0
      %v3296 = vadd.f32 0.0, %v3295
      %v3297 = vpop.f32.mrf.mxu0
      %3298 = vmatprep.mubr.f32.mxu0 0.0
      %3299 = vmatmul.mubr.f32.gmra.mxu0 %v3045
      %v3300 = vpop.f32.mrf.mxu0
      %v3301 = vadd.f32 0.0, %v3300
      %v3302 = vpop.f32.mrf.mxu0
      %3303 = vmatprep.mubr.f32.mxu0 0.0
      %3304 = vmatmul.mubr.f32.gmra.mxu0 %v3046
      %v3305 = vpop.f32.mrf.mxu0
      %v3306 = vadd.f32 0.0, %v3305
      %v3307 = vpop.f32.mrf.mxu0
      %3308 = vmatprep.mubr.f32.mxu0 0.0
      %3309 = vmatmul.mubr.f32.gmra.mxu0 %v3047
      %v3310 = vpop.f32.mrf.mxu0
      %v3311 = vadd.f32 0.0, %v3310
      %v3312 = vpop.f32.mrf.mxu0
      %3313 = vmatprep.mubr.f32.mxu0 0.0
      %3314 = vmatmul.mubr.f32.gmra.mxu0 %v3048
      %v3315 = vpop.f32.mrf.mxu0
      %v3316 = vadd.f32 0.0, %v3315
      %v3317 = vpop.f32.mrf.mxu0
      %3318 = vmatprep.mubr.f32.mxu0 0.0
      %3319 = vmatmul.mubr.f32.gmra.mxu0 %v3049
      %v3320 = vpop.f32.mrf.mxu0
      %v3321 = vadd.f32 0.0, %v3320
      %v3322 = vpop.f32.mrf.mxu0
      %3323 = vmatprep.mubr.f32.mxu0 0.0
      %3324 = vmatmul.mubr.f32.gmra.mxu0 %v3050
      %v3325 = vpop.f32.mrf.mxu0
      %v3326 = vadd.f32 0.0, %v3325
      %v3327 = vpop.f32.mrf.mxu0
      %3328 = vmatprep.mubr.f32.mxu0 0.0
      %3329 = vmatmul.mubr.f32.gmra.mxu0 %v3051
      %v3330 = vpop.f32.mrf.mxu0
      %v3331 = vadd.f32 0.0, %v3330
      %v3332 = vpop.f32.mrf.mxu0
      %3333 = vmatprep.mubr.f32.mxu0 0.0
      %3334 = vmatmul.mubr.f32.gmra.mxu0 %v3052
      %v3335 = vpop.f32.mrf.mxu0
      %v3336 = vadd.f32 0.0, %v3335
      %v3337 = vpop.f32.mrf.mxu0
      %3338 = vmatprep.mubr.f32.mxu0 0.0
      %3339 = vmatmul.mubr.f32.gmra.mxu0 %v3053
      %v3340 = vpop.f32.mrf.mxu0
      %v3341 = vadd.f32 0.0, %v3340
      %v3342 = vpop.f32.mrf.mxu0
      %3343 = vmatprep.mubr.f32.mxu0 0.0
      %3344 = vmatmul.mubr.f32.gmra.mxu0 %v3054
      %v3345 = vpop.f32.mrf.mxu0
      %v3346 = vadd.f32 0.0, %v3345
      %v3347 = vpop.f32.mrf.mxu0
      %3348 = vmatprep.mubr.f32.mxu0 0.0
      %3349 = vmatmul.mubr.f32.gmra.mxu0 %v3055
      %v3350 = vpop.f32.mrf.mxu0
      %v3351 = vadd.f32 0.0, %v3350
      %v3352 = vpop.f32.mrf.mxu0
      %3353 = vmatprep.mubr.f32.mxu0 0.0
      %3354 = vmatmul.mubr.f32.gmra.mxu0 %v3056
      %v3355 = vpop.f32.mrf.mxu0
      %v3356 = vadd.f32 0.0, %v3355
      %v3357 = vpop.f32.mrf.mxu0
      %3358 = vmatprep.mubr.f32.mxu0 0.0
      %3359 = vmatmul.mubr.f32.gmra.mxu0 %v3057
      %v3360 = vpop.f32.mrf.mxu0
      %v3361 = vadd.f32 0.0, %v3360
      %v3362 = vpop.f32.mrf.mxu0
      %3363 = vmatprep.mubr.f32.mxu0 0.0
      %3364 = vmatmul.mubr.f32.gmra.mxu0 %v3058
      %v3365 = vpop.f32.mrf.mxu0
      %v3366 = vadd.f32 0.0, %v3365
      %v3367 = vpop.f32.mrf.mxu0
      %3368 = vmatprep.mubr.f32.mxu0 0.0
      %3369 = vmatmul.mubr.f32.gmra.mxu0 %v3059
      %v3370 = vpop.f32.mrf.mxu0
      %v3371 = vadd.f32 0.0, %v3370
      %v3372 = vpop.f32.mrf.mxu0
      %3373 = vmatprep.mubr.f32.mxu0 0.0
      %3374 = vmatmul.mubr.f32.gmra.mxu0 %v3060
      %v3375 = vpop.f32.mrf.mxu0
      %v3376 = vadd.f32 0.0, %v3375
      %v3377 = vpop.f32.mrf.mxu0
      %3378 = vmatprep.mubr.f32.mxu0 0.0
      %3379 = vmatmul.mubr.f32.gmra.mxu0 %v3061
      %v3380 = vpop.f32.mrf.mxu0
      %v3381 = vadd.f32 0.0, %v3380
      %v3382 = vpop.f32.mrf.mxu0
      %3383 = vdwg.mxu0
      %v3384 = vadd.f32 %v2966, %v3146
      %v3385 = vadd.f32 %v2967, %v3151
      %v3386 = vadd.f32 %v2968, %v3156
      %v3387 = vadd.f32 %v2969, %v3161
      %v3388 = vadd.f32 %v2970, %v3166
      %v3389 = vadd.f32 %v2971, %v3171
      %v3390 = vadd.f32 %v2972, %v3176
      %v3391 = vadd.f32 %v2973, %v3181
      %v3392 = vadd.f32 %v2974, %v3186
      %v3393 = vadd.f32 %v2975, %v3191
      %v3394 = vadd.f32 %v2976, %v3196
      %v3395 = vadd.f32 %v2977, %v3201
      %v3396 = vadd.f32 %v2978, %v3206
      %v3397 = vadd.f32 %v2979, %v3211
      %v3398 = vadd.f32 %v2980, %v3216
      %v3399 = vadd.f32 %v2981, %v3221
      %v3400 = vadd.f32 %v2982, %v3226
      %v3401 = vadd.f32 %v2983, %v3231
      %v3402 = vadd.f32 %v2984, %v3236
      %v3403 = vadd.f32 %v2985, %v3241
      %v3404 = vadd.f32 %v2986, %v3246
      %v3405 = vadd.f32 %v2987, %v3251
      %v3406 = vadd.f32 %v2988, %v3256
      %v3407 = vadd.f32 %v2989, %v3261
      %v3408 = vadd.f32 %v2990, %v3266
      %v3409 = vadd.f32 %v2991, %v3271
      %v3410 = vadd.f32 %v2992, %v3276
      %v3411 = vadd.f32 %v2993, %v3281
      %v3412 = vadd.f32 %v2994, %v3286
      %v3413 = vadd.f32 %v2995, %v3291
      %v3414 = vadd.f32 %v2996, %v3296
      %v3415 = vadd.f32 %v2997, %v3301
      %v3416 = vadd.f32 %v2998, %v3306
      %v3417 = vadd.f32 %v2999, %v3311
      %v3418 = vadd.f32 %v3000, %v3316
      %v3419 = vadd.f32 %v3001, %v3321
      %v3420 = vadd.f32 %v3002, %v3326
      %v3421 = vadd.f32 %v3003, %v3331
      %v3422 = vadd.f32 %v3004, %v3336
      %v3423 = vadd.f32 %v3005, %v3341
      %v3424 = vadd.f32 %v3006, %v3346
      %v3425 = vadd.f32 %v3007, %v3351
      %v3426 = vadd.f32 %v3008, %v3356
      %v3427 = vadd.f32 %v3009, %v3361
      %v3428 = vadd.f32 %v3010, %v3366
      %v3429 = vadd.f32 %v3011, %v3371
      %v3430 = vadd.f32 %v3012, %v3376
      %v3431 = vadd.f32 %v3013, %v3381
      %v3432 = vld [vmem:[#allocation2 + $0x30] sm:$0xff]
      %v3433 = vld [vmem:[#allocation2 + $0x38] sm:$0xff]
      %v3434 = vld [vmem:[#allocation2 + $0x40] sm:$0xff]
      %v3435 = vld [vmem:[#allocation2 + $0x48] sm:$0xff]
      %v3436 = vld [vmem:[#allocation2 + $0x50] sm:$0xff]
      %v3437 = vld [vmem:[#allocation2 + $0x58] sm:$0xff]
      %v3438 = vld [vmem:[#allocation2 + $0x60] sm:$0xff]
      %v3439 = vld [vmem:[#allocation2 + $0x68] sm:$0xff]
      %v3440 = vld [vmem:[#allocation2 + $0x70] sm:$0xff]
      %v3441 = vld [vmem:[#allocation2 + $0x78] sm:$0xff]
      %v3442 = vld [vmem:[#allocation2 + $0x80] sm:$0xff]
      %v3443 = vld [vmem:[#allocation2 + $0x88] sm:$0xff]
      %v3444 = vld [vmem:[#allocation2 + $0x90] sm:$0xff]
      %v3445 = vld [vmem:[#allocation2 + $0x98] sm:$0xff]
      %v3446 = vld [vmem:[#allocation2 + $0xa0] sm:$0xff]
      %v3447 = vld [vmem:[#allocation2 + $0xa8] sm:$0xff]
      %v3448 = vld [vmem:[#allocation2 + $0xb0] sm:$0xff]
      %v3449 = vld [vmem:[#allocation2 + $0xb8] sm:$0xff]
      %v3450 = vld [vmem:[#allocation2 + $0xc0] sm:$0xff]
      %v3451 = vld [vmem:[#allocation2 + $0xc8] sm:$0xff]
      %v3452 = vld [vmem:[#allocation2 + $0xd0] sm:$0xff]
      %v3453 = vld [vmem:[#allocation2 + $0xd8] sm:$0xff]
      %v3454 = vld [vmem:[#allocation2 + $0xe0] sm:$0xff]
      %v3455 = vld [vmem:[#allocation2 + $0xe8] sm:$0xff]
      %v3456 = vld [vmem:[#allocation2 + $0xf0] sm:$0xff]
      %v3457 = vld [vmem:[#allocation2 + $0xf8] sm:$0xff]
      %v3458 = vld [vmem:[#allocation2 + $0x100] sm:$0xff]
      %v3459 = vld [vmem:[#allocation2 + $0x108] sm:$0xff]
      %v3460 = vld [vmem:[#allocation2 + $0x110] sm:$0xff]
      %v3461 = vld [vmem:[#allocation2 + $0x118] sm:$0xff]
      %v3462 = vld [vmem:[#allocation2 + $0x120] sm:$0xff]
      %v3463 = vld [vmem:[#allocation2 + $0x128] sm:$0xff]
      %v3464 = vld [vmem:[#allocation2 + $0x130] sm:$0xff]
      %v3465 = vld [vmem:[#allocation2 + $0x138] sm:$0xff]
      %v3466 = vld [vmem:[#allocation2 + $0x140] sm:$0xff]
      %v3467 = vld [vmem:[#allocation2 + $0x148] sm:$0xff]
      %v3468 = vld [vmem:[#allocation2 + $0x150] sm:$0xff]
      %v3469 = vld [vmem:[#allocation2 + $0x158] sm:$0xff]
      %v3470 = vld [vmem:[#allocation2 + $0x160] sm:$0xff]
      %v3471 = vld [vmem:[#allocation2 + $0x168] sm:$0xff]
      %v3472 = vld [vmem:[#allocation2 + $0x170] sm:$0xff]
      %v3473 = vld [vmem:[#allocation2 + $0x178] sm:$0xff]
      %v3474 = vld [vmem:[#allocation2 + $0x180] sm:$0xff]
      %v3475 = vld [vmem:[#allocation2 + $0x188] sm:$0xff]
      %v3476 = vld [vmem:[#allocation2 + $0x190] sm:$0xff]
      %v3477 = vld [vmem:[#allocation2 + $0x198] sm:$0xff]
      %v3478 = vld [vmem:[#allocation2 + $0x1a0] sm:$0xff]
      %v3479 = vld [vmem:[#allocation2 + $0x1a8] sm:$0xff]
      %s3480 = scalar_lea.vmem %s1, 768
      %v3481 = vld [vmem:[%s3480] sm:$0xff]
      %v3482 = vld [vmem:[%s3480 + $0x8] sm:$0xff]
      %v3483 = vld [vmem:[%s3480 + $0x10] sm:$0xff]
      %v3484 = vld [vmem:[%s3480 + $0x18] sm:$0xff]
      %v3485 = vld [vmem:[%s3480 + $0x20] sm:$0xff]
      %v3486 = vld [vmem:[%s3480 + $0x28] sm:$0xff]
      %v3487 = vld [vmem:[%s3480 + $0x30] sm:$0xff]
      %v3488 = vld [vmem:[%s3480 + $0x38] sm:$0xff]
      %v3489 = vld [vmem:[%s3480 + $0x40] sm:$0xff]
      %v3490 = vld [vmem:[%s3480 + $0x48] sm:$0xff]
      %v3491 = vld [vmem:[%s3480 + $0x50] sm:$0xff]
      %v3492 = vld [vmem:[%s3480 + $0x58] sm:$0xff]
      %v3493 = vld [vmem:[%s3480 + $0x60] sm:$0xff]
      %v3494 = vld [vmem:[%s3480 + $0x68] sm:$0xff]
      %v3495 = vld [vmem:[%s3480 + $0x70] sm:$0xff]
      %v3496 = vld [vmem:[%s3480 + $0x78] sm:$0xff]
      %3497 = vmatprep.subr.mxu0 0.0
      %3498 = vmatpush1.msra.mxu0 %v3496
      %3499 = vmatprep.subr.mxu0 0.0
      %3500 = vmatpush1.msra.mxu0 %v3495
      %3501 = vmatprep.subr.mxu0 0.0
      %3502 = vmatpush1.msra.mxu0 %v3494
      %3503 = vmatprep.subr.mxu0 0.0
      %3504 = vmatpush1.msra.mxu0 %v3493
      %3505 = vmatprep.subr.mxu0 0.0
      %3506 = vmatpush1.msra.mxu0 %v3492
      %3507 = vmatprep.subr.mxu0 0.0
      %3508 = vmatpush1.msra.mxu0 %v3491
      %3509 = vmatprep.subr.mxu0 0.0
      %3510 = vmatpush1.msra.mxu0 %v3490
      %3511 = vmatprep.subr.mxu0 0.0
      %3512 = vmatpush1.msra.mxu0 %v3489
      %3513 = vmatprep.subr.mxu0 0.0
      %3514 = vmatpush1.msra.mxu0 %v3488
      %3515 = vmatprep.subr.mxu0 0.0
      %3516 = vmatpush1.msra.mxu0 %v3487
      %3517 = vmatprep.subr.mxu0 0.0
      %3518 = vmatpush1.msra.mxu0 %v3486
      %3519 = vmatprep.subr.mxu0 0.0
      %3520 = vmatpush1.msra.mxu0 %v3485
      %3521 = vmatprep.subr.mxu0 0.0
      %3522 = vmatpush1.msra.mxu0 %v3484
      %3523 = vmatprep.subr.mxu0 0.0
      %3524 = vmatpush1.msra.mxu0 %v3483
      %3525 = vmatprep.subr.mxu0 0.0
      %3526 = vmatpush1.msra.mxu0 %v3482
      %3527 = vmatprep.subr.mxu0 0.0
      %3528 = vmatpush1.msra.mxu0 %v3481
      %3529 = vmatprep.subr.mxu0 0.0
      %3530 = vmatpush2.msra.mxu0 0.0
      %3531 = vmatprep.subr.mxu0 0.0
      %3532 = vmatpush2.msra.mxu0 0.0
      %3533 = vmatprep.subr.mxu0 0.0
      %3534 = vmatpush2.msra.mxu0 0.0
      %3535 = vmatprep.subr.mxu0 0.0
      %3536 = vmatpush2.msra.mxu0 0.0
      %3537 = vmatprep.subr.mxu0 0.0
      %3538 = vmatpush2.msra.mxu0 0.0
      %3539 = vmatprep.subr.mxu0 0.0
      %3540 = vmatpush2.msra.mxu0 0.0
      %3541 = vmatprep.subr.mxu0 0.0
      %3542 = vmatpush2.msra.mxu0 0.0
      %3543 = vmatprep.subr.mxu0 0.0
      %3544 = vmatpush2.msra.mxu0 0.0
      %3545 = vmatprep.subr.mxu0 0.0
      %3546 = vmatpush2.msra.mxu0 0.0
      %3547 = vmatprep.subr.mxu0 0.0
      %3548 = vmatpush2.msra.mxu0 0.0
      %3549 = vmatprep.subr.mxu0 0.0
      %3550 = vmatpush2.msra.mxu0 0.0
      %3551 = vmatprep.subr.mxu0 0.0
      %3552 = vmatpush2.msra.mxu0 0.0
      %3553 = vmatprep.subr.mxu0 0.0
      %3554 = vmatpush2.msra.mxu0 0.0
      %3555 = vmatprep.subr.mxu0 0.0
      %3556 = vmatpush2.msra.mxu0 0.0
      %3557 = vmatprep.subr.mxu0 0.0
      %3558 = vmatpush2.msra.mxu0 0.0
      %3559 = vmatprep.subr.mxu0 0.0
      %3560 = vmatpush2.msra.mxu0 0.0
      %3561 = vmatprep.mubr.f32.mxu0 0.0
      %3562 = vmatmul.mubr.f32.gmra.mxu0 %v3432
      %v3563 = vpop.f32.mrf.mxu0
      %v3564 = vadd.f32 0.0, %v3563
      %v3565 = vpop.f32.mrf.mxu0
      %3566 = vmatprep.mubr.f32.mxu0 0.0
      %3567 = vmatmul.mubr.f32.gmra.mxu0 %v3433
      %v3568 = vpop.f32.mrf.mxu0
      %v3569 = vadd.f32 0.0, %v3568
      %v3570 = vpop.f32.mrf.mxu0
      %3571 = vmatprep.mubr.f32.mxu0 0.0
      %3572 = vmatmul.mubr.f32.gmra.mxu0 %v3434
      %v3573 = vpop.f32.mrf.mxu0
      %v3574 = vadd.f32 0.0, %v3573
      %v3575 = vpop.f32.mrf.mxu0
      %3576 = vmatprep.mubr.f32.mxu0 0.0
      %3577 = vmatmul.mubr.f32.gmra.mxu0 %v3435
      %v3578 = vpop.f32.mrf.mxu0
      %v3579 = vadd.f32 0.0, %v3578
      %v3580 = vpop.f32.mrf.mxu0
      %3581 = vmatprep.mubr.f32.mxu0 0.0
      %3582 = vmatmul.mubr.f32.gmra.mxu0 %v3436
      %v3583 = vpop.f32.mrf.mxu0
      %v3584 = vadd.f32 0.0, %v3583
      %v3585 = vpop.f32.mrf.mxu0
      %3586 = vmatprep.mubr.f32.mxu0 0.0
      %3587 = vmatmul.mubr.f32.gmra.mxu0 %v3437
      %v3588 = vpop.f32.mrf.mxu0
      %v3589 = vadd.f32 0.0, %v3588
      %v3590 = vpop.f32.mrf.mxu0
      %3591 = vmatprep.mubr.f32.mxu0 0.0
      %3592 = vmatmul.mubr.f32.gmra.mxu0 %v3438
      %v3593 = vpop.f32.mrf.mxu0
      %v3594 = vadd.f32 0.0, %v3593
      %v3595 = vpop.f32.mrf.mxu0
      %3596 = vmatprep.mubr.f32.mxu0 0.0
      %3597 = vmatmul.mubr.f32.gmra.mxu0 %v3439
      %v3598 = vpop.f32.mrf.mxu0
      %v3599 = vadd.f32 0.0, %v3598
      %v3600 = vpop.f32.mrf.mxu0
      %3601 = vmatprep.mubr.f32.mxu0 0.0
      %3602 = vmatmul.mubr.f32.gmra.mxu0 %v3440
      %v3603 = vpop.f32.mrf.mxu0
      %v3604 = vadd.f32 0.0, %v3603
      %v3605 = vpop.f32.mrf.mxu0
      %3606 = vmatprep.mubr.f32.mxu0 0.0
      %3607 = vmatmul.mubr.f32.gmra.mxu0 %v3441
      %v3608 = vpop.f32.mrf.mxu0
      %v3609 = vadd.f32 0.0, %v3608
      %v3610 = vpop.f32.mrf.mxu0
      %3611 = vmatprep.mubr.f32.mxu0 0.0
      %3612 = vmatmul.mubr.f32.gmra.mxu0 %v3442
      %v3613 = vpop.f32.mrf.mxu0
      %v3614 = vadd.f32 0.0, %v3613
      %v3615 = vpop.f32.mrf.mxu0
      %3616 = vmatprep.mubr.f32.mxu0 0.0
      %3617 = vmatmul.mubr.f32.gmra.mxu0 %v3443
      %v3618 = vpop.f32.mrf.mxu0
      %v3619 = vadd.f32 0.0, %v3618
      %v3620 = vpop.f32.mrf.mxu0
      %3621 = vmatprep.mubr.f32.mxu0 0.0
      %3622 = vmatmul.mubr.f32.gmra.mxu0 %v3444
      %v3623 = vpop.f32.mrf.mxu0
      %v3624 = vadd.f32 0.0, %v3623
      %v3625 = vpop.f32.mrf.mxu0
      %3626 = vmatprep.mubr.f32.mxu0 0.0
      %3627 = vmatmul.mubr.f32.gmra.mxu0 %v3445
      %v3628 = vpop.f32.mrf.mxu0
      %v3629 = vadd.f32 0.0, %v3628
      %v3630 = vpop.f32.mrf.mxu0
      %3631 = vmatprep.mubr.f32.mxu0 0.0
      %3632 = vmatmul.mubr.f32.gmra.mxu0 %v3446
      %v3633 = vpop.f32.mrf.mxu0
      %v3634 = vadd.f32 0.0, %v3633
      %v3635 = vpop.f32.mrf.mxu0
      %3636 = vmatprep.mubr.f32.mxu0 0.0
      %3637 = vmatmul.mubr.f32.gmra.mxu0 %v3447
      %v3638 = vpop.f32.mrf.mxu0
      %v3639 = vadd.f32 0.0, %v3638
      %v3640 = vpop.f32.mrf.mxu0
      %3641 = vmatprep.mubr.f32.mxu0 0.0
      %3642 = vmatmul.mubr.f32.gmra.mxu0 %v3448
      %v3643 = vpop.f32.mrf.mxu0
      %v3644 = vadd.f32 0.0, %v3643
      %v3645 = vpop.f32.mrf.mxu0
      %3646 = vmatprep.mubr.f32.mxu0 0.0
      %3647 = vmatmul.mubr.f32.gmra.mxu0 %v3449
      %v3648 = vpop.f32.mrf.mxu0
      %v3649 = vadd.f32 0.0, %v3648
      %v3650 = vpop.f32.mrf.mxu0
      %3651 = vmatprep.mubr.f32.mxu0 0.0
      %3652 = vmatmul.mubr.f32.gmra.mxu0 %v3450
      %v3653 = vpop.f32.mrf.mxu0
      %v3654 = vadd.f32 0.0, %v3653
      %v3655 = vpop.f32.mrf.mxu0
      %3656 = vmatprep.mubr.f32.mxu0 0.0
      %3657 = vmatmul.mubr.f32.gmra.mxu0 %v3451
      %v3658 = vpop.f32.mrf.mxu0
      %v3659 = vadd.f32 0.0, %v3658
      %v3660 = vpop.f32.mrf.mxu0
      %3661 = vmatprep.mubr.f32.mxu0 0.0
      %3662 = vmatmul.mubr.f32.gmra.mxu0 %v3452
      %v3663 = vpop.f32.mrf.mxu0
      %v3664 = vadd.f32 0.0, %v3663
      %v3665 = vpop.f32.mrf.mxu0
      %3666 = vmatprep.mubr.f32.mxu0 0.0
      %3667 = vmatmul.mubr.f32.gmra.mxu0 %v3453
      %v3668 = vpop.f32.mrf.mxu0
      %v3669 = vadd.f32 0.0, %v3668
      %v3670 = vpop.f32.mrf.mxu0
      %3671 = vmatprep.mubr.f32.mxu0 0.0
      %3672 = vmatmul.mubr.f32.gmra.mxu0 %v3454
      %v3673 = vpop.f32.mrf.mxu0
      %v3674 = vadd.f32 0.0, %v3673
      %v3675 = vpop.f32.mrf.mxu0
      %3676 = vmatprep.mubr.f32.mxu0 0.0
      %3677 = vmatmul.mubr.f32.gmra.mxu0 %v3455
      %v3678 = vpop.f32.mrf.mxu0
      %v3679 = vadd.f32 0.0, %v3678
      %v3680 = vpop.f32.mrf.mxu0
      %3681 = vmatprep.mubr.f32.mxu0 0.0
      %3682 = vmatmul.mubr.f32.gmra.mxu0 %v3456
      %v3683 = vpop.f32.mrf.mxu0
      %v3684 = vadd.f32 0.0, %v3683
      %v3685 = vpop.f32.mrf.mxu0
      %3686 = vmatprep.mubr.f32.mxu0 0.0
      %3687 = vmatmul.mubr.f32.gmra.mxu0 %v3457
      %v3688 = vpop.f32.mrf.mxu0
      %v3689 = vadd.f32 0.0, %v3688
      %v3690 = vpop.f32.mrf.mxu0
      %3691 = vmatprep.mubr.f32.mxu0 0.0
      %3692 = vmatmul.mubr.f32.gmra.mxu0 %v3458
      %v3693 = vpop.f32.mrf.mxu0
      %v3694 = vadd.f32 0.0, %v3693
      %v3695 = vpop.f32.mrf.mxu0
      %3696 = vmatprep.mubr.f32.mxu0 0.0
      %3697 = vmatmul.mubr.f32.gmra.mxu0 %v3459
      %v3698 = vpop.f32.mrf.mxu0
      %v3699 = vadd.f32 0.0, %v3698
      %v3700 = vpop.f32.mrf.mxu0
      %3701 = vmatprep.mubr.f32.mxu0 0.0
      %3702 = vmatmul.mubr.f32.gmra.mxu0 %v3460
      %v3703 = vpop.f32.mrf.mxu0
      %v3704 = vadd.f32 0.0, %v3703
      %v3705 = vpop.f32.mrf.mxu0
      %3706 = vmatprep.mubr.f32.mxu0 0.0
      %3707 = vmatmul.mubr.f32.gmra.mxu0 %v3461
      %v3708 = vpop.f32.mrf.mxu0
      %v3709 = vadd.f32 0.0, %v3708
      %v3710 = vpop.f32.mrf.mxu0
      %3711 = vmatprep.mubr.f32.mxu0 0.0
      %3712 = vmatmul.mubr.f32.gmra.mxu0 %v3462
      %v3713 = vpop.f32.mrf.mxu0
      %v3714 = vadd.f32 0.0, %v3713
      %v3715 = vpop.f32.mrf.mxu0
      %3716 = vmatprep.mubr.f32.mxu0 0.0
      %3717 = vmatmul.mubr.f32.gmra.mxu0 %v3463
      %v3718 = vpop.f32.mrf.mxu0
      %v3719 = vadd.f32 0.0, %v3718
      %v3720 = vpop.f32.mrf.mxu0
      %3721 = vmatprep.mubr.f32.mxu0 0.0
      %3722 = vmatmul.mubr.f32.gmra.mxu0 %v3464
      %v3723 = vpop.f32.mrf.mxu0
      %v3724 = vadd.f32 0.0, %v3723
      %v3725 = vpop.f32.mrf.mxu0
      %3726 = vmatprep.mubr.f32.mxu0 0.0
      %3727 = vmatmul.mubr.f32.gmra.mxu0 %v3465
      %v3728 = vpop.f32.mrf.mxu0
      %v3729 = vadd.f32 0.0, %v3728
      %v3730 = vpop.f32.mrf.mxu0
      %3731 = vmatprep.mubr.f32.mxu0 0.0
      %3732 = vmatmul.mubr.f32.gmra.mxu0 %v3466
      %v3733 = vpop.f32.mrf.mxu0
      %v3734 = vadd.f32 0.0, %v3733
      %v3735 = vpop.f32.mrf.mxu0
      %3736 = vmatprep.mubr.f32.mxu0 0.0
      %3737 = vmatmul.mubr.f32.gmra.mxu0 %v3467
      %v3738 = vpop.f32.mrf.mxu0
      %v3739 = vadd.f32 0.0, %v3738
      %v3740 = vpop.f32.mrf.mxu0
      %3741 = vmatprep.mubr.f32.mxu0 0.0
      %3742 = vmatmul.mubr.f32.gmra.mxu0 %v3468
      %v3743 = vpop.f32.mrf.mxu0
      %v3744 = vadd.f32 0.0, %v3743
      %v3745 = vpop.f32.mrf.mxu0
      %3746 = vmatprep.mubr.f32.mxu0 0.0
      %3747 = vmatmul.mubr.f32.gmra.mxu0 %v3469
      %v3748 = vpop.f32.mrf.mxu0
      %v3749 = vadd.f32 0.0, %v3748
      %v3750 = vpop.f32.mrf.mxu0
      %3751 = vmatprep.mubr.f32.mxu0 0.0
      %3752 = vmatmul.mubr.f32.gmra.mxu0 %v3470
      %v3753 = vpop.f32.mrf.mxu0
      %v3754 = vadd.f32 0.0, %v3753
      %v3755 = vpop.f32.mrf.mxu0
      %3756 = vmatprep.mubr.f32.mxu0 0.0
      %3757 = vmatmul.mubr.f32.gmra.mxu0 %v3471
      %v3758 = vpop.f32.mrf.mxu0
      %v3759 = vadd.f32 0.0, %v3758
      %v3760 = vpop.f32.mrf.mxu0
      %3761 = vmatprep.mubr.f32.mxu0 0.0
      %3762 = vmatmul.mubr.f32.gmra.mxu0 %v3472
      %v3763 = vpop.f32.mrf.mxu0
      %v3764 = vadd.f32 0.0, %v3763
      %v3765 = vpop.f32.mrf.mxu0
      %3766 = vmatprep.mubr.f32.mxu0 0.0
      %3767 = vmatmul.mubr.f32.gmra.mxu0 %v3473
      %v3768 = vpop.f32.mrf.mxu0
      %v3769 = vadd.f32 0.0, %v3768
      %v3770 = vpop.f32.mrf.mxu0
      %3771 = vmatprep.mubr.f32.mxu0 0.0
      %3772 = vmatmul.mubr.f32.gmra.mxu0 %v3474
      %v3773 = vpop.f32.mrf.mxu0
      %v3774 = vadd.f32 0.0, %v3773
      %v3775 = vpop.f32.mrf.mxu0
      %3776 = vmatprep.mubr.f32.mxu0 0.0
      %3777 = vmatmul.mubr.f32.gmra.mxu0 %v3475
      %v3778 = vpop.f32.mrf.mxu0
      %v3779 = vadd.f32 0.0, %v3778
      %v3780 = vpop.f32.mrf.mxu0
      %3781 = vmatprep.mubr.f32.mxu0 0.0
      %3782 = vmatmul.mubr.f32.gmra.mxu0 %v3476
      %v3783 = vpop.f32.mrf.mxu0
      %v3784 = vadd.f32 0.0, %v3783
      %v3785 = vpop.f32.mrf.mxu0
      %3786 = vmatprep.mubr.f32.mxu0 0.0
      %3787 = vmatmul.mubr.f32.gmra.mxu0 %v3477
      %v3788 = vpop.f32.mrf.mxu0
      %v3789 = vadd.f32 0.0, %v3788
      %v3790 = vpop.f32.mrf.mxu0
      %3791 = vmatprep.mubr.f32.mxu0 0.0
      %3792 = vmatmul.mubr.f32.gmra.mxu0 %v3478
      %v3793 = vpop.f32.mrf.mxu0
      %v3794 = vadd.f32 0.0, %v3793
      %v3795 = vpop.f32.mrf.mxu0
      %3796 = vmatprep.mubr.f32.mxu0 0.0
      %3797 = vmatmul.mubr.f32.gmra.mxu0 %v3479
      %v3798 = vpop.f32.mrf.mxu0
      %v3799 = vadd.f32 0.0, %v3798
      %v3800 = vpop.f32.mrf.mxu0
      %3801 = vdwg.mxu0
      %v3802 = vadd.f32 %v3384, %v3564
      %v3803 = vadd.f32 %v3385, %v3569
      %v3804 = vadd.f32 %v3386, %v3574
      %v3805 = vadd.f32 %v3387, %v3579
      %v3806 = vadd.f32 %v3388, %v3584
      %v3807 = vadd.f32 %v3389, %v3589
      %v3808 = vadd.f32 %v3390, %v3594
      %v3809 = vadd.f32 %v3391, %v3599
      %v3810 = vadd.f32 %v3392, %v3604
      %v3811 = vadd.f32 %v3393, %v3609
      %v3812 = vadd.f32 %v3394, %v3614
      %v3813 = vadd.f32 %v3395, %v3619
      %v3814 = vadd.f32 %v3396, %v3624
      %v3815 = vadd.f32 %v3397, %v3629
      %v3816 = vadd.f32 %v3398, %v3634
      %v3817 = vadd.f32 %v3399, %v3639
      %v3818 = vadd.f32 %v3400, %v3644
      %v3819 = vadd.f32 %v3401, %v3649
      %v3820 = vadd.f32 %v3402, %v3654
      %v3821 = vadd.f32 %v3403, %v3659
      %v3822 = vadd.f32 %v3404, %v3664
      %v3823 = vadd.f32 %v3405, %v3669
      %v3824 = vadd.f32 %v3406, %v3674
      %v3825 = vadd.f32 %v3407, %v3679
      %v3826 = vadd.f32 %v3408, %v3684
      %v3827 = vadd.f32 %v3409, %v3689
      %v3828 = vadd.f32 %v3410, %v3694
      %v3829 = vadd.f32 %v3411, %v3699
      %v3830 = vadd.f32 %v3412, %v3704
      %v3831 = vadd.f32 %v3413, %v3709
      %v3832 = vadd.f32 %v3414, %v3714
      %v3833 = vadd.f32 %v3415, %v3719
      %v3834 = vadd.f32 %v3416, %v3724
      %v3835 = vadd.f32 %v3417, %v3729
      %v3836 = vadd.f32 %v3418, %v3734
      %v3837 = vadd.f32 %v3419, %v3739
      %v3838 = vadd.f32 %v3420, %v3744
      %v3839 = vadd.f32 %v3421, %v3749
      %v3840 = vadd.f32 %v3422, %v3754
      %v3841 = vadd.f32 %v3423, %v3759
      %v3842 = vadd.f32 %v3424, %v3764
      %v3843 = vadd.f32 %v3425, %v3769
      %v3844 = vadd.f32 %v3426, %v3774
      %v3845 = vadd.f32 %v3427, %v3779
      %v3846 = vadd.f32 %v3428, %v3784
      %v3847 = vadd.f32 %v3429, %v3789
      %v3848 = vadd.f32 %v3430, %v3794
      %v3849 = vadd.f32 %v3431, %v3799
      %v3850 = vld [vmem:[#allocation2 + $0x31] sm:$0xff]
      %v3851 = vld [vmem:[#allocation2 + $0x39] sm:$0xff]
      %v3852 = vld [vmem:[#allocation2 + $0x41] sm:$0xff]
      %v3853 = vld [vmem:[#allocation2 + $0x49] sm:$0xff]
      %v3854 = vld [vmem:[#allocation2 + $0x51] sm:$0xff]
      %v3855 = vld [vmem:[#allocation2 + $0x59] sm:$0xff]
      %v3856 = vld [vmem:[#allocation2 + $0x61] sm:$0xff]
      %v3857 = vld [vmem:[#allocation2 + $0x69] sm:$0xff]
      %v3858 = vld [vmem:[#allocation2 + $0x71] sm:$0xff]
      %v3859 = vld [vmem:[#allocation2 + $0x79] sm:$0xff]
      %v3860 = vld [vmem:[#allocation2 + $0x81] sm:$0xff]
      %v3861 = vld [vmem:[#allocation2 + $0x89] sm:$0xff]
      %v3862 = vld [vmem:[#allocation2 + $0x91] sm:$0xff]
      %v3863 = vld [vmem:[#allocation2 + $0x99] sm:$0xff]
      %v3864 = vld [vmem:[#allocation2 + $0xa1] sm:$0xff]
      %v3865 = vld [vmem:[#allocation2 + $0xa9] sm:$0xff]
      %v3866 = vld [vmem:[#allocation2 + $0xb1] sm:$0xff]
      %v3867 = vld [vmem:[#allocation2 + $0xb9] sm:$0xff]
      %v3868 = vld [vmem:[#allocation2 + $0xc1] sm:$0xff]
      %v3869 = vld [vmem:[#allocation2 + $0xc9] sm:$0xff]
      %v3870 = vld [vmem:[#allocation2 + $0xd1] sm:$0xff]
      %v3871 = vld [vmem:[#allocation2 + $0xd9] sm:$0xff]
      %v3872 = vld [vmem:[#allocation2 + $0xe1] sm:$0xff]
      %v3873 = vld [vmem:[#allocation2 + $0xe9] sm:$0xff]
      %v3874 = vld [vmem:[#allocation2 + $0xf1] sm:$0xff]
      %v3875 = vld [vmem:[#allocation2 + $0xf9] sm:$0xff]
      %v3876 = vld [vmem:[#allocation2 + $0x101] sm:$0xff]
      %v3877 = vld [vmem:[#allocation2 + $0x109] sm:$0xff]
      %v3878 = vld [vmem:[#allocation2 + $0x111] sm:$0xff]
      %v3879 = vld [vmem:[#allocation2 + $0x119] sm:$0xff]
      %v3880 = vld [vmem:[#allocation2 + $0x121] sm:$0xff]
      %v3881 = vld [vmem:[#allocation2 + $0x129] sm:$0xff]
      %v3882 = vld [vmem:[#allocation2 + $0x131] sm:$0xff]
      %v3883 = vld [vmem:[#allocation2 + $0x139] sm:$0xff]
      %v3884 = vld [vmem:[#allocation2 + $0x141] sm:$0xff]
      %v3885 = vld [vmem:[#allocation2 + $0x149] sm:$0xff]
      %v3886 = vld [vmem:[#allocation2 + $0x151] sm:$0xff]
      %v3887 = vld [vmem:[#allocation2 + $0x159] sm:$0xff]
      %v3888 = vld [vmem:[#allocation2 + $0x161] sm:$0xff]
      %v3889 = vld [vmem:[#allocation2 + $0x169] sm:$0xff]
      %v3890 = vld [vmem:[#allocation2 + $0x171] sm:$0xff]
      %v3891 = vld [vmem:[#allocation2 + $0x179] sm:$0xff]
      %v3892 = vld [vmem:[#allocation2 + $0x181] sm:$0xff]
      %v3893 = vld [vmem:[#allocation2 + $0x189] sm:$0xff]
      %v3894 = vld [vmem:[#allocation2 + $0x191] sm:$0xff]
      %v3895 = vld [vmem:[#allocation2 + $0x199] sm:$0xff]
      %v3896 = vld [vmem:[#allocation2 + $0x1a1] sm:$0xff]
      %v3897 = vld [vmem:[#allocation2 + $0x1a9] sm:$0xff]
      %s3898 = scalar_lea.vmem %s1, 896
      %v3899 = vld [vmem:[%s3898] sm:$0xff]
      %v3900 = vld [vmem:[%s3898 + $0x8] sm:$0xff]
      %v3901 = vld [vmem:[%s3898 + $0x10] sm:$0xff]
      %v3902 = vld [vmem:[%s3898 + $0x18] sm:$0xff]
      %v3903 = vld [vmem:[%s3898 + $0x20] sm:$0xff]
      %v3904 = vld [vmem:[%s3898 + $0x28] sm:$0xff]
      %v3905 = vld [vmem:[%s3898 + $0x30] sm:$0xff]
      %v3906 = vld [vmem:[%s3898 + $0x38] sm:$0xff]
      %v3907 = vld [vmem:[%s3898 + $0x40] sm:$0xff]
      %v3908 = vld [vmem:[%s3898 + $0x48] sm:$0xff]
      %v3909 = vld [vmem:[%s3898 + $0x50] sm:$0xff]
      %v3910 = vld [vmem:[%s3898 + $0x58] sm:$0xff]
      %v3911 = vld [vmem:[%s3898 + $0x60] sm:$0xff]
      %v3912 = vld [vmem:[%s3898 + $0x68] sm:$0xff]
      %v3913 = vld [vmem:[%s3898 + $0x70] sm:$0xff]
      %v3914 = vld [vmem:[%s3898 + $0x78] sm:$0xff]
      %3915 = vmatprep.subr.mxu0 0.0
      %3916 = vmatpush1.msra.mxu0 %v3914
      %3917 = vmatprep.subr.mxu0 0.0
      %3918 = vmatpush1.msra.mxu0 %v3913
      %3919 = vmatprep.subr.mxu0 0.0
      %3920 = vmatpush1.msra.mxu0 %v3912
      %3921 = vmatprep.subr.mxu0 0.0
      %3922 = vmatpush1.msra.mxu0 %v3911
      %3923 = vmatprep.subr.mxu0 0.0
      %3924 = vmatpush1.msra.mxu0 %v3910
      %3925 = vmatprep.subr.mxu0 0.0
      %3926 = vmatpush1.msra.mxu0 %v3909
      %3927 = vmatprep.subr.mxu0 0.0
      %3928 = vmatpush1.msra.mxu0 %v3908
      %3929 = vmatprep.subr.mxu0 0.0
      %3930 = vmatpush1.msra.mxu0 %v3907
      %3931 = vmatprep.subr.mxu0 0.0
      %3932 = vmatpush1.msra.mxu0 %v3906
      %3933 = vmatprep.subr.mxu0 0.0
      %3934 = vmatpush1.msra.mxu0 %v3905
      %3935 = vmatprep.subr.mxu0 0.0
      %3936 = vmatpush1.msra.mxu0 %v3904
      %3937 = vmatprep.subr.mxu0 0.0
      %3938 = vmatpush1.msra.mxu0 %v3903
      %3939 = vmatprep.subr.mxu0 0.0
      %3940 = vmatpush1.msra.mxu0 %v3902
      %3941 = vmatprep.subr.mxu0 0.0
      %3942 = vmatpush1.msra.mxu0 %v3901
      %3943 = vmatprep.subr.mxu0 0.0
      %3944 = vmatpush1.msra.mxu0 %v3900
      %3945 = vmatprep.subr.mxu0 0.0
      %3946 = vmatpush1.msra.mxu0 %v3899
      %3947 = vmatprep.subr.mxu0 0.0
      %3948 = vmatpush2.msra.mxu0 0.0
      %3949 = vmatprep.subr.mxu0 0.0
      %3950 = vmatpush2.msra.mxu0 0.0
      %3951 = vmatprep.subr.mxu0 0.0
      %3952 = vmatpush2.msra.mxu0 0.0
      %3953 = vmatprep.subr.mxu0 0.0
      %3954 = vmatpush2.msra.mxu0 0.0
      %3955 = vmatprep.subr.mxu0 0.0
      %3956 = vmatpush2.msra.mxu0 0.0
      %3957 = vmatprep.subr.mxu0 0.0
      %3958 = vmatpush2.msra.mxu0 0.0
      %3959 = vmatprep.subr.mxu0 0.0
      %3960 = vmatpush2.msra.mxu0 0.0
      %3961 = vmatprep.subr.mxu0 0.0
      %3962 = vmatpush2.msra.mxu0 0.0
      %3963 = vmatprep.subr.mxu0 0.0
      %3964 = vmatpush2.msra.mxu0 0.0
      %3965 = vmatprep.subr.mxu0 0.0
      %3966 = vmatpush2.msra.mxu0 0.0
      %3967 = vmatprep.subr.mxu0 0.0
      %3968 = vmatpush2.msra.mxu0 0.0
      %3969 = vmatprep.subr.mxu0 0.0
      %3970 = vmatpush2.msra.mxu0 0.0
      %3971 = vmatprep.subr.mxu0 0.0
      %3972 = vmatpush2.msra.mxu0 0.0
      %3973 = vmatprep.subr.mxu0 0.0
      %3974 = vmatpush2.msra.mxu0 0.0
      %3975 = vmatprep.subr.mxu0 0.0
      %3976 = vmatpush2.msra.mxu0 0.0
      %3977 = vmatprep.subr.mxu0 0.0
      %3978 = vmatpush2.msra.mxu0 0.0
      %3979 = vmatprep.mubr.f32.mxu0 0.0
      %3980 = vmatmul.mubr.f32.gmra.mxu0 %v3850
      %v3981 = vpop.f32.mrf.mxu0
      %v3982 = vadd.f32 0.0, %v3981
      %v3983 = vpop.f32.mrf.mxu0
      %3984 = vmatprep.mubr.f32.mxu0 0.0
      %3985 = vmatmul.mubr.f32.gmra.mxu0 %v3851
      %v3986 = vpop.f32.mrf.mxu0
      %v3987 = vadd.f32 0.0, %v3986
      %v3988 = vpop.f32.mrf.mxu0
      %3989 = vmatprep.mubr.f32.mxu0 0.0
      %3990 = vmatmul.mubr.f32.gmra.mxu0 %v3852
      %v3991 = vpop.f32.mrf.mxu0
      %v3992 = vadd.f32 0.0, %v3991
      %v3993 = vpop.f32.mrf.mxu0
      %3994 = vmatprep.mubr.f32.mxu0 0.0
      %3995 = vmatmul.mubr.f32.gmra.mxu0 %v3853
      %v3996 = vpop.f32.mrf.mxu0
      %v3997 = vadd.f32 0.0, %v3996
      %v3998 = vpop.f32.mrf.mxu0
      %3999 = vmatprep.mubr.f32.mxu0 0.0
      %4000 = vmatmul.mubr.f32.gmra.mxu0 %v3854
      %v4001 = vpop.f32.mrf.mxu0
      %v4002 = vadd.f32 0.0, %v4001
      %v4003 = vpop.f32.mrf.mxu0
      %4004 = vmatprep.mubr.f32.mxu0 0.0
      %4005 = vmatmul.mubr.f32.gmra.mxu0 %v3855
      %v4006 = vpop.f32.mrf.mxu0
      %v4007 = vadd.f32 0.0, %v4006
      %v4008 = vpop.f32.mrf.mxu0
      %4009 = vmatprep.mubr.f32.mxu0 0.0
      %4010 = vmatmul.mubr.f32.gmra.mxu0 %v3856
      %v4011 = vpop.f32.mrf.mxu0
      %v4012 = vadd.f32 0.0, %v4011
      %v4013 = vpop.f32.mrf.mxu0
      %4014 = vmatprep.mubr.f32.mxu0 0.0
      %4015 = vmatmul.mubr.f32.gmra.mxu0 %v3857
      %v4016 = vpop.f32.mrf.mxu0
      %v4017 = vadd.f32 0.0, %v4016
      %v4018 = vpop.f32.mrf.mxu0
      %4019 = vmatprep.mubr.f32.mxu0 0.0
      %4020 = vmatmul.mubr.f32.gmra.mxu0 %v3858
      %v4021 = vpop.f32.mrf.mxu0
      %v4022 = vadd.f32 0.0, %v4021
      %v4023 = vpop.f32.mrf.mxu0
      %4024 = vmatprep.mubr.f32.mxu0 0.0
      %4025 = vmatmul.mubr.f32.gmra.mxu0 %v3859
      %v4026 = vpop.f32.mrf.mxu0
      %v4027 = vadd.f32 0.0, %v4026
      %v4028 = vpop.f32.mrf.mxu0
      %4029 = vmatprep.mubr.f32.mxu0 0.0
      %4030 = vmatmul.mubr.f32.gmra.mxu0 %v3860
      %v4031 = vpop.f32.mrf.mxu0
      %v4032 = vadd.f32 0.0, %v4031
      %v4033 = vpop.f32.mrf.mxu0
      %4034 = vmatprep.mubr.f32.mxu0 0.0
      %4035 = vmatmul.mubr.f32.gmra.mxu0 %v3861
      %v4036 = vpop.f32.mrf.mxu0
      %v4037 = vadd.f32 0.0, %v4036
      %v4038 = vpop.f32.mrf.mxu0
      %4039 = vmatprep.mubr.f32.mxu0 0.0
      %4040 = vmatmul.mubr.f32.gmra.mxu0 %v3862
      %v4041 = vpop.f32.mrf.mxu0
      %v4042 = vadd.f32 0.0, %v4041
      %v4043 = vpop.f32.mrf.mxu0
      %4044 = vmatprep.mubr.f32.mxu0 0.0
      %4045 = vmatmul.mubr.f32.gmra.mxu0 %v3863
      %v4046 = vpop.f32.mrf.mxu0
      %v4047 = vadd.f32 0.0, %v4046
      %v4048 = vpop.f32.mrf.mxu0
      %4049 = vmatprep.mubr.f32.mxu0 0.0
      %4050 = vmatmul.mubr.f32.gmra.mxu0 %v3864
      %v4051 = vpop.f32.mrf.mxu0
      %v4052 = vadd.f32 0.0, %v4051
      %v4053 = vpop.f32.mrf.mxu0
      %4054 = vmatprep.mubr.f32.mxu0 0.0
      %4055 = vmatmul.mubr.f32.gmra.mxu0 %v3865
      %v4056 = vpop.f32.mrf.mxu0
      %v4057 = vadd.f32 0.0, %v4056
      %v4058 = vpop.f32.mrf.mxu0
      %4059 = vmatprep.mubr.f32.mxu0 0.0
      %4060 = vmatmul.mubr.f32.gmra.mxu0 %v3866
      %v4061 = vpop.f32.mrf.mxu0
      %v4062 = vadd.f32 0.0, %v4061
      %v4063 = vpop.f32.mrf.mxu0
      %4064 = vmatprep.mubr.f32.mxu0 0.0
      %4065 = vmatmul.mubr.f32.gmra.mxu0 %v3867
      %v4066 = vpop.f32.mrf.mxu0
      %v4067 = vadd.f32 0.0, %v4066
      %v4068 = vpop.f32.mrf.mxu0
      %4069 = vmatprep.mubr.f32.mxu0 0.0
      %4070 = vmatmul.mubr.f32.gmra.mxu0 %v3868
      %v4071 = vpop.f32.mrf.mxu0
      %v4072 = vadd.f32 0.0, %v4071
      %v4073 = vpop.f32.mrf.mxu0
      %4074 = vmatprep.mubr.f32.mxu0 0.0
      %4075 = vmatmul.mubr.f32.gmra.mxu0 %v3869
      %v4076 = vpop.f32.mrf.mxu0
      %v4077 = vadd.f32 0.0, %v4076
      %v4078 = vpop.f32.mrf.mxu0
      %4079 = vmatprep.mubr.f32.mxu0 0.0
      %4080 = vmatmul.mubr.f32.gmra.mxu0 %v3870
      %v4081 = vpop.f32.mrf.mxu0
      %v4082 = vadd.f32 0.0, %v4081
      %v4083 = vpop.f32.mrf.mxu0
      %4084 = vmatprep.mubr.f32.mxu0 0.0
      %4085 = vmatmul.mubr.f32.gmra.mxu0 %v3871
      %v4086 = vpop.f32.mrf.mxu0
      %v4087 = vadd.f32 0.0, %v4086
      %v4088 = vpop.f32.mrf.mxu0
      %4089 = vmatprep.mubr.f32.mxu0 0.0
      %4090 = vmatmul.mubr.f32.gmra.mxu0 %v3872
      %v4091 = vpop.f32.mrf.mxu0
      %v4092 = vadd.f32 0.0, %v4091
      %v4093 = vpop.f32.mrf.mxu0
      %4094 = vmatprep.mubr.f32.mxu0 0.0
      %4095 = vmatmul.mubr.f32.gmra.mxu0 %v3873
      %v4096 = vpop.f32.mrf.mxu0
      %v4097 = vadd.f32 0.0, %v4096
      %v4098 = vpop.f32.mrf.mxu0
      %4099 = vmatprep.mubr.f32.mxu0 0.0
      %4100 = vmatmul.mubr.f32.gmra.mxu0 %v3874
      %v4101 = vpop.f32.mrf.mxu0
      %v4102 = vadd.f32 0.0, %v4101
      %v4103 = vpop.f32.mrf.mxu0
      %4104 = vmatprep.mubr.f32.mxu0 0.0
      %4105 = vmatmul.mubr.f32.gmra.mxu0 %v3875
      %v4106 = vpop.f32.mrf.mxu0
      %v4107 = vadd.f32 0.0, %v4106
      %v4108 = vpop.f32.mrf.mxu0
      %4109 = vmatprep.mubr.f32.mxu0 0.0
      %4110 = vmatmul.mubr.f32.gmra.mxu0 %v3876
      %v4111 = vpop.f32.mrf.mxu0
      %v4112 = vadd.f32 0.0, %v4111
      %v4113 = vpop.f32.mrf.mxu0
      %4114 = vmatprep.mubr.f32.mxu0 0.0
      %4115 = vmatmul.mubr.f32.gmra.mxu0 %v3877
      %v4116 = vpop.f32.mrf.mxu0
      %v4117 = vadd.f32 0.0, %v4116
      %v4118 = vpop.f32.mrf.mxu0
      %4119 = vmatprep.mubr.f32.mxu0 0.0
      %4120 = vmatmul.mubr.f32.gmra.mxu0 %v3878
      %v4121 = vpop.f32.mrf.mxu0
      %v4122 = vadd.f32 0.0, %v4121
      %v4123 = vpop.f32.mrf.mxu0
      %4124 = vmatprep.mubr.f32.mxu0 0.0
      %4125 = vmatmul.mubr.f32.gmra.mxu0 %v3879
      %v4126 = vpop.f32.mrf.mxu0
      %v4127 = vadd.f32 0.0, %v4126
      %v4128 = vpop.f32.mrf.mxu0
      %4129 = vmatprep.mubr.f32.mxu0 0.0
      %4130 = vmatmul.mubr.f32.gmra.mxu0 %v3880
      %v4131 = vpop.f32.mrf.mxu0
      %v4132 = vadd.f32 0.0, %v4131
      %v4133 = vpop.f32.mrf.mxu0
      %4134 = vmatprep.mubr.f32.mxu0 0.0
      %4135 = vmatmul.mubr.f32.gmra.mxu0 %v3881
      %v4136 = vpop.f32.mrf.mxu0
      %v4137 = vadd.f32 0.0, %v4136
      %v4138 = vpop.f32.mrf.mxu0
      %4139 = vmatprep.mubr.f32.mxu0 0.0
      %4140 = vmatmul.mubr.f32.gmra.mxu0 %v3882
      %v4141 = vpop.f32.mrf.mxu0
      %v4142 = vadd.f32 0.0, %v4141
      %v4143 = vpop.f32.mrf.mxu0
      %4144 = vmatprep.mubr.f32.mxu0 0.0
      %4145 = vmatmul.mubr.f32.gmra.mxu0 %v3883
      %v4146 = vpop.f32.mrf.mxu0
      %v4147 = vadd.f32 0.0, %v4146
      %v4148 = vpop.f32.mrf.mxu0
      %4149 = vmatprep.mubr.f32.mxu0 0.0
      %4150 = vmatmul.mubr.f32.gmra.mxu0 %v3884
      %v4151 = vpop.f32.mrf.mxu0
      %v4152 = vadd.f32 0.0, %v4151
      %v4153 = vpop.f32.mrf.mxu0
      %4154 = vmatprep.mubr.f32.mxu0 0.0
      %4155 = vmatmul.mubr.f32.gmra.mxu0 %v3885
      %v4156 = vpop.f32.mrf.mxu0
      %v4157 = vadd.f32 0.0, %v4156
      %v4158 = vpop.f32.mrf.mxu0
      %4159 = vmatprep.mubr.f32.mxu0 0.0
      %4160 = vmatmul.mubr.f32.gmra.mxu0 %v3886
      %v4161 = vpop.f32.mrf.mxu0
      %v4162 = vadd.f32 0.0, %v4161
      %v4163 = vpop.f32.mrf.mxu0
      %4164 = vmatprep.mubr.f32.mxu0 0.0
      %4165 = vmatmul.mubr.f32.gmra.mxu0 %v3887
      %v4166 = vpop.f32.mrf.mxu0
      %v4167 = vadd.f32 0.0, %v4166
      %v4168 = vpop.f32.mrf.mxu0
      %4169 = vmatprep.mubr.f32.mxu0 0.0
      %4170 = vmatmul.mubr.f32.gmra.mxu0 %v3888
      %v4171 = vpop.f32.mrf.mxu0
      %v4172 = vadd.f32 0.0, %v4171
      %v4173 = vpop.f32.mrf.mxu0
      %4174 = vmatprep.mubr.f32.mxu0 0.0
      %4175 = vmatmul.mubr.f32.gmra.mxu0 %v3889
      %v4176 = vpop.f32.mrf.mxu0
      %v4177 = vadd.f32 0.0, %v4176
      %v4178 = vpop.f32.mrf.mxu0
      %4179 = vmatprep.mubr.f32.mxu0 0.0
      %4180 = vmatmul.mubr.f32.gmra.mxu0 %v3890
      %v4181 = vpop.f32.mrf.mxu0
      %v4182 = vadd.f32 0.0, %v4181
      %v4183 = vpop.f32.mrf.mxu0
      %4184 = vmatprep.mubr.f32.mxu0 0.0
      %4185 = vmatmul.mubr.f32.gmra.mxu0 %v3891
      %v4186 = vpop.f32.mrf.mxu0
      %v4187 = vadd.f32 0.0, %v4186
      %v4188 = vpop.f32.mrf.mxu0
      %4189 = vmatprep.mubr.f32.mxu0 0.0
      %4190 = vmatmul.mubr.f32.gmra.mxu0 %v3892
      %v4191 = vpop.f32.mrf.mxu0
      %v4192 = vadd.f32 0.0, %v4191
      %v4193 = vpop.f32.mrf.mxu0
      %4194 = vmatprep.mubr.f32.mxu0 0.0
      %4195 = vmatmul.mubr.f32.gmra.mxu0 %v3893
      %v4196 = vpop.f32.mrf.mxu0
      %v4197 = vadd.f32 0.0, %v4196
      %v4198 = vpop.f32.mrf.mxu0
      %4199 = vmatprep.mubr.f32.mxu0 0.0
      %4200 = vmatmul.mubr.f32.gmra.mxu0 %v3894
      %v4201 = vpop.f32.mrf.mxu0
      %v4202 = vadd.f32 0.0, %v4201
      %v4203 = vpop.f32.mrf.mxu0
      %4204 = vmatprep.mubr.f32.mxu0 0.0
      %4205 = vmatmul.mubr.f32.gmra.mxu0 %v3895
      %v4206 = vpop.f32.mrf.mxu0
      %v4207 = vadd.f32 0.0, %v4206
      %v4208 = vpop.f32.mrf.mxu0
      %4209 = vmatprep.mubr.f32.mxu0 0.0
      %4210 = vmatmul.mubr.f32.gmra.mxu0 %v3896
      %v4211 = vpop.f32.mrf.mxu0
      %v4212 = vadd.f32 0.0, %v4211
      %v4213 = vpop.f32.mrf.mxu0
      %4214 = vmatprep.mubr.f32.mxu0 0.0
      %4215 = vmatmul.mubr.f32.gmra.mxu0 %v3897
      %v4216 = vpop.f32.mrf.mxu0
      %v4217 = vadd.f32 0.0, %v4216
      %v4218 = vpop.f32.mrf.mxu0
      %4219 = vdwg.mxu0
      %v4220 = vadd.f32 %v3802, %v3982
      %v4221 = vadd.f32 %v3803, %v3987
      %v4222 = vadd.f32 %v3804, %v3992
      %v4223 = vadd.f32 %v3805, %v3997
      %v4224 = vadd.f32 %v3806, %v4002
      %v4225 = vadd.f32 %v3807, %v4007
      %v4226 = vadd.f32 %v3808, %v4012
      %v4227 = vadd.f32 %v3809, %v4017
      %v4228 = vadd.f32 %v3810, %v4022
      %v4229 = vadd.f32 %v3811, %v4027
      %v4230 = vadd.f32 %v3812, %v4032
      %v4231 = vadd.f32 %v3813, %v4037
      %v4232 = vadd.f32 %v3814, %v4042
      %v4233 = vadd.f32 %v3815, %v4047
      %v4234 = vadd.f32 %v3816, %v4052
      %v4235 = vadd.f32 %v3817, %v4057
      %v4236 = vadd.f32 %v3818, %v4062
      %v4237 = vadd.f32 %v3819, %v4067
      %v4238 = vadd.f32 %v3820, %v4072
      %v4239 = vadd.f32 %v3821, %v4077
      %v4240 = vadd.f32 %v3822, %v4082
      %v4241 = vadd.f32 %v3823, %v4087
      %v4242 = vadd.f32 %v3824, %v4092
      %v4243 = vadd.f32 %v3825, %v4097
      %v4244 = vadd.f32 %v3826, %v4102
      %v4245 = vadd.f32 %v3827, %v4107
      %v4246 = vadd.f32 %v3828, %v4112
      %v4247 = vadd.f32 %v3829, %v4117
      %v4248 = vadd.f32 %v3830, %v4122
      %v4249 = vadd.f32 %v3831, %v4127
      %v4250 = vadd.f32 %v3832, %v4132
      %v4251 = vadd.f32 %v3833, %v4137
      %v4252 = vadd.f32 %v3834, %v4142
      %v4253 = vadd.f32 %v3835, %v4147
      %v4254 = vadd.f32 %v3836, %v4152
      %v4255 = vadd.f32 %v3837, %v4157
      %v4256 = vadd.f32 %v3838, %v4162
      %v4257 = vadd.f32 %v3839, %v4167
      %v4258 = vadd.f32 %v3840, %v4172
      %v4259 = vadd.f32 %v3841, %v4177
      %v4260 = vadd.f32 %v3842, %v4182
      %v4261 = vadd.f32 %v3843, %v4187
      %v4262 = vadd.f32 %v3844, %v4192
      %v4263 = vadd.f32 %v3845, %v4197
      %v4264 = vadd.f32 %v3846, %v4202
      %v4265 = vadd.f32 %v3847, %v4207
      %v4266 = vadd.f32 %v3848, %v4212
      %v4267 = vadd.f32 %v3849, %v4217
      %v4268 = vld [vmem:[#allocation2 + $0x32] sm:$0xff]
      %v4269 = vld [vmem:[#allocation2 + $0x3a] sm:$0xff]
      %v4270 = vld [vmem:[#allocation2 + $0x42] sm:$0xff]
      %v4271 = vld [vmem:[#allocation2 + $0x4a] sm:$0xff]
      %v4272 = vld [vmem:[#allocation2 + $0x52] sm:$0xff]
      %v4273 = vld [vmem:[#allocation2 + $0x5a] sm:$0xff]
      %v4274 = vld [vmem:[#allocation2 + $0x62] sm:$0xff]
      %v4275 = vld [vmem:[#allocation2 + $0x6a] sm:$0xff]
      %v4276 = vld [vmem:[#allocation2 + $0x72] sm:$0xff]
      %v4277 = vld [vmem:[#allocation2 + $0x7a] sm:$0xff]
      %v4278 = vld [vmem:[#allocation2 + $0x82] sm:$0xff]
      %v4279 = vld [vmem:[#allocation2 + $0x8a] sm:$0xff]
      %v4280 = vld [vmem:[#allocation2 + $0x92] sm:$0xff]
      %v4281 = vld [vmem:[#allocation2 + $0x9a] sm:$0xff]
      %v4282 = vld [vmem:[#allocation2 + $0xa2] sm:$0xff]
      %v4283 = vld [vmem:[#allocation2 + $0xaa] sm:$0xff]
      %v4284 = vld [vmem:[#allocation2 + $0xb2] sm:$0xff]
      %v4285 = vld [vmem:[#allocation2 + $0xba] sm:$0xff]
      %v4286 = vld [vmem:[#allocation2 + $0xc2] sm:$0xff]
      %v4287 = vld [vmem:[#allocation2 + $0xca] sm:$0xff]
      %v4288 = vld [vmem:[#allocation2 + $0xd2] sm:$0xff]
      %v4289 = vld [vmem:[#allocation2 + $0xda] sm:$0xff]
      %v4290 = vld [vmem:[#allocation2 + $0xe2] sm:$0xff]
      %v4291 = vld [vmem:[#allocation2 + $0xea] sm:$0xff]
      %v4292 = vld [vmem:[#allocation2 + $0xf2] sm:$0xff]
      %v4293 = vld [vmem:[#allocation2 + $0xfa] sm:$0xff]
      %v4294 = vld [vmem:[#allocation2 + $0x102] sm:$0xff]
      %v4295 = vld [vmem:[#allocation2 + $0x10a] sm:$0xff]
      %v4296 = vld [vmem:[#allocation2 + $0x112] sm:$0xff]
      %v4297 = vld [vmem:[#allocation2 + $0x11a] sm:$0xff]
      %v4298 = vld [vmem:[#allocation2 + $0x122] sm:$0xff]
      %v4299 = vld [vmem:[#allocation2 + $0x12a] sm:$0xff]
      %v4300 = vld [vmem:[#allocation2 + $0x132] sm:$0xff]
      %v4301 = vld [vmem:[#allocation2 + $0x13a] sm:$0xff]
      %v4302 = vld [vmem:[#allocation2 + $0x142] sm:$0xff]
      %v4303 = vld [vmem:[#allocation2 + $0x14a] sm:$0xff]
      %v4304 = vld [vmem:[#allocation2 + $0x152] sm:$0xff]
      %v4305 = vld [vmem:[#allocation2 + $0x15a] sm:$0xff]
      %v4306 = vld [vmem:[#allocation2 + $0x162] sm:$0xff]
      %v4307 = vld [vmem:[#allocation2 + $0x16a] sm:$0xff]
      %v4308 = vld [vmem:[#allocation2 + $0x172] sm:$0xff]
      %v4309 = vld [vmem:[#allocation2 + $0x17a] sm:$0xff]
      %v4310 = vld [vmem:[#allocation2 + $0x182] sm:$0xff]
      %v4311 = vld [vmem:[#allocation2 + $0x18a] sm:$0xff]
      %v4312 = vld [vmem:[#allocation2 + $0x192] sm:$0xff]
      %v4313 = vld [vmem:[#allocation2 + $0x19a] sm:$0xff]
      %v4314 = vld [vmem:[#allocation2 + $0x1a2] sm:$0xff]
      %v4315 = vld [vmem:[#allocation2 + $0x1aa] sm:$0xff]
      %s4316 = scalar_lea.vmem %s1, 1024
      %v4317 = vld [vmem:[%s4316] sm:$0xff]
      %v4318 = vld [vmem:[%s4316 + $0x8] sm:$0xff]
      %v4319 = vld [vmem:[%s4316 + $0x10] sm:$0xff]
      %v4320 = vld [vmem:[%s4316 + $0x18] sm:$0xff]
      %v4321 = vld [vmem:[%s4316 + $0x20] sm:$0xff]
      %v4322 = vld [vmem:[%s4316 + $0x28] sm:$0xff]
      %v4323 = vld [vmem:[%s4316 + $0x30] sm:$0xff]
      %v4324 = vld [vmem:[%s4316 + $0x38] sm:$0xff]
      %v4325 = vld [vmem:[%s4316 + $0x40] sm:$0xff]
      %v4326 = vld [vmem:[%s4316 + $0x48] sm:$0xff]
      %v4327 = vld [vmem:[%s4316 + $0x50] sm:$0xff]
      %v4328 = vld [vmem:[%s4316 + $0x58] sm:$0xff]
      %v4329 = vld [vmem:[%s4316 + $0x60] sm:$0xff]
      %v4330 = vld [vmem:[%s4316 + $0x68] sm:$0xff]
      %v4331 = vld [vmem:[%s4316 + $0x70] sm:$0xff]
      %v4332 = vld [vmem:[%s4316 + $0x78] sm:$0xff]
      %4333 = vmatprep.subr.mxu0 0.0
      %4334 = vmatpush1.msra.mxu0 %v4332
      %4335 = vmatprep.subr.mxu0 0.0
      %4336 = vmatpush1.msra.mxu0 %v4331
      %4337 = vmatprep.subr.mxu0 0.0
      %4338 = vmatpush1.msra.mxu0 %v4330
      %4339 = vmatprep.subr.mxu0 0.0
      %4340 = vmatpush1.msra.mxu0 %v4329
      %4341 = vmatprep.subr.mxu0 0.0
      %4342 = vmatpush1.msra.mxu0 %v4328
      %4343 = vmatprep.subr.mxu0 0.0
      %4344 = vmatpush1.msra.mxu0 %v4327
      %4345 = vmatprep.subr.mxu0 0.0
      %4346 = vmatpush1.msra.mxu0 %v4326
      %4347 = vmatprep.subr.mxu0 0.0
      %4348 = vmatpush1.msra.mxu0 %v4325
      %4349 = vmatprep.subr.mxu0 0.0
      %4350 = vmatpush1.msra.mxu0 %v4324
      %4351 = vmatprep.subr.mxu0 0.0
      %4352 = vmatpush1.msra.mxu0 %v4323
      %4353 = vmatprep.subr.mxu0 0.0
      %4354 = vmatpush1.msra.mxu0 %v4322
      %4355 = vmatprep.subr.mxu0 0.0
      %4356 = vmatpush1.msra.mxu0 %v4321
      %4357 = vmatprep.subr.mxu0 0.0
      %4358 = vmatpush1.msra.mxu0 %v4320
      %4359 = vmatprep.subr.mxu0 0.0
      %4360 = vmatpush1.msra.mxu0 %v4319
      %4361 = vmatprep.subr.mxu0 0.0
      %4362 = vmatpush1.msra.mxu0 %v4318
      %4363 = vmatprep.subr.mxu0 0.0
      %4364 = vmatpush1.msra.mxu0 %v4317
      %4365 = vmatprep.subr.mxu0 0.0
      %4366 = vmatpush2.msra.mxu0 0.0
      %4367 = vmatprep.subr.mxu0 0.0
      %4368 = vmatpush2.msra.mxu0 0.0
      %4369 = vmatprep.subr.mxu0 0.0
      %4370 = vmatpush2.msra.mxu0 0.0
      %4371 = vmatprep.subr.mxu0 0.0
      %4372 = vmatpush2.msra.mxu0 0.0
      %4373 = vmatprep.subr.mxu0 0.0
      %4374 = vmatpush2.msra.mxu0 0.0
      %4375 = vmatprep.subr.mxu0 0.0
      %4376 = vmatpush2.msra.mxu0 0.0
      %4377 = vmatprep.subr.mxu0 0.0
      %4378 = vmatpush2.msra.mxu0 0.0
      %4379 = vmatprep.subr.mxu0 0.0
      %4380 = vmatpush2.msra.mxu0 0.0
      %4381 = vmatprep.subr.mxu0 0.0
      %4382 = vmatpush2.msra.mxu0 0.0
      %4383 = vmatprep.subr.mxu0 0.0
      %4384 = vmatpush2.msra.mxu0 0.0
      %4385 = vmatprep.subr.mxu0 0.0
      %4386 = vmatpush2.msra.mxu0 0.0
      %4387 = vmatprep.subr.mxu0 0.0
      %4388 = vmatpush2.msra.mxu0 0.0
      %4389 = vmatprep.subr.mxu0 0.0
      %4390 = vmatpush2.msra.mxu0 0.0
      %4391 = vmatprep.subr.mxu0 0.0
      %4392 = vmatpush2.msra.mxu0 0.0
      %4393 = vmatprep.subr.mxu0 0.0
      %4394 = vmatpush2.msra.mxu0 0.0
      %4395 = vmatprep.subr.mxu0 0.0
      %4396 = vmatpush2.msra.mxu0 0.0
      %4397 = vmatprep.mubr.f32.mxu0 0.0
      %4398 = vmatmul.mubr.f32.gmra.mxu0 %v4268
      %v4399 = vpop.f32.mrf.mxu0
      %v4400 = vadd.f32 0.0, %v4399
      %v4401 = vpop.f32.mrf.mxu0
      %4402 = vmatprep.mubr.f32.mxu0 0.0
      %4403 = vmatmul.mubr.f32.gmra.mxu0 %v4269
      %v4404 = vpop.f32.mrf.mxu0
      %v4405 = vadd.f32 0.0, %v4404
      %v4406 = vpop.f32.mrf.mxu0
      %4407 = vmatprep.mubr.f32.mxu0 0.0
      %4408 = vmatmul.mubr.f32.gmra.mxu0 %v4270
      %v4409 = vpop.f32.mrf.mxu0
      %v4410 = vadd.f32 0.0, %v4409
      %v4411 = vpop.f32.mrf.mxu0
      %4412 = vmatprep.mubr.f32.mxu0 0.0
      %4413 = vmatmul.mubr.f32.gmra.mxu0 %v4271
      %v4414 = vpop.f32.mrf.mxu0
      %v4415 = vadd.f32 0.0, %v4414
      %v4416 = vpop.f32.mrf.mxu0
      %4417 = vmatprep.mubr.f32.mxu0 0.0
      %4418 = vmatmul.mubr.f32.gmra.mxu0 %v4272
      %v4419 = vpop.f32.mrf.mxu0
      %v4420 = vadd.f32 0.0, %v4419
      %v4421 = vpop.f32.mrf.mxu0
      %4422 = vmatprep.mubr.f32.mxu0 0.0
      %4423 = vmatmul.mubr.f32.gmra.mxu0 %v4273
      %v4424 = vpop.f32.mrf.mxu0
      %v4425 = vadd.f32 0.0, %v4424
      %v4426 = vpop.f32.mrf.mxu0
      %4427 = vmatprep.mubr.f32.mxu0 0.0
      %4428 = vmatmul.mubr.f32.gmra.mxu0 %v4274
      %v4429 = vpop.f32.mrf.mxu0
      %v4430 = vadd.f32 0.0, %v4429
      %v4431 = vpop.f32.mrf.mxu0
      %4432 = vmatprep.mubr.f32.mxu0 0.0
      %4433 = vmatmul.mubr.f32.gmra.mxu0 %v4275
      %v4434 = vpop.f32.mrf.mxu0
      %v4435 = vadd.f32 0.0, %v4434
      %v4436 = vpop.f32.mrf.mxu0
      %4437 = vmatprep.mubr.f32.mxu0 0.0
      %4438 = vmatmul.mubr.f32.gmra.mxu0 %v4276
      %v4439 = vpop.f32.mrf.mxu0
      %v4440 = vadd.f32 0.0, %v4439
      %v4441 = vpop.f32.mrf.mxu0
      %4442 = vmatprep.mubr.f32.mxu0 0.0
      %4443 = vmatmul.mubr.f32.gmra.mxu0 %v4277
      %v4444 = vpop.f32.mrf.mxu0
      %v4445 = vadd.f32 0.0, %v4444
      %v4446 = vpop.f32.mrf.mxu0
      %4447 = vmatprep.mubr.f32.mxu0 0.0
      %4448 = vmatmul.mubr.f32.gmra.mxu0 %v4278
      %v4449 = vpop.f32.mrf.mxu0
      %v4450 = vadd.f32 0.0, %v4449
      %v4451 = vpop.f32.mrf.mxu0
      %4452 = vmatprep.mubr.f32.mxu0 0.0
      %4453 = vmatmul.mubr.f32.gmra.mxu0 %v4279
      %v4454 = vpop.f32.mrf.mxu0
      %v4455 = vadd.f32 0.0, %v4454
      %v4456 = vpop.f32.mrf.mxu0
      %4457 = vmatprep.mubr.f32.mxu0 0.0
      %4458 = vmatmul.mubr.f32.gmra.mxu0 %v4280
      %v4459 = vpop.f32.mrf.mxu0
      %v4460 = vadd.f32 0.0, %v4459
      %v4461 = vpop.f32.mrf.mxu0
      %4462 = vmatprep.mubr.f32.mxu0 0.0
      %4463 = vmatmul.mubr.f32.gmra.mxu0 %v4281
      %v4464 = vpop.f32.mrf.mxu0
      %v4465 = vadd.f32 0.0, %v4464
      %v4466 = vpop.f32.mrf.mxu0
      %4467 = vmatprep.mubr.f32.mxu0 0.0
      %4468 = vmatmul.mubr.f32.gmra.mxu0 %v4282
      %v4469 = vpop.f32.mrf.mxu0
      %v4470 = vadd.f32 0.0, %v4469
      %v4471 = vpop.f32.mrf.mxu0
      %4472 = vmatprep.mubr.f32.mxu0 0.0
      %4473 = vmatmul.mubr.f32.gmra.mxu0 %v4283
      %v4474 = vpop.f32.mrf.mxu0
      %v4475 = vadd.f32 0.0, %v4474
      %v4476 = vpop.f32.mrf.mxu0
      %4477 = vmatprep.mubr.f32.mxu0 0.0
      %4478 = vmatmul.mubr.f32.gmra.mxu0 %v4284
      %v4479 = vpop.f32.mrf.mxu0
      %v4480 = vadd.f32 0.0, %v4479
      %v4481 = vpop.f32.mrf.mxu0
      %4482 = vmatprep.mubr.f32.mxu0 0.0
      %4483 = vmatmul.mubr.f32.gmra.mxu0 %v4285
      %v4484 = vpop.f32.mrf.mxu0
      %v4485 = vadd.f32 0.0, %v4484
      %v4486 = vpop.f32.mrf.mxu0
      %4487 = vmatprep.mubr.f32.mxu0 0.0
      %4488 = vmatmul.mubr.f32.gmra.mxu0 %v4286
      %v4489 = vpop.f32.mrf.mxu0
      %v4490 = vadd.f32 0.0, %v4489
      %v4491 = vpop.f32.mrf.mxu0
      %4492 = vmatprep.mubr.f32.mxu0 0.0
      %4493 = vmatmul.mubr.f32.gmra.mxu0 %v4287
      %v4494 = vpop.f32.mrf.mxu0
      %v4495 = vadd.f32 0.0, %v4494
      %v4496 = vpop.f32.mrf.mxu0
      %4497 = vmatprep.mubr.f32.mxu0 0.0
      %4498 = vmatmul.mubr.f32.gmra.mxu0 %v4288
      %v4499 = vpop.f32.mrf.mxu0
      %v4500 = vadd.f32 0.0, %v4499
      %v4501 = vpop.f32.mrf.mxu0
      %4502 = vmatprep.mubr.f32.mxu0 0.0
      %4503 = vmatmul.mubr.f32.gmra.mxu0 %v4289
      %v4504 = vpop.f32.mrf.mxu0
      %v4505 = vadd.f32 0.0, %v4504
      %v4506 = vpop.f32.mrf.mxu0
      %4507 = vmatprep.mubr.f32.mxu0 0.0
      %4508 = vmatmul.mubr.f32.gmra.mxu0 %v4290
      %v4509 = vpop.f32.mrf.mxu0
      %v4510 = vadd.f32 0.0, %v4509
      %v4511 = vpop.f32.mrf.mxu0
      %4512 = vmatprep.mubr.f32.mxu0 0.0
      %4513 = vmatmul.mubr.f32.gmra.mxu0 %v4291
      %v4514 = vpop.f32.mrf.mxu0
      %v4515 = vadd.f32 0.0, %v4514
      %v4516 = vpop.f32.mrf.mxu0
      %4517 = vmatprep.mubr.f32.mxu0 0.0
      %4518 = vmatmul.mubr.f32.gmra.mxu0 %v4292
      %v4519 = vpop.f32.mrf.mxu0
      %v4520 = vadd.f32 0.0, %v4519
      %v4521 = vpop.f32.mrf.mxu0
      %4522 = vmatprep.mubr.f32.mxu0 0.0
      %4523 = vmatmul.mubr.f32.gmra.mxu0 %v4293
      %v4524 = vpop.f32.mrf.mxu0
      %v4525 = vadd.f32 0.0, %v4524
      %v4526 = vpop.f32.mrf.mxu0
      %4527 = vmatprep.mubr.f32.mxu0 0.0
      %4528 = vmatmul.mubr.f32.gmra.mxu0 %v4294
      %v4529 = vpop.f32.mrf.mxu0
      %v4530 = vadd.f32 0.0, %v4529
      %v4531 = vpop.f32.mrf.mxu0
      %4532 = vmatprep.mubr.f32.mxu0 0.0
      %4533 = vmatmul.mubr.f32.gmra.mxu0 %v4295
      %v4534 = vpop.f32.mrf.mxu0
      %v4535 = vadd.f32 0.0, %v4534
      %v4536 = vpop.f32.mrf.mxu0
      %4537 = vmatprep.mubr.f32.mxu0 0.0
      %4538 = vmatmul.mubr.f32.gmra.mxu0 %v4296
      %v4539 = vpop.f32.mrf.mxu0
      %v4540 = vadd.f32 0.0, %v4539
      %v4541 = vpop.f32.mrf.mxu0
      %4542 = vmatprep.mubr.f32.mxu0 0.0
      %4543 = vmatmul.mubr.f32.gmra.mxu0 %v4297
      %v4544 = vpop.f32.mrf.mxu0
      %v4545 = vadd.f32 0.0, %v4544
      %v4546 = vpop.f32.mrf.mxu0
      %4547 = vmatprep.mubr.f32.mxu0 0.0
      %4548 = vmatmul.mubr.f32.gmra.mxu0 %v4298
      %v4549 = vpop.f32.mrf.mxu0
      %v4550 = vadd.f32 0.0, %v4549
      %v4551 = vpop.f32.mrf.mxu0
      %4552 = vmatprep.mubr.f32.mxu0 0.0
      %4553 = vmatmul.mubr.f32.gmra.mxu0 %v4299
      %v4554 = vpop.f32.mrf.mxu0
      %v4555 = vadd.f32 0.0, %v4554
      %v4556 = vpop.f32.mrf.mxu0
      %4557 = vmatprep.mubr.f32.mxu0 0.0
      %4558 = vmatmul.mubr.f32.gmra.mxu0 %v4300
      %v4559 = vpop.f32.mrf.mxu0
      %v4560 = vadd.f32 0.0, %v4559
      %v4561 = vpop.f32.mrf.mxu0
      %4562 = vmatprep.mubr.f32.mxu0 0.0
      %4563 = vmatmul.mubr.f32.gmra.mxu0 %v4301
      %v4564 = vpop.f32.mrf.mxu0
      %v4565 = vadd.f32 0.0, %v4564
      %v4566 = vpop.f32.mrf.mxu0
      %4567 = vmatprep.mubr.f32.mxu0 0.0
      %4568 = vmatmul.mubr.f32.gmra.mxu0 %v4302
      %v4569 = vpop.f32.mrf.mxu0
      %v4570 = vadd.f32 0.0, %v4569
      %v4571 = vpop.f32.mrf.mxu0
      %4572 = vmatprep.mubr.f32.mxu0 0.0
      %4573 = vmatmul.mubr.f32.gmra.mxu0 %v4303
      %v4574 = vpop.f32.mrf.mxu0
      %v4575 = vadd.f32 0.0, %v4574
      %v4576 = vpop.f32.mrf.mxu0
      %4577 = vmatprep.mubr.f32.mxu0 0.0
      %4578 = vmatmul.mubr.f32.gmra.mxu0 %v4304
      %v4579 = vpop.f32.mrf.mxu0
      %v4580 = vadd.f32 0.0, %v4579
      %v4581 = vpop.f32.mrf.mxu0
      %4582 = vmatprep.mubr.f32.mxu0 0.0
      %4583 = vmatmul.mubr.f32.gmra.mxu0 %v4305
      %v4584 = vpop.f32.mrf.mxu0
      %v4585 = vadd.f32 0.0, %v4584
      %v4586 = vpop.f32.mrf.mxu0
      %4587 = vmatprep.mubr.f32.mxu0 0.0
      %4588 = vmatmul.mubr.f32.gmra.mxu0 %v4306
      %v4589 = vpop.f32.mrf.mxu0
      %v4590 = vadd.f32 0.0, %v4589
      %v4591 = vpop.f32.mrf.mxu0
      %4592 = vmatprep.mubr.f32.mxu0 0.0
      %4593 = vmatmul.mubr.f32.gmra.mxu0 %v4307
      %v4594 = vpop.f32.mrf.mxu0
      %v4595 = vadd.f32 0.0, %v4594
      %v4596 = vpop.f32.mrf.mxu0
      %4597 = vmatprep.mubr.f32.mxu0 0.0
      %4598 = vmatmul.mubr.f32.gmra.mxu0 %v4308
      %v4599 = vpop.f32.mrf.mxu0
      %v4600 = vadd.f32 0.0, %v4599
      %v4601 = vpop.f32.mrf.mxu0
      %4602 = vmatprep.mubr.f32.mxu0 0.0
      %4603 = vmatmul.mubr.f32.gmra.mxu0 %v4309
      %v4604 = vpop.f32.mrf.mxu0
      %v4605 = vadd.f32 0.0, %v4604
      %v4606 = vpop.f32.mrf.mxu0
      %4607 = vmatprep.mubr.f32.mxu0 0.0
      %4608 = vmatmul.mubr.f32.gmra.mxu0 %v4310
      %v4609 = vpop.f32.mrf.mxu0
      %v4610 = vadd.f32 0.0, %v4609
      %v4611 = vpop.f32.mrf.mxu0
      %4612 = vmatprep.mubr.f32.mxu0 0.0
      %4613 = vmatmul.mubr.f32.gmra.mxu0 %v4311
      %v4614 = vpop.f32.mrf.mxu0
      %v4615 = vadd.f32 0.0, %v4614
      %v4616 = vpop.f32.mrf.mxu0
      %4617 = vmatprep.mubr.f32.mxu0 0.0
      %4618 = vmatmul.mubr.f32.gmra.mxu0 %v4312
      %v4619 = vpop.f32.mrf.mxu0
      %v4620 = vadd.f32 0.0, %v4619
      %v4621 = vpop.f32.mrf.mxu0
      %4622 = vmatprep.mubr.f32.mxu0 0.0
      %4623 = vmatmul.mubr.f32.gmra.mxu0 %v4313
      %v4624 = vpop.f32.mrf.mxu0
      %v4625 = vadd.f32 0.0, %v4624
      %v4626 = vpop.f32.mrf.mxu0
      %4627 = vmatprep.mubr.f32.mxu0 0.0
      %4628 = vmatmul.mubr.f32.gmra.mxu0 %v4314
      %v4629 = vpop.f32.mrf.mxu0
      %v4630 = vadd.f32 0.0, %v4629
      %v4631 = vpop.f32.mrf.mxu0
      %4632 = vmatprep.mubr.f32.mxu0 0.0
      %4633 = vmatmul.mubr.f32.gmra.mxu0 %v4315
      %v4634 = vpop.f32.mrf.mxu0
      %v4635 = vadd.f32 0.0, %v4634
      %v4636 = vpop.f32.mrf.mxu0
      %4637 = vdwg.mxu0
      %v4638 = vadd.f32 %v4220, %v4400
      %v4639 = vadd.f32 %v4221, %v4405
      %v4640 = vadd.f32 %v4222, %v4410
      %v4641 = vadd.f32 %v4223, %v4415
      %v4642 = vadd.f32 %v4224, %v4420
      %v4643 = vadd.f32 %v4225, %v4425
      %v4644 = vadd.f32 %v4226, %v4430
      %v4645 = vadd.f32 %v4227, %v4435
      %v4646 = vadd.f32 %v4228, %v4440
      %v4647 = vadd.f32 %v4229, %v4445
      %v4648 = vadd.f32 %v4230, %v4450
      %v4649 = vadd.f32 %v4231, %v4455
      %v4650 = vadd.f32 %v4232, %v4460
      %v4651 = vadd.f32 %v4233, %v4465
      %v4652 = vadd.f32 %v4234, %v4470
      %v4653 = vadd.f32 %v4235, %v4475
      %v4654 = vadd.f32 %v4236, %v4480
      %v4655 = vadd.f32 %v4237, %v4485
      %v4656 = vadd.f32 %v4238, %v4490
      %v4657 = vadd.f32 %v4239, %v4495
      %v4658 = vadd.f32 %v4240, %v4500
      %v4659 = vadd.f32 %v4241, %v4505
      %v4660 = vadd.f32 %v4242, %v4510
      %v4661 = vadd.f32 %v4243, %v4515
      %v4662 = vadd.f32 %v4244, %v4520
      %v4663 = vadd.f32 %v4245, %v4525
      %v4664 = vadd.f32 %v4246, %v4530
      %v4665 = vadd.f32 %v4247, %v4535
      %v4666 = vadd.f32 %v4248, %v4540
      %v4667 = vadd.f32 %v4249, %v4545
      %v4668 = vadd.f32 %v4250, %v4550
      %v4669 = vadd.f32 %v4251, %v4555
      %v4670 = vadd.f32 %v4252, %v4560
      %v4671 = vadd.f32 %v4253, %v4565
      %v4672 = vadd.f32 %v4254, %v4570
      %v4673 = vadd.f32 %v4255, %v4575
      %v4674 = vadd.f32 %v4256, %v4580
      %v4675 = vadd.f32 %v4257, %v4585
      %v4676 = vadd.f32 %v4258, %v4590
      %v4677 = vadd.f32 %v4259, %v4595
      %v4678 = vadd.f32 %v4260, %v4600
      %v4679 = vadd.f32 %v4261, %v4605
      %v4680 = vadd.f32 %v4262, %v4610
      %v4681 = vadd.f32 %v4263, %v4615
      %v4682 = vadd.f32 %v4264, %v4620
      %v4683 = vadd.f32 %v4265, %v4625
      %v4684 = vadd.f32 %v4266, %v4630
      %v4685 = vadd.f32 %v4267, %v4635
      %4686 = vst [vmem:[%s316] sm:$0xff] 0.0
      %4687 = vst [vmem:[%s316 + $0x8] sm:$0xff] 0.0
      %4688 = vst [vmem:[%s316 + $0x10] sm:$0xff] 0.0
      %4689 = vst [vmem:[%s316 + $0x18] sm:$0xff] %v4638
      %4690 = vst [vmem:[%s316 + $0x20] sm:$0xff] %v4639
      %4691 = vst [vmem:[%s316 + $0x28] sm:$0xff] %v4640
      %4692 = vst [vmem:[%s316 + $0x30] sm:$0xff] %v4641
      %4693 = vst [vmem:[%s316 + $0x38] sm:$0xff] %v4642
      %4694 = vst [vmem:[%s316 + $0x40] sm:$0xff] %v4643
      %4695 = vst [vmem:[%s316 + $0x48] sm:$0xff] %v4644
      %4696 = vst [vmem:[%s316 + $0x50] sm:$0xff] %v4645
      %4697 = vst [vmem:[%s316 + $0x58] sm:$0xff] %v4646
      %4698 = vst [vmem:[%s316 + $0x60] sm:$0xff] %v4647
      %4699 = vst [vmem:[%s316 + $0x68] sm:$0xff] %v4648
      %4700 = vst [vmem:[%s316 + $0x70] sm:$0xff] %v4649
      %4701 = vst [vmem:[%s316 + $0x78] sm:$0xff] %v4650
      %4702 = vst [vmem:[%s316 + $0x80] sm:$0xff] %v4651
      %4703 = vst [vmem:[%s316 + $0x88] sm:$0xff] %v4652
      %4704 = vst [vmem:[%s316 + $0x90] sm:$0xff] %v4653
      %4705 = vst [vmem:[%s316 + $0x98] sm:$0xff] %v4654
      %4706 = vst [vmem:[%s316 + $0xa0] sm:$0xff] %v4655
      %4707 = vst [vmem:[%s316 + $0xa8] sm:$0xff] %v4656
      %4708 = vst [vmem:[%s316 + $0xb0] sm:$0xff] %v4657
      %4709 = vst [vmem:[%s316 + $0xb8] sm:$0xff] %v4658
      %4710 = vst [vmem:[%s316 + $0xc0] sm:$0xff] %v4659
      %4711 = vst [vmem:[%s316 + $0xc8] sm:$0xff] %v4660
      %4712 = vst [vmem:[%s316 + $0xd0] sm:$0xff] %v4661
      %4713 = vst [vmem:[%s316 + $0xd8] sm:$0xff] %v4662
      %4714 = vst [vmem:[%s316 + $0xe0] sm:$0xff] %v4663
      %4715 = vst [vmem:[%s316 + $0xe8] sm:$0xff] %v4664
      %4716 = vst [vmem:[%s316 + $0xf0] sm:$0xff] %v4665
      %4717 = vst [vmem:[%s316 + $0xf8] sm:$0xff] %v4666
      %4718 = vst [vmem:[%s316 + $0x100] sm:$0xff] %v4667
      %4719 = vst [vmem:[%s316 + $0x108] sm:$0xff] %v4668
      %4720 = vst [vmem:[%s316 + $0x110] sm:$0xff] %v4669
      %4721 = vst [vmem:[%s316 + $0x118] sm:$0xff] %v4670
      %4722 = vst [vmem:[%s316 + $0x120] sm:$0xff] %v4671
      %4723 = vst [vmem:[%s316 + $0x128] sm:$0xff] %v4672
      %4724 = vst [vmem:[%s316 + $0x130] sm:$0xff] %v4673
      %4725 = vst [vmem:[%s316 + $0x138] sm:$0xff] %v4674
      %4726 = vst [vmem:[%s316 + $0x140] sm:$0xff] %v4675
      %4727 = vst [vmem:[%s316 + $0x148] sm:$0xff] %v4676
      %4728 = vst [vmem:[%s316 + $0x150] sm:$0xff] %v4677
      %4729 = vst [vmem:[%s316 + $0x158] sm:$0xff] %v4678
      %4730 = vst [vmem:[%s316 + $0x160] sm:$0xff] %v4679
      %4731 = vst [vmem:[%s316 + $0x168] sm:$0xff] %v4680
      %4732 = vst [vmem:[%s316 + $0x170] sm:$0xff] %v4681
      %4733 = vst [vmem:[%s316 + $0x178] sm:$0xff] %v4682
      %4734 = vst [vmem:[%s316 + $0x180] sm:$0xff] %v4683
      %4735 = vst [vmem:[%s316 + $0x188] sm:$0xff] %v4684
      %4736 = vst [vmem:[%s316 + $0x190] sm:$0xff] %v4685
      %4737 = vst [vmem:[%s316 + $0x198] sm:$0xff] 0.0
      %4738 = vst [vmem:[%s316 + $0x1a0] sm:$0xff] 0.0
      %4739 = vst [vmem:[%s316 + $0x1a8] sm:$0xff] 0.0
      %4740 = vst [vmem:[%s316 + $0x1b0] sm:$0xff] 0.0
      %4741 = vst [vmem:[%s316 + $0x1b8] sm:$0xff] 0.0
      %4742 = vst [vmem:[%s316 + $0x1c0] sm:$0xff] 0.0
      %v4743 = vld [vmem:[%s5] sm:$0xff]
      %v4744 = vld [vmem:[%s5 + $0x8] sm:$0xff]
      %v4745 = vld [vmem:[%s5 + $0x10] sm:$0xff]
      %v4746 = vld [vmem:[%s5 + $0x18] sm:$0xff]
      %v4747 = vld [vmem:[%s5 + $0x20] sm:$0xff]
      %v4748 = vld [vmem:[%s5 + $0x28] sm:$0xff]
      %v4749 = vld [vmem:[%s5 + $0x30] sm:$0xff]
      %v4750 = vld [vmem:[%s5 + $0x38] sm:$0xff]
      %v4751 = vld [vmem:[%s5 + $0x40] sm:$0xff]
      %v4752 = vld [vmem:[%s5 + $0x48] sm:$0xff]
      %v4753 = vld [vmem:[%s5 + $0x50] sm:$0xff]
      %v4754 = vld [vmem:[%s5 + $0x58] sm:$0xff]
      %v4755 = vld [vmem:[%s5 + $0x60] sm:$0xff]
      %v4756 = vld [vmem:[%s5 + $0x68] sm:$0xff]
      %v4757 = vld [vmem:[%s5 + $0x70] sm:$0xff]
      %v4758 = vld [vmem:[%s5 + $0x78] sm:$0xff]
      %v4759 = vld [vmem:[%s5 + $0x80] sm:$0xff]
      %v4760 = vld [vmem:[%s5 + $0x88] sm:$0xff]
      %v4761 = vld [vmem:[%s5 + $0x90] sm:$0xff]
      %v4762 = vld [vmem:[%s5 + $0x98] sm:$0xff]
      %v4763 = vld [vmem:[%s5 + $0xa0] sm:$0xff]
      %v4764 = vld [vmem:[%s5 + $0xa8] sm:$0xff]
      %v4765 = vld [vmem:[%s5 + $0xb0] sm:$0xff]
      %v4766 = vld [vmem:[%s5 + $0xb8] sm:$0xff]
      %v4767 = vld [vmem:[%s5 + $0xc0] sm:$0xff]
      %v4768 = vld [vmem:[%s5 + $0xc8] sm:$0xff]
      %v4769 = vld [vmem:[%s5 + $0xd0] sm:$0xff]
      %v4770 = vld [vmem:[%s5 + $0xd8] sm:$0xff]
      %v4771 = vld [vmem:[%s5 + $0xe0] sm:$0xff]
      %v4772 = vld [vmem:[%s5 + $0xe8] sm:$0xff]
      %v4773 = vld [vmem:[%s5 + $0xf0] sm:$0xff]
      %v4774 = vld [vmem:[%s5 + $0xf8] sm:$0xff]
      %v4775 = vld [vmem:[%s5 + $0x100] sm:$0xff]
      %v4776 = vld [vmem:[%s5 + $0x108] sm:$0xff]
      %v4777 = vld [vmem:[%s5 + $0x110] sm:$0xff]
      %v4778 = vld [vmem:[%s5 + $0x118] sm:$0xff]
      %v4779 = vld [vmem:[%s5 + $0x120] sm:$0xff]
      %v4780 = vld [vmem:[%s5 + $0x128] sm:$0xff]
      %v4781 = vld [vmem:[%s5 + $0x130] sm:$0xff]
      %v4782 = vld [vmem:[%s5 + $0x138] sm:$0xff]
      %v4783 = vld [vmem:[%s5 + $0x140] sm:$0xff]
      %v4784 = vld [vmem:[%s5 + $0x148] sm:$0xff]
      %v4785 = vld [vmem:[%s5 + $0x150] sm:$0xff]
      %v4786 = vld [vmem:[%s5 + $0x158] sm:$0xff]
      %v4787 = vld [vmem:[%s5 + $0x160] sm:$0xff]
      %v4788 = vld [vmem:[%s5 + $0x168] sm:$0xff]
      %v4789 = vld [vmem:[%s5 + $0x170] sm:$0xff]
      %v4790 = vld [vmem:[%s5 + $0x178] sm:$0xff]
      %4792 = vset.pattern.permute.xlu0 0
      %4793 = vperm.xlu0 %4792, %v4743
      %v4794 = vpop.permute.xlu0 %4793
      %4797 = vset.pattern.permute.xlu0 0
      %4798 = vperm.xlu0 %4797, %v4744
      %v4799 = vpop.permute.xlu0 %4798
      %4802 = vset.pattern.permute.xlu0 0
      %4803 = vperm.xlu0 %4802, %v4745
      %v4804 = vpop.permute.xlu0 %4803
      %4807 = vset.pattern.permute.xlu0 0
      %4808 = vperm.xlu0 %4807, %v4746
      %v4809 = vpop.permute.xlu0 %4808
      %4812 = vset.pattern.permute.xlu0 0
      %4813 = vperm.xlu0 %4812, %v4747
      %v4814 = vpop.permute.xlu0 %4813
      %4817 = vset.pattern.permute.xlu0 0
      %4818 = vperm.xlu0 %4817, %v4748
      %v4819 = vpop.permute.xlu0 %4818
      %4822 = vset.pattern.permute.xlu0 0
      %4823 = vperm.xlu0 %4822, %v4749
      %v4824 = vpop.permute.xlu0 %4823
      %4827 = vset.pattern.permute.xlu0 0
      %4828 = vperm.xlu0 %4827, %v4750
      %v4829 = vpop.permute.xlu0 %4828
      %4832 = vset.pattern.permute.xlu0 0
      %4833 = vperm.xlu0 %4832, %v4751
      %v4834 = vpop.permute.xlu0 %4833
      %4837 = vset.pattern.permute.xlu0 0
      %4838 = vperm.xlu0 %4837, %v4752
      %v4839 = vpop.permute.xlu0 %4838
      %4842 = vset.pattern.permute.xlu0 0
      %4843 = vperm.xlu0 %4842, %v4753
      %v4844 = vpop.permute.xlu0 %4843
      %4847 = vset.pattern.permute.xlu0 0
      %4848 = vperm.xlu0 %4847, %v4754
      %v4849 = vpop.permute.xlu0 %4848
      %4852 = vset.pattern.permute.xlu0 0
      %4853 = vperm.xlu0 %4852, %v4755
      %v4854 = vpop.permute.xlu0 %4853
      %4857 = vset.pattern.permute.xlu0 0
      %4858 = vperm.xlu0 %4857, %v4756
      %v4859 = vpop.permute.xlu0 %4858
      %4862 = vset.pattern.permute.xlu0 0
      %4863 = vperm.xlu0 %4862, %v4757
      %v4864 = vpop.permute.xlu0 %4863
      %4867 = vset.pattern.permute.xlu0 0
      %4868 = vperm.xlu0 %4867, %v4758
      %v4869 = vpop.permute.xlu0 %4868
      %4872 = vset.pattern.permute.xlu0 0
      %4873 = vperm.xlu0 %4872, %v4759
      %v4874 = vpop.permute.xlu0 %4873
      %4877 = vset.pattern.permute.xlu0 0
      %4878 = vperm.xlu0 %4877, %v4760
      %v4879 = vpop.permute.xlu0 %4878
      %4882 = vset.pattern.permute.xlu0 0
      %4883 = vperm.xlu0 %4882, %v4761
      %v4884 = vpop.permute.xlu0 %4883
      %4887 = vset.pattern.permute.xlu0 0
      %4888 = vperm.xlu0 %4887, %v4762
      %v4889 = vpop.permute.xlu0 %4888
      %4892 = vset.pattern.permute.xlu0 0
      %4893 = vperm.xlu0 %4892, %v4763
      %v4894 = vpop.permute.xlu0 %4893
      %4897 = vset.pattern.permute.xlu0 0
      %4898 = vperm.xlu0 %4897, %v4764
      %v4899 = vpop.permute.xlu0 %4898
      %4902 = vset.pattern.permute.xlu0 0
      %4903 = vperm.xlu0 %4902, %v4765
      %v4904 = vpop.permute.xlu0 %4903
      %4907 = vset.pattern.permute.xlu0 0
      %4908 = vperm.xlu0 %4907, %v4766
      %v4909 = vpop.permute.xlu0 %4908
      %4912 = vset.pattern.permute.xlu0 0
      %4913 = vperm.xlu0 %4912, %v4767
      %v4914 = vpop.permute.xlu0 %4913
      %4917 = vset.pattern.permute.xlu0 0
      %4918 = vperm.xlu0 %4917, %v4768
      %v4919 = vpop.permute.xlu0 %4918
      %4922 = vset.pattern.permute.xlu0 0
      %4923 = vperm.xlu0 %4922, %v4769
      %v4924 = vpop.permute.xlu0 %4923
      %4927 = vset.pattern.permute.xlu0 0
      %4928 = vperm.xlu0 %4927, %v4770
      %v4929 = vpop.permute.xlu0 %4928
      %4932 = vset.pattern.permute.xlu0 0
      %4933 = vperm.xlu0 %4932, %v4771
      %v4934 = vpop.permute.xlu0 %4933
      %4937 = vset.pattern.permute.xlu0 0
      %4938 = vperm.xlu0 %4937, %v4772
      %v4939 = vpop.permute.xlu0 %4938
      %4942 = vset.pattern.permute.xlu0 0
      %4943 = vperm.xlu0 %4942, %v4773
      %v4944 = vpop.permute.xlu0 %4943
      %4947 = vset.pattern.permute.xlu0 0
      %4948 = vperm.xlu0 %4947, %v4774
      %v4949 = vpop.permute.xlu0 %4948
      %4952 = vset.pattern.permute.xlu0 0
      %4953 = vperm.xlu0 %4952, %v4775
      %v4954 = vpop.permute.xlu0 %4953
      %4957 = vset.pattern.permute.xlu0 0
      %4958 = vperm.xlu0 %4957, %v4776
      %v4959 = vpop.permute.xlu0 %4958
      %4962 = vset.pattern.permute.xlu0 0
      %4963 = vperm.xlu0 %4962, %v4777
      %v4964 = vpop.permute.xlu0 %4963
      %4967 = vset.pattern.permute.xlu0 0
      %4968 = vperm.xlu0 %4967, %v4778
      %v4969 = vpop.permute.xlu0 %4968
      %4972 = vset.pattern.permute.xlu0 0
      %4973 = vperm.xlu0 %4972, %v4779
      %v4974 = vpop.permute.xlu0 %4973
      %4977 = vset.pattern.permute.xlu0 0
      %4978 = vperm.xlu0 %4977, %v4780
      %v4979 = vpop.permute.xlu0 %4978
      %4982 = vset.pattern.permute.xlu0 0
      %4983 = vperm.xlu0 %4982, %v4781
      %v4984 = vpop.permute.xlu0 %4983
      %4987 = vset.pattern.permute.xlu0 0
      %4988 = vperm.xlu0 %4987, %v4782
      %v4989 = vpop.permute.xlu0 %4988
      %4992 = vset.pattern.permute.xlu0 0
      %4993 = vperm.xlu0 %4992, %v4783
      %v4994 = vpop.permute.xlu0 %4993
      %4997 = vset.pattern.permute.xlu0 0
      %4998 = vperm.xlu0 %4997, %v4784
      %v4999 = vpop.permute.xlu0 %4998
      %5002 = vset.pattern.permute.xlu0 0
      %5003 = vperm.xlu0 %5002, %v4785
      %v5004 = vpop.permute.xlu0 %5003
      %5007 = vset.pattern.permute.xlu0 0
      %5008 = vperm.xlu0 %5007, %v4786
      %v5009 = vpop.permute.xlu0 %5008
      %5012 = vset.pattern.permute.xlu0 0
      %5013 = vperm.xlu0 %5012, %v4787
      %v5014 = vpop.permute.xlu0 %5013
      %5017 = vset.pattern.permute.xlu0 0
      %5018 = vperm.xlu0 %5017, %v4788
      %v5019 = vpop.permute.xlu0 %5018
      %5022 = vset.pattern.permute.xlu0 0
      %5023 = vperm.xlu0 %5022, %v4789
      %v5024 = vpop.permute.xlu0 %5023
      %5027 = vset.pattern.permute.xlu0 0
      %5028 = vperm.xlu0 %5027, %v4790
      %v5029 = vpop.permute.xlu0 %5028
      %v5031 = vmul.f32 %v4638, %v4794
      %v5032 = vmul.f32 %v4639, %v4799
      %v5033 = vmul.f32 %v4640, %v4804
      %v5034 = vmul.f32 %v4641, %v4809
      %v5035 = vmul.f32 %v4642, %v4814
      %v5036 = vmul.f32 %v4643, %v4819
      %v5037 = vmul.f32 %v4644, %v4824
      %v5038 = vmul.f32 %v4645, %v4829
      %v5039 = vmul.f32 %v4646, %v4834
      %v5040 = vmul.f32 %v4647, %v4839
      %v5041 = vmul.f32 %v4648, %v4844
      %v5042 = vmul.f32 %v4649, %v4849
      %v5043 = vmul.f32 %v4650, %v4854
      %v5044 = vmul.f32 %v4651, %v4859
      %v5045 = vmul.f32 %v4652, %v4864
      %v5046 = vmul.f32 %v4653, %v4869
      %v5047 = vmul.f32 %v4654, %v4874
      %v5048 = vmul.f32 %v4655, %v4879
      %v5049 = vmul.f32 %v4656, %v4884
      %v5050 = vmul.f32 %v4657, %v4889
      %v5051 = vmul.f32 %v4658, %v4894
      %v5052 = vmul.f32 %v4659, %v4899
      %v5053 = vmul.f32 %v4660, %v4904
      %v5054 = vmul.f32 %v4661, %v4909
      %v5055 = vmul.f32 %v4662, %v4914
      %v5056 = vmul.f32 %v4663, %v4919
      %v5057 = vmul.f32 %v4664, %v4924
      %v5058 = vmul.f32 %v4665, %v4929
      %v5059 = vmul.f32 %v4666, %v4934
      %v5060 = vmul.f32 %v4667, %v4939
      %v5061 = vmul.f32 %v4668, %v4944
      %v5062 = vmul.f32 %v4669, %v4949
      %v5063 = vmul.f32 %v4670, %v4954
      %v5064 = vmul.f32 %v4671, %v4959
      %v5065 = vmul.f32 %v4672, %v4964
      %v5066 = vmul.f32 %v4673, %v4969
      %v5067 = vmul.f32 %v4674, %v4974
      %v5068 = vmul.f32 %v4675, %v4979
      %v5069 = vmul.f32 %v4676, %v4984
      %v5070 = vmul.f32 %v4677, %v4989
      %v5071 = vmul.f32 %v4678, %v4994
      %v5072 = vmul.f32 %v4679, %v4999
      %v5073 = vmul.f32 %v4680, %v5004
      %v5074 = vmul.f32 %v4681, %v5009
      %v5075 = vmul.f32 %v4682, %v5014
      %v5076 = vmul.f32 %v4683, %v5019
      %v5077 = vmul.f32 %v4684, %v5024
      %v5078 = vmul.f32 %v4685, %v5029
      %v5079 = vadd.f32 %v5031, %v5032
      %v5080 = vadd.f32 %v5079, %v5033
      %v5081 = vadd.f32 %v5080, %v5034
      %v5082 = vadd.f32 %v5081, %v5035
      %v5083 = vadd.f32 %v5082, %v5036
      %v5084 = vadd.f32 %v5083, %v5037
      %v5085 = vadd.f32 %v5084, %v5038
      %v5086 = vadd.f32 %v5085, %v5039
      %v5087 = vadd.f32 %v5086, %v5040
      %v5088 = vadd.f32 %v5087, %v5041
      %v5089 = vadd.f32 %v5088, %v5042
      %v5090 = vadd.f32 %v5089, %v5043
      %v5091 = vadd.f32 %v5090, %v5044
      %v5092 = vadd.f32 %v5091, %v5045
      %v5093 = vadd.f32 %v5092, %v5046
      %v5094 = vadd.f32 %v5093, %v5047
      %v5095 = vadd.f32 %v5094, %v5048
      %v5096 = vadd.f32 %v5095, %v5049
      %v5097 = vadd.f32 %v5096, %v5050
      %v5098 = vadd.f32 %v5097, %v5051
      %v5099 = vadd.f32 %v5098, %v5052
      %v5100 = vadd.f32 %v5099, %v5053
      %v5101 = vadd.f32 %v5100, %v5054
      %v5102 = vadd.f32 %v5101, %v5055
      %v5103 = vadd.f32 %v5102, %v5056
      %v5104 = vadd.f32 %v5103, %v5057
      %v5105 = vadd.f32 %v5104, %v5058
      %v5106 = vadd.f32 %v5105, %v5059
      %v5107 = vadd.f32 %v5106, %v5060
      %v5108 = vadd.f32 %v5107, %v5061
      %v5109 = vadd.f32 %v5108, %v5062
      %v5110 = vadd.f32 %v5109, %v5063
      %v5111 = vadd.f32 %v5110, %v5064
      %v5112 = vadd.f32 %v5111, %v5065
      %v5113 = vadd.f32 %v5112, %v5066
      %v5114 = vadd.f32 %v5113, %v5067
      %v5115 = vadd.f32 %v5114, %v5068
      %v5116 = vadd.f32 %v5115, %v5069
      %v5117 = vadd.f32 %v5116, %v5070
      %v5118 = vadd.f32 %v5117, %v5071
      %v5119 = vadd.f32 %v5118, %v5072
      %v5120 = vadd.f32 %v5119, %v5073
      %v5121 = vadd.f32 %v5120, %v5074
      %v5122 = vadd.f32 %v5121, %v5075
      %v5123 = vadd.f32 %v5122, %v5076
      %v5124 = vadd.f32 %v5123, %v5077
      %v5125 = vadd.f32 %v5124, %v5078
      %v5126 = vrot.slane %v5125, 4
      %v5127 = vadd.f32 %v5125, %v5126
      %v5128 = vrot.slane %v5127, 2
      %v5129 = vadd.f32 %v5127, %v5128
      %v5130 = vrot.slane %v5129, 1
      %v5131 = vadd.f32 %v5129, %v5130
      %5132 = vst [vmem:[%s319] sm:$0x1] %v5131
      %v5133 = vmul.f32 %v5031, %v4638
      %v5134 = vmul.f32 %v5032, %v4639
      %v5135 = vmul.f32 %v5033, %v4640
      %v5136 = vmul.f32 %v5034, %v4641
      %v5137 = vmul.f32 %v5035, %v4642
      %v5138 = vmul.f32 %v5036, %v4643
      %v5139 = vmul.f32 %v5037, %v4644
      %v5140 = vmul.f32 %v5038, %v4645
      %v5141 = vmul.f32 %v5039, %v4646
      %v5142 = vmul.f32 %v5040, %v4647
      %v5143 = vmul.f32 %v5041, %v4648
      %v5144 = vmul.f32 %v5042, %v4649
      %v5145 = vmul.f32 %v5043, %v4650
      %v5146 = vmul.f32 %v5044, %v4651
      %v5147 = vmul.f32 %v5045, %v4652
      %v5148 = vmul.f32 %v5046, %v4653
      %v5149 = vmul.f32 %v5047, %v4654
      %v5150 = vmul.f32 %v5048, %v4655
      %v5151 = vmul.f32 %v5049, %v4656
      %v5152 = vmul.f32 %v5050, %v4657
      %v5153 = vmul.f32 %v5051, %v4658
      %v5154 = vmul.f32 %v5052, %v4659
      %v5155 = vmul.f32 %v5053, %v4660
      %v5156 = vmul.f32 %v5054, %v4661
      %v5157 = vmul.f32 %v5055, %v4662
      %v5158 = vmul.f32 %v5056, %v4663
      %v5159 = vmul.f32 %v5057, %v4664
      %v5160 = vmul.f32 %v5058, %v4665
      %v5161 = vmul.f32 %v5059, %v4666
      %v5162 = vmul.f32 %v5060, %v4667
      %v5163 = vmul.f32 %v5061, %v4668
      %v5164 = vmul.f32 %v5062, %v4669
      %v5165 = vmul.f32 %v5063, %v4670
      %v5166 = vmul.f32 %v5064, %v4671
      %v5167 = vmul.f32 %v5065, %v4672
      %v5168 = vmul.f32 %v5066, %v4673
      %v5169 = vmul.f32 %v5067, %v4674
      %v5170 = vmul.f32 %v5068, %v4675
      %v5171 = vmul.f32 %v5069, %v4676
      %v5172 = vmul.f32 %v5070, %v4677
      %v5173 = vmul.f32 %v5071, %v4678
      %v5174 = vmul.f32 %v5072, %v4679
      %v5175 = vmul.f32 %v5073, %v4680
      %v5176 = vmul.f32 %v5074, %v4681
      %v5177 = vmul.f32 %v5075, %v4682
      %v5178 = vmul.f32 %v5076, %v4683
      %v5179 = vmul.f32 %v5077, %v4684
      %v5180 = vmul.f32 %v5078, %v4685
      %v5181 = vadd.f32 %v5133, %v5134
      %v5182 = vadd.f32 %v5181, %v5135
      %v5183 = vadd.f32 %v5182, %v5136
      %v5184 = vadd.f32 %v5183, %v5137
      %v5185 = vadd.f32 %v5184, %v5138
      %v5186 = vadd.f32 %v5185, %v5139
      %v5187 = vadd.f32 %v5186, %v5140
      %v5188 = vadd.f32 %v5187, %v5141
      %v5189 = vadd.f32 %v5188, %v5142
      %v5190 = vadd.f32 %v5189, %v5143
      %v5191 = vadd.f32 %v5190, %v5144
      %v5192 = vadd.f32 %v5191, %v5145
      %v5193 = vadd.f32 %v5192, %v5146
      %v5194 = vadd.f32 %v5193, %v5147
      %v5195 = vadd.f32 %v5194, %v5148
      %v5196 = vadd.f32 %v5195, %v5149
      %v5197 = vadd.f32 %v5196, %v5150
      %v5198 = vadd.f32 %v5197, %v5151
      %v5199 = vadd.f32 %v5198, %v5152
      %v5200 = vadd.f32 %v5199, %v5153
      %v5201 = vadd.f32 %v5200, %v5154
      %v5202 = vadd.f32 %v5201, %v5155
      %v5203 = vadd.f32 %v5202, %v5156
      %v5204 = vadd.f32 %v5203, %v5157
      %v5205 = vadd.f32 %v5204, %v5158
      %v5206 = vadd.f32 %v5205, %v5159
      %v5207 = vadd.f32 %v5206, %v5160
      %v5208 = vadd.f32 %v5207, %v5161
      %v5209 = vadd.f32 %v5208, %v5162
      %v5210 = vadd.f32 %v5209, %v5163
      %v5211 = vadd.f32 %v5210, %v5164
      %v5212 = vadd.f32 %v5211, %v5165
      %v5213 = vadd.f32 %v5212, %v5166
      %v5214 = vadd.f32 %v5213, %v5167
      %v5215 = vadd.f32 %v5214, %v5168
      %v5216 = vadd.f32 %v5215, %v5169
      %v5217 = vadd.f32 %v5216, %v5170
      %v5218 = vadd.f32 %v5217, %v5171
      %v5219 = vadd.f32 %v5218, %v5172
      %v5220 = vadd.f32 %v5219, %v5173
      %v5221 = vadd.f32 %v5220, %v5174
      %v5222 = vadd.f32 %v5221, %v5175
      %v5223 = vadd.f32 %v5222, %v5176
      %v5224 = vadd.f32 %v5223, %v5177
      %v5225 = vadd.f32 %v5224, %v5178
      %v5226 = vadd.f32 %v5225, %v5179
      %v5227 = vadd.f32 %v5226, %v5180
      %v5228 = vrot.slane %v5227, 4
      %v5229 = vadd.f32 %v5227, %v5228
      %v5230 = vrot.slane %v5229, 2
      %v5231 = vadd.f32 %v5229, %v5230
      %v5232 = vrot.slane %v5231, 1
      %v5233 = vadd.f32 %v5231, %v5232
      %5234 = vst [vmem:[%s322] sm:$0x1] %v5233
      %p5235 = scmp.lt.s32.totalorder %s20, 1
      %s5236 = scalar_select %p5235, %s20, 1
      %s5237 = smul.addr %s5236, 57
      %s5238 = smul.addr %s5237, 8
      %s5239 = scalar_lea.vmem %s6, %s5238
      %p5240 = scmp.lt.s32.totalorder %s20, 1
      %s5241 = scalar_select %p5240, %s20, 1
      %s5242 = scalar_lea.vmem %s7, %s5241
      %p5243 = scmp.lt.s32.totalorder %s20, 1
      %s5244 = scalar_select %p5243, %s20, 1
      %s5245 = scalar_lea.vmem %s8, %s5244
      // Predicated region
      $region45: #{block_forward.4} parent=43 // pred_check
        %p5246 = pneg %p169
      $region46: #{block_forward.4} parent=43 // pred_check_branch
        %5248 = sbr.rel (%p5246) target = $region48
      $region47: #{block_forward.4} parent=43 // pred_region
        _
      $region48: #{block_forward.4} parent=43 // pred_fallthru
        _
      // Predicated region
      $region49: #{block_forward.4} parent=43 // pred_check
        %p5249 = pneg %p195
      $region50: #{block_forward.4} parent=43 // pred_check_branch
        %5251 = sbr.rel (%p5249) target = $region52
      $region51: #{block_forward.4} parent=43 // pred_region
        _
      $region52: #{block_forward.4} parent=43 // pred_fallthru
        _
      // Predicated region
      $region53: #{block_forward.4} parent=43 // pred_check
        %p5252 = pneg %p221
      $region54: #{block_forward.4} parent=43 // pred_check_branch
        %5254 = sbr.rel (%p5252) target = $region56
      $region55: #{block_forward.4} parent=43 // pred_region
        _
      $region56: #{block_forward.4} parent=43 // pred_fallthru
        _
    $region44: #{block_forward.4} parent=5 // pred_fallthru
      _
    %p5255 = scmp.le.s32.totalorder 2, %s15
    // Predicated region
    $region57: #{block_forward.4} parent=5 // pred_check
      %p5256 = pneg %p5255
    $region58: #{block_forward.4} parent=5 // pred_check_branch
      %5258 = sbr.rel (%p5256) target = $region60
    $region59: #{block_forward.4} parent=5 // pred_region
      %s5259 = ssub.s32 %s15, 2
      // Predicated region
      $region61: #{block_forward.4} parent=59 // pred_check
        %p5260 = pneg %p175
      $region62: #{block_forward.4} parent=59 // pred_check_branch
        %5262 = sbr.rel (%p5260) target = $region64
      $region63: #{block_forward.4} parent=59 // pred_region
        %p5263 = scmp.lt.s32.totalorder %s21, 1
        %s5264 = scalar_select %p5263, %s21, 1
        %s5265 = smul.addr %s5264, 57
        %s5266 = smul.addr %s5265, 8
        %s5267 = scalar_lea.vmem %s6, %s5266
      $region64: #{block_forward.4} parent=59 // pred_fallthru
        _
      // Predicated region
      $region65: #{block_forward.4} parent=59 // pred_check
        %p5268 = pneg %p201
      $region66: #{block_forward.4} parent=59 // pred_check_branch
        %5270 = sbr.rel (%p5268) target = $region68
      $region67: #{block_forward.4} parent=59 // pred_region
        %p5271 = scmp.lt.s32.totalorder %s21, 1
        %s5272 = scalar_select %p5271, %s21, 1
        %s5273 = scalar_lea.vmem %s7, %s5272
      $region68: #{block_forward.4} parent=59 // pred_fallthru
        _
      // Predicated region
      $region69: #{block_forward.4} parent=59 // pred_check
        %p5274 = pneg %p227
      $region70: #{block_forward.4} parent=59 // pred_check_branch
        %5276 = sbr.rel (%p5274) target = $region72
      $region71: #{block_forward.4} parent=59 // pred_region
        %p5277 = scmp.lt.s32.totalorder %s21, 1
        %s5278 = scalar_select %p5277, %s21, 1
        %s5279 = scalar_lea.vmem %s8, %s5278
      $region72: #{block_forward.4} parent=59 // pred_fallthru
        _
    $region60: #{block_forward.4} parent=5 // pred_fallthru
      _
  $region6: #{block_forward.4} parent=0 // loop_footer
    %s19 = sadd.s32 1, %s15
  $region7: #{block_forward.4} parent=0 // loop_footer_branch
    %14 = sbr.rel target = $region3
  $region8: #{block_forward.4} parent=0 // loop_exit
    _

</llo_original>
